<compile_context>
chip_gen: v5e
topology: v5e:2x2
jax: 0.10.0
libtpu: 0.0.40
codegen_flags: <defaults>
</compile_context>

<pallas_src>
import functools

import jax
import jax.numpy as jnp
from jax.experimental import pallas as pl
from jax.experimental.pallas import tpu as pltpu

L = 500          # fixed in the module
L_PAD = 512      # padded to a multiple of 128 lanes
ONE_COL = L      # padded column of H that is forced to a constant 1.0
K = 1            # fixed in the module
NEG_BIG = -1e30  # "-inf" stand-in that stays NaN-free through exp/max


def _round_up(a, b):
    return ((a + b - 1) // b) * b


# ----------------------------------------------------------------------------
# Parameter init (mirrors torch.nn.Linear default init; weights stored (in,out))
# ----------------------------------------------------------------------------
def _init_linear(key, fan_in, fan_out):
    kw, kb = jax.random.split(key)
    bound = 1.0 / jnp.sqrt(jnp.float32(fan_in))
    w = jax.random.uniform(kw, (fan_in, fan_out), jnp.float32, -bound, bound)
    b = jax.random.uniform(kb, (1, fan_out), jnp.float32, -bound, bound)
    return w, b


def init_params(key, num_att, D):
    keys = jax.random.split(key, 5)
    wfe, bfe = _init_linear(keys[0], num_att, L)
    wv, bv = _init_linear(keys[1], L, D)
    wu, bu = _init_linear(keys[2], L, D)
    ww, bw = _init_linear(keys[3], D, K)
    wc, bc = _init_linear(keys[4], L * K, 1)
    return dict(wfe=wfe, bfe=bfe, wv=wv, bv=bv, wu=wu, bu=bu,
                ww=ww, bw=bw, wc=wc, bc=bc)


# ----------------------------------------------------------------------------
# Parameter preparation: pad L->512, fuse V|U gates, fold every bias into the
# weights (ones column of x -> bfe; constant-1 column H[:,500] -> b_vu and bc).
# bw is dropped (softmax shift invariance; raw scores are never exposed).
# ----------------------------------------------------------------------------
def prepare_params(params, matmul_dtype):
    num_att = params["wfe"].shape[0]
    D = params["wv"].shape[1]
    na_aug = _round_up(num_att + 1, 8)                     # +1 ones column

    wfe_aug = jnp.zeros((na_aug, L_PAD), jnp.float32)
    wfe_aug = wfe_aug.at[:num_att, :L].set(params["wfe"])
    wfe_aug = wfe_aug.at[num_att, :L].set(params["bfe"][0])   # bfe via ones col
    wfe_aug = wfe_aug.at[num_att, ONE_COL].set(1.0)           # H[:,500] == 1

    w_vu = jnp.zeros((L_PAD, 2 * D), jnp.float32)
    w_vu = w_vu.at[:L, :D].set(params["wv"]).at[:L, D:].set(params["wu"])
    w_vu = w_vu.at[ONE_COL, :D].set(params["bv"][0])          # b_v via H[:,500]
    w_vu = w_vu.at[ONE_COL, D:].set(params["bu"][0])          # b_u via H[:,500]

    ww_row = params["ww"].reshape(1, D)                       # (1, D)

    wc_row = jnp.zeros((1, L_PAD), jnp.float32)
    wc_row = wc_row.at[:, :L].set(params["wc"].reshape(1, L))
    wc_row = wc_row.at[:, ONE_COL].set(params["bc"][0, 0])    # bc via M[:,500]==1

    return dict(
        na_aug=na_aug,
        wfe=wfe_aug.astype(matmul_dtype),
        w_vu=w_vu.astype(matmul_dtype),
        ww=ww_row.astype(matmul_dtype),
        wc=wc_row.astype(jnp.float32),
    )


def _augment_x(x2d, num_att, na_aug, n_pad, matmul_dtype):
    """Zero-pad rows to n_pad, append a ones column (bias folding) + zero pad."""
    N = x2d.shape[0]
    x_aug = jnp.zeros((n_pad, na_aug), jnp.float32)
    x_aug = x_aug.at[:N, :num_att].set(x2d)
    x_aug = x_aug.at[:N, num_att].set(1.0)
    return x_aug.astype(matmul_dtype)


# ----------------------------------------------------------------------------
# Kernel
# ----------------------------------------------------------------------------
def _gated_attention_kernel(
        # scalar prefetch
        n_valid_ref,           # (1,) int32 in SMEM: true bag length
        # inputs
        x_ref,                 # (tile_n, na_aug)  matmul_dtype (ones col appended)
        wfe_ref,               # (na_aug, 512)     matmul_dtype (bfe folded in)
        wvu_ref,               # (512, 2D)         matmul_dtype (b_v|b_u folded in)
        ww_ref,                # (1, D)            matmul_dtype
        wc_ref,                # (1, 512)          f32 (bc folded in)
        # outputs
        scalars_ref,           # (1, 128) f32   lane0 = Y_prob, lane1 = Y_hat
        a_ref,                 # (1, n_pad) f32 attention weights (resident)
        # scratch (persist across the grid = online-softmax carry)
        m_ref, l_ref,          # (1, 1) f32 running max / denominator
        macc_ref,              # (1, 512) f32 rescaled unnormalized M
        *, d_att, tile_n, matmul_dtype):
    i = pl.program_id(0)
    n_tiles = pl.num_programs(0)
    n_valid = n_valid_ref[0]

    @pl.when(i == 0)
    def _init():
        m_ref[...] = jnp.full_like(m_ref, NEG_BIG)
        l_ref[...] = jnp.zeros_like(l_ref)
        macc_ref[...] = jnp.zeros_like(macc_ref)

    # (1) feature extractor: Linear(num_att -> 512) + ReLU, bias folded into wfe
    H = jnp.maximum(
        jnp.dot(x_ref[...], wfe_ref[...], preferred_element_type=jnp.float32),
        0.0)                                               # (tile_n, 512) f32
    H_md = H.astype(matmul_dtype)                          # single bf16 copy, reused

    # (2) fused gate projections: one (512, 2D) matmul, biases folded via H[:,500]==1
    vu = jnp.dot(H_md, wvu_ref[...], preferred_element_type=jnp.float32)
    gated = jnp.tanh(vu[:, :d_att]) * jax.nn.sigmoid(vu[:, d_att:])   # (tile_n, D)

    # (3) attention scores directly in (1, tile_n) lane layout (bw dropped:
    #     softmax is shift-invariant and raw scores are never returned)
    scores = jax.lax.dot_general(
        ww_ref[...], gated.astype(matmul_dtype), (((1,), (1,)), ((), ())),
        preferred_element_type=jnp.float32)                # (1, tile_n)

    # mask rows past the true bag length (last tile may be zero-padded)
    col = jax.lax.broadcasted_iota(jnp.int32, (1, tile_n), 1) + i * tile_n
    scores = jnp.where(col < n_valid, scores, NEG_BIG)

    # stash raw (masked) scores into the resident (1, n_pad) output slab
    start = pl.multiple_of(i * tile_n, tile_n)
    a_ref[:, pl.ds(start, tile_n)] = scores

    # (4) online-softmax update of the weighted instance-feature sum
    m_prev = m_ref[...]                                    # (1, 1)
    m_new = jnp.maximum(m_prev, jnp.max(scores, axis=-1, keepdims=True))
    alpha = jnp.exp(m_prev - m_new)
    e = jnp.exp(scores - m_new)                            # (1, tile_n)
    e = jnp.where(col < n_valid, e, 0.0)                   # robust even if a tile is fully masked
    l_ref[...] = l_ref[...] * alpha + jnp.sum(e, axis=-1, keepdims=True)
    macc_ref[...] = macc_ref[...] * alpha + jnp.dot(
        e.astype(matmul_dtype), H_md, preferred_element_type=jnp.float32)
    m_ref[...] = m_new

    # (5) finalize on the last tile
    @pl.when(i == n_tiles - 1)
    def _finalize():
        inv_l = pl.reciprocal(l_ref[...], approx=False)
        # TODO(synk): for very large bags, store per-tile e + per-tile max and
        # rescale per tile here instead of re-exponentiating the whole slab.
        a_ref[...] = jnp.exp(a_ref[...] - m_ref[...]) * inv_l
        M = macc_ref[...] * inv_l                          # (1, 512); M[:,500] == 1
        # classifier Linear(500 -> 1): VPU mul + lane reduction (bc folded into wc)
        logit = jnp.sum(M * wc_ref[...], axis=-1, keepdims=True)
        y_prob = jax.nn.sigmoid(logit)                     # (1, 1)
        y_hat = (y_prob >= 0.5).astype(jnp.float32)
        lane = jax.lax.broadcasted_iota(jnp.int32, (1, 128), 1)
        scalars_ref[...] = jnp.where(lane == 0, y_prob,
                                     jnp.where(lane == 1, y_hat, 0.0))


# ----------------------------------------------------------------------------
# Wrapper
# ----------------------------------------------------------------------------
def gated_attention_forward(x, params, *, tile_n=1024, matmul_dtype=jnp.bfloat16):
    """x: (1, N, num_att) as in the PyTorch forward (leading dim squeezed)."""
    x2d = jnp.squeeze(x, axis=0).astype(jnp.float32)
    N, num_att = x2d.shape
    D = params["wv"].shape[1]

    tile_n = max(128, _round_up(tile_n, 128))        # lane/sublane aligned
    n_tiles = (N + tile_n - 1) // tile_n
    n_pad = n_tiles * tile_n                          # bucketed bag length

    p = prepare_params(params, matmul_dtype)
    na_aug = p["na_aug"]
    x_aug = _augment_x(x2d, num_att, na_aug, n_pad, matmul_dtype)
    n_valid = jnp.array([N], jnp.int32)               # dynamic: no recompile per N within a bucket

    kernel = functools.partial(
        _gated_attention_kernel,
        d_att=D, tile_n=tile_n, matmul_dtype=matmul_dtype)

    pinned = lambda shape: pl.BlockSpec(shape, lambda i, nv: (0,) * len(shape))

    grid_spec = pltpu.PrefetchScalarGridSpec(
        num_scalar_prefetch=1,
        grid=(n_tiles,),
        in_specs=[
            pl.BlockSpec((tile_n, na_aug), lambda i, nv: (i, 0)),  # x tile (pipelined)
            pinned((na_aug, L_PAD)),                               # wfe (resident)
            pinned((L_PAD, 2 * D)),                                # fused wv|wu (+biases)
            pinned((1, D)),                                        # ww row (bf16)
            pinned((1, L_PAD)),                                    # wc row (+bc)
        ],
        out_specs=(
            pl.BlockSpec((1, 128), lambda i, nv: (0, 0)),          # packed Y_prob/Y_hat
            pl.BlockSpec((1, n_pad), lambda i, nv: (0, 0)),        # A (resident slab)
        ),
        scratch_shapes=[
            pltpu.VMEM((1, 1), jnp.float32),       # running max
            pltpu.VMEM((1, 1), jnp.float32),       # running denominator
            pltpu.VMEM((1, L_PAD), jnp.float32),   # rescaled M accumulator
        ],
    )
    out_shape = (
        jax.ShapeDtypeStruct((1, 128), jnp.float32),
        jax.ShapeDtypeStruct((1, n_pad), jnp.float32),
    )

    # Explicit VMEM budget so large tiles never hit the default scoped limit
    # (v5e default is 16 MiB); generous headroom, capped well under v7x's 64 MiB.
    bmd = jnp.dtype(matmul_dtype).itemsize
    vmem_need = int(
        2 * tile_n * na_aug * bmd                 # x (double-buffered)
        + na_aug * L_PAD * bmd + L_PAD * 2 * D * bmd + D * bmd + L_PAD * 4
        + tile_n * L_PAD * (4 + bmd)              # H f32 + H_md
        + tile_n * 2 * D * 4 * 2                  # vu / gate intermediates
        + 8 * n_pad * 4 + 8 * 128 * 4             # A slab + scalars (sublane-padded)
        + L_PAD * 4 + 64)                         # scratch
    vmem_limit = int(min(max(2 * vmem_need, 32 << 20), 48 << 20))

    scalars, a_full = pl.pallas_call(
        kernel,
        grid_spec=grid_spec,
        out_shape=out_shape,
        compiler_params=pltpu.CompilerParams(
            dimension_semantics=("arbitrary",),   # carried online-softmax state
            vmem_limit_bytes=vmem_limit),
        # TODO(synk): on v7x, shard N across the two TensorCores and merge
        # partial (m, l, macc) in a small epilogue for ~2x on the streaming part.
    )(n_valid, x_aug, p["wfe"], p["w_vu"], p["ww"], p["wc"])

    y_prob = scalars[:, 0:1]
    y_hat = scalars[:, 1:2]
    A = a_full[:, :N]
    return y_prob, y_hat, A


# ----------------------------------------------------------------------------
# References
# ----------------------------------------------------------------------------
def reference_forward(x, p, matmul_dtype=jnp.float32):
    """Pure-JAX mirror of the PyTorch forward (exact math when f32)."""
    x2d = jnp.squeeze(x, axis=0).astype(jnp.float32)
    mm = lambda a, b: jnp.dot(a.astype(matmul_dtype), b.astype(matmul_dtype),
                              preferred_element_type=jnp.float32)
    H = jnp.maximum(mm(x2d, p["wfe"]) + p["bfe"], 0.0)
    A_V = jnp.tanh(mm(H, p["wv"]) + p["bv"])
    A_U = jax.nn.sigmoid(mm(H, p["wu"]) + p["bu"])
    A = (A_V * A_U) @ p["ww"] + p["bw"]
    A = jax.nn.softmax(A.T, axis=1)
    M = A @ H
    y_prob = jax.nn.sigmoid(M @ p["wc"] + p["bc"])
    y_hat = (y_prob >= 0.5).astype(jnp.float32)
    return y_prob, y_hat, A


def matched_reference(x, params, matmul_dtype=jnp.bfloat16):
    """Replicates the kernel's exact cast/fold choices (single pass, no tiling)."""
    p = prepare_params(params, matmul_dtype)
    x2d = jnp.squeeze(x, axis=0).astype(jnp.float32)
    N, num_att = x2d.shape
    D = params["wv"].shape[1]
    x_aug = _augment_x(x2d, num_att, p["na_aug"], N, matmul_dtype)
    H = jnp.maximum(jnp.dot(x_aug, p["wfe"],
                            preferred_element_type=jnp.float32), 0.0)
    H_md = H.astype(matmul_dtype)
    vu = jnp.dot(H_md, p["w_vu"], preferred_element_type=jnp.float32)
    gated = jnp.tanh(vu[:, :D]) * jax.nn.sigmoid(vu[:, D:])
    scores = jax.lax.dot_general(
        p["ww"], gated.astype(matmul_dtype), (((1,), (1,)), ((), ())),
        preferred_element_type=jnp.float32)                      # (1, N)
    m = jnp.max(scores, axis=-1, keepdims=True)
    e = jnp.exp(scores - m)
    l = jnp.sum(e, axis=-1, keepdims=True)
    A = e / l
    macc = jnp.dot(e.astype(matmul_dtype), H_md, preferred_element_type=jnp.float32)
    M = macc / l
    logit = jnp.sum(M * p["wc"], axis=-1, keepdims=True)
    y_prob = jax.nn.sigmoid(logit)
    y_hat = (y_prob >= 0.5).astype(jnp.float32)
    return y_prob, y_hat, A


if __name__ == "__main__":
    num_att = 32   # input feature dim per instance
    D = 64         # attention hidden dim (2D = 128 -> lane-dense fused gate)
    N = 600        # bag size

    key = jax.random.PRNGKey(0)
    kp, kx = jax.random.split(key)
    params = init_params(kp, num_att, D)
    x = jax.random.normal(kx, (1, N, num_att), jnp.float32)

    # --- default config: tile_n=1024 -> single grid tile -------------------
    y_prob, y_hat, a = gated_attention_forward(x, params)
    jax.block_until_ready((y_prob, y_hat, a))
    assert y_prob.shape == (1, 1) and y_hat.shape == (1, 1) and a.shape == (1, N)

    mref_prob, _, mref_a = matched_reference(x, params, jnp.bfloat16)
    fref_prob, _, fref_a = reference_forward(x, params, jnp.float32)

    assert jnp.allclose(y_prob, mref_prob, atol=1e-4, rtol=1e-3)
    assert jnp.allclose(a, mref_a, atol=1e-4, rtol=1e-3)
    assert jnp.allclose(y_prob, fref_prob, atol=2e-2)
    assert jnp.allclose(a, fref_a, atol=1e-3)
    assert jnp.allclose(jnp.sum(a), 1.0, atol=1e-4)
    assert bool(jnp.all(y_hat == (y_prob >= 0.5).astype(jnp.float32)))

    # --- multi-tile config: exercises the online-softmax carry + masking ---
    y_prob2, y_hat2, a2 = gated_attention_forward(x, params, tile_n=256)
    jax.block_until_ready((y_prob2, y_hat2, a2))
    assert jnp.allclose(a2, mref_a, atol=1e-4, rtol=1e-3)
    assert jnp.allclose(y_prob2, mref_prob, atol=5e-3)
    assert jnp.allclose(y_prob2, fref_prob, atol=2e-2)
    assert jnp.allclose(jnp.sum(a2), 1.0, atol=1e-4)
    assert bool(jnp.all(y_hat2 == (y_prob2 >= 0.5).astype(jnp.float32)))

    print("KERNEL_OK")
</pallas_src>

<mosaic_0001>
module attributes {stable_mosaic.version = 11 : i64} {
  func.func @_gated_attention_kernel(%arg0: i32, %arg1: memref<1xi32, #tpu.memory_space<smem>>, %arg2: memref<1024x40xbf16, #tpu.memory_space<vmem>>, %arg3: memref<40x512xbf16, #tpu.memory_space<vmem>>, %arg4: memref<512x128xbf16, #tpu.memory_space<vmem>>, %arg5: memref<1x64xbf16, #tpu.memory_space<vmem>>, %arg6: memref<1x512xf32, #tpu.memory_space<vmem>>, %arg7: memref<1x128xf32, #tpu.memory_space<vmem>>, %arg8: memref<1x1024xf32, #tpu.memory_space<vmem>>, %arg9: memref<1x1xf32, #tpu.memory_space<vmem>>, %arg10: memref<1x1xf32, #tpu.memory_space<vmem>>, %arg11: memref<1x512xf32, #tpu.memory_space<vmem>>) attributes {dimension_semantics = [#tpu.dimension_semantics<arbitrary>], iteration_bounds = array<i64: 1>, scalar_prefetch = 1 : i64, scratch_operands = 3 : i64, tpu.core_type = #tpu.core_type<tc>, window_params = [{transform_indices = @transform_0, window_bounds = array<i64: 1024, 40>}, {pipeline_mode = #tpu.pipeline_mode<synchronous>, transform_indices = @transform_1, window_bounds = array<i64: 40, 512>}, {pipeline_mode = #tpu.pipeline_mode<synchronous>, transform_indices = @transform_2, window_bounds = array<i64: 512, 128>}, {pipeline_mode = #tpu.pipeline_mode<synchronous>, transform_indices = @transform_3, window_bounds = array<i64: 1, 64>}, {pipeline_mode = #tpu.pipeline_mode<synchronous>, transform_indices = @transform_4, window_bounds = array<i64: 1, 512>}, {pipeline_mode = #tpu.pipeline_mode<synchronous>, transform_indices = @transform_5, window_bounds = array<i64: 1, 128>}, {pipeline_mode = #tpu.pipeline_mode<synchronous>, transform_indices = @transform_6, window_bounds = array<i64: 1, 1024>}]} {
    %c0 = arith.constant 0 : index
    %0 = memref.load %arg1[%c0] : memref<1xi32, #tpu.memory_space<smem>>
    %c0_i32 = arith.constant 0 : i32
    %1 = arith.cmpi eq, %arg0, %c0_i32 : i32
    %2 = arith.extui %1 : i1 to i32
    %c0_i32_0 = arith.constant 0 : i32
    %3 = arith.cmpi ne, %2, %c0_i32_0 : i32
    scf.if %3 {
      %cst_34 = arith.constant -1.000000e+30 : f32
      %66 = vector.broadcast %cst_34 : f32 to vector<1x1xf32>
      %c0_35 = arith.constant 0 : index
      %c0_36 = arith.constant 0 : index
      %67 = vector.load %arg9[%c0_35, %c0_36] : memref<1x1xf32, #tpu.memory_space<vmem>>, vector<1x1xf32>
      tpu.vector_store %arg9[%c0_35, %c0_36], %66 {strides = array<i32>} : memref<1x1xf32, #tpu.memory_space<vmem>>, vector<1x1xf32>,
      %cst_37 = arith.constant 0.000000e+00 : f32
      %68 = vector.broadcast %cst_37 : f32 to vector<1x1xf32>
      %c0_38 = arith.constant 0 : index
      %c0_39 = arith.constant 0 : index
      %69 = vector.load %arg10[%c0_38, %c0_39] : memref<1x1xf32, #tpu.memory_space<vmem>>, vector<1x1xf32>
      tpu.vector_store %arg10[%c0_38, %c0_39], %68 {strides = array<i32>} : memref<1x1xf32, #tpu.memory_space<vmem>>, vector<1x1xf32>,
      %cst_40 = arith.constant 0.000000e+00 : f32
      %70 = vector.broadcast %cst_40 : f32 to vector<1x512xf32>
      %c0_41 = arith.constant 0 : index
      %c0_42 = arith.constant 0 : index
      %71 = vector.load %arg11[%c0_41, %c0_42] : memref<1x512xf32, #tpu.memory_space<vmem>>, vector<1x512xf32>
      tpu.vector_store %arg11[%c0_41, %c0_42], %70 {strides = array<i32>} : memref<1x512xf32, #tpu.memory_space<vmem>>, vector<1x512xf32>,
    } else {
    }
    %c0_1 = arith.constant 0 : index
    %c0_2 = arith.constant 0 : index
    %4 = vector.load %arg2[%c0_1, %c0_2] : memref<1024x40xbf16, #tpu.memory_space<vmem>>, vector<1024x40xbf16>
    %c0_3 = arith.constant 0 : index
    %c0_4 = arith.constant 0 : index
    %5 = vector.load %arg3[%c0_3, %c0_4] : memref<40x512xbf16, #tpu.memory_space<vmem>>, vector<40x512xbf16>
    %cst = arith.constant dense<0.000000e+00> : vector<1024x512xf32>
    %6 = tpu.matmul %4, %5, %cst {dimension_numbers = #tpu.dot_dimension_numbers<[1], [0], [0], [1], [0, 0, 1, 1], [], []>} : vector<1024x40xbf16>, vector<40x512xbf16>, vector<1024x512xf32> -> vector<1024x512xf32>
    %cst_5 = arith.constant 0.000000e+00 : f32
    %7 = vector.broadcast %cst_5 : f32 to vector<1024x512xf32>
    %8 = arith.maximumf %6, %7 : vector<1024x512xf32>
    %9 = arith.truncf %8 : vector<1024x512xf32> to vector<1024x512xbf16>
    %c0_6 = arith.constant 0 : index
    %c0_7 = arith.constant 0 : index
    %10 = vector.load %arg4[%c0_6, %c0_7] : memref<512x128xbf16, #tpu.memory_space<vmem>>, vector<512x128xbf16>
    %cst_8 = arith.constant dense<0.000000e+00> : vector<1024x128xf32>
    %11 = tpu.matmul %9, %10, %cst_8 {dimension_numbers = #tpu.dot_dimension_numbers<[1], [0], [0], [1], [0, 0, 1, 1], [], []>} : vector<1024x512xbf16>, vector<512x128xbf16>, vector<1024x128xf32> -> vector<1024x128xf32>
    %12 = vector.extract_strided_slice %11 {offsets = [0, 0], sizes = [1024, 64], strides = [1, 1]} : vector<1024x128xf32> to vector<1024x64xf32>
    %13 = math.tanh %12 : vector<1024x64xf32>
    %14 = vector.extract_strided_slice %11 {offsets = [0, 64], sizes = [1024, 64], strides = [1, 1]} : vector<1024x128xf32> to vector<1024x64xf32>
    %15 = arith.negf %14 : vector<1024x64xf32>
    %16 = math.exp %15 : vector<1024x64xf32>
    %cst_9 = arith.constant 1.000000e+00 : f32
    %17 = vector.broadcast %cst_9 : f32 to vector<1024x64xf32>
    %18 = arith.addf %17, %16 : vector<1024x64xf32>
    %19 = arith.divf %17, %18 : vector<1024x64xf32>
    %20 = arith.mulf %13, %19 : vector<1024x64xf32>
    %c0_10 = arith.constant 0 : index
    %c0_11 = arith.constant 0 : index
    %21 = vector.load %arg5[%c0_10, %c0_11] : memref<1x64xbf16, #tpu.memory_space<vmem>>, vector<1x64xbf16>
    %22 = arith.truncf %20 : vector<1024x64xf32> to vector<1024x64xbf16>
    %cst_12 = arith.constant dense<0.000000e+00> : vector<1x1024xf32>
    %23 = tpu.matmul %21, %22, %cst_12 {dimension_numbers = #tpu.dot_dimension_numbers<[1], [1], [0], [0], [0, 0, 1, 0], [], []>} : vector<1x64xbf16>, vector<1024x64xbf16>, vector<1x1024xf32> -> vector<1x1024xf32>
    %24 = tpu.iota {dimensions = array<i32: 1>} : vector<1x1024xi32>
    %c1024_i32 = arith.constant 1024 : i32
    %25 = arith.muli %arg0, %c1024_i32 : i32
    %26 = vector.broadcast %25 : i32 to vector<1x1024xi32>
    %27 = arith.addi %24, %26 : vector<1x1024xi32>
    %28 = vector.broadcast %0 : i32 to vector<1x1024xi32>
    %29 = arith.cmpi slt, %27, %28 : vector<1x1024xi32>
    %cst_13 = arith.constant -1.000000e+30 : f32
    %30 = vector.broadcast %cst_13 : f32 to vector<1x1024xf32>
    %31 = arith.select %29, %23, %30 : vector<1x1024xi1>, vector<1x1024xf32>
    %c1024_i32_14 = arith.constant 1024 : i32
    %32 = arith.muli %arg0, %c1024_i32_14 : i32
    %33 = tpu.assume_multiple %32, 1024 : i32
    %c0_15 = arith.constant 0 : index
    %34 = arith.index_cast %33 : i32 to index
    %35 = vector.load %arg8[%c0_15, %34] : memref<1x1024xf32, #tpu.memory_space<vmem>>, vector<1x1024xf32>
    tpu.vector_store %arg8[%c0_15, %34], %31 {strides = array<i32>} : memref<1x1024xf32, #tpu.memory_space<vmem>>, vector<1x1024xf32>,
    %c0_16 = arith.constant 0 : index
    %c0_17 = arith.constant 0 : index
    %36 = vector.load %arg9[%c0_16, %c0_17] : memref<1x1xf32, #tpu.memory_space<vmem>>, vector<1x1xf32>
    %cst_18 = arith.constant dense<0xFF800000> : vector<1xf32>
    %37 = vector.multi_reduction <maximumf>, %31, %cst_18 [1] : vector<1x1024xf32> to vector<1xf32>
    %38 = vector.shape_cast %37 : vector<1xf32> to vector<1x1xf32>
    %39 = arith.maximumf %36, %38 : vector<1x1xf32>
    %40 = arith.subf %36, %39 : vector<1x1xf32>
    %41 = math.exp %40 : vector<1x1xf32>
    %42 = vector.broadcast %39 : vector<1x1xf32> to vector<1x1024xf32>
    %43 = arith.subf %31, %42 : vector<1x1024xf32>
    %44 = math.exp %43 : vector<1x1024xf32>
    %45 = vector.broadcast %0 : i32 to vector<1x1024xi32>
    %46 = arith.cmpi slt, %27, %45 : vector<1x1024xi32>
    %cst_19 = arith.constant 0.000000e+00 : f32
    %47 = vector.broadcast %cst_19 : f32 to vector<1x1024xf32>
    %48 = arith.select %46, %44, %47 : vector<1x1024xi1>, vector<1x1024xf32>
    %c0_20 = arith.constant 0 : index
    %c0_21 = arith.constant 0 : index
    %49 = vector.load %arg10[%c0_20, %c0_21] : memref<1x1xf32, #tpu.memory_space<vmem>>, vector<1x1xf32>
    %50 = arith.mulf %49, %41 : vector<1x1xf32>
    %cst_22 = arith.constant dense<0.000000e+00> : vector<1xf32>
    %51 = vector.multi_reduction <add>, %48, %cst_22 [1] : vector<1x1024xf32> to vector<1xf32>
    %52 = vector.shape_cast %51 : vector<1xf32> to vector<1x1xf32>
    %53 = arith.addf %50, %52 : vector<1x1xf32>
    %c0_23 = arith.constant 0 : index
    %c0_24 = arith.constant 0 : index
    %54 = vector.load %arg10[%c0_23, %c0_24] : memref<1x1xf32, #tpu.memory_space<vmem>>, vector<1x1xf32>
    tpu.vector_store %arg10[%c0_23, %c0_24], %53 {strides = array<i32>} : memref<1x1xf32, #tpu.memory_space<vmem>>, vector<1x1xf32>,
    %c0_25 = arith.constant 0 : index
    %c0_26 = arith.constant 0 : index
    %55 = vector.load %arg11[%c0_25, %c0_26] : memref<1x512xf32, #tpu.memory_space<vmem>>, vector<1x512xf32>
    %56 = vector.broadcast %41 : vector<1x1xf32> to vector<1x512xf32>
    %57 = arith.mulf %55, %56 : vector<1x512xf32>
    %58 = arith.truncf %48 : vector<1x1024xf32> to vector<1x1024xbf16>
    %cst_27 = arith.constant dense<0.000000e+00> : vector<1x512xf32>
    %59 = tpu.matmul %58, %9, %cst_27 {dimension_numbers = #tpu.dot_dimension_numbers<[1], [0], [0], [1], [0, 0, 1, 1], [], []>} : vector<1x1024xbf16>, vector<1024x512xbf16>, vector<1x512xf32> -> vector<1x512xf32>
    %60 = arith.addf %57, %59 : vector<1x512xf32>
    %c0_28 = arith.constant 0 : index
    %c0_29 = arith.constant 0 : index
    %61 = vector.load %arg11[%c0_28, %c0_29] : memref<1x512xf32, #tpu.memory_space<vmem>>, vector<1x512xf32>
    tpu.vector_store %arg11[%c0_28, %c0_29], %60 {strides = array<i32>} : memref<1x512xf32, #tpu.memory_space<vmem>>, vector<1x512xf32>,
    %c0_30 = arith.constant 0 : index
    %c0_31 = arith.constant 0 : index
    %62 = vector.load %arg9[%c0_30, %c0_31] : memref<1x1xf32, #tpu.memory_space<vmem>>, vector<1x1xf32>
    tpu.vector_store %arg9[%c0_30, %c0_31], %39 {strides = array<i32>} : memref<1x1xf32, #tpu.memory_space<vmem>>, vector<1x1xf32>,
    %c0_i32_32 = arith.constant 0 : i32
    %63 = arith.cmpi eq, %arg0, %c0_i32_32 : i32
    %64 = arith.extui %63 : i1 to i32
    %c0_i32_33 = arith.constant 0 : i32
    %65 = arith.cmpi ne, %64, %c0_i32_33 : i32
    scf.if %65 {
      %c0_34 = arith.constant 0 : index
      %c0_35 = arith.constant 0 : index
      %66 = vector.load %arg10[%c0_34, %c0_35] : memref<1x1xf32, #tpu.memory_space<vmem>>, vector<1x1xf32>
      %67 = tpu.reciprocal %66 : vector<1x1xf32> -> vector<1x1xf32>
      %c0_36 = arith.constant 0 : index
      %c0_37 = arith.constant 0 : index
      %68 = vector.load %arg8[%c0_36, %c0_37] : memref<1x1024xf32, #tpu.memory_space<vmem>>, vector<1x1024xf32>
      %c0_38 = arith.constant 0 : index
      %c0_39 = arith.constant 0 : index
      %69 = vector.load %arg9[%c0_38, %c0_39] : memref<1x1xf32, #tpu.memory_space<vmem>>, vector<1x1xf32>
      %70 = vector.broadcast %69 : vector<1x1xf32> to vector<1x1024xf32>
      %71 = arith.subf %68, %70 : vector<1x1024xf32>
      %72 = math.exp %71 : vector<1x1024xf32>
      %73 = vector.broadcast %67 : vector<1x1xf32> to vector<1x1024xf32>
      %74 = arith.mulf %72, %73 : vector<1x1024xf32>
      %c0_40 = arith.constant 0 : index
      %c0_41 = arith.constant 0 : index
      %75 = vector.load %arg8[%c0_40, %c0_41] : memref<1x1024xf32, #tpu.memory_space<vmem>>, vector<1x1024xf32>
      tpu.vector_store %arg8[%c0_40, %c0_41], %74 {strides = array<i32>} : memref<1x1024xf32, #tpu.memory_space<vmem>>, vector<1x1024xf32>,
      %c0_42 = arith.constant 0 : index
      %c0_43 = arith.constant 0 : index
      %76 = vector.load %arg11[%c0_42, %c0_43] : memref<1x512xf32, #tpu.memory_space<vmem>>, vector<1x512xf32>
      %77 = vector.broadcast %67 : vector<1x1xf32> to vector<1x512xf32>
      %78 = arith.mulf %76, %77 : vector<1x512xf32>
      %c0_44 = arith.constant 0 : index
      %c0_45 = arith.constant 0 : index
      %79 = vector.load %arg6[%c0_44, %c0_45] : memref<1x512xf32, #tpu.memory_space<vmem>>, vector<1x512xf32>
      %80 = arith.mulf %78, %79 : vector<1x512xf32>
      %cst_46 = arith.constant dense<0.000000e+00> : vector<1xf32>
      %81 = vector.multi_reduction <add>, %80, %cst_46 [1] : vector<1x512xf32> to vector<1xf32>
      %82 = vector.shape_cast %81 : vector<1xf32> to vector<1x1xf32>
      %83 = arith.negf %82 : vector<1x1xf32>
      %84 = math.exp %83 : vector<1x1xf32>
      %cst_47 = arith.constant 1.000000e+00 : f32
      %85 = vector.broadcast %cst_47 : f32 to vector<1x1xf32>
      %86 = arith.addf %85, %84 : vector<1x1xf32>
      %87 = arith.divf %85, %86 : vector<1x1xf32>
      %cst_48 = arith.constant 5.000000e-01 : f32
      %88 = vector.broadcast %cst_48 : f32 to vector<1x1xf32>
      %89 = arith.cmpf oge, %87, %88 : vector<1x1xf32>
      %90 = arith.extui %89 : vector<1x1xi1> to vector<1x1xi32>
      %91 = arith.sitofp %90 : vector<1x1xi32> to vector<1x1xf32>
      %92 = tpu.iota {dimensions = array<i32: 1>} : vector<1x128xi32>
      %c0_i32_49 = arith.constant 0 : i32
      %93 = vector.broadcast %c0_i32_49 : i32 to vector<1x128xi32>
      %94 = arith.cmpi eq, %92, %93 : vector<1x128xi32>
      %c1_i32 = arith.constant 1 : i32
      %95 = vector.broadcast %c1_i32 : i32 to vector<1x128xi32>
      %96 = arith.cmpi eq, %92, %95 : vector<1x128xi32>
      %cst_50 = arith.constant 0.000000e+00 : f32
      %97 = vector.shape_cast %91 : vector<1x1xf32> to vector<1x1xf32>
      %98 = vector.broadcast %97 : vector<1x1xf32> to vector<1x128xf32>
      %99 = vector.broadcast %cst_50 : f32 to vector<1x128xf32>
      %100 = arith.select %96, %98, %99 : vector<1x128xi1>, vector<1x128xf32>
      %101 = vector.shape_cast %87 : vector<1x1xf32> to vector<1x1xf32>
      %102 = vector.broadcast %101 : vector<1x1xf32> to vector<1x128xf32>
      %103 = arith.select %94, %102, %100 : vector<1x128xi1>, vector<1x128xf32>
      %c0_51 = arith.constant 0 : index
      %c0_52 = arith.constant 0 : index
      %104 = vector.load %arg7[%c0_51, %c0_52] : memref<1x128xf32, #tpu.memory_space<vmem>>, vector<1x128xf32>
      tpu.vector_store %arg7[%c0_51, %c0_52], %103 {strides = array<i32>} : memref<1x128xf32, #tpu.memory_space<vmem>>, vector<1x128xf32>,
    } else {
    }
    return
  }
  func.func @transform_0(%arg0: i32, %arg1: memref<1xi32, #tpu.memory_space<smem>>) -> (i32, i32) {
    %c0_i32 = arith.constant 0 : i32
    %c0_i32_0 = arith.constant 0 : i32
    return %arg0, %c0_i32 : i32, i32
  }
  func.func @transform_1(%arg0: i32, %arg1: memref<1xi32, #tpu.memory_space<smem>>) -> (i32, i32) {
    %c0_i32 = arith.constant 0 : i32
    %c0_i32_0 = arith.constant 0 : i32
    %c0_i32_1 = arith.constant 0 : i32
    return %c0_i32, %c0_i32_0 : i32, i32
  }
  func.func @transform_2(%arg0: i32, %arg1: memref<1xi32, #tpu.memory_space<smem>>) -> (i32, i32) {
    %c0_i32 = arith.constant 0 : i32
    %c0_i32_0 = arith.constant 0 : i32
    %c0_i32_1 = arith.constant 0 : i32
    return %c0_i32, %c0_i32_0 : i32, i32
  }
  func.func @transform_3(%arg0: i32, %arg1: memref<1xi32, #tpu.memory_space<smem>>) -> (i32, i32) {
    %c0_i32 = arith.constant 0 : i32
    %c0_i32_0 = arith.constant 0 : i32
    %c0_i32_1 = arith.constant 0 : i32
    return %c0_i32, %c0_i32_0 : i32, i32
  }
  func.func @transform_4(%arg0: i32, %arg1: memref<1xi32, #tpu.memory_space<smem>>) -> (i32, i32) {
    %c0_i32 = arith.constant 0 : i32
    %c0_i32_0 = arith.constant 0 : i32
    %c0_i32_1 = arith.constant 0 : i32
    return %c0_i32, %c0_i32_0 : i32, i32
  }
  func.func @transform_5(%arg0: i32, %arg1: memref<1xi32, #tpu.memory_space<smem>>) -> (i32, i32) {
    %c0_i32 = arith.constant 0 : i32
    %c0_i32_0 = arith.constant 0 : i32
    %c0_i32_1 = arith.constant 0 : i32
    return %c0_i32, %c0_i32_0 : i32, i32
  }
  func.func @transform_6(%arg0: i32, %arg1: memref<1xi32, #tpu.memory_space<smem>>) -> (i32, i32) {
    %c0_i32 = arith.constant 0 : i32
    %c0_i32_0 = arith.constant 0 : i32
    %c0_i32_1 = arith.constant 0 : i32
    return %c0_i32, %c0_i32_0 : i32, i32
  }
}

</mosaic_0001>

<llo_original>
// kernel: tpu_custom_call.1
$region0: #{tpu_custom_call.1}
  #allocation0 [shape = 'u32[]', space=smem, size = 0x4, offset = 0x4, fixed_abs, tag = 'smem constant byte address 0x4 - core index']
  #allocation1 [shape = 'u32[72,128]{1,0:T(1,128)}', space=vmem, size = 0x9000, scoped, tag = 'internal scratch']
  #allocation2 [shape = 'f32[1,1]{1,0:T(1,128)}', space=vmem, size = 0x200, scoped, tag = 'scratch operand']
  #allocation3 [shape = 'f32[1,1]{1,0:T(1,128)}', space=vmem, size = 0x200, scoped, tag = 'scratch operand']
  #allocation4 [shape = 'f32[1,512]{1,0:T(1,128)}', space=vmem, size = 0x800, scoped, tag = 'scratch operand']
  #allocation5 [shape = 's32[1]{0}', space=sflag, size = 0x4, scoped, tag = 'scoped memory for tpu_custom_call.1']
  #allocation6 [shape = 's32[1]{0:T(128)S(6)}', space=smem, size = 0x200, scoped, tag = 'prefetched SMEM operand 0']
  %s0 = inlined_call_operand.<no memory space> [shape: s32[1], index: 0, kind: input, shape index: {}]
  %s1 = inlined_call_operand.vmem [shape: bf16[1024,40], index: 1, kind: input, shape index: {}]
  %s2 = inlined_call_operand.vmem [shape: bf16[40,512], index: 2, kind: input, shape index: {}]
  %s3 = inlined_call_operand.vmem [shape: bf16[512,128], index: 3, kind: input, shape index: {}]
  %s4 = inlined_call_operand.vmem [shape: bf16[1,64], index: 4, kind: input, shape index: {}]
  %s5 = inlined_call_operand.vmem [shape: f32[1,512], index: 5, kind: input, shape index: {}]
  %s6 = inlined_call_operand.hbm [shape: f32[1,128], index: 6, kind: output, shape index: {0}]
  %s7 = inlined_call_operand.hbm [shape: f32[1,1024], index: 7, kind: output, shape index: {1}]
  %8 = xla_tuple %s6, %s7
  %s9 = sld [smem:[#allocation0]]
  $region46: #{tpu_custom_call.1} parent=0
    _
  %s11 = ssub.s32 1, %s9
  %s12 = scalar_select 0, %s11, %s9
  %13 = sst [smem:[#allocation6]] %s0
  $region1: #{tpu_custom_call.1} parent=0
    #allocation7 [shape = 'u8[512]{0}', space=vmem, size = 0x400, scoped, tag = 'output window, operand 0, single buffered']
    #allocation8 [shape = 's32[1]{0}', space=sflag, size = 0x4, scoped, tag = 'scoped memory for tpu_custom_call.1']
    #allocation9 [shape = 'u8[4096]{0}', space=vmem, size = 0x1000, scoped, tag = 'output window, operand 1, single buffered']
    #allocation10 [shape = 's32[1]{0}', space=sflag, size = 0x4, scoped, tag = 'scoped memory for tpu_custom_call.1']
    %14 = vsyncpa [#allocation8], 0
    %15 = vsyncpa [#allocation10], 0
    // Predicated region
    $region2: #{tpu_custom_call.1} parent=1 // pred_check
      _
    $region3: #{tpu_custom_call.1} parent=1 // pred_check_branch
      %17 = sbr.rel (0) target = $region5
    $region4: #{tpu_custom_call.1} parent=1 // pred_region
      _
    $region5: #{tpu_custom_call.1} parent=1 // pred_fallthru
      _
    // Predicated region
    $region6: #{tpu_custom_call.1} parent=1 // pred_check
      _
    $region7: #{tpu_custom_call.1} parent=1 // pred_check_branch
      %19 = sbr.rel (0) target = $region9
    $region8: #{tpu_custom_call.1} parent=1 // pred_region
      _
    $region9: #{tpu_custom_call.1} parent=1 // pred_fallthru
      _
    // Predicated region
    $region10: #{tpu_custom_call.1} parent=1 // pred_check
      _
    $region11: #{tpu_custom_call.1} parent=1 // pred_check_branch
      %21 = sbr.rel (0) target = $region13
    $region12: #{tpu_custom_call.1} parent=1 // pred_region
      _
    $region13: #{tpu_custom_call.1} parent=1 // pred_fallthru
      _
    // Predicated region
    $region14: #{tpu_custom_call.1} parent=1 // pred_check
      _
    $region15: #{tpu_custom_call.1} parent=1 // pred_check_branch
      %23 = sbr.rel (0) target = $region17
    $region16: #{tpu_custom_call.1} parent=1 // pred_region
      _
    $region17: #{tpu_custom_call.1} parent=1 // pred_fallthru
      _
    // Predicated region
    $region18: #{tpu_custom_call.1} parent=1 // pred_check
      _
    $region19: #{tpu_custom_call.1} parent=1 // pred_check_branch
      %25 = sbr.rel (0) target = $region21
    $region20: #{tpu_custom_call.1} parent=1 // pred_region
      _
    $region21: #{tpu_custom_call.1} parent=1 // pred_fallthru
      _
    %s27 = sld [smem:[#allocation6]]
    %p28 = scmp.eq.s32.totalorder 0, 0
    // Predicated region
    $region22: #{tpu_custom_call.1} parent=1 // pred_check
      %p29 = pneg %p28
    $region23: #{tpu_custom_call.1} parent=1 // pred_check_branch
      %31 = sbr.rel (%p29) target = $region25
    $region24: #{tpu_custom_call.1} parent=1 // pred_region
      %vm32 = vcmask 0
      %33 = vst.msk [vmem:[#allocation2] sm:$0x1] %vm32, -1e+30
      %34 = vst.msk [vmem:[#allocation3] sm:$0x1] %vm32, 0.0
      %v35 = vlaneseq
      %vm36 = vcmp.ge.s32.totalorder %v35, 0
      %vm37 = vcmp.lt.s32.totalorder %v35, 512
      %vm38 = vmand %vm36, %vm37
      %39 = vst.msk [vmem:[#allocation4] sm:$0xf] %vm38, 0.0
    $region25: #{tpu_custom_call.1} parent=1 // pred_fallthru
      _
    %v40 = vld [vmem:[%s1] sm:$0xf]
    %v41 = vld [vmem:[%s1 + $0x4] sm:$0xf]
    %v42 = vld [vmem:[%s1 + $0x8] sm:$0xf]
    %v43 = vld [vmem:[%s1 + $0xc] sm:$0xf]
    %v44 = vld [vmem:[%s1 + $0x10] sm:$0xf]
    %v45 = vld [vmem:[%s1 + $0x14] sm:$0xf]
    %v46 = vld [vmem:[%s1 + $0x18] sm:$0xf]
    %v47 = vld [vmem:[%s1 + $0x1c] sm:$0xf]
    %v48 = vld [vmem:[%s1 + $0x20] sm:$0xf]
    %v49 = vld [vmem:[%s1 + $0x24] sm:$0xf]
    %v50 = vld [vmem:[%s1 + $0x28] sm:$0xf]
    %v51 = vld [vmem:[%s1 + $0x2c] sm:$0xf]
    %v52 = vld [vmem:[%s1 + $0x30] sm:$0xf]
    %v53 = vld [vmem:[%s1 + $0x34] sm:$0xf]
    %v54 = vld [vmem:[%s1 + $0x38] sm:$0xf]
    %v55 = vld [vmem:[%s1 + $0x3c] sm:$0xf]
    %v56 = vld [vmem:[%s1 + $0x40] sm:$0xf]
    %v57 = vld [vmem:[%s1 + $0x44] sm:$0xf]
    %v58 = vld [vmem:[%s1 + $0x48] sm:$0xf]
    %v59 = vld [vmem:[%s1 + $0x4c] sm:$0xf]
    %v60 = vld [vmem:[%s1 + $0x50] sm:$0xf]
    %v61 = vld [vmem:[%s1 + $0x54] sm:$0xf]
    %v62 = vld [vmem:[%s1 + $0x58] sm:$0xf]
    %v63 = vld [vmem:[%s1 + $0x5c] sm:$0xf]
    %v64 = vld [vmem:[%s1 + $0x60] sm:$0xf]
    %v65 = vld [vmem:[%s1 + $0x64] sm:$0xf]
    %v66 = vld [vmem:[%s1 + $0x68] sm:$0xf]
    %v67 = vld [vmem:[%s1 + $0x6c] sm:$0xf]
    %v68 = vld [vmem:[%s1 + $0x70] sm:$0xf]
    %v69 = vld [vmem:[%s1 + $0x74] sm:$0xf]
    %v70 = vld [vmem:[%s1 + $0x78] sm:$0xf]
    %v71 = vld [vmem:[%s1 + $0x7c] sm:$0xf]
    %v72 = vld [vmem:[%s1 + $0x80] sm:$0xf]
    %v73 = vld [vmem:[%s1 + $0x84] sm:$0xf]
    %v74 = vld [vmem:[%s1 + $0x88] sm:$0xf]
    %v75 = vld [vmem:[%s1 + $0x8c] sm:$0xf]
    %v76 = vld [vmem:[%s1 + $0x90] sm:$0xf]
    %v77 = vld [vmem:[%s1 + $0x94] sm:$0xf]
    %v78 = vld [vmem:[%s1 + $0x98] sm:$0xf]
    %v79 = vld [vmem:[%s1 + $0x9c] sm:$0xf]
    %v80 = vld [vmem:[%s1 + $0xa0] sm:$0xf]
    %v81 = vld [vmem:[%s1 + $0xa4] sm:$0xf]
    %v82 = vld [vmem:[%s1 + $0xa8] sm:$0xf]
    %v83 = vld [vmem:[%s1 + $0xac] sm:$0xf]
    %v84 = vld [vmem:[%s1 + $0xb0] sm:$0xf]
    %v85 = vld [vmem:[%s1 + $0xb4] sm:$0xf]
    %v86 = vld [vmem:[%s1 + $0xb8] sm:$0xf]
    %v87 = vld [vmem:[%s1 + $0xbc] sm:$0xf]
    %v88 = vld [vmem:[%s1 + $0xc0] sm:$0xf]
    %v89 = vld [vmem:[%s1 + $0xc4] sm:$0xf]
    %v90 = vld [vmem:[%s1 + $0xc8] sm:$0xf]
    %v91 = vld [vmem:[%s1 + $0xcc] sm:$0xf]
    %v92 = vld [vmem:[%s1 + $0xd0] sm:$0xf]
    %v93 = vld [vmem:[%s1 + $0xd4] sm:$0xf]
    %v94 = vld [vmem:[%s1 + $0xd8] sm:$0xf]
    %v95 = vld [vmem:[%s1 + $0xdc] sm:$0xf]
    %v96 = vld [vmem:[%s1 + $0xe0] sm:$0xf]
    %v97 = vld [vmem:[%s1 + $0xe4] sm:$0xf]
    %v98 = vld [vmem:[%s1 + $0xe8] sm:$0xf]
    %v99 = vld [vmem:[%s1 + $0xec] sm:$0xf]
    %v100 = vld [vmem:[%s1 + $0xf0] sm:$0xf]
    %v101 = vld [vmem:[%s1 + $0xf4] sm:$0xf]
    %v102 = vld [vmem:[%s1 + $0xf8] sm:$0xf]
    %v103 = vld [vmem:[%s1 + $0xfc] sm:$0xf]
    %v104 = vld [vmem:[%s1 + $0x100] sm:$0xf]
    %v105 = vld [vmem:[%s1 + $0x104] sm:$0xf]
    %v106 = vld [vmem:[%s1 + $0x108] sm:$0xf]
    %v107 = vld [vmem:[%s1 + $0x10c] sm:$0xf]
    %v108 = vld [vmem:[%s1 + $0x110] sm:$0xf]
    %v109 = vld [vmem:[%s1 + $0x114] sm:$0xf]
    %v110 = vld [vmem:[%s1 + $0x118] sm:$0xf]
    %v111 = vld [vmem:[%s1 + $0x11c] sm:$0xf]
    %v112 = vld [vmem:[%s1 + $0x120] sm:$0xf]
    %v113 = vld [vmem:[%s1 + $0x124] sm:$0xf]
    %v114 = vld [vmem:[%s1 + $0x128] sm:$0xf]
    %v115 = vld [vmem:[%s1 + $0x12c] sm:$0xf]
    %v116 = vld [vmem:[%s1 + $0x130] sm:$0xf]
    %v117 = vld [vmem:[%s1 + $0x134] sm:$0xf]
    %v118 = vld [vmem:[%s1 + $0x138] sm:$0xf]
    %v119 = vld [vmem:[%s1 + $0x13c] sm:$0xf]
    %v120 = vld [vmem:[%s1 + $0x140] sm:$0xf]
    %v121 = vld [vmem:[%s1 + $0x144] sm:$0xf]
    %v122 = vld [vmem:[%s1 + $0x148] sm:$0xf]
    %v123 = vld [vmem:[%s1 + $0x14c] sm:$0xf]
    %v124 = vld [vmem:[%s1 + $0x150] sm:$0xf]
    %v125 = vld [vmem:[%s1 + $0x154] sm:$0xf]
    %v126 = vld [vmem:[%s1 + $0x158] sm:$0xf]
    %v127 = vld [vmem:[%s1 + $0x15c] sm:$0xf]
    %v128 = vld [vmem:[%s1 + $0x160] sm:$0xf]
    %v129 = vld [vmem:[%s1 + $0x164] sm:$0xf]
    %v130 = vld [vmem:[%s1 + $0x168] sm:$0xf]
    %v131 = vld [vmem:[%s1 + $0x16c] sm:$0xf]
    %v132 = vld [vmem:[%s1 + $0x170] sm:$0xf]
    %v133 = vld [vmem:[%s1 + $0x174] sm:$0xf]
    %v134 = vld [vmem:[%s1 + $0x178] sm:$0xf]
    %v135 = vld [vmem:[%s1 + $0x17c] sm:$0xf]
    %v136 = vld [vmem:[%s1 + $0x180] sm:$0xf]
    %v137 = vld [vmem:[%s1 + $0x184] sm:$0xf]
    %v138 = vld [vmem:[%s1 + $0x188] sm:$0xf]
    %v139 = vld [vmem:[%s1 + $0x18c] sm:$0xf]
    %v140 = vld [vmem:[%s1 + $0x190] sm:$0xf]
    %v141 = vld [vmem:[%s1 + $0x194] sm:$0xf]
    %v142 = vld [vmem:[%s1 + $0x198] sm:$0xf]
    %v143 = vld [vmem:[%s1 + $0x19c] sm:$0xf]
    %v144 = vld [vmem:[%s1 + $0x1a0] sm:$0xf]
    %v145 = vld [vmem:[%s1 + $0x1a4] sm:$0xf]
    %v146 = vld [vmem:[%s1 + $0x1a8] sm:$0xf]
    %v147 = vld [vmem:[%s1 + $0x1ac] sm:$0xf]
    %v148 = vld [vmem:[%s1 + $0x1b0] sm:$0xf]
    %v149 = vld [vmem:[%s1 + $0x1b4] sm:$0xf]
    %v150 = vld [vmem:[%s1 + $0x1b8] sm:$0xf]
    %v151 = vld [vmem:[%s1 + $0x1bc] sm:$0xf]
    %v152 = vld [vmem:[%s1 + $0x1c0] sm:$0xf]
    %v153 = vld [vmem:[%s1 + $0x1c4] sm:$0xf]
    %v154 = vld [vmem:[%s1 + $0x1c8] sm:$0xf]
    %v155 = vld [vmem:[%s1 + $0x1cc] sm:$0xf]
    %v156 = vld [vmem:[%s1 + $0x1d0] sm:$0xf]
    %v157 = vld [vmem:[%s1 + $0x1d4] sm:$0xf]
    %v158 = vld [vmem:[%s1 + $0x1d8] sm:$0xf]
    %v159 = vld [vmem:[%s1 + $0x1dc] sm:$0xf]
    %v160 = vld [vmem:[%s1 + $0x1e0] sm:$0xf]
    %v161 = vld [vmem:[%s1 + $0x1e4] sm:$0xf]
    %v162 = vld [vmem:[%s1 + $0x1e8] sm:$0xf]
    %v163 = vld [vmem:[%s1 + $0x1ec] sm:$0xf]
    %v164 = vld [vmem:[%s1 + $0x1f0] sm:$0xf]
    %v165 = vld [vmem:[%s1 + $0x1f4] sm:$0xf]
    %v166 = vld [vmem:[%s1 + $0x1f8] sm:$0xf]
    %v167 = vld [vmem:[%s1 + $0x1fc] sm:$0xf]
    %v168 = vld [vmem:[%s2] sm:$0xff]
    %v169 = vld [vmem:[%s2 + $0x8] sm:$0xff]
    %v170 = vld [vmem:[%s2 + $0x10] sm:$0xff]
    %v171 = vld [vmem:[%s2 + $0x18] sm:$0xff]
    %v172 = vld [vmem:[%s2 + $0x20] sm:$0xff]
    %v173 = vld [vmem:[%s2 + $0x28] sm:$0xff]
    %v174 = vld [vmem:[%s2 + $0x30] sm:$0xff]
    %v175 = vld [vmem:[%s2 + $0x38] sm:$0xff]
    %v176 = vld [vmem:[%s2 + $0x40] sm:$0xff]
    %v177 = vld [vmem:[%s2 + $0x48] sm:$0xff]
    %v306 = vunpack.c.l.b16 %v40
    %v307 = vunpack.c.l.b16 %v41
    %v308 = vunpack.c.l.b16 %v42
    %v309 = vunpack.c.l.b16 %v43
    %v310 = vunpack.c.l.b16 %v44
    %v311 = vunpack.c.l.b16 %v45
    %v312 = vunpack.c.l.b16 %v46
    %v313 = vunpack.c.l.b16 %v47
    %v314 = vunpack.c.l.b16 %v48
    %v315 = vunpack.c.l.b16 %v49
    %v316 = vunpack.c.l.b16 %v50
    %v317 = vunpack.c.l.b16 %v51
    %v318 = vunpack.c.l.b16 %v52
    %v319 = vunpack.c.l.b16 %v53
    %v320 = vunpack.c.l.b16 %v54
    %v321 = vunpack.c.l.b16 %v55
    %v322 = vunpack.c.l.b16 %v56
    %v323 = vunpack.c.l.b16 %v57
    %v324 = vunpack.c.l.b16 %v58
    %v325 = vunpack.c.l.b16 %v59
    %v326 = vunpack.c.l.b16 %v60
    %v327 = vunpack.c.l.b16 %v61
    %v328 = vunpack.c.l.b16 %v62
    %v329 = vunpack.c.l.b16 %v63
    %v330 = vunpack.c.l.b16 %v64
    %v331 = vunpack.c.l.b16 %v65
    %v332 = vunpack.c.l.b16 %v66
    %v333 = vunpack.c.l.b16 %v67
    %v334 = vunpack.c.l.b16 %v68
    %v335 = vunpack.c.l.b16 %v69
    %v336 = vunpack.c.l.b16 %v70
    %v337 = vunpack.c.l.b16 %v71
    %v338 = vunpack.c.l.b16 %v72
    %v339 = vunpack.c.l.b16 %v73
    %v340 = vunpack.c.l.b16 %v74
    %v341 = vunpack.c.l.b16 %v75
    %v342 = vunpack.c.l.b16 %v76
    %v343 = vunpack.c.l.b16 %v77
    %v344 = vunpack.c.l.b16 %v78
    %v345 = vunpack.c.l.b16 %v79
    %v346 = vunpack.c.l.b16 %v80
    %v347 = vunpack.c.l.b16 %v81
    %v348 = vunpack.c.l.b16 %v82
    %v349 = vunpack.c.l.b16 %v83
    %v350 = vunpack.c.l.b16 %v84
    %v351 = vunpack.c.l.b16 %v85
    %v352 = vunpack.c.l.b16 %v86
    %v353 = vunpack.c.l.b16 %v87
    %v354 = vunpack.c.l.b16 %v88
    %v355 = vunpack.c.l.b16 %v89
    %v356 = vunpack.c.l.b16 %v90
    %v357 = vunpack.c.l.b16 %v91
    %v358 = vunpack.c.l.b16 %v92
    %v359 = vunpack.c.l.b16 %v93
    %v360 = vunpack.c.l.b16 %v94
    %v361 = vunpack.c.l.b16 %v95
    %v362 = vunpack.c.l.b16 %v96
    %v363 = vunpack.c.l.b16 %v97
    %v364 = vunpack.c.l.b16 %v98
    %v365 = vunpack.c.l.b16 %v99
    %v366 = vunpack.c.l.b16 %v100
    %v367 = vunpack.c.l.b16 %v101
    %v368 = vunpack.c.l.b16 %v102
    %v369 = vunpack.c.l.b16 %v103
    %v370 = vunpack.c.l.b16 %v104
    %v371 = vunpack.c.l.b16 %v105
    %v372 = vunpack.c.l.b16 %v106
    %v373 = vunpack.c.l.b16 %v107
    %v374 = vunpack.c.l.b16 %v108
    %v375 = vunpack.c.l.b16 %v109
    %v376 = vunpack.c.l.b16 %v110
    %v377 = vunpack.c.l.b16 %v111
    %v378 = vunpack.c.l.b16 %v112
    %v379 = vunpack.c.l.b16 %v113
    %v380 = vunpack.c.l.b16 %v114
    %v381 = vunpack.c.l.b16 %v115
    %v382 = vunpack.c.l.b16 %v116
    %v383 = vunpack.c.l.b16 %v117
    %v384 = vunpack.c.l.b16 %v118
    %v385 = vunpack.c.l.b16 %v119
    %v386 = vunpack.c.l.b16 %v120
    %v387 = vunpack.c.l.b16 %v121
    %v388 = vunpack.c.l.b16 %v122
    %v389 = vunpack.c.l.b16 %v123
    %v390 = vunpack.c.l.b16 %v124
    %v391 = vunpack.c.l.b16 %v125
    %v392 = vunpack.c.l.b16 %v126
    %v393 = vunpack.c.l.b16 %v127
    %v394 = vunpack.c.l.b16 %v128
    %v395 = vunpack.c.l.b16 %v129
    %v396 = vunpack.c.l.b16 %v130
    %v397 = vunpack.c.l.b16 %v131
    %v398 = vunpack.c.l.b16 %v132
    %v399 = vunpack.c.l.b16 %v133
    %v400 = vunpack.c.l.b16 %v134
    %v401 = vunpack.c.l.b16 %v135
    %v402 = vunpack.c.l.b16 %v136
    %v403 = vunpack.c.l.b16 %v137
    %v404 = vunpack.c.l.b16 %v138
    %v405 = vunpack.c.l.b16 %v139
    %v406 = vunpack.c.l.b16 %v140
    %v407 = vunpack.c.l.b16 %v141
    %v408 = vunpack.c.l.b16 %v142
    %v409 = vunpack.c.l.b16 %v143
    %v410 = vunpack.c.l.b16 %v144
    %v411 = vunpack.c.l.b16 %v145
    %v412 = vunpack.c.l.b16 %v146
    %v413 = vunpack.c.l.b16 %v147
    %v414 = vunpack.c.l.b16 %v148
    %v415 = vunpack.c.l.b16 %v149
    %v416 = vunpack.c.l.b16 %v150
    %v417 = vunpack.c.l.b16 %v151
    %v418 = vunpack.c.l.b16 %v152
    %v419 = vunpack.c.l.b16 %v153
    %v420 = vunpack.c.l.b16 %v154
    %v421 = vunpack.c.l.b16 %v155
    %v422 = vunpack.c.l.b16 %v156
    %v423 = vunpack.c.l.b16 %v157
    %v424 = vunpack.c.l.b16 %v158
    %v425 = vunpack.c.l.b16 %v159
    %v426 = vunpack.c.l.b16 %v160
    %v427 = vunpack.c.l.b16 %v161
    %v428 = vunpack.c.l.b16 %v162
    %v429 = vunpack.c.l.b16 %v163
    %v430 = vunpack.c.l.b16 %v164
    %v431 = vunpack.c.l.b16 %v165
    %v432 = vunpack.c.l.b16 %v166
    %v433 = vunpack.c.l.b16 %v167
    %v434 = vpack.c.b16 %v307, %v306
    %v435 = vpack.c.b16 %v309, %v308
    %v436 = vpack.c.b16 %v311, %v310
    %v437 = vpack.c.b16 %v313, %v312
    %v438 = vpack.c.b16 %v315, %v314
    %v439 = vpack.c.b16 %v317, %v316
    %v440 = vpack.c.b16 %v319, %v318
    %v441 = vpack.c.b16 %v321, %v320
    %v442 = vpack.c.b16 %v323, %v322
    %v443 = vpack.c.b16 %v325, %v324
    %v444 = vpack.c.b16 %v327, %v326
    %v445 = vpack.c.b16 %v329, %v328
    %v446 = vpack.c.b16 %v331, %v330
    %v447 = vpack.c.b16 %v333, %v332
    %v448 = vpack.c.b16 %v335, %v334
    %v449 = vpack.c.b16 %v337, %v336
    %v450 = vpack.c.b16 %v339, %v338
    %v451 = vpack.c.b16 %v341, %v340
    %v452 = vpack.c.b16 %v343, %v342
    %v453 = vpack.c.b16 %v345, %v344
    %v454 = vpack.c.b16 %v347, %v346
    %v455 = vpack.c.b16 %v349, %v348
    %v456 = vpack.c.b16 %v351, %v350
    %v457 = vpack.c.b16 %v353, %v352
    %v458 = vpack.c.b16 %v355, %v354
    %v459 = vpack.c.b16 %v357, %v356
    %v460 = vpack.c.b16 %v359, %v358
    %v461 = vpack.c.b16 %v361, %v360
    %v462 = vpack.c.b16 %v363, %v362
    %v463 = vpack.c.b16 %v365, %v364
    %v464 = vpack.c.b16 %v367, %v366
    %v465 = vpack.c.b16 %v369, %v368
    %v466 = vpack.c.b16 %v371, %v370
    %v467 = vpack.c.b16 %v373, %v372
    %v468 = vpack.c.b16 %v375, %v374
    %v469 = vpack.c.b16 %v377, %v376
    %v470 = vpack.c.b16 %v379, %v378
    %v471 = vpack.c.b16 %v381, %v380
    %v472 = vpack.c.b16 %v383, %v382
    %v473 = vpack.c.b16 %v385, %v384
    %v474 = vpack.c.b16 %v387, %v386
    %v475 = vpack.c.b16 %v389, %v388
    %v476 = vpack.c.b16 %v391, %v390
    %v477 = vpack.c.b16 %v393, %v392
    %v478 = vpack.c.b16 %v395, %v394
    %v479 = vpack.c.b16 %v397, %v396
    %v480 = vpack.c.b16 %v399, %v398
    %v481 = vpack.c.b16 %v401, %v400
    %v482 = vpack.c.b16 %v403, %v402
    %v483 = vpack.c.b16 %v405, %v404
    %v484 = vpack.c.b16 %v407, %v406
    %v485 = vpack.c.b16 %v409, %v408
    %v486 = vpack.c.b16 %v411, %v410
    %v487 = vpack.c.b16 %v413, %v412
    %v488 = vpack.c.b16 %v415, %v414
    %v489 = vpack.c.b16 %v417, %v416
    %v490 = vpack.c.b16 %v419, %v418
    %v491 = vpack.c.b16 %v421, %v420
    %v492 = vpack.c.b16 %v423, %v422
    %v493 = vpack.c.b16 %v425, %v424
    %v494 = vpack.c.b16 %v427, %v426
    %v495 = vpack.c.b16 %v429, %v428
    %v496 = vpack.c.b16 %v431, %v430
    %v497 = vpack.c.b16 %v433, %v432
    %v508 = vunpack.c.l.b16 %v168
    %v509 = vunpack.c.h.b16 %v168
    %v510 = vunpack.c.l.b16 %v169
    %v511 = vunpack.c.h.b16 %v169
    %v512 = vunpack.c.l.b16 %v170
    %v513 = vunpack.c.h.b16 %v170
    %v514 = vunpack.c.l.b16 %v171
    %v515 = vunpack.c.h.b16 %v171
    %v516 = vunpack.c.l.b16 %v172
    %v517 = vunpack.c.h.b16 %v172
    %v518 = vunpack.c.l.b16 %v173
    %v519 = vunpack.c.h.b16 %v173
    %v520 = vunpack.c.l.b16 %v174
    %v521 = vunpack.c.h.b16 %v174
    %v522 = vunpack.c.l.b16 %v175
    %v523 = vunpack.c.h.b16 %v175
    %v524 = vunpack.c.l.b16 %v176
    %v525 = vunpack.c.h.b16 %v176
    %v526 = vunpack.c.l.b16 %v177
    %v527 = vunpack.c.h.b16 %v177
    %v528 = vpack.c.b16 %v512, %v508
    %v529 = vpack.c.b16 %v513, %v509
    %v530 = vpack.c.b16 %v514, %v510
    %v531 = vpack.c.b16 %v515, %v511
    %v532 = vpack.c.b16 %v520, %v516
    %v533 = vpack.c.b16 %v521, %v517
    %v534 = vpack.c.b16 %v522, %v518
    %v535 = vpack.c.b16 %v523, %v519
    %v536 = vpack.c.b16 %v524, %v524
    %v537 = vpack.c.b16 %v525, %v525
    %v538 = vpack.c.b16 %v526, %v526
    %v539 = vpack.c.b16 %v527, %v527
    %vm548 = vcmask 326656
    %v550 = vsel %vm548, %v434, 0
    %v553 = vsel %vm548, %v435, 0
    %v556 = vsel %vm548, %v436, 0
    %v559 = vsel %vm548, %v437, 0
    %v562 = vsel %vm548, %v438, 0
    %v565 = vsel %vm548, %v439, 0
    %v568 = vsel %vm548, %v440, 0
    %v571 = vsel %vm548, %v441, 0
    %v574 = vsel %vm548, %v442, 0
    %v577 = vsel %vm548, %v443, 0
    %v580 = vsel %vm548, %v444, 0
    %v583 = vsel %vm548, %v445, 0
    %v586 = vsel %vm548, %v446, 0
    %v589 = vsel %vm548, %v447, 0
    %v592 = vsel %vm548, %v448, 0
    %v595 = vsel %vm548, %v449, 0
    %v598 = vsel %vm548, %v450, 0
    %v601 = vsel %vm548, %v451, 0
    %v604 = vsel %vm548, %v452, 0
    %v607 = vsel %vm548, %v453, 0
    %v610 = vsel %vm548, %v454, 0
    %v613 = vsel %vm548, %v455, 0
    %v616 = vsel %vm548, %v456, 0
    %v619 = vsel %vm548, %v457, 0
    %v622 = vsel %vm548, %v458, 0
    %v625 = vsel %vm548, %v459, 0
    %v628 = vsel %vm548, %v460, 0
    %v631 = vsel %vm548, %v461, 0
    %v634 = vsel %vm548, %v462, 0
    %v637 = vsel %vm548, %v463, 0
    %v640 = vsel %vm548, %v464, 0
    %v643 = vsel %vm548, %v465, 0
    %v646 = vsel %vm548, %v466, 0
    %v649 = vsel %vm548, %v467, 0
    %v652 = vsel %vm548, %v468, 0
    %v655 = vsel %vm548, %v469, 0
    %v658 = vsel %vm548, %v470, 0
    %v661 = vsel %vm548, %v471, 0
    %v664 = vsel %vm548, %v472, 0
    %v667 = vsel %vm548, %v473, 0
    %v670 = vsel %vm548, %v474, 0
    %v673 = vsel %vm548, %v475, 0
    %v676 = vsel %vm548, %v476, 0
    %v679 = vsel %vm548, %v477, 0
    %v682 = vsel %vm548, %v478, 0
    %v685 = vsel %vm548, %v479, 0
    %v688 = vsel %vm548, %v480, 0
    %v691 = vsel %vm548, %v481, 0
    %v694 = vsel %vm548, %v482, 0
    %v697 = vsel %vm548, %v483, 0
    %v700 = vsel %vm548, %v484, 0
    %v703 = vsel %vm548, %v485, 0
    %v706 = vsel %vm548, %v486, 0
    %v709 = vsel %vm548, %v487, 0
    %v712 = vsel %vm548, %v488, 0
    %v715 = vsel %vm548, %v489, 0
    %v718 = vsel %vm548, %v490, 0
    %v721 = vsel %vm548, %v491, 0
    %v724 = vsel %vm548, %v492, 0
    %v727 = vsel %vm548, %v493, 0
    %v730 = vsel %vm548, %v494, 0
    %v733 = vsel %vm548, %v495, 0
    %v736 = vsel %vm548, %v496, 0
    %v739 = vsel %vm548, %v497, 0
    %vm741 = vcmask 1043456
    %v743 = vsel %vm741, %v536, 0
    %v746 = vsel %vm741, %v537, 0
    %v749 = vsel %vm741, %v538, 0
    %v752 = vsel %vm741, %v539, 0
    %754 = vmatpush.bf16.msra.mxu0 0
    %755 = vmatpush.bf16.msra.mxu0 0
    %756 = vmatpush.bf16.msra.mxu0 0
    %757 = vmatpush.bf16.msra.mxu0 0
    %758 = vmatpush.bf16.msra.mxu0 0
    %759 = vmatpush.bf16.msra.mxu0 %v743
    %760 = vmatpush.bf16.msra.mxu0 %v532
    %761 = vmatpush.bf16.msra.mxu0 %v528
    %762 = vmatmul.bf16.gmra.mxu0 %v550
    %v763 = vpop.f32.mrf.mxu0
    %v764 = vadd.f32 0.0, %v763
    %v765 = vpop.f32.mrf.mxu0
    %v766 = vadd.f32 0.0, %v765
    %767 = vmatmul.bf16.gmra.mxu0 %v553
    %v768 = vpop.f32.mrf.mxu0
    %v769 = vadd.f32 0.0, %v768
    %v770 = vpop.f32.mrf.mxu0
    %v771 = vadd.f32 0.0, %v770
    %772 = vmatmul.bf16.gmra.mxu0 %v556
    %v773 = vpop.f32.mrf.mxu0
    %v774 = vadd.f32 0.0, %v773
    %v775 = vpop.f32.mrf.mxu0
    %v776 = vadd.f32 0.0, %v775
    %777 = vmatmul.bf16.gmra.mxu0 %v559
    %v778 = vpop.f32.mrf.mxu0
    %v779 = vadd.f32 0.0, %v778
    %v780 = vpop.f32.mrf.mxu0
    %v781 = vadd.f32 0.0, %v780
    %782 = vmatmul.bf16.gmra.mxu0 %v562
    %v783 = vpop.f32.mrf.mxu0
    %v784 = vadd.f32 0.0, %v783
    %v785 = vpop.f32.mrf.mxu0
    %v786 = vadd.f32 0.0, %v785
    %787 = vmatmul.bf16.gmra.mxu0 %v565
    %v788 = vpop.f32.mrf.mxu0
    %v789 = vadd.f32 0.0, %v788
    %v790 = vpop.f32.mrf.mxu0
    %v791 = vadd.f32 0.0, %v790
    %792 = vmatmul.bf16.gmra.mxu0 %v568
    %v793 = vpop.f32.mrf.mxu0
    %v794 = vadd.f32 0.0, %v793
    %v795 = vpop.f32.mrf.mxu0
    %v796 = vadd.f32 0.0, %v795
    %797 = vmatmul.bf16.gmra.mxu0 %v571
    %v798 = vpop.f32.mrf.mxu0
    %v799 = vadd.f32 0.0, %v798
    %v800 = vpop.f32.mrf.mxu0
    %v801 = vadd.f32 0.0, %v800
    %802 = vmatmul.bf16.gmra.mxu0 %v574
    %v803 = vpop.f32.mrf.mxu0
    %v804 = vadd.f32 0.0, %v803
    %v805 = vpop.f32.mrf.mxu0
    %v806 = vadd.f32 0.0, %v805
    %807 = vmatmul.bf16.gmra.mxu0 %v577
    %v808 = vpop.f32.mrf.mxu0
    %v809 = vadd.f32 0.0, %v808
    %v810 = vpop.f32.mrf.mxu0
    %v811 = vadd.f32 0.0, %v810
    %812 = vmatmul.bf16.gmra.mxu0 %v580
    %v813 = vpop.f32.mrf.mxu0
    %v814 = vadd.f32 0.0, %v813
    %v815 = vpop.f32.mrf.mxu0
    %v816 = vadd.f32 0.0, %v815
    %817 = vmatmul.bf16.gmra.mxu0 %v583
    %v818 = vpop.f32.mrf.mxu0
    %v819 = vadd.f32 0.0, %v818
    %v820 = vpop.f32.mrf.mxu0
    %v821 = vadd.f32 0.0, %v820
    %822 = vmatmul.bf16.gmra.mxu0 %v586
    %v823 = vpop.f32.mrf.mxu0
    %v824 = vadd.f32 0.0, %v823
    %v825 = vpop.f32.mrf.mxu0
    %v826 = vadd.f32 0.0, %v825
    %827 = vmatmul.bf16.gmra.mxu0 %v589
    %v828 = vpop.f32.mrf.mxu0
    %v829 = vadd.f32 0.0, %v828
    %v830 = vpop.f32.mrf.mxu0
    %v831 = vadd.f32 0.0, %v830
    %832 = vmatmul.bf16.gmra.mxu0 %v592
    %v833 = vpop.f32.mrf.mxu0
    %v834 = vadd.f32 0.0, %v833
    %v835 = vpop.f32.mrf.mxu0
    %v836 = vadd.f32 0.0, %v835
    %837 = vmatmul.bf16.gmra.mxu0 %v595
    %v838 = vpop.f32.mrf.mxu0
    %v839 = vadd.f32 0.0, %v838
    %v840 = vpop.f32.mrf.mxu0
    %v841 = vadd.f32 0.0, %v840
    %842 = vmatmul.bf16.gmra.mxu0 %v598
    %v843 = vpop.f32.mrf.mxu0
    %v844 = vadd.f32 0.0, %v843
    %v845 = vpop.f32.mrf.mxu0
    %v846 = vadd.f32 0.0, %v845
    %847 = vmatmul.bf16.gmra.mxu0 %v601
    %v848 = vpop.f32.mrf.mxu0
    %v849 = vadd.f32 0.0, %v848
    %v850 = vpop.f32.mrf.mxu0
    %v851 = vadd.f32 0.0, %v850
    %852 = vmatmul.bf16.gmra.mxu0 %v604
    %v853 = vpop.f32.mrf.mxu0
    %v854 = vadd.f32 0.0, %v853
    %v855 = vpop.f32.mrf.mxu0
    %v856 = vadd.f32 0.0, %v855
    %857 = vmatmul.bf16.gmra.mxu0 %v607
    %v858 = vpop.f32.mrf.mxu0
    %v859 = vadd.f32 0.0, %v858
    %v860 = vpop.f32.mrf.mxu0
    %v861 = vadd.f32 0.0, %v860
    %862 = vmatmul.bf16.gmra.mxu0 %v610
    %v863 = vpop.f32.mrf.mxu0
    %v864 = vadd.f32 0.0, %v863
    %v865 = vpop.f32.mrf.mxu0
    %v866 = vadd.f32 0.0, %v865
    %867 = vmatmul.bf16.gmra.mxu0 %v613
    %v868 = vpop.f32.mrf.mxu0
    %v869 = vadd.f32 0.0, %v868
    %v870 = vpop.f32.mrf.mxu0
    %v871 = vadd.f32 0.0, %v870
    %872 = vmatmul.bf16.gmra.mxu0 %v616
    %v873 = vpop.f32.mrf.mxu0
    %v874 = vadd.f32 0.0, %v873
    %v875 = vpop.f32.mrf.mxu0
    %v876 = vadd.f32 0.0, %v875
    %877 = vmatmul.bf16.gmra.mxu0 %v619
    %v878 = vpop.f32.mrf.mxu0
    %v879 = vadd.f32 0.0, %v878
    %v880 = vpop.f32.mrf.mxu0
    %v881 = vadd.f32 0.0, %v880
    %882 = vmatmul.bf16.gmra.mxu0 %v622
    %v883 = vpop.f32.mrf.mxu0
    %v884 = vadd.f32 0.0, %v883
    %v885 = vpop.f32.mrf.mxu0
    %v886 = vadd.f32 0.0, %v885
    %887 = vmatmul.bf16.gmra.mxu0 %v625
    %v888 = vpop.f32.mrf.mxu0
    %v889 = vadd.f32 0.0, %v888
    %v890 = vpop.f32.mrf.mxu0
    %v891 = vadd.f32 0.0, %v890
    %892 = vmatmul.bf16.gmra.mxu0 %v628
    %v893 = vpop.f32.mrf.mxu0
    %v894 = vadd.f32 0.0, %v893
    %v895 = vpop.f32.mrf.mxu0
    %v896 = vadd.f32 0.0, %v895
    %897 = vmatmul.bf16.gmra.mxu0 %v631
    %v898 = vpop.f32.mrf.mxu0
    %v899 = vadd.f32 0.0, %v898
    %v900 = vpop.f32.mrf.mxu0
    %v901 = vadd.f32 0.0, %v900
    %902 = vmatmul.bf16.gmra.mxu0 %v634
    %v903 = vpop.f32.mrf.mxu0
    %v904 = vadd.f32 0.0, %v903
    %v905 = vpop.f32.mrf.mxu0
    %v906 = vadd.f32 0.0, %v905
    %907 = vmatmul.bf16.gmra.mxu0 %v637
    %v908 = vpop.f32.mrf.mxu0
    %v909 = vadd.f32 0.0, %v908
    %v910 = vpop.f32.mrf.mxu0
    %v911 = vadd.f32 0.0, %v910
    %912 = vmatmul.bf16.gmra.mxu0 %v640
    %v913 = vpop.f32.mrf.mxu0
    %v914 = vadd.f32 0.0, %v913
    %v915 = vpop.f32.mrf.mxu0
    %v916 = vadd.f32 0.0, %v915
    %917 = vmatmul.bf16.gmra.mxu0 %v643
    %v918 = vpop.f32.mrf.mxu0
    %v919 = vadd.f32 0.0, %v918
    %v920 = vpop.f32.mrf.mxu0
    %v921 = vadd.f32 0.0, %v920
    %922 = vmatmul.bf16.gmra.mxu0 %v646
    %v923 = vpop.f32.mrf.mxu0
    %v924 = vadd.f32 0.0, %v923
    %v925 = vpop.f32.mrf.mxu0
    %v926 = vadd.f32 0.0, %v925
    %927 = vmatmul.bf16.gmra.mxu0 %v649
    %v928 = vpop.f32.mrf.mxu0
    %v929 = vadd.f32 0.0, %v928
    %v930 = vpop.f32.mrf.mxu0
    %v931 = vadd.f32 0.0, %v930
    %932 = vmatmul.bf16.gmra.mxu0 %v652
    %v933 = vpop.f32.mrf.mxu0
    %v934 = vadd.f32 0.0, %v933
    %v935 = vpop.f32.mrf.mxu0
    %v936 = vadd.f32 0.0, %v935
    %937 = vmatmul.bf16.gmra.mxu0 %v655
    %v938 = vpop.f32.mrf.mxu0
    %v939 = vadd.f32 0.0, %v938
    %v940 = vpop.f32.mrf.mxu0
    %v941 = vadd.f32 0.0, %v940
    %942 = vmatmul.bf16.gmra.mxu0 %v658
    %v943 = vpop.f32.mrf.mxu0
    %v944 = vadd.f32 0.0, %v943
    %v945 = vpop.f32.mrf.mxu0
    %v946 = vadd.f32 0.0, %v945
    %947 = vmatmul.bf16.gmra.mxu0 %v661
    %v948 = vpop.f32.mrf.mxu0
    %v949 = vadd.f32 0.0, %v948
    %v950 = vpop.f32.mrf.mxu0
    %v951 = vadd.f32 0.0, %v950
    %952 = vmatmul.bf16.gmra.mxu0 %v664
    %v953 = vpop.f32.mrf.mxu0
    %v954 = vadd.f32 0.0, %v953
    %v955 = vpop.f32.mrf.mxu0
    %v956 = vadd.f32 0.0, %v955
    %957 = vmatmul.bf16.gmra.mxu0 %v667
    %v958 = vpop.f32.mrf.mxu0
    %v959 = vadd.f32 0.0, %v958
    %v960 = vpop.f32.mrf.mxu0
    %v961 = vadd.f32 0.0, %v960
    %962 = vmatmul.bf16.gmra.mxu0 %v670
    %v963 = vpop.f32.mrf.mxu0
    %v964 = vadd.f32 0.0, %v963
    %v965 = vpop.f32.mrf.mxu0
    %v966 = vadd.f32 0.0, %v965
    %967 = vmatmul.bf16.gmra.mxu0 %v673
    %v968 = vpop.f32.mrf.mxu0
    %v969 = vadd.f32 0.0, %v968
    %v970 = vpop.f32.mrf.mxu0
    %v971 = vadd.f32 0.0, %v970
    %972 = vmatmul.bf16.gmra.mxu0 %v676
    %v973 = vpop.f32.mrf.mxu0
    %v974 = vadd.f32 0.0, %v973
    %v975 = vpop.f32.mrf.mxu0
    %v976 = vadd.f32 0.0, %v975
    %977 = vmatmul.bf16.gmra.mxu0 %v679
    %v978 = vpop.f32.mrf.mxu0
    %v979 = vadd.f32 0.0, %v978
    %v980 = vpop.f32.mrf.mxu0
    %v981 = vadd.f32 0.0, %v980
    %982 = vmatmul.bf16.gmra.mxu0 %v682
    %v983 = vpop.f32.mrf.mxu0
    %v984 = vadd.f32 0.0, %v983
    %v985 = vpop.f32.mrf.mxu0
    %v986 = vadd.f32 0.0, %v985
    %987 = vmatmul.bf16.gmra.mxu0 %v685
    %v988 = vpop.f32.mrf.mxu0
    %v989 = vadd.f32 0.0, %v988
    %v990 = vpop.f32.mrf.mxu0
    %v991 = vadd.f32 0.0, %v990
    %992 = vmatmul.bf16.gmra.mxu0 %v688
    %v993 = vpop.f32.mrf.mxu0
    %v994 = vadd.f32 0.0, %v993
    %v995 = vpop.f32.mrf.mxu0
    %v996 = vadd.f32 0.0, %v995
    %997 = vmatmul.bf16.gmra.mxu0 %v691
    %v998 = vpop.f32.mrf.mxu0
    %v999 = vadd.f32 0.0, %v998
    %v1000 = vpop.f32.mrf.mxu0
    %v1001 = vadd.f32 0.0, %v1000
    %1002 = vmatmul.bf16.gmra.mxu0 %v694
    %v1003 = vpop.f32.mrf.mxu0
    %v1004 = vadd.f32 0.0, %v1003
    %v1005 = vpop.f32.mrf.mxu0
    %v1006 = vadd.f32 0.0, %v1005
    %1007 = vmatmul.bf16.gmra.mxu0 %v697
    %v1008 = vpop.f32.mrf.mxu0
    %v1009 = vadd.f32 0.0, %v1008
    %v1010 = vpop.f32.mrf.mxu0
    %v1011 = vadd.f32 0.0, %v1010
    %1012 = vmatmul.bf16.gmra.mxu0 %v700
    %v1013 = vpop.f32.mrf.mxu0
    %v1014 = vadd.f32 0.0, %v1013
    %v1015 = vpop.f32.mrf.mxu0
    %v1016 = vadd.f32 0.0, %v1015
    %1017 = vmatmul.bf16.gmra.mxu0 %v703
    %v1018 = vpop.f32.mrf.mxu0
    %v1019 = vadd.f32 0.0, %v1018
    %v1020 = vpop.f32.mrf.mxu0
    %v1021 = vadd.f32 0.0, %v1020
    %1022 = vmatmul.bf16.gmra.mxu0 %v706
    %v1023 = vpop.f32.mrf.mxu0
    %v1024 = vadd.f32 0.0, %v1023
    %v1025 = vpop.f32.mrf.mxu0
    %v1026 = vadd.f32 0.0, %v1025
    %1027 = vmatmul.bf16.gmra.mxu0 %v709
    %v1028 = vpop.f32.mrf.mxu0
    %v1029 = vadd.f32 0.0, %v1028
    %v1030 = vpop.f32.mrf.mxu0
    %v1031 = vadd.f32 0.0, %v1030
    %1032 = vmatmul.bf16.gmra.mxu0 %v712
    %v1033 = vpop.f32.mrf.mxu0
    %v1034 = vadd.f32 0.0, %v1033
    %v1035 = vpop.f32.mrf.mxu0
    %v1036 = vadd.f32 0.0, %v1035
    %1037 = vmatmul.bf16.gmra.mxu0 %v715
    %v1038 = vpop.f32.mrf.mxu0
    %v1039 = vadd.f32 0.0, %v1038
    %v1040 = vpop.f32.mrf.mxu0
    %v1041 = vadd.f32 0.0, %v1040
    %1042 = vmatmul.bf16.gmra.mxu0 %v718
    %v1043 = vpop.f32.mrf.mxu0
    %v1044 = vadd.f32 0.0, %v1043
    %v1045 = vpop.f32.mrf.mxu0
    %v1046 = vadd.f32 0.0, %v1045
    %1047 = vmatmul.bf16.gmra.mxu0 %v721
    %v1048 = vpop.f32.mrf.mxu0
    %v1049 = vadd.f32 0.0, %v1048
    %v1050 = vpop.f32.mrf.mxu0
    %v1051 = vadd.f32 0.0, %v1050
    %1052 = vmatmul.bf16.gmra.mxu0 %v724
    %v1053 = vpop.f32.mrf.mxu0
    %v1054 = vadd.f32 0.0, %v1053
    %v1055 = vpop.f32.mrf.mxu0
    %v1056 = vadd.f32 0.0, %v1055
    %1057 = vmatmul.bf16.gmra.mxu0 %v727
    %v1058 = vpop.f32.mrf.mxu0
    %v1059 = vadd.f32 0.0, %v1058
    %v1060 = vpop.f32.mrf.mxu0
    %v1061 = vadd.f32 0.0, %v1060
    %1062 = vmatmul.bf16.gmra.mxu0 %v730
    %v1063 = vpop.f32.mrf.mxu0
    %v1064 = vadd.f32 0.0, %v1063
    %v1065 = vpop.f32.mrf.mxu0
    %v1066 = vadd.f32 0.0, %v1065
    %1067 = vmatmul.bf16.gmra.mxu0 %v733
    %v1068 = vpop.f32.mrf.mxu0
    %v1069 = vadd.f32 0.0, %v1068
    %v1070 = vpop.f32.mrf.mxu0
    %v1071 = vadd.f32 0.0, %v1070
    %1072 = vmatmul.bf16.gmra.mxu0 %v736
    %v1073 = vpop.f32.mrf.mxu0
    %v1074 = vadd.f32 0.0, %v1073
    %v1075 = vpop.f32.mrf.mxu0
    %v1076 = vadd.f32 0.0, %v1075
    %1077 = vmatmul.bf16.gmra.mxu0 %v739
    %v1078 = vpop.f32.mrf.mxu0
    %v1079 = vadd.f32 0.0, %v1078
    %v1080 = vpop.f32.mrf.mxu0
    %v1081 = vadd.f32 0.0, %v1080
    %1082 = vdwg.mxu0
    %1083 = vmatpush.bf16.msra.mxu0 0
    %1084 = vmatpush.bf16.msra.mxu0 0
    %1085 = vmatpush.bf16.msra.mxu0 0
    %1086 = vmatpush.bf16.msra.mxu0 0
    %1087 = vmatpush.bf16.msra.mxu0 0
    %1088 = vmatpush.bf16.msra.mxu0 %v746
    %1089 = vmatpush.bf16.msra.mxu0 %v533
    %1090 = vmatpush.bf16.msra.mxu0 %v529
    %1091 = vmatmul.bf16.gmra.mxu0 %v550
    %v1092 = vpop.f32.mrf.mxu0
    %v1093 = vadd.f32 0.0, %v1092
    %v1094 = vpop.f32.mrf.mxu0
    %v1095 = vadd.f32 0.0, %v1094
    %1096 = vmatmul.bf16.gmra.mxu0 %v553
    %v1097 = vpop.f32.mrf.mxu0
    %v1098 = vadd.f32 0.0, %v1097
    %v1099 = vpop.f32.mrf.mxu0
    %v1100 = vadd.f32 0.0, %v1099
    %1101 = vmatmul.bf16.gmra.mxu0 %v556
    %v1102 = vpop.f32.mrf.mxu0
    %v1103 = vadd.f32 0.0, %v1102
    %v1104 = vpop.f32.mrf.mxu0
    %v1105 = vadd.f32 0.0, %v1104
    %1106 = vmatmul.bf16.gmra.mxu0 %v559
    %v1107 = vpop.f32.mrf.mxu0
    %v1108 = vadd.f32 0.0, %v1107
    %v1109 = vpop.f32.mrf.mxu0
    %v1110 = vadd.f32 0.0, %v1109
    %1111 = vmatmul.bf16.gmra.mxu0 %v562
    %v1112 = vpop.f32.mrf.mxu0
    %v1113 = vadd.f32 0.0, %v1112
    %v1114 = vpop.f32.mrf.mxu0
    %v1115 = vadd.f32 0.0, %v1114
    %1116 = vmatmul.bf16.gmra.mxu0 %v565
    %v1117 = vpop.f32.mrf.mxu0
    %v1118 = vadd.f32 0.0, %v1117
    %v1119 = vpop.f32.mrf.mxu0
    %v1120 = vadd.f32 0.0, %v1119
    %1121 = vmatmul.bf16.gmra.mxu0 %v568
    %v1122 = vpop.f32.mrf.mxu0
    %v1123 = vadd.f32 0.0, %v1122
    %v1124 = vpop.f32.mrf.mxu0
    %v1125 = vadd.f32 0.0, %v1124
    %1126 = vmatmul.bf16.gmra.mxu0 %v571
    %v1127 = vpop.f32.mrf.mxu0
    %v1128 = vadd.f32 0.0, %v1127
    %v1129 = vpop.f32.mrf.mxu0
    %v1130 = vadd.f32 0.0, %v1129
    %1131 = vmatmul.bf16.gmra.mxu0 %v574
    %v1132 = vpop.f32.mrf.mxu0
    %v1133 = vadd.f32 0.0, %v1132
    %v1134 = vpop.f32.mrf.mxu0
    %v1135 = vadd.f32 0.0, %v1134
    %1136 = vmatmul.bf16.gmra.mxu0 %v577
    %v1137 = vpop.f32.mrf.mxu0
    %v1138 = vadd.f32 0.0, %v1137
    %v1139 = vpop.f32.mrf.mxu0
    %v1140 = vadd.f32 0.0, %v1139
    %1141 = vmatmul.bf16.gmra.mxu0 %v580
    %v1142 = vpop.f32.mrf.mxu0
    %v1143 = vadd.f32 0.0, %v1142
    %v1144 = vpop.f32.mrf.mxu0
    %v1145 = vadd.f32 0.0, %v1144
    %1146 = vmatmul.bf16.gmra.mxu0 %v583
    %v1147 = vpop.f32.mrf.mxu0
    %v1148 = vadd.f32 0.0, %v1147
    %v1149 = vpop.f32.mrf.mxu0
    %v1150 = vadd.f32 0.0, %v1149
    %1151 = vmatmul.bf16.gmra.mxu0 %v586
    %v1152 = vpop.f32.mrf.mxu0
    %v1153 = vadd.f32 0.0, %v1152
    %v1154 = vpop.f32.mrf.mxu0
    %v1155 = vadd.f32 0.0, %v1154
    %1156 = vmatmul.bf16.gmra.mxu0 %v589
    %v1157 = vpop.f32.mrf.mxu0
    %v1158 = vadd.f32 0.0, %v1157
    %v1159 = vpop.f32.mrf.mxu0
    %v1160 = vadd.f32 0.0, %v1159
    %1161 = vmatmul.bf16.gmra.mxu0 %v592
    %v1162 = vpop.f32.mrf.mxu0
    %v1163 = vadd.f32 0.0, %v1162
    %v1164 = vpop.f32.mrf.mxu0
    %v1165 = vadd.f32 0.0, %v1164
    %1166 = vmatmul.bf16.gmra.mxu0 %v595
    %v1167 = vpop.f32.mrf.mxu0
    %v1168 = vadd.f32 0.0, %v1167
    %v1169 = vpop.f32.mrf.mxu0
    %v1170 = vadd.f32 0.0, %v1169
    %1171 = vmatmul.bf16.gmra.mxu0 %v598
    %v1172 = vpop.f32.mrf.mxu0
    %v1173 = vadd.f32 0.0, %v1172
    %v1174 = vpop.f32.mrf.mxu0
    %v1175 = vadd.f32 0.0, %v1174
    %1176 = vmatmul.bf16.gmra.mxu0 %v601
    %v1177 = vpop.f32.mrf.mxu0
    %v1178 = vadd.f32 0.0, %v1177
    %v1179 = vpop.f32.mrf.mxu0
    %v1180 = vadd.f32 0.0, %v1179
    %1181 = vmatmul.bf16.gmra.mxu0 %v604
    %v1182 = vpop.f32.mrf.mxu0
    %v1183 = vadd.f32 0.0, %v1182
    %v1184 = vpop.f32.mrf.mxu0
    %v1185 = vadd.f32 0.0, %v1184
    %1186 = vmatmul.bf16.gmra.mxu0 %v607
    %v1187 = vpop.f32.mrf.mxu0
    %v1188 = vadd.f32 0.0, %v1187
    %v1189 = vpop.f32.mrf.mxu0
    %v1190 = vadd.f32 0.0, %v1189
    %1191 = vmatmul.bf16.gmra.mxu0 %v610
    %v1192 = vpop.f32.mrf.mxu0
    %v1193 = vadd.f32 0.0, %v1192
    %v1194 = vpop.f32.mrf.mxu0
    %v1195 = vadd.f32 0.0, %v1194
    %1196 = vmatmul.bf16.gmra.mxu0 %v613
    %v1197 = vpop.f32.mrf.mxu0
    %v1198 = vadd.f32 0.0, %v1197
    %v1199 = vpop.f32.mrf.mxu0
    %v1200 = vadd.f32 0.0, %v1199
    %1201 = vmatmul.bf16.gmra.mxu0 %v616
    %v1202 = vpop.f32.mrf.mxu0
    %v1203 = vadd.f32 0.0, %v1202
    %v1204 = vpop.f32.mrf.mxu0
    %v1205 = vadd.f32 0.0, %v1204
    %1206 = vmatmul.bf16.gmra.mxu0 %v619
    %v1207 = vpop.f32.mrf.mxu0
    %v1208 = vadd.f32 0.0, %v1207
    %v1209 = vpop.f32.mrf.mxu0
    %v1210 = vadd.f32 0.0, %v1209
    %1211 = vmatmul.bf16.gmra.mxu0 %v622
    %v1212 = vpop.f32.mrf.mxu0
    %v1213 = vadd.f32 0.0, %v1212
    %v1214 = vpop.f32.mrf.mxu0
    %v1215 = vadd.f32 0.0, %v1214
    %1216 = vmatmul.bf16.gmra.mxu0 %v625
    %v1217 = vpop.f32.mrf.mxu0
    %v1218 = vadd.f32 0.0, %v1217
    %v1219 = vpop.f32.mrf.mxu0
    %v1220 = vadd.f32 0.0, %v1219
    %1221 = vmatmul.bf16.gmra.mxu0 %v628
    %v1222 = vpop.f32.mrf.mxu0
    %v1223 = vadd.f32 0.0, %v1222
    %v1224 = vpop.f32.mrf.mxu0
    %v1225 = vadd.f32 0.0, %v1224
    %1226 = vmatmul.bf16.gmra.mxu0 %v631
    %v1227 = vpop.f32.mrf.mxu0
    %v1228 = vadd.f32 0.0, %v1227
    %v1229 = vpop.f32.mrf.mxu0
    %v1230 = vadd.f32 0.0, %v1229
    %1231 = vmatmul.bf16.gmra.mxu0 %v634
    %v1232 = vpop.f32.mrf.mxu0
    %v1233 = vadd.f32 0.0, %v1232
    %v1234 = vpop.f32.mrf.mxu0
    %v1235 = vadd.f32 0.0, %v1234
    %1236 = vmatmul.bf16.gmra.mxu0 %v637
    %v1237 = vpop.f32.mrf.mxu0
    %v1238 = vadd.f32 0.0, %v1237
    %v1239 = vpop.f32.mrf.mxu0
    %v1240 = vadd.f32 0.0, %v1239
    %1241 = vmatmul.bf16.gmra.mxu0 %v640
    %v1242 = vpop.f32.mrf.mxu0
    %v1243 = vadd.f32 0.0, %v1242
    %v1244 = vpop.f32.mrf.mxu0
    %v1245 = vadd.f32 0.0, %v1244
    %1246 = vmatmul.bf16.gmra.mxu0 %v643
    %v1247 = vpop.f32.mrf.mxu0
    %v1248 = vadd.f32 0.0, %v1247
    %v1249 = vpop.f32.mrf.mxu0
    %v1250 = vadd.f32 0.0, %v1249
    %1251 = vmatmul.bf16.gmra.mxu0 %v646
    %v1252 = vpop.f32.mrf.mxu0
    %v1253 = vadd.f32 0.0, %v1252
    %v1254 = vpop.f32.mrf.mxu0
    %v1255 = vadd.f32 0.0, %v1254
    %1256 = vmatmul.bf16.gmra.mxu0 %v649
    %v1257 = vpop.f32.mrf.mxu0
    %v1258 = vadd.f32 0.0, %v1257
    %v1259 = vpop.f32.mrf.mxu0
    %v1260 = vadd.f32 0.0, %v1259
    %1261 = vmatmul.bf16.gmra.mxu0 %v652
    %v1262 = vpop.f32.mrf.mxu0
    %v1263 = vadd.f32 0.0, %v1262
    %v1264 = vpop.f32.mrf.mxu0
    %v1265 = vadd.f32 0.0, %v1264
    %1266 = vmatmul.bf16.gmra.mxu0 %v655
    %v1267 = vpop.f32.mrf.mxu0
    %v1268 = vadd.f32 0.0, %v1267
    %v1269 = vpop.f32.mrf.mxu0
    %v1270 = vadd.f32 0.0, %v1269
    %1271 = vmatmul.bf16.gmra.mxu0 %v658
    %v1272 = vpop.f32.mrf.mxu0
    %v1273 = vadd.f32 0.0, %v1272
    %v1274 = vpop.f32.mrf.mxu0
    %v1275 = vadd.f32 0.0, %v1274
    %1276 = vmatmul.bf16.gmra.mxu0 %v661
    %v1277 = vpop.f32.mrf.mxu0
    %v1278 = vadd.f32 0.0, %v1277
    %v1279 = vpop.f32.mrf.mxu0
    %v1280 = vadd.f32 0.0, %v1279
    %1281 = vmatmul.bf16.gmra.mxu0 %v664
    %v1282 = vpop.f32.mrf.mxu0
    %v1283 = vadd.f32 0.0, %v1282
    %v1284 = vpop.f32.mrf.mxu0
    %v1285 = vadd.f32 0.0, %v1284
    %1286 = vmatmul.bf16.gmra.mxu0 %v667
    %v1287 = vpop.f32.mrf.mxu0
    %v1288 = vadd.f32 0.0, %v1287
    %v1289 = vpop.f32.mrf.mxu0
    %v1290 = vadd.f32 0.0, %v1289
    %1291 = vmatmul.bf16.gmra.mxu0 %v670
    %v1292 = vpop.f32.mrf.mxu0
    %v1293 = vadd.f32 0.0, %v1292
    %v1294 = vpop.f32.mrf.mxu0
    %v1295 = vadd.f32 0.0, %v1294
    %1296 = vmatmul.bf16.gmra.mxu0 %v673
    %v1297 = vpop.f32.mrf.mxu0
    %v1298 = vadd.f32 0.0, %v1297
    %v1299 = vpop.f32.mrf.mxu0
    %v1300 = vadd.f32 0.0, %v1299
    %1301 = vmatmul.bf16.gmra.mxu0 %v676
    %v1302 = vpop.f32.mrf.mxu0
    %v1303 = vadd.f32 0.0, %v1302
    %v1304 = vpop.f32.mrf.mxu0
    %v1305 = vadd.f32 0.0, %v1304
    %1306 = vmatmul.bf16.gmra.mxu0 %v679
    %v1307 = vpop.f32.mrf.mxu0
    %v1308 = vadd.f32 0.0, %v1307
    %v1309 = vpop.f32.mrf.mxu0
    %v1310 = vadd.f32 0.0, %v1309
    %1311 = vmatmul.bf16.gmra.mxu0 %v682
    %v1312 = vpop.f32.mrf.mxu0
    %v1313 = vadd.f32 0.0, %v1312
    %v1314 = vpop.f32.mrf.mxu0
    %v1315 = vadd.f32 0.0, %v1314
    %1316 = vmatmul.bf16.gmra.mxu0 %v685
    %v1317 = vpop.f32.mrf.mxu0
    %v1318 = vadd.f32 0.0, %v1317
    %v1319 = vpop.f32.mrf.mxu0
    %v1320 = vadd.f32 0.0, %v1319
    %1321 = vmatmul.bf16.gmra.mxu0 %v688
    %v1322 = vpop.f32.mrf.mxu0
    %v1323 = vadd.f32 0.0, %v1322
    %v1324 = vpop.f32.mrf.mxu0
    %v1325 = vadd.f32 0.0, %v1324
    %1326 = vmatmul.bf16.gmra.mxu0 %v691
    %v1327 = vpop.f32.mrf.mxu0
    %v1328 = vadd.f32 0.0, %v1327
    %v1329 = vpop.f32.mrf.mxu0
    %v1330 = vadd.f32 0.0, %v1329
    %1331 = vmatmul.bf16.gmra.mxu0 %v694
    %v1332 = vpop.f32.mrf.mxu0
    %v1333 = vadd.f32 0.0, %v1332
    %v1334 = vpop.f32.mrf.mxu0
    %v1335 = vadd.f32 0.0, %v1334
    %1336 = vmatmul.bf16.gmra.mxu0 %v697
    %v1337 = vpop.f32.mrf.mxu0
    %v1338 = vadd.f32 0.0, %v1337
    %v1339 = vpop.f32.mrf.mxu0
    %v1340 = vadd.f32 0.0, %v1339
    %1341 = vmatmul.bf16.gmra.mxu0 %v700
    %v1342 = vpop.f32.mrf.mxu0
    %v1343 = vadd.f32 0.0, %v1342
    %v1344 = vpop.f32.mrf.mxu0
    %v1345 = vadd.f32 0.0, %v1344
    %1346 = vmatmul.bf16.gmra.mxu0 %v703
    %v1347 = vpop.f32.mrf.mxu0
    %v1348 = vadd.f32 0.0, %v1347
    %v1349 = vpop.f32.mrf.mxu0
    %v1350 = vadd.f32 0.0, %v1349
    %1351 = vmatmul.bf16.gmra.mxu0 %v706
    %v1352 = vpop.f32.mrf.mxu0
    %v1353 = vadd.f32 0.0, %v1352
    %v1354 = vpop.f32.mrf.mxu0
    %v1355 = vadd.f32 0.0, %v1354
    %1356 = vmatmul.bf16.gmra.mxu0 %v709
    %v1357 = vpop.f32.mrf.mxu0
    %v1358 = vadd.f32 0.0, %v1357
    %v1359 = vpop.f32.mrf.mxu0
    %v1360 = vadd.f32 0.0, %v1359
    %1361 = vmatmul.bf16.gmra.mxu0 %v712
    %v1362 = vpop.f32.mrf.mxu0
    %v1363 = vadd.f32 0.0, %v1362
    %v1364 = vpop.f32.mrf.mxu0
    %v1365 = vadd.f32 0.0, %v1364
    %1366 = vmatmul.bf16.gmra.mxu0 %v715
    %v1367 = vpop.f32.mrf.mxu0
    %v1368 = vadd.f32 0.0, %v1367
    %v1369 = vpop.f32.mrf.mxu0
    %v1370 = vadd.f32 0.0, %v1369
    %1371 = vmatmul.bf16.gmra.mxu0 %v718
    %v1372 = vpop.f32.mrf.mxu0
    %v1373 = vadd.f32 0.0, %v1372
    %v1374 = vpop.f32.mrf.mxu0
    %v1375 = vadd.f32 0.0, %v1374
    %1376 = vmatmul.bf16.gmra.mxu0 %v721
    %v1377 = vpop.f32.mrf.mxu0
    %v1378 = vadd.f32 0.0, %v1377
    %v1379 = vpop.f32.mrf.mxu0
    %v1380 = vadd.f32 0.0, %v1379
    %1381 = vmatmul.bf16.gmra.mxu0 %v724
    %v1382 = vpop.f32.mrf.mxu0
    %v1383 = vadd.f32 0.0, %v1382
    %v1384 = vpop.f32.mrf.mxu0
    %v1385 = vadd.f32 0.0, %v1384
    %1386 = vmatmul.bf16.gmra.mxu0 %v727
    %v1387 = vpop.f32.mrf.mxu0
    %v1388 = vadd.f32 0.0, %v1387
    %v1389 = vpop.f32.mrf.mxu0
    %v1390 = vadd.f32 0.0, %v1389
    %1391 = vmatmul.bf16.gmra.mxu0 %v730
    %v1392 = vpop.f32.mrf.mxu0
    %v1393 = vadd.f32 0.0, %v1392
    %v1394 = vpop.f32.mrf.mxu0
    %v1395 = vadd.f32 0.0, %v1394
    %1396 = vmatmul.bf16.gmra.mxu0 %v733
    %v1397 = vpop.f32.mrf.mxu0
    %v1398 = vadd.f32 0.0, %v1397
    %v1399 = vpop.f32.mrf.mxu0
    %v1400 = vadd.f32 0.0, %v1399
    %1401 = vmatmul.bf16.gmra.mxu0 %v736
    %v1402 = vpop.f32.mrf.mxu0
    %v1403 = vadd.f32 0.0, %v1402
    %v1404 = vpop.f32.mrf.mxu0
    %v1405 = vadd.f32 0.0, %v1404
    %1406 = vmatmul.bf16.gmra.mxu0 %v739
    %v1407 = vpop.f32.mrf.mxu0
    %v1408 = vadd.f32 0.0, %v1407
    %v1409 = vpop.f32.mrf.mxu0
    %v1410 = vadd.f32 0.0, %v1409
    %1411 = vdwg.mxu0
    %1412 = vmatpush.bf16.msra.mxu0 0
    %1413 = vmatpush.bf16.msra.mxu0 0
    %1414 = vmatpush.bf16.msra.mxu0 0
    %1415 = vmatpush.bf16.msra.mxu0 0
    %1416 = vmatpush.bf16.msra.mxu0 0
    %1417 = vmatpush.bf16.msra.mxu0 %v749
    %1418 = vmatpush.bf16.msra.mxu0 %v534
    %1419 = vmatpush.bf16.msra.mxu0 %v530
    %1420 = vmatmul.bf16.gmra.mxu0 %v550
    %v1421 = vpop.f32.mrf.mxu0
    %v1422 = vadd.f32 0.0, %v1421
    %v1423 = vpop.f32.mrf.mxu0
    %v1424 = vadd.f32 0.0, %v1423
    %1425 = vmatmul.bf16.gmra.mxu0 %v553
    %v1426 = vpop.f32.mrf.mxu0
    %v1427 = vadd.f32 0.0, %v1426
    %v1428 = vpop.f32.mrf.mxu0
    %v1429 = vadd.f32 0.0, %v1428
    %1430 = vmatmul.bf16.gmra.mxu0 %v556
    %v1431 = vpop.f32.mrf.mxu0
    %v1432 = vadd.f32 0.0, %v1431
    %v1433 = vpop.f32.mrf.mxu0
    %v1434 = vadd.f32 0.0, %v1433
    %1435 = vmatmul.bf16.gmra.mxu0 %v559
    %v1436 = vpop.f32.mrf.mxu0
    %v1437 = vadd.f32 0.0, %v1436
    %v1438 = vpop.f32.mrf.mxu0
    %v1439 = vadd.f32 0.0, %v1438
    %1440 = vmatmul.bf16.gmra.mxu0 %v562
    %v1441 = vpop.f32.mrf.mxu0
    %v1442 = vadd.f32 0.0, %v1441
    %v1443 = vpop.f32.mrf.mxu0
    %v1444 = vadd.f32 0.0, %v1443
    %1445 = vmatmul.bf16.gmra.mxu0 %v565
    %v1446 = vpop.f32.mrf.mxu0
    %v1447 = vadd.f32 0.0, %v1446
    %v1448 = vpop.f32.mrf.mxu0
    %v1449 = vadd.f32 0.0, %v1448
    %1450 = vmatmul.bf16.gmra.mxu0 %v568
    %v1451 = vpop.f32.mrf.mxu0
    %v1452 = vadd.f32 0.0, %v1451
    %v1453 = vpop.f32.mrf.mxu0
    %v1454 = vadd.f32 0.0, %v1453
    %1455 = vmatmul.bf16.gmra.mxu0 %v571
    %v1456 = vpop.f32.mrf.mxu0
    %v1457 = vadd.f32 0.0, %v1456
    %v1458 = vpop.f32.mrf.mxu0
    %v1459 = vadd.f32 0.0, %v1458
    %1460 = vmatmul.bf16.gmra.mxu0 %v574
    %v1461 = vpop.f32.mrf.mxu0
    %v1462 = vadd.f32 0.0, %v1461
    %v1463 = vpop.f32.mrf.mxu0
    %v1464 = vadd.f32 0.0, %v1463
    %1465 = vmatmul.bf16.gmra.mxu0 %v577
    %v1466 = vpop.f32.mrf.mxu0
    %v1467 = vadd.f32 0.0, %v1466
    %v1468 = vpop.f32.mrf.mxu0
    %v1469 = vadd.f32 0.0, %v1468
    %1470 = vmatmul.bf16.gmra.mxu0 %v580
    %v1471 = vpop.f32.mrf.mxu0
    %v1472 = vadd.f32 0.0, %v1471
    %v1473 = vpop.f32.mrf.mxu0
    %v1474 = vadd.f32 0.0, %v1473
    %1475 = vmatmul.bf16.gmra.mxu0 %v583
    %v1476 = vpop.f32.mrf.mxu0
    %v1477 = vadd.f32 0.0, %v1476
    %v1478 = vpop.f32.mrf.mxu0
    %v1479 = vadd.f32 0.0, %v1478
    %1480 = vmatmul.bf16.gmra.mxu0 %v586
    %v1481 = vpop.f32.mrf.mxu0
    %v1482 = vadd.f32 0.0, %v1481
    %v1483 = vpop.f32.mrf.mxu0
    %v1484 = vadd.f32 0.0, %v1483
    %1485 = vmatmul.bf16.gmra.mxu0 %v589
    %v1486 = vpop.f32.mrf.mxu0
    %v1487 = vadd.f32 0.0, %v1486
    %v1488 = vpop.f32.mrf.mxu0
    %v1489 = vadd.f32 0.0, %v1488
    %1490 = vmatmul.bf16.gmra.mxu0 %v592
    %v1491 = vpop.f32.mrf.mxu0
    %v1492 = vadd.f32 0.0, %v1491
    %v1493 = vpop.f32.mrf.mxu0
    %v1494 = vadd.f32 0.0, %v1493
    %1495 = vmatmul.bf16.gmra.mxu0 %v595
    %v1496 = vpop.f32.mrf.mxu0
    %v1497 = vadd.f32 0.0, %v1496
    %v1498 = vpop.f32.mrf.mxu0
    %v1499 = vadd.f32 0.0, %v1498
    %1500 = vmatmul.bf16.gmra.mxu0 %v598
    %v1501 = vpop.f32.mrf.mxu0
    %v1502 = vadd.f32 0.0, %v1501
    %v1503 = vpop.f32.mrf.mxu0
    %v1504 = vadd.f32 0.0, %v1503
    %1505 = vmatmul.bf16.gmra.mxu0 %v601
    %v1506 = vpop.f32.mrf.mxu0
    %v1507 = vadd.f32 0.0, %v1506
    %v1508 = vpop.f32.mrf.mxu0
    %v1509 = vadd.f32 0.0, %v1508
    %1510 = vmatmul.bf16.gmra.mxu0 %v604
    %v1511 = vpop.f32.mrf.mxu0
    %v1512 = vadd.f32 0.0, %v1511
    %v1513 = vpop.f32.mrf.mxu0
    %v1514 = vadd.f32 0.0, %v1513
    %1515 = vmatmul.bf16.gmra.mxu0 %v607
    %v1516 = vpop.f32.mrf.mxu0
    %v1517 = vadd.f32 0.0, %v1516
    %v1518 = vpop.f32.mrf.mxu0
    %v1519 = vadd.f32 0.0, %v1518
    %1520 = vmatmul.bf16.gmra.mxu0 %v610
    %v1521 = vpop.f32.mrf.mxu0
    %v1522 = vadd.f32 0.0, %v1521
    %v1523 = vpop.f32.mrf.mxu0
    %v1524 = vadd.f32 0.0, %v1523
    %1525 = vmatmul.bf16.gmra.mxu0 %v613
    %v1526 = vpop.f32.mrf.mxu0
    %v1527 = vadd.f32 0.0, %v1526
    %v1528 = vpop.f32.mrf.mxu0
    %v1529 = vadd.f32 0.0, %v1528
    %1530 = vmatmul.bf16.gmra.mxu0 %v616
    %v1531 = vpop.f32.mrf.mxu0
    %v1532 = vadd.f32 0.0, %v1531
    %v1533 = vpop.f32.mrf.mxu0
    %v1534 = vadd.f32 0.0, %v1533
    %1535 = vmatmul.bf16.gmra.mxu0 %v619
    %v1536 = vpop.f32.mrf.mxu0
    %v1537 = vadd.f32 0.0, %v1536
    %v1538 = vpop.f32.mrf.mxu0
    %v1539 = vadd.f32 0.0, %v1538
    %1540 = vmatmul.bf16.gmra.mxu0 %v622
    %v1541 = vpop.f32.mrf.mxu0
    %v1542 = vadd.f32 0.0, %v1541
    %v1543 = vpop.f32.mrf.mxu0
    %v1544 = vadd.f32 0.0, %v1543
    %1545 = vmatmul.bf16.gmra.mxu0 %v625
    %v1546 = vpop.f32.mrf.mxu0
    %v1547 = vadd.f32 0.0, %v1546
    %v1548 = vpop.f32.mrf.mxu0
    %v1549 = vadd.f32 0.0, %v1548
    %1550 = vmatmul.bf16.gmra.mxu0 %v628
    %v1551 = vpop.f32.mrf.mxu0
    %v1552 = vadd.f32 0.0, %v1551
    %v1553 = vpop.f32.mrf.mxu0
    %v1554 = vadd.f32 0.0, %v1553
    %1555 = vmatmul.bf16.gmra.mxu0 %v631
    %v1556 = vpop.f32.mrf.mxu0
    %v1557 = vadd.f32 0.0, %v1556
    %v1558 = vpop.f32.mrf.mxu0
    %v1559 = vadd.f32 0.0, %v1558
    %1560 = vmatmul.bf16.gmra.mxu0 %v634
    %v1561 = vpop.f32.mrf.mxu0
    %v1562 = vadd.f32 0.0, %v1561
    %v1563 = vpop.f32.mrf.mxu0
    %v1564 = vadd.f32 0.0, %v1563
    %1565 = vmatmul.bf16.gmra.mxu0 %v637
    %v1566 = vpop.f32.mrf.mxu0
    %v1567 = vadd.f32 0.0, %v1566
    %v1568 = vpop.f32.mrf.mxu0
    %v1569 = vadd.f32 0.0, %v1568
    %1570 = vmatmul.bf16.gmra.mxu0 %v640
    %v1571 = vpop.f32.mrf.mxu0
    %v1572 = vadd.f32 0.0, %v1571
    %v1573 = vpop.f32.mrf.mxu0
    %v1574 = vadd.f32 0.0, %v1573
    %1575 = vmatmul.bf16.gmra.mxu0 %v643
    %v1576 = vpop.f32.mrf.mxu0
    %v1577 = vadd.f32 0.0, %v1576
    %v1578 = vpop.f32.mrf.mxu0
    %v1579 = vadd.f32 0.0, %v1578
    %1580 = vmatmul.bf16.gmra.mxu0 %v646
    %v1581 = vpop.f32.mrf.mxu0
    %v1582 = vadd.f32 0.0, %v1581
    %v1583 = vpop.f32.mrf.mxu0
    %v1584 = vadd.f32 0.0, %v1583
    %1585 = vmatmul.bf16.gmra.mxu0 %v649
    %v1586 = vpop.f32.mrf.mxu0
    %v1587 = vadd.f32 0.0, %v1586
    %v1588 = vpop.f32.mrf.mxu0
    %v1589 = vadd.f32 0.0, %v1588
    %1590 = vmatmul.bf16.gmra.mxu0 %v652
    %v1591 = vpop.f32.mrf.mxu0
    %v1592 = vadd.f32 0.0, %v1591
    %v1593 = vpop.f32.mrf.mxu0
    %v1594 = vadd.f32 0.0, %v1593
    %1595 = vmatmul.bf16.gmra.mxu0 %v655
    %v1596 = vpop.f32.mrf.mxu0
    %v1597 = vadd.f32 0.0, %v1596
    %v1598 = vpop.f32.mrf.mxu0
    %v1599 = vadd.f32 0.0, %v1598
    %1600 = vmatmul.bf16.gmra.mxu0 %v658
    %v1601 = vpop.f32.mrf.mxu0
    %v1602 = vadd.f32 0.0, %v1601
    %v1603 = vpop.f32.mrf.mxu0
    %v1604 = vadd.f32 0.0, %v1603
    %1605 = vmatmul.bf16.gmra.mxu0 %v661
    %v1606 = vpop.f32.mrf.mxu0
    %v1607 = vadd.f32 0.0, %v1606
    %v1608 = vpop.f32.mrf.mxu0
    %v1609 = vadd.f32 0.0, %v1608
    %1610 = vmatmul.bf16.gmra.mxu0 %v664
    %v1611 = vpop.f32.mrf.mxu0
    %v1612 = vadd.f32 0.0, %v1611
    %v1613 = vpop.f32.mrf.mxu0
    %v1614 = vadd.f32 0.0, %v1613
    %1615 = vmatmul.bf16.gmra.mxu0 %v667
    %v1616 = vpop.f32.mrf.mxu0
    %v1617 = vadd.f32 0.0, %v1616
    %v1618 = vpop.f32.mrf.mxu0
    %v1619 = vadd.f32 0.0, %v1618
    %1620 = vmatmul.bf16.gmra.mxu0 %v670
    %v1621 = vpop.f32.mrf.mxu0
    %v1622 = vadd.f32 0.0, %v1621
    %v1623 = vpop.f32.mrf.mxu0
    %v1624 = vadd.f32 0.0, %v1623
    %1625 = vmatmul.bf16.gmra.mxu0 %v673
    %v1626 = vpop.f32.mrf.mxu0
    %v1627 = vadd.f32 0.0, %v1626
    %v1628 = vpop.f32.mrf.mxu0
    %v1629 = vadd.f32 0.0, %v1628
    %1630 = vmatmul.bf16.gmra.mxu0 %v676
    %v1631 = vpop.f32.mrf.mxu0
    %v1632 = vadd.f32 0.0, %v1631
    %v1633 = vpop.f32.mrf.mxu0
    %v1634 = vadd.f32 0.0, %v1633
    %1635 = vmatmul.bf16.gmra.mxu0 %v679
    %v1636 = vpop.f32.mrf.mxu0
    %v1637 = vadd.f32 0.0, %v1636
    %v1638 = vpop.f32.mrf.mxu0
    %v1639 = vadd.f32 0.0, %v1638
    %1640 = vmatmul.bf16.gmra.mxu0 %v682
    %v1641 = vpop.f32.mrf.mxu0
    %v1642 = vadd.f32 0.0, %v1641
    %v1643 = vpop.f32.mrf.mxu0
    %v1644 = vadd.f32 0.0, %v1643
    %1645 = vmatmul.bf16.gmra.mxu0 %v685
    %v1646 = vpop.f32.mrf.mxu0
    %v1647 = vadd.f32 0.0, %v1646
    %v1648 = vpop.f32.mrf.mxu0
    %v1649 = vadd.f32 0.0, %v1648
    %1650 = vmatmul.bf16.gmra.mxu0 %v688
    %v1651 = vpop.f32.mrf.mxu0
    %v1652 = vadd.f32 0.0, %v1651
    %v1653 = vpop.f32.mrf.mxu0
    %v1654 = vadd.f32 0.0, %v1653
    %1655 = vmatmul.bf16.gmra.mxu0 %v691
    %v1656 = vpop.f32.mrf.mxu0
    %v1657 = vadd.f32 0.0, %v1656
    %v1658 = vpop.f32.mrf.mxu0
    %v1659 = vadd.f32 0.0, %v1658
    %1660 = vmatmul.bf16.gmra.mxu0 %v694
    %v1661 = vpop.f32.mrf.mxu0
    %v1662 = vadd.f32 0.0, %v1661
    %v1663 = vpop.f32.mrf.mxu0
    %v1664 = vadd.f32 0.0, %v1663
    %1665 = vmatmul.bf16.gmra.mxu0 %v697
    %v1666 = vpop.f32.mrf.mxu0
    %v1667 = vadd.f32 0.0, %v1666
    %v1668 = vpop.f32.mrf.mxu0
    %v1669 = vadd.f32 0.0, %v1668
    %1670 = vmatmul.bf16.gmra.mxu0 %v700
    %v1671 = vpop.f32.mrf.mxu0
    %v1672 = vadd.f32 0.0, %v1671
    %v1673 = vpop.f32.mrf.mxu0
    %v1674 = vadd.f32 0.0, %v1673
    %1675 = vmatmul.bf16.gmra.mxu0 %v703
    %v1676 = vpop.f32.mrf.mxu0
    %v1677 = vadd.f32 0.0, %v1676
    %v1678 = vpop.f32.mrf.mxu0
    %v1679 = vadd.f32 0.0, %v1678
    %1680 = vmatmul.bf16.gmra.mxu0 %v706
    %v1681 = vpop.f32.mrf.mxu0
    %v1682 = vadd.f32 0.0, %v1681
    %v1683 = vpop.f32.mrf.mxu0
    %v1684 = vadd.f32 0.0, %v1683
    %1685 = vmatmul.bf16.gmra.mxu0 %v709
    %v1686 = vpop.f32.mrf.mxu0
    %v1687 = vadd.f32 0.0, %v1686
    %v1688 = vpop.f32.mrf.mxu0
    %v1689 = vadd.f32 0.0, %v1688
    %1690 = vmatmul.bf16.gmra.mxu0 %v712
    %v1691 = vpop.f32.mrf.mxu0
    %v1692 = vadd.f32 0.0, %v1691
    %v1693 = vpop.f32.mrf.mxu0
    %v1694 = vadd.f32 0.0, %v1693
    %1695 = vmatmul.bf16.gmra.mxu0 %v715
    %v1696 = vpop.f32.mrf.mxu0
    %v1697 = vadd.f32 0.0, %v1696
    %v1698 = vpop.f32.mrf.mxu0
    %v1699 = vadd.f32 0.0, %v1698
    %1700 = vmatmul.bf16.gmra.mxu0 %v718
    %v1701 = vpop.f32.mrf.mxu0
    %v1702 = vadd.f32 0.0, %v1701
    %v1703 = vpop.f32.mrf.mxu0
    %v1704 = vadd.f32 0.0, %v1703
    %1705 = vmatmul.bf16.gmra.mxu0 %v721
    %v1706 = vpop.f32.mrf.mxu0
    %v1707 = vadd.f32 0.0, %v1706
    %v1708 = vpop.f32.mrf.mxu0
    %v1709 = vadd.f32 0.0, %v1708
    %1710 = vmatmul.bf16.gmra.mxu0 %v724
    %v1711 = vpop.f32.mrf.mxu0
    %v1712 = vadd.f32 0.0, %v1711
    %v1713 = vpop.f32.mrf.mxu0
    %v1714 = vadd.f32 0.0, %v1713
    %1715 = vmatmul.bf16.gmra.mxu0 %v727
    %v1716 = vpop.f32.mrf.mxu0
    %v1717 = vadd.f32 0.0, %v1716
    %v1718 = vpop.f32.mrf.mxu0
    %v1719 = vadd.f32 0.0, %v1718
    %1720 = vmatmul.bf16.gmra.mxu0 %v730
    %v1721 = vpop.f32.mrf.mxu0
    %v1722 = vadd.f32 0.0, %v1721
    %v1723 = vpop.f32.mrf.mxu0
    %v1724 = vadd.f32 0.0, %v1723
    %1725 = vmatmul.bf16.gmra.mxu0 %v733
    %v1726 = vpop.f32.mrf.mxu0
    %v1727 = vadd.f32 0.0, %v1726
    %v1728 = vpop.f32.mrf.mxu0
    %v1729 = vadd.f32 0.0, %v1728
    %1730 = vmatmul.bf16.gmra.mxu0 %v736
    %v1731 = vpop.f32.mrf.mxu0
    %v1732 = vadd.f32 0.0, %v1731
    %v1733 = vpop.f32.mrf.mxu0
    %v1734 = vadd.f32 0.0, %v1733
    %1735 = vmatmul.bf16.gmra.mxu0 %v739
    %v1736 = vpop.f32.mrf.mxu0
    %v1737 = vadd.f32 0.0, %v1736
    %v1738 = vpop.f32.mrf.mxu0
    %v1739 = vadd.f32 0.0, %v1738
    %1740 = vdwg.mxu0
    %1741 = vmatpush.bf16.msra.mxu0 0
    %1742 = vmatpush.bf16.msra.mxu0 0
    %1743 = vmatpush.bf16.msra.mxu0 0
    %1744 = vmatpush.bf16.msra.mxu0 0
    %1745 = vmatpush.bf16.msra.mxu0 0
    %1746 = vmatpush.bf16.msra.mxu0 %v752
    %1747 = vmatpush.bf16.msra.mxu0 %v535
    %1748 = vmatpush.bf16.msra.mxu0 %v531
    %1749 = vmatmul.bf16.gmra.mxu0 %v550
    %v1750 = vpop.f32.mrf.mxu0
    %v1751 = vadd.f32 0.0, %v1750
    %v1752 = vpop.f32.mrf.mxu0
    %v1753 = vadd.f32 0.0, %v1752
    %1754 = vmatmul.bf16.gmra.mxu0 %v553
    %v1755 = vpop.f32.mrf.mxu0
    %v1756 = vadd.f32 0.0, %v1755
    %v1757 = vpop.f32.mrf.mxu0
    %v1758 = vadd.f32 0.0, %v1757
    %1759 = vmatmul.bf16.gmra.mxu0 %v556
    %v1760 = vpop.f32.mrf.mxu0
    %v1761 = vadd.f32 0.0, %v1760
    %v1762 = vpop.f32.mrf.mxu0
    %v1763 = vadd.f32 0.0, %v1762
    %1764 = vmatmul.bf16.gmra.mxu0 %v559
    %v1765 = vpop.f32.mrf.mxu0
    %v1766 = vadd.f32 0.0, %v1765
    %v1767 = vpop.f32.mrf.mxu0
    %v1768 = vadd.f32 0.0, %v1767
    %1769 = vmatmul.bf16.gmra.mxu0 %v562
    %v1770 = vpop.f32.mrf.mxu0
    %v1771 = vadd.f32 0.0, %v1770
    %v1772 = vpop.f32.mrf.mxu0
    %v1773 = vadd.f32 0.0, %v1772
    %1774 = vmatmul.bf16.gmra.mxu0 %v565
    %v1775 = vpop.f32.mrf.mxu0
    %v1776 = vadd.f32 0.0, %v1775
    %v1777 = vpop.f32.mrf.mxu0
    %v1778 = vadd.f32 0.0, %v1777
    %1779 = vmatmul.bf16.gmra.mxu0 %v568
    %v1780 = vpop.f32.mrf.mxu0
    %v1781 = vadd.f32 0.0, %v1780
    %v1782 = vpop.f32.mrf.mxu0
    %v1783 = vadd.f32 0.0, %v1782
    %1784 = vmatmul.bf16.gmra.mxu0 %v571
    %v1785 = vpop.f32.mrf.mxu0
    %v1786 = vadd.f32 0.0, %v1785
    %v1787 = vpop.f32.mrf.mxu0
    %v1788 = vadd.f32 0.0, %v1787
    %1789 = vmatmul.bf16.gmra.mxu0 %v574
    %v1790 = vpop.f32.mrf.mxu0
    %v1791 = vadd.f32 0.0, %v1790
    %v1792 = vpop.f32.mrf.mxu0
    %v1793 = vadd.f32 0.0, %v1792
    %1794 = vmatmul.bf16.gmra.mxu0 %v577
    %v1795 = vpop.f32.mrf.mxu0
    %v1796 = vadd.f32 0.0, %v1795
    %v1797 = vpop.f32.mrf.mxu0
    %v1798 = vadd.f32 0.0, %v1797
    %1799 = vmatmul.bf16.gmra.mxu0 %v580
    %v1800 = vpop.f32.mrf.mxu0
    %v1801 = vadd.f32 0.0, %v1800
    %v1802 = vpop.f32.mrf.mxu0
    %v1803 = vadd.f32 0.0, %v1802
    %1804 = vmatmul.bf16.gmra.mxu0 %v583
    %v1805 = vpop.f32.mrf.mxu0
    %v1806 = vadd.f32 0.0, %v1805
    %v1807 = vpop.f32.mrf.mxu0
    %v1808 = vadd.f32 0.0, %v1807
    %1809 = vmatmul.bf16.gmra.mxu0 %v586
    %v1810 = vpop.f32.mrf.mxu0
    %v1811 = vadd.f32 0.0, %v1810
    %v1812 = vpop.f32.mrf.mxu0
    %v1813 = vadd.f32 0.0, %v1812
    %1814 = vmatmul.bf16.gmra.mxu0 %v589
    %v1815 = vpop.f32.mrf.mxu0
    %v1816 = vadd.f32 0.0, %v1815
    %v1817 = vpop.f32.mrf.mxu0
    %v1818 = vadd.f32 0.0, %v1817
    %1819 = vmatmul.bf16.gmra.mxu0 %v592
    %v1820 = vpop.f32.mrf.mxu0
    %v1821 = vadd.f32 0.0, %v1820
    %v1822 = vpop.f32.mrf.mxu0
    %v1823 = vadd.f32 0.0, %v1822
    %1824 = vmatmul.bf16.gmra.mxu0 %v595
    %v1825 = vpop.f32.mrf.mxu0
    %v1826 = vadd.f32 0.0, %v1825
    %v1827 = vpop.f32.mrf.mxu0
    %v1828 = vadd.f32 0.0, %v1827
    %1829 = vmatmul.bf16.gmra.mxu0 %v598
    %v1830 = vpop.f32.mrf.mxu0
    %v1831 = vadd.f32 0.0, %v1830
    %v1832 = vpop.f32.mrf.mxu0
    %v1833 = vadd.f32 0.0, %v1832
    %1834 = vmatmul.bf16.gmra.mxu0 %v601
    %v1835 = vpop.f32.mrf.mxu0
    %v1836 = vadd.f32 0.0, %v1835
    %v1837 = vpop.f32.mrf.mxu0
    %v1838 = vadd.f32 0.0, %v1837
    %1839 = vmatmul.bf16.gmra.mxu0 %v604
    %v1840 = vpop.f32.mrf.mxu0
    %v1841 = vadd.f32 0.0, %v1840
    %v1842 = vpop.f32.mrf.mxu0
    %v1843 = vadd.f32 0.0, %v1842
    %1844 = vmatmul.bf16.gmra.mxu0 %v607
    %v1845 = vpop.f32.mrf.mxu0
    %v1846 = vadd.f32 0.0, %v1845
    %v1847 = vpop.f32.mrf.mxu0
    %v1848 = vadd.f32 0.0, %v1847
    %1849 = vmatmul.bf16.gmra.mxu0 %v610
    %v1850 = vpop.f32.mrf.mxu0
    %v1851 = vadd.f32 0.0, %v1850
    %v1852 = vpop.f32.mrf.mxu0
    %v1853 = vadd.f32 0.0, %v1852
    %1854 = vmatmul.bf16.gmra.mxu0 %v613
    %v1855 = vpop.f32.mrf.mxu0
    %v1856 = vadd.f32 0.0, %v1855
    %v1857 = vpop.f32.mrf.mxu0
    %v1858 = vadd.f32 0.0, %v1857
    %1859 = vmatmul.bf16.gmra.mxu0 %v616
    %v1860 = vpop.f32.mrf.mxu0
    %v1861 = vadd.f32 0.0, %v1860
    %v1862 = vpop.f32.mrf.mxu0
    %v1863 = vadd.f32 0.0, %v1862
    %1864 = vmatmul.bf16.gmra.mxu0 %v619
    %v1865 = vpop.f32.mrf.mxu0
    %v1866 = vadd.f32 0.0, %v1865
    %v1867 = vpop.f32.mrf.mxu0
    %v1868 = vadd.f32 0.0, %v1867
    %1869 = vmatmul.bf16.gmra.mxu0 %v622
    %v1870 = vpop.f32.mrf.mxu0
    %v1871 = vadd.f32 0.0, %v1870
    %v1872 = vpop.f32.mrf.mxu0
    %v1873 = vadd.f32 0.0, %v1872
    %1874 = vmatmul.bf16.gmra.mxu0 %v625
    %v1875 = vpop.f32.mrf.mxu0
    %v1876 = vadd.f32 0.0, %v1875
    %v1877 = vpop.f32.mrf.mxu0
    %v1878 = vadd.f32 0.0, %v1877
    %1879 = vmatmul.bf16.gmra.mxu0 %v628
    %v1880 = vpop.f32.mrf.mxu0
    %v1881 = vadd.f32 0.0, %v1880
    %v1882 = vpop.f32.mrf.mxu0
    %v1883 = vadd.f32 0.0, %v1882
    %1884 = vmatmul.bf16.gmra.mxu0 %v631
    %v1885 = vpop.f32.mrf.mxu0
    %v1886 = vadd.f32 0.0, %v1885
    %v1887 = vpop.f32.mrf.mxu0
    %v1888 = vadd.f32 0.0, %v1887
    %1889 = vmatmul.bf16.gmra.mxu0 %v634
    %v1890 = vpop.f32.mrf.mxu0
    %v1891 = vadd.f32 0.0, %v1890
    %v1892 = vpop.f32.mrf.mxu0
    %v1893 = vadd.f32 0.0, %v1892
    %1894 = vmatmul.bf16.gmra.mxu0 %v637
    %v1895 = vpop.f32.mrf.mxu0
    %v1896 = vadd.f32 0.0, %v1895
    %v1897 = vpop.f32.mrf.mxu0
    %v1898 = vadd.f32 0.0, %v1897
    %1899 = vmatmul.bf16.gmra.mxu0 %v640
    %v1900 = vpop.f32.mrf.mxu0
    %v1901 = vadd.f32 0.0, %v1900
    %v1902 = vpop.f32.mrf.mxu0
    %v1903 = vadd.f32 0.0, %v1902
    %1904 = vmatmul.bf16.gmra.mxu0 %v643
    %v1905 = vpop.f32.mrf.mxu0
    %v1906 = vadd.f32 0.0, %v1905
    %v1907 = vpop.f32.mrf.mxu0
    %v1908 = vadd.f32 0.0, %v1907
    %1909 = vmatmul.bf16.gmra.mxu0 %v646
    %v1910 = vpop.f32.mrf.mxu0
    %v1911 = vadd.f32 0.0, %v1910
    %v1912 = vpop.f32.mrf.mxu0
    %v1913 = vadd.f32 0.0, %v1912
    %1914 = vmatmul.bf16.gmra.mxu0 %v649
    %v1915 = vpop.f32.mrf.mxu0
    %v1916 = vadd.f32 0.0, %v1915
    %v1917 = vpop.f32.mrf.mxu0
    %v1918 = vadd.f32 0.0, %v1917
    %1919 = vmatmul.bf16.gmra.mxu0 %v652
    %v1920 = vpop.f32.mrf.mxu0
    %v1921 = vadd.f32 0.0, %v1920
    %v1922 = vpop.f32.mrf.mxu0
    %v1923 = vadd.f32 0.0, %v1922
    %1924 = vmatmul.bf16.gmra.mxu0 %v655
    %v1925 = vpop.f32.mrf.mxu0
    %v1926 = vadd.f32 0.0, %v1925
    %v1927 = vpop.f32.mrf.mxu0
    %v1928 = vadd.f32 0.0, %v1927
    %1929 = vmatmul.bf16.gmra.mxu0 %v658
    %v1930 = vpop.f32.mrf.mxu0
    %v1931 = vadd.f32 0.0, %v1930
    %v1932 = vpop.f32.mrf.mxu0
    %v1933 = vadd.f32 0.0, %v1932
    %1934 = vmatmul.bf16.gmra.mxu0 %v661
    %v1935 = vpop.f32.mrf.mxu0
    %v1936 = vadd.f32 0.0, %v1935
    %v1937 = vpop.f32.mrf.mxu0
    %v1938 = vadd.f32 0.0, %v1937
    %1939 = vmatmul.bf16.gmra.mxu0 %v664
    %v1940 = vpop.f32.mrf.mxu0
    %v1941 = vadd.f32 0.0, %v1940
    %v1942 = vpop.f32.mrf.mxu0
    %v1943 = vadd.f32 0.0, %v1942
    %1944 = vmatmul.bf16.gmra.mxu0 %v667
    %v1945 = vpop.f32.mrf.mxu0
    %v1946 = vadd.f32 0.0, %v1945
    %v1947 = vpop.f32.mrf.mxu0
    %v1948 = vadd.f32 0.0, %v1947
    %1949 = vmatmul.bf16.gmra.mxu0 %v670
    %v1950 = vpop.f32.mrf.mxu0
    %v1951 = vadd.f32 0.0, %v1950
    %v1952 = vpop.f32.mrf.mxu0
    %v1953 = vadd.f32 0.0, %v1952
    %1954 = vmatmul.bf16.gmra.mxu0 %v673
    %v1955 = vpop.f32.mrf.mxu0
    %v1956 = vadd.f32 0.0, %v1955
    %v1957 = vpop.f32.mrf.mxu0
    %v1958 = vadd.f32 0.0, %v1957
    %1959 = vmatmul.bf16.gmra.mxu0 %v676
    %v1960 = vpop.f32.mrf.mxu0
    %v1961 = vadd.f32 0.0, %v1960
    %v1962 = vpop.f32.mrf.mxu0
    %v1963 = vadd.f32 0.0, %v1962
    %1964 = vmatmul.bf16.gmra.mxu0 %v679
    %v1965 = vpop.f32.mrf.mxu0
    %v1966 = vadd.f32 0.0, %v1965
    %v1967 = vpop.f32.mrf.mxu0
    %v1968 = vadd.f32 0.0, %v1967
    %1969 = vmatmul.bf16.gmra.mxu0 %v682
    %v1970 = vpop.f32.mrf.mxu0
    %v1971 = vadd.f32 0.0, %v1970
    %v1972 = vpop.f32.mrf.mxu0
    %v1973 = vadd.f32 0.0, %v1972
    %1974 = vmatmul.bf16.gmra.mxu0 %v685
    %v1975 = vpop.f32.mrf.mxu0
    %v1976 = vadd.f32 0.0, %v1975
    %v1977 = vpop.f32.mrf.mxu0
    %v1978 = vadd.f32 0.0, %v1977
    %1979 = vmatmul.bf16.gmra.mxu0 %v688
    %v1980 = vpop.f32.mrf.mxu0
    %v1981 = vadd.f32 0.0, %v1980
    %v1982 = vpop.f32.mrf.mxu0
    %v1983 = vadd.f32 0.0, %v1982
    %1984 = vmatmul.bf16.gmra.mxu0 %v691
    %v1985 = vpop.f32.mrf.mxu0
    %v1986 = vadd.f32 0.0, %v1985
    %v1987 = vpop.f32.mrf.mxu0
    %v1988 = vadd.f32 0.0, %v1987
    %1989 = vmatmul.bf16.gmra.mxu0 %v694
    %v1990 = vpop.f32.mrf.mxu0
    %v1991 = vadd.f32 0.0, %v1990
    %v1992 = vpop.f32.mrf.mxu0
    %v1993 = vadd.f32 0.0, %v1992
    %1994 = vmatmul.bf16.gmra.mxu0 %v697
    %v1995 = vpop.f32.mrf.mxu0
    %v1996 = vadd.f32 0.0, %v1995
    %v1997 = vpop.f32.mrf.mxu0
    %v1998 = vadd.f32 0.0, %v1997
    %1999 = vmatmul.bf16.gmra.mxu0 %v700
    %v2000 = vpop.f32.mrf.mxu0
    %v2001 = vadd.f32 0.0, %v2000
    %v2002 = vpop.f32.mrf.mxu0
    %v2003 = vadd.f32 0.0, %v2002
    %2004 = vmatmul.bf16.gmra.mxu0 %v703
    %v2005 = vpop.f32.mrf.mxu0
    %v2006 = vadd.f32 0.0, %v2005
    %v2007 = vpop.f32.mrf.mxu0
    %v2008 = vadd.f32 0.0, %v2007
    %2009 = vmatmul.bf16.gmra.mxu0 %v706
    %v2010 = vpop.f32.mrf.mxu0
    %v2011 = vadd.f32 0.0, %v2010
    %v2012 = vpop.f32.mrf.mxu0
    %v2013 = vadd.f32 0.0, %v2012
    %2014 = vmatmul.bf16.gmra.mxu0 %v709
    %v2015 = vpop.f32.mrf.mxu0
    %v2016 = vadd.f32 0.0, %v2015
    %v2017 = vpop.f32.mrf.mxu0
    %v2018 = vadd.f32 0.0, %v2017
    %2019 = vmatmul.bf16.gmra.mxu0 %v712
    %v2020 = vpop.f32.mrf.mxu0
    %v2021 = vadd.f32 0.0, %v2020
    %v2022 = vpop.f32.mrf.mxu0
    %v2023 = vadd.f32 0.0, %v2022
    %2024 = vmatmul.bf16.gmra.mxu0 %v715
    %v2025 = vpop.f32.mrf.mxu0
    %v2026 = vadd.f32 0.0, %v2025
    %v2027 = vpop.f32.mrf.mxu0
    %v2028 = vadd.f32 0.0, %v2027
    %2029 = vmatmul.bf16.gmra.mxu0 %v718
    %v2030 = vpop.f32.mrf.mxu0
    %v2031 = vadd.f32 0.0, %v2030
    %v2032 = vpop.f32.mrf.mxu0
    %v2033 = vadd.f32 0.0, %v2032
    %2034 = vmatmul.bf16.gmra.mxu0 %v721
    %v2035 = vpop.f32.mrf.mxu0
    %v2036 = vadd.f32 0.0, %v2035
    %v2037 = vpop.f32.mrf.mxu0
    %v2038 = vadd.f32 0.0, %v2037
    %2039 = vmatmul.bf16.gmra.mxu0 %v724
    %v2040 = vpop.f32.mrf.mxu0
    %v2041 = vadd.f32 0.0, %v2040
    %v2042 = vpop.f32.mrf.mxu0
    %v2043 = vadd.f32 0.0, %v2042
    %2044 = vmatmul.bf16.gmra.mxu0 %v727
    %v2045 = vpop.f32.mrf.mxu0
    %v2046 = vadd.f32 0.0, %v2045
    %v2047 = vpop.f32.mrf.mxu0
    %v2048 = vadd.f32 0.0, %v2047
    %2049 = vmatmul.bf16.gmra.mxu0 %v730
    %v2050 = vpop.f32.mrf.mxu0
    %v2051 = vadd.f32 0.0, %v2050
    %v2052 = vpop.f32.mrf.mxu0
    %v2053 = vadd.f32 0.0, %v2052
    %2054 = vmatmul.bf16.gmra.mxu0 %v733
    %v2055 = vpop.f32.mrf.mxu0
    %v2056 = vadd.f32 0.0, %v2055
    %v2057 = vpop.f32.mrf.mxu0
    %v2058 = vadd.f32 0.0, %v2057
    %2059 = vmatmul.bf16.gmra.mxu0 %v736
    %v2060 = vpop.f32.mrf.mxu0
    %v2061 = vadd.f32 0.0, %v2060
    %v2062 = vpop.f32.mrf.mxu0
    %v2063 = vadd.f32 0.0, %v2062
    %2064 = vmatmul.bf16.gmra.mxu0 %v739
    %v2065 = vpop.f32.mrf.mxu0
    %v2066 = vadd.f32 0.0, %v2065
    %v2067 = vpop.f32.mrf.mxu0
    %v2068 = vadd.f32 0.0, %v2067
    %2069 = vdwg.mxu0
    %v2070 = vmax.f32 %v764, 0.0
    %v2071 = vmax.f32 %v1093, 0.0
    %v2072 = vmax.f32 %v1422, 0.0
    %v2073 = vmax.f32 %v1751, 0.0
    %v2074 = vmax.f32 %v766, 0.0
    %v2075 = vmax.f32 %v1095, 0.0
    %v2076 = vmax.f32 %v1424, 0.0
    %v2077 = vmax.f32 %v1753, 0.0
    %v2078 = vmax.f32 %v769, 0.0
    %v2079 = vmax.f32 %v1098, 0.0
    %v2080 = vmax.f32 %v1427, 0.0
    %v2081 = vmax.f32 %v1756, 0.0
    %v2082 = vmax.f32 %v771, 0.0
    %v2083 = vmax.f32 %v1100, 0.0
    %v2084 = vmax.f32 %v1429, 0.0
    %v2085 = vmax.f32 %v1758, 0.0
    %v2086 = vmax.f32 %v774, 0.0
    %v2087 = vmax.f32 %v1103, 0.0
    %v2088 = vmax.f32 %v1432, 0.0
    %v2089 = vmax.f32 %v1761, 0.0
    %v2090 = vmax.f32 %v776, 0.0
    %v2091 = vmax.f32 %v1105, 0.0
    %v2092 = vmax.f32 %v1434, 0.0
    %v2093 = vmax.f32 %v1763, 0.0
    %v2094 = vmax.f32 %v779, 0.0
    %v2095 = vmax.f32 %v1108, 0.0
    %v2096 = vmax.f32 %v1437, 0.0
    %v2097 = vmax.f32 %v1766, 0.0
    %v2098 = vmax.f32 %v781, 0.0
    %v2099 = vmax.f32 %v1110, 0.0
    %v2100 = vmax.f32 %v1439, 0.0
    %v2101 = vmax.f32 %v1768, 0.0
    %v2102 = vmax.f32 %v784, 0.0
    %v2103 = vmax.f32 %v1113, 0.0
    %v2104 = vmax.f32 %v1442, 0.0
    %v2105 = vmax.f32 %v1771, 0.0
    %v2106 = vmax.f32 %v786, 0.0
    %v2107 = vmax.f32 %v1115, 0.0
    %v2108 = vmax.f32 %v1444, 0.0
    %v2109 = vmax.f32 %v1773, 0.0
    %v2110 = vmax.f32 %v789, 0.0
    %v2111 = vmax.f32 %v1118, 0.0
    %v2112 = vmax.f32 %v1447, 0.0
    %v2113 = vmax.f32 %v1776, 0.0
    %v2114 = vmax.f32 %v791, 0.0
    %v2115 = vmax.f32 %v1120, 0.0
    %v2116 = vmax.f32 %v1449, 0.0
    %v2117 = vmax.f32 %v1778, 0.0
    %v2118 = vmax.f32 %v794, 0.0
    %v2119 = vmax.f32 %v1123, 0.0
    %v2120 = vmax.f32 %v1452, 0.0
    %v2121 = vmax.f32 %v1781, 0.0
    %v2122 = vmax.f32 %v796, 0.0
    %v2123 = vmax.f32 %v1125, 0.0
    %v2124 = vmax.f32 %v1454, 0.0
    %v2125 = vmax.f32 %v1783, 0.0
    %v2126 = vmax.f32 %v799, 0.0
    %v2127 = vmax.f32 %v1128, 0.0
    %v2128 = vmax.f32 %v1457, 0.0
    %v2129 = vmax.f32 %v1786, 0.0
    %v2130 = vmax.f32 %v801, 0.0
    %v2131 = vmax.f32 %v1130, 0.0
    %v2132 = vmax.f32 %v1459, 0.0
    %v2133 = vmax.f32 %v1788, 0.0
    %v2134 = vmax.f32 %v804, 0.0
    %v2135 = vmax.f32 %v1133, 0.0
    %v2136 = vmax.f32 %v1462, 0.0
    %v2137 = vmax.f32 %v1791, 0.0
    %v2138 = vmax.f32 %v806, 0.0
    %v2139 = vmax.f32 %v1135, 0.0
    %v2140 = vmax.f32 %v1464, 0.0
    %v2141 = vmax.f32 %v1793, 0.0
    %v2142 = vmax.f32 %v809, 0.0
    %v2143 = vmax.f32 %v1138, 0.0
    %v2144 = vmax.f32 %v1467, 0.0
    %v2145 = vmax.f32 %v1796, 0.0
    %v2146 = vmax.f32 %v811, 0.0
    %v2147 = vmax.f32 %v1140, 0.0
    %v2148 = vmax.f32 %v1469, 0.0
    %v2149 = vmax.f32 %v1798, 0.0
    %v2150 = vmax.f32 %v814, 0.0
    %v2151 = vmax.f32 %v1143, 0.0
    %v2152 = vmax.f32 %v1472, 0.0
    %v2153 = vmax.f32 %v1801, 0.0
    %v2154 = vmax.f32 %v816, 0.0
    %v2155 = vmax.f32 %v1145, 0.0
    %v2156 = vmax.f32 %v1474, 0.0
    %v2157 = vmax.f32 %v1803, 0.0
    %v2158 = vmax.f32 %v819, 0.0
    %v2159 = vmax.f32 %v1148, 0.0
    %v2160 = vmax.f32 %v1477, 0.0
    %v2161 = vmax.f32 %v1806, 0.0
    %v2162 = vmax.f32 %v821, 0.0
    %v2163 = vmax.f32 %v1150, 0.0
    %v2164 = vmax.f32 %v1479, 0.0
    %v2165 = vmax.f32 %v1808, 0.0
    %v2166 = vmax.f32 %v824, 0.0
    %v2167 = vmax.f32 %v1153, 0.0
    %v2168 = vmax.f32 %v1482, 0.0
    %v2169 = vmax.f32 %v1811, 0.0
    %v2170 = vmax.f32 %v826, 0.0
    %v2171 = vmax.f32 %v1155, 0.0
    %v2172 = vmax.f32 %v1484, 0.0
    %v2173 = vmax.f32 %v1813, 0.0
    %v2174 = vmax.f32 %v829, 0.0
    %v2175 = vmax.f32 %v1158, 0.0
    %v2176 = vmax.f32 %v1487, 0.0
    %v2177 = vmax.f32 %v1816, 0.0
    %v2178 = vmax.f32 %v831, 0.0
    %v2179 = vmax.f32 %v1160, 0.0
    %v2180 = vmax.f32 %v1489, 0.0
    %v2181 = vmax.f32 %v1818, 0.0
    %v2182 = vmax.f32 %v834, 0.0
    %v2183 = vmax.f32 %v1163, 0.0
    %v2184 = vmax.f32 %v1492, 0.0
    %v2185 = vmax.f32 %v1821, 0.0
    %v2186 = vmax.f32 %v836, 0.0
    %v2187 = vmax.f32 %v1165, 0.0
    %v2188 = vmax.f32 %v1494, 0.0
    %v2189 = vmax.f32 %v1823, 0.0
    %v2190 = vmax.f32 %v839, 0.0
    %v2191 = vmax.f32 %v1168, 0.0
    %v2192 = vmax.f32 %v1497, 0.0
    %v2193 = vmax.f32 %v1826, 0.0
    %v2194 = vmax.f32 %v841, 0.0
    %v2195 = vmax.f32 %v1170, 0.0
    %v2196 = vmax.f32 %v1499, 0.0
    %v2197 = vmax.f32 %v1828, 0.0
    %v2198 = vmax.f32 %v844, 0.0
    %v2199 = vmax.f32 %v1173, 0.0
    %v2200 = vmax.f32 %v1502, 0.0
    %v2201 = vmax.f32 %v1831, 0.0
    %v2202 = vmax.f32 %v846, 0.0
    %v2203 = vmax.f32 %v1175, 0.0
    %v2204 = vmax.f32 %v1504, 0.0
    %v2205 = vmax.f32 %v1833, 0.0
    %v2206 = vmax.f32 %v849, 0.0
    %v2207 = vmax.f32 %v1178, 0.0
    %v2208 = vmax.f32 %v1507, 0.0
    %v2209 = vmax.f32 %v1836, 0.0
    %v2210 = vmax.f32 %v851, 0.0
    %v2211 = vmax.f32 %v1180, 0.0
    %v2212 = vmax.f32 %v1509, 0.0
    %v2213 = vmax.f32 %v1838, 0.0
    %v2214 = vmax.f32 %v854, 0.0
    %v2215 = vmax.f32 %v1183, 0.0
    %v2216 = vmax.f32 %v1512, 0.0
    %v2217 = vmax.f32 %v1841, 0.0
    %v2218 = vmax.f32 %v856, 0.0
    %v2219 = vmax.f32 %v1185, 0.0
    %v2220 = vmax.f32 %v1514, 0.0
    %v2221 = vmax.f32 %v1843, 0.0
    %v2222 = vmax.f32 %v859, 0.0
    %v2223 = vmax.f32 %v1188, 0.0
    %v2224 = vmax.f32 %v1517, 0.0
    %v2225 = vmax.f32 %v1846, 0.0
    %v2226 = vmax.f32 %v861, 0.0
    %v2227 = vmax.f32 %v1190, 0.0
    %v2228 = vmax.f32 %v1519, 0.0
    %v2229 = vmax.f32 %v1848, 0.0
    %v2230 = vmax.f32 %v864, 0.0
    %v2231 = vmax.f32 %v1193, 0.0
    %v2232 = vmax.f32 %v1522, 0.0
    %v2233 = vmax.f32 %v1851, 0.0
    %v2234 = vmax.f32 %v866, 0.0
    %v2235 = vmax.f32 %v1195, 0.0
    %v2236 = vmax.f32 %v1524, 0.0
    %v2237 = vmax.f32 %v1853, 0.0
    %v2238 = vmax.f32 %v869, 0.0
    %v2239 = vmax.f32 %v1198, 0.0
    %v2240 = vmax.f32 %v1527, 0.0
    %v2241 = vmax.f32 %v1856, 0.0
    %v2242 = vmax.f32 %v871, 0.0
    %v2243 = vmax.f32 %v1200, 0.0
    %v2244 = vmax.f32 %v1529, 0.0
    %v2245 = vmax.f32 %v1858, 0.0
    %v2246 = vmax.f32 %v874, 0.0
    %v2247 = vmax.f32 %v1203, 0.0
    %v2248 = vmax.f32 %v1532, 0.0
    %v2249 = vmax.f32 %v1861, 0.0
    %v2250 = vmax.f32 %v876, 0.0
    %v2251 = vmax.f32 %v1205, 0.0
    %v2252 = vmax.f32 %v1534, 0.0
    %v2253 = vmax.f32 %v1863, 0.0
    %v2254 = vmax.f32 %v879, 0.0
    %v2255 = vmax.f32 %v1208, 0.0
    %v2256 = vmax.f32 %v1537, 0.0
    %v2257 = vmax.f32 %v1866, 0.0
    %v2258 = vmax.f32 %v881, 0.0
    %v2259 = vmax.f32 %v1210, 0.0
    %v2260 = vmax.f32 %v1539, 0.0
    %v2261 = vmax.f32 %v1868, 0.0
    %v2262 = vmax.f32 %v884, 0.0
    %v2263 = vmax.f32 %v1213, 0.0
    %v2264 = vmax.f32 %v1542, 0.0
    %v2265 = vmax.f32 %v1871, 0.0
    %v2266 = vmax.f32 %v886, 0.0
    %v2267 = vmax.f32 %v1215, 0.0
    %v2268 = vmax.f32 %v1544, 0.0
    %v2269 = vmax.f32 %v1873, 0.0
    %v2270 = vmax.f32 %v889, 0.0
    %v2271 = vmax.f32 %v1218, 0.0
    %v2272 = vmax.f32 %v1547, 0.0
    %v2273 = vmax.f32 %v1876, 0.0
    %v2274 = vmax.f32 %v891, 0.0
    %v2275 = vmax.f32 %v1220, 0.0
    %v2276 = vmax.f32 %v1549, 0.0
    %v2277 = vmax.f32 %v1878, 0.0
    %v2278 = vmax.f32 %v894, 0.0
    %v2279 = vmax.f32 %v1223, 0.0
    %v2280 = vmax.f32 %v1552, 0.0
    %v2281 = vmax.f32 %v1881, 0.0
    %v2282 = vmax.f32 %v896, 0.0
    %v2283 = vmax.f32 %v1225, 0.0
    %v2284 = vmax.f32 %v1554, 0.0
    %v2285 = vmax.f32 %v1883, 0.0
    %v2286 = vmax.f32 %v899, 0.0
    %v2287 = vmax.f32 %v1228, 0.0
    %v2288 = vmax.f32 %v1557, 0.0
    %v2289 = vmax.f32 %v1886, 0.0
    %v2290 = vmax.f32 %v901, 0.0
    %v2291 = vmax.f32 %v1230, 0.0
    %v2292 = vmax.f32 %v1559, 0.0
    %v2293 = vmax.f32 %v1888, 0.0
    %v2294 = vmax.f32 %v904, 0.0
    %v2295 = vmax.f32 %v1233, 0.0
    %v2296 = vmax.f32 %v1562, 0.0
    %v2297 = vmax.f32 %v1891, 0.0
    %v2298 = vmax.f32 %v906, 0.0
    %v2299 = vmax.f32 %v1235, 0.0
    %v2300 = vmax.f32 %v1564, 0.0
    %v2301 = vmax.f32 %v1893, 0.0
    %v2302 = vmax.f32 %v909, 0.0
    %v2303 = vmax.f32 %v1238, 0.0
    %v2304 = vmax.f32 %v1567, 0.0
    %v2305 = vmax.f32 %v1896, 0.0
    %v2306 = vmax.f32 %v911, 0.0
    %v2307 = vmax.f32 %v1240, 0.0
    %v2308 = vmax.f32 %v1569, 0.0
    %v2309 = vmax.f32 %v1898, 0.0
    %v2310 = vmax.f32 %v914, 0.0
    %v2311 = vmax.f32 %v1243, 0.0
    %v2312 = vmax.f32 %v1572, 0.0
    %v2313 = vmax.f32 %v1901, 0.0
    %v2314 = vmax.f32 %v916, 0.0
    %v2315 = vmax.f32 %v1245, 0.0
    %v2316 = vmax.f32 %v1574, 0.0
    %v2317 = vmax.f32 %v1903, 0.0
    %v2318 = vmax.f32 %v919, 0.0
    %v2319 = vmax.f32 %v1248, 0.0
    %v2320 = vmax.f32 %v1577, 0.0
    %v2321 = vmax.f32 %v1906, 0.0
    %v2322 = vmax.f32 %v921, 0.0
    %v2323 = vmax.f32 %v1250, 0.0
    %v2324 = vmax.f32 %v1579, 0.0
    %v2325 = vmax.f32 %v1908, 0.0
    %v2326 = vmax.f32 %v924, 0.0
    %v2327 = vmax.f32 %v1253, 0.0
    %v2328 = vmax.f32 %v1582, 0.0
    %v2329 = vmax.f32 %v1911, 0.0
    %v2330 = vmax.f32 %v926, 0.0
    %v2331 = vmax.f32 %v1255, 0.0
    %v2332 = vmax.f32 %v1584, 0.0
    %v2333 = vmax.f32 %v1913, 0.0
    %v2334 = vmax.f32 %v929, 0.0
    %v2335 = vmax.f32 %v1258, 0.0
    %v2336 = vmax.f32 %v1587, 0.0
    %v2337 = vmax.f32 %v1916, 0.0
    %v2338 = vmax.f32 %v931, 0.0
    %v2339 = vmax.f32 %v1260, 0.0
    %v2340 = vmax.f32 %v1589, 0.0
    %v2341 = vmax.f32 %v1918, 0.0
    %v2342 = vmax.f32 %v934, 0.0
    %v2343 = vmax.f32 %v1263, 0.0
    %v2344 = vmax.f32 %v1592, 0.0
    %v2345 = vmax.f32 %v1921, 0.0
    %v2346 = vmax.f32 %v936, 0.0
    %v2347 = vmax.f32 %v1265, 0.0
    %v2348 = vmax.f32 %v1594, 0.0
    %v2349 = vmax.f32 %v1923, 0.0
    %v2350 = vmax.f32 %v939, 0.0
    %v2351 = vmax.f32 %v1268, 0.0
    %v2352 = vmax.f32 %v1597, 0.0
    %v2353 = vmax.f32 %v1926, 0.0
    %v2354 = vmax.f32 %v941, 0.0
    %v2355 = vmax.f32 %v1270, 0.0
    %v2356 = vmax.f32 %v1599, 0.0
    %v2357 = vmax.f32 %v1928, 0.0
    %v2358 = vmax.f32 %v944, 0.0
    %v2359 = vmax.f32 %v1273, 0.0
    %v2360 = vmax.f32 %v1602, 0.0
    %v2361 = vmax.f32 %v1931, 0.0
    %v2362 = vmax.f32 %v946, 0.0
    %v2363 = vmax.f32 %v1275, 0.0
    %v2364 = vmax.f32 %v1604, 0.0
    %v2365 = vmax.f32 %v1933, 0.0
    %v2366 = vmax.f32 %v949, 0.0
    %v2367 = vmax.f32 %v1278, 0.0
    %v2368 = vmax.f32 %v1607, 0.0
    %v2369 = vmax.f32 %v1936, 0.0
    %v2370 = vmax.f32 %v951, 0.0
    %v2371 = vmax.f32 %v1280, 0.0
    %v2372 = vmax.f32 %v1609, 0.0
    %v2373 = vmax.f32 %v1938, 0.0
    %v2374 = vmax.f32 %v954, 0.0
    %v2375 = vmax.f32 %v1283, 0.0
    %v2376 = vmax.f32 %v1612, 0.0
    %v2377 = vmax.f32 %v1941, 0.0
    %v2378 = vmax.f32 %v956, 0.0
    %v2379 = vmax.f32 %v1285, 0.0
    %v2380 = vmax.f32 %v1614, 0.0
    %v2381 = vmax.f32 %v1943, 0.0
    %v2382 = vmax.f32 %v959, 0.0
    %v2383 = vmax.f32 %v1288, 0.0
    %v2384 = vmax.f32 %v1617, 0.0
    %v2385 = vmax.f32 %v1946, 0.0
    %v2386 = vmax.f32 %v961, 0.0
    %v2387 = vmax.f32 %v1290, 0.0
    %v2388 = vmax.f32 %v1619, 0.0
    %v2389 = vmax.f32 %v1948, 0.0
    %v2390 = vmax.f32 %v964, 0.0
    %v2391 = vmax.f32 %v1293, 0.0
    %v2392 = vmax.f32 %v1622, 0.0
    %v2393 = vmax.f32 %v1951, 0.0
    %v2394 = vmax.f32 %v966, 0.0
    %v2395 = vmax.f32 %v1295, 0.0
    %v2396 = vmax.f32 %v1624, 0.0
    %v2397 = vmax.f32 %v1953, 0.0
    %v2398 = vmax.f32 %v969, 0.0
    %v2399 = vmax.f32 %v1298, 0.0
    %v2400 = vmax.f32 %v1627, 0.0
    %v2401 = vmax.f32 %v1956, 0.0
    %v2402 = vmax.f32 %v971, 0.0
    %v2403 = vmax.f32 %v1300, 0.0
    %v2404 = vmax.f32 %v1629, 0.0
    %v2405 = vmax.f32 %v1958, 0.0
    %v2406 = vmax.f32 %v974, 0.0
    %v2407 = vmax.f32 %v1303, 0.0
    %v2408 = vmax.f32 %v1632, 0.0
    %v2409 = vmax.f32 %v1961, 0.0
    %v2410 = vmax.f32 %v976, 0.0
    %v2411 = vmax.f32 %v1305, 0.0
    %v2412 = vmax.f32 %v1634, 0.0
    %v2413 = vmax.f32 %v1963, 0.0
    %v2414 = vmax.f32 %v979, 0.0
    %v2415 = vmax.f32 %v1308, 0.0
    %v2416 = vmax.f32 %v1637, 0.0
    %v2417 = vmax.f32 %v1966, 0.0
    %v2418 = vmax.f32 %v981, 0.0
    %v2419 = vmax.f32 %v1310, 0.0
    %v2420 = vmax.f32 %v1639, 0.0
    %v2421 = vmax.f32 %v1968, 0.0
    %v2422 = vmax.f32 %v984, 0.0
    %v2423 = vmax.f32 %v1313, 0.0
    %v2424 = vmax.f32 %v1642, 0.0
    %v2425 = vmax.f32 %v1971, 0.0
    %v2426 = vmax.f32 %v986, 0.0
    %v2427 = vmax.f32 %v1315, 0.0
    %v2428 = vmax.f32 %v1644, 0.0
    %v2429 = vmax.f32 %v1973, 0.0
    %v2430 = vmax.f32 %v989, 0.0
    %v2431 = vmax.f32 %v1318, 0.0
    %v2432 = vmax.f32 %v1647, 0.0
    %v2433 = vmax.f32 %v1976, 0.0
    %v2434 = vmax.f32 %v991, 0.0
    %v2435 = vmax.f32 %v1320, 0.0
    %v2436 = vmax.f32 %v1649, 0.0
    %v2437 = vmax.f32 %v1978, 0.0
    %v2438 = vmax.f32 %v994, 0.0
    %v2439 = vmax.f32 %v1323, 0.0
    %v2440 = vmax.f32 %v1652, 0.0
    %v2441 = vmax.f32 %v1981, 0.0
    %v2442 = vmax.f32 %v996, 0.0
    %v2443 = vmax.f32 %v1325, 0.0
    %v2444 = vmax.f32 %v1654, 0.0
    %v2445 = vmax.f32 %v1983, 0.0
    %v2446 = vmax.f32 %v999, 0.0
    %v2447 = vmax.f32 %v1328, 0.0
    %v2448 = vmax.f32 %v1657, 0.0
    %v2449 = vmax.f32 %v1986, 0.0
    %v2450 = vmax.f32 %v1001, 0.0
    %v2451 = vmax.f32 %v1330, 0.0
    %v2452 = vmax.f32 %v1659, 0.0
    %v2453 = vmax.f32 %v1988, 0.0
    %v2454 = vmax.f32 %v1004, 0.0
    %v2455 = vmax.f32 %v1333, 0.0
    %v2456 = vmax.f32 %v1662, 0.0
    %v2457 = vmax.f32 %v1991, 0.0
    %v2458 = vmax.f32 %v1006, 0.0
    %v2459 = vmax.f32 %v1335, 0.0
    %v2460 = vmax.f32 %v1664, 0.0
    %v2461 = vmax.f32 %v1993, 0.0
    %v2462 = vmax.f32 %v1009, 0.0
    %v2463 = vmax.f32 %v1338, 0.0
    %v2464 = vmax.f32 %v1667, 0.0
    %v2465 = vmax.f32 %v1996, 0.0
    %v2466 = vmax.f32 %v1011, 0.0
    %v2467 = vmax.f32 %v1340, 0.0
    %v2468 = vmax.f32 %v1669, 0.0
    %v2469 = vmax.f32 %v1998, 0.0
    %v2470 = vmax.f32 %v1014, 0.0
    %v2471 = vmax.f32 %v1343, 0.0
    %v2472 = vmax.f32 %v1672, 0.0
    %v2473 = vmax.f32 %v2001, 0.0
    %v2474 = vmax.f32 %v1016, 0.0
    %v2475 = vmax.f32 %v1345, 0.0
    %v2476 = vmax.f32 %v1674, 0.0
    %v2477 = vmax.f32 %v2003, 0.0
    %v2478 = vmax.f32 %v1019, 0.0
    %v2479 = vmax.f32 %v1348, 0.0
    %v2480 = vmax.f32 %v1677, 0.0
    %v2481 = vmax.f32 %v2006, 0.0
    %v2482 = vmax.f32 %v1021, 0.0
    %v2483 = vmax.f32 %v1350, 0.0
    %v2484 = vmax.f32 %v1679, 0.0
    %v2485 = vmax.f32 %v2008, 0.0
    %v2486 = vmax.f32 %v1024, 0.0
    %v2487 = vmax.f32 %v1353, 0.0
    %v2488 = vmax.f32 %v1682, 0.0
    %v2489 = vmax.f32 %v2011, 0.0
    %v2490 = vmax.f32 %v1026, 0.0
    %v2491 = vmax.f32 %v1355, 0.0
    %v2492 = vmax.f32 %v1684, 0.0
    %v2493 = vmax.f32 %v2013, 0.0
    %v2494 = vmax.f32 %v1029, 0.0
    %v2495 = vmax.f32 %v1358, 0.0
    %v2496 = vmax.f32 %v1687, 0.0
    %v2497 = vmax.f32 %v2016, 0.0
    %v2498 = vmax.f32 %v1031, 0.0
    %v2499 = vmax.f32 %v1360, 0.0
    %v2500 = vmax.f32 %v1689, 0.0
    %v2501 = vmax.f32 %v2018, 0.0
    %v2502 = vmax.f32 %v1034, 0.0
    %v2503 = vmax.f32 %v1363, 0.0
    %v2504 = vmax.f32 %v1692, 0.0
    %v2505 = vmax.f32 %v2021, 0.0
    %v2506 = vmax.f32 %v1036, 0.0
    %v2507 = vmax.f32 %v1365, 0.0
    %v2508 = vmax.f32 %v1694, 0.0
    %v2509 = vmax.f32 %v2023, 0.0
    %v2510 = vmax.f32 %v1039, 0.0
    %v2511 = vmax.f32 %v1368, 0.0
    %v2512 = vmax.f32 %v1697, 0.0
    %v2513 = vmax.f32 %v2026, 0.0
    %v2514 = vmax.f32 %v1041, 0.0
    %v2515 = vmax.f32 %v1370, 0.0
    %v2516 = vmax.f32 %v1699, 0.0
    %v2517 = vmax.f32 %v2028, 0.0
    %v2518 = vmax.f32 %v1044, 0.0
    %v2519 = vmax.f32 %v1373, 0.0
    %v2520 = vmax.f32 %v1702, 0.0
    %v2521 = vmax.f32 %v2031, 0.0
    %v2522 = vmax.f32 %v1046, 0.0
    %v2523 = vmax.f32 %v1375, 0.0
    %v2524 = vmax.f32 %v1704, 0.0
    %v2525 = vmax.f32 %v2033, 0.0
    %v2526 = vmax.f32 %v1049, 0.0
    %v2527 = vmax.f32 %v1378, 0.0
    %v2528 = vmax.f32 %v1707, 0.0
    %v2529 = vmax.f32 %v2036, 0.0
    %v2530 = vmax.f32 %v1051, 0.0
    %v2531 = vmax.f32 %v1380, 0.0
    %v2532 = vmax.f32 %v1709, 0.0
    %v2533 = vmax.f32 %v2038, 0.0
    %v2534 = vmax.f32 %v1054, 0.0
    %v2535 = vmax.f32 %v1383, 0.0
    %v2536 = vmax.f32 %v1712, 0.0
    %v2537 = vmax.f32 %v2041, 0.0
    %v2538 = vmax.f32 %v1056, 0.0
    %v2539 = vmax.f32 %v1385, 0.0
    %v2540 = vmax.f32 %v1714, 0.0
    %v2541 = vmax.f32 %v2043, 0.0
    %v2542 = vmax.f32 %v1059, 0.0
    %v2543 = vmax.f32 %v1388, 0.0
    %v2544 = vmax.f32 %v1717, 0.0
    %v2545 = vmax.f32 %v2046, 0.0
    %v2546 = vmax.f32 %v1061, 0.0
    %v2547 = vmax.f32 %v1390, 0.0
    %v2548 = vmax.f32 %v1719, 0.0
    %v2549 = vmax.f32 %v2048, 0.0
    %v2550 = vmax.f32 %v1064, 0.0
    %v2551 = vmax.f32 %v1393, 0.0
    %v2552 = vmax.f32 %v1722, 0.0
    %v2553 = vmax.f32 %v2051, 0.0
    %v2554 = vmax.f32 %v1066, 0.0
    %v2555 = vmax.f32 %v1395, 0.0
    %v2556 = vmax.f32 %v1724, 0.0
    %v2557 = vmax.f32 %v2053, 0.0
    %v2558 = vmax.f32 %v1069, 0.0
    %v2559 = vmax.f32 %v1398, 0.0
    %v2560 = vmax.f32 %v1727, 0.0
    %v2561 = vmax.f32 %v2056, 0.0
    %v2562 = vmax.f32 %v1071, 0.0
    %v2563 = vmax.f32 %v1400, 0.0
    %v2564 = vmax.f32 %v1729, 0.0
    %v2565 = vmax.f32 %v2058, 0.0
    %v2566 = vmax.f32 %v1074, 0.0
    %v2567 = vmax.f32 %v1403, 0.0
    %v2568 = vmax.f32 %v1732, 0.0
    %v2569 = vmax.f32 %v2061, 0.0
    %v2570 = vmax.f32 %v1076, 0.0
    %v2571 = vmax.f32 %v1405, 0.0
    %v2572 = vmax.f32 %v1734, 0.0
    %v2573 = vmax.f32 %v2063, 0.0
    %v2574 = vmax.f32 %v1079, 0.0
    %v2575 = vmax.f32 %v1408, 0.0
    %v2576 = vmax.f32 %v1737, 0.0
    %v2577 = vmax.f32 %v2066, 0.0
    %v2578 = vmax.f32 %v1081, 0.0
    %v2579 = vmax.f32 %v1410, 0.0
    %v2580 = vmax.f32 %v1739, 0.0
    %v2581 = vmax.f32 %v2068, 0.0
    %v2582 = vpack.c.bf16 %v2074, %v2070
    %v2583 = vpack.c.bf16 %v2075, %v2071
    %v2584 = vpack.c.bf16 %v2076, %v2072
    %v2585 = vpack.c.bf16 %v2077, %v2073
    %v2586 = vpack.c.bf16 %v2082, %v2078
    %v2587 = vpack.c.bf16 %v2083, %v2079
    %v2588 = vpack.c.bf16 %v2084, %v2080
    %v2589 = vpack.c.bf16 %v2085, %v2081
    %v2590 = vpack.c.bf16 %v2090, %v2086
    %v2591 = vpack.c.bf16 %v2091, %v2087
    %v2592 = vpack.c.bf16 %v2092, %v2088
    %v2593 = vpack.c.bf16 %v2093, %v2089
    %v2594 = vpack.c.bf16 %v2098, %v2094
    %v2595 = vpack.c.bf16 %v2099, %v2095
    %v2596 = vpack.c.bf16 %v2100, %v2096
    %v2597 = vpack.c.bf16 %v2101, %v2097
    %v2598 = vpack.c.bf16 %v2106, %v2102
    %v2599 = vpack.c.bf16 %v2107, %v2103
    %v2600 = vpack.c.bf16 %v2108, %v2104
    %v2601 = vpack.c.bf16 %v2109, %v2105
    %v2602 = vpack.c.bf16 %v2114, %v2110
    %v2603 = vpack.c.bf16 %v2115, %v2111
    %v2604 = vpack.c.bf16 %v2116, %v2112
    %v2605 = vpack.c.bf16 %v2117, %v2113
    %v2606 = vpack.c.bf16 %v2122, %v2118
    %v2607 = vpack.c.bf16 %v2123, %v2119
    %v2608 = vpack.c.bf16 %v2124, %v2120
    %v2609 = vpack.c.bf16 %v2125, %v2121
    %v2610 = vpack.c.bf16 %v2130, %v2126
    %v2611 = vpack.c.bf16 %v2131, %v2127
    %v2612 = vpack.c.bf16 %v2132, %v2128
    %v2613 = vpack.c.bf16 %v2133, %v2129
    %v2614 = vpack.c.bf16 %v2138, %v2134
    %v2615 = vpack.c.bf16 %v2139, %v2135
    %v2616 = vpack.c.bf16 %v2140, %v2136
    %v2617 = vpack.c.bf16 %v2141, %v2137
    %v2618 = vpack.c.bf16 %v2146, %v2142
    %v2619 = vpack.c.bf16 %v2147, %v2143
    %v2620 = vpack.c.bf16 %v2148, %v2144
    %v2621 = vpack.c.bf16 %v2149, %v2145
    %v2622 = vpack.c.bf16 %v2154, %v2150
    %v2623 = vpack.c.bf16 %v2155, %v2151
    %v2624 = vpack.c.bf16 %v2156, %v2152
    %v2625 = vpack.c.bf16 %v2157, %v2153
    %v2626 = vpack.c.bf16 %v2162, %v2158
    %v2627 = vpack.c.bf16 %v2163, %v2159
    %v2628 = vpack.c.bf16 %v2164, %v2160
    %v2629 = vpack.c.bf16 %v2165, %v2161
    %v2630 = vpack.c.bf16 %v2170, %v2166
    %v2631 = vpack.c.bf16 %v2171, %v2167
    %v2632 = vpack.c.bf16 %v2172, %v2168
    %v2633 = vpack.c.bf16 %v2173, %v2169
    %v2634 = vpack.c.bf16 %v2178, %v2174
    %v2635 = vpack.c.bf16 %v2179, %v2175
    %v2636 = vpack.c.bf16 %v2180, %v2176
    %v2637 = vpack.c.bf16 %v2181, %v2177
    %v2638 = vpack.c.bf16 %v2186, %v2182
    %v2639 = vpack.c.bf16 %v2187, %v2183
    %v2640 = vpack.c.bf16 %v2188, %v2184
    %v2641 = vpack.c.bf16 %v2189, %v2185
    %v2642 = vpack.c.bf16 %v2194, %v2190
    %v2643 = vpack.c.bf16 %v2195, %v2191
    %v2644 = vpack.c.bf16 %v2196, %v2192
    %v2645 = vpack.c.bf16 %v2197, %v2193
    %v2646 = vpack.c.bf16 %v2202, %v2198
    %v2647 = vpack.c.bf16 %v2203, %v2199
    %v2648 = vpack.c.bf16 %v2204, %v2200
    %v2649 = vpack.c.bf16 %v2205, %v2201
    %v2650 = vpack.c.bf16 %v2210, %v2206
    %v2651 = vpack.c.bf16 %v2211, %v2207
    %v2652 = vpack.c.bf16 %v2212, %v2208
    %v2653 = vpack.c.bf16 %v2213, %v2209
    %v2654 = vpack.c.bf16 %v2218, %v2214
    %v2655 = vpack.c.bf16 %v2219, %v2215
    %v2656 = vpack.c.bf16 %v2220, %v2216
    %v2657 = vpack.c.bf16 %v2221, %v2217
    %v2658 = vpack.c.bf16 %v2226, %v2222
    %v2659 = vpack.c.bf16 %v2227, %v2223
    %v2660 = vpack.c.bf16 %v2228, %v2224
    %v2661 = vpack.c.bf16 %v2229, %v2225
    %v2662 = vpack.c.bf16 %v2234, %v2230
    %v2663 = vpack.c.bf16 %v2235, %v2231
    %v2664 = vpack.c.bf16 %v2236, %v2232
    %v2665 = vpack.c.bf16 %v2237, %v2233
    %v2666 = vpack.c.bf16 %v2242, %v2238
    %v2667 = vpack.c.bf16 %v2243, %v2239
    %v2668 = vpack.c.bf16 %v2244, %v2240
    %v2669 = vpack.c.bf16 %v2245, %v2241
    %v2670 = vpack.c.bf16 %v2250, %v2246
    %v2671 = vpack.c.bf16 %v2251, %v2247
    %v2672 = vpack.c.bf16 %v2252, %v2248
    %v2673 = vpack.c.bf16 %v2253, %v2249
    %v2674 = vpack.c.bf16 %v2258, %v2254
    %v2675 = vpack.c.bf16 %v2259, %v2255
    %v2676 = vpack.c.bf16 %v2260, %v2256
    %v2677 = vpack.c.bf16 %v2261, %v2257
    %v2678 = vpack.c.bf16 %v2266, %v2262
    %v2679 = vpack.c.bf16 %v2267, %v2263
    %v2680 = vpack.c.bf16 %v2268, %v2264
    %v2681 = vpack.c.bf16 %v2269, %v2265
    %v2682 = vpack.c.bf16 %v2274, %v2270
    %v2683 = vpack.c.bf16 %v2275, %v2271
    %v2684 = vpack.c.bf16 %v2276, %v2272
    %v2685 = vpack.c.bf16 %v2277, %v2273
    %v2686 = vpack.c.bf16 %v2282, %v2278
    %v2687 = vpack.c.bf16 %v2283, %v2279
    %v2688 = vpack.c.bf16 %v2284, %v2280
    %v2689 = vpack.c.bf16 %v2285, %v2281
    %v2690 = vpack.c.bf16 %v2290, %v2286
    %v2691 = vpack.c.bf16 %v2291, %v2287
    %v2692 = vpack.c.bf16 %v2292, %v2288
    %v2693 = vpack.c.bf16 %v2293, %v2289
    %v2694 = vpack.c.bf16 %v2298, %v2294
    %v2695 = vpack.c.bf16 %v2299, %v2295
    %v2696 = vpack.c.bf16 %v2300, %v2296
    %v2697 = vpack.c.bf16 %v2301, %v2297
    %v2698 = vpack.c.bf16 %v2306, %v2302
    %v2699 = vpack.c.bf16 %v2307, %v2303
    %v2700 = vpack.c.bf16 %v2308, %v2304
    %v2701 = vpack.c.bf16 %v2309, %v2305
    %v2702 = vpack.c.bf16 %v2314, %v2310
    %v2703 = vpack.c.bf16 %v2315, %v2311
    %v2704 = vpack.c.bf16 %v2316, %v2312
    %v2705 = vpack.c.bf16 %v2317, %v2313
    %v2706 = vpack.c.bf16 %v2322, %v2318
    %v2707 = vpack.c.bf16 %v2323, %v2319
    %v2708 = vpack.c.bf16 %v2324, %v2320
    %v2709 = vpack.c.bf16 %v2325, %v2321
    %v2710 = vpack.c.bf16 %v2330, %v2326
    %v2711 = vpack.c.bf16 %v2331, %v2327
    %v2712 = vpack.c.bf16 %v2332, %v2328
    %v2713 = vpack.c.bf16 %v2333, %v2329
    %v2714 = vpack.c.bf16 %v2338, %v2334
    %v2715 = vpack.c.bf16 %v2339, %v2335
    %v2716 = vpack.c.bf16 %v2340, %v2336
    %v2717 = vpack.c.bf16 %v2341, %v2337
    %v2718 = vpack.c.bf16 %v2346, %v2342
    %v2719 = vpack.c.bf16 %v2347, %v2343
    %v2720 = vpack.c.bf16 %v2348, %v2344
    %v2721 = vpack.c.bf16 %v2349, %v2345
    %v2722 = vpack.c.bf16 %v2354, %v2350
    %v2723 = vpack.c.bf16 %v2355, %v2351
    %v2724 = vpack.c.bf16 %v2356, %v2352
    %v2725 = vpack.c.bf16 %v2357, %v2353
    %v2726 = vpack.c.bf16 %v2362, %v2358
    %v2727 = vpack.c.bf16 %v2363, %v2359
    %v2728 = vpack.c.bf16 %v2364, %v2360
    %v2729 = vpack.c.bf16 %v2365, %v2361
    %v2730 = vpack.c.bf16 %v2370, %v2366
    %v2731 = vpack.c.bf16 %v2371, %v2367
    %v2732 = vpack.c.bf16 %v2372, %v2368
    %v2733 = vpack.c.bf16 %v2373, %v2369
    %v2734 = vpack.c.bf16 %v2378, %v2374
    %v2735 = vpack.c.bf16 %v2379, %v2375
    %v2736 = vpack.c.bf16 %v2380, %v2376
    %v2737 = vpack.c.bf16 %v2381, %v2377
    %v2738 = vpack.c.bf16 %v2386, %v2382
    %v2739 = vpack.c.bf16 %v2387, %v2383
    %v2740 = vpack.c.bf16 %v2388, %v2384
    %v2741 = vpack.c.bf16 %v2389, %v2385
    %v2742 = vpack.c.bf16 %v2394, %v2390
    %v2743 = vpack.c.bf16 %v2395, %v2391
    %v2744 = vpack.c.bf16 %v2396, %v2392
    %v2745 = vpack.c.bf16 %v2397, %v2393
    %v2746 = vpack.c.bf16 %v2402, %v2398
    %v2747 = vpack.c.bf16 %v2403, %v2399
    %v2748 = vpack.c.bf16 %v2404, %v2400
    %v2749 = vpack.c.bf16 %v2405, %v2401
    %v2750 = vpack.c.bf16 %v2410, %v2406
    %v2751 = vpack.c.bf16 %v2411, %v2407
    %v2752 = vpack.c.bf16 %v2412, %v2408
    %v2753 = vpack.c.bf16 %v2413, %v2409
    %v2754 = vpack.c.bf16 %v2418, %v2414
    %v2755 = vpack.c.bf16 %v2419, %v2415
    %v2756 = vpack.c.bf16 %v2420, %v2416
    %v2757 = vpack.c.bf16 %v2421, %v2417
    %v2758 = vpack.c.bf16 %v2426, %v2422
    %v2759 = vpack.c.bf16 %v2427, %v2423
    %v2760 = vpack.c.bf16 %v2428, %v2424
    %v2761 = vpack.c.bf16 %v2429, %v2425
    %v2762 = vpack.c.bf16 %v2434, %v2430
    %v2763 = vpack.c.bf16 %v2435, %v2431
    %v2764 = vpack.c.bf16 %v2436, %v2432
    %v2765 = vpack.c.bf16 %v2437, %v2433
    %v2766 = vpack.c.bf16 %v2442, %v2438
    %v2767 = vpack.c.bf16 %v2443, %v2439
    %v2768 = vpack.c.bf16 %v2444, %v2440
    %v2769 = vpack.c.bf16 %v2445, %v2441
    %v2770 = vpack.c.bf16 %v2450, %v2446
    %v2771 = vpack.c.bf16 %v2451, %v2447
    %v2772 = vpack.c.bf16 %v2452, %v2448
    %v2773 = vpack.c.bf16 %v2453, %v2449
    %v2774 = vpack.c.bf16 %v2458, %v2454
    %v2775 = vpack.c.bf16 %v2459, %v2455
    %v2776 = vpack.c.bf16 %v2460, %v2456
    %v2777 = vpack.c.bf16 %v2461, %v2457
    %v2778 = vpack.c.bf16 %v2466, %v2462
    %v2779 = vpack.c.bf16 %v2467, %v2463
    %v2780 = vpack.c.bf16 %v2468, %v2464
    %v2781 = vpack.c.bf16 %v2469, %v2465
    %v2782 = vpack.c.bf16 %v2474, %v2470
    %v2783 = vpack.c.bf16 %v2475, %v2471
    %v2784 = vpack.c.bf16 %v2476, %v2472
    %v2785 = vpack.c.bf16 %v2477, %v2473
    %v2786 = vpack.c.bf16 %v2482, %v2478
    %v2787 = vpack.c.bf16 %v2483, %v2479
    %v2788 = vpack.c.bf16 %v2484, %v2480
    %v2789 = vpack.c.bf16 %v2485, %v2481
    %v2790 = vpack.c.bf16 %v2490, %v2486
    %v2791 = vpack.c.bf16 %v2491, %v2487
    %v2792 = vpack.c.bf16 %v2492, %v2488
    %v2793 = vpack.c.bf16 %v2493, %v2489
    %v2794 = vpack.c.bf16 %v2498, %v2494
    %v2795 = vpack.c.bf16 %v2499, %v2495
    %v2796 = vpack.c.bf16 %v2500, %v2496
    %v2797 = vpack.c.bf16 %v2501, %v2497
    %v2798 = vpack.c.bf16 %v2506, %v2502
    %v2799 = vpack.c.bf16 %v2507, %v2503
    %v2800 = vpack.c.bf16 %v2508, %v2504
    %v2801 = vpack.c.bf16 %v2509, %v2505
    %v2802 = vpack.c.bf16 %v2514, %v2510
    %v2803 = vpack.c.bf16 %v2515, %v2511
    %v2804 = vpack.c.bf16 %v2516, %v2512
    %v2805 = vpack.c.bf16 %v2517, %v2513
    %v2806 = vpack.c.bf16 %v2522, %v2518
    %v2807 = vpack.c.bf16 %v2523, %v2519
    %v2808 = vpack.c.bf16 %v2524, %v2520
    %v2809 = vpack.c.bf16 %v2525, %v2521
    %v2810 = vpack.c.bf16 %v2530, %v2526
    %v2811 = vpack.c.bf16 %v2531, %v2527
    %v2812 = vpack.c.bf16 %v2532, %v2528
    %v2813 = vpack.c.bf16 %v2533, %v2529
    %v2814 = vpack.c.bf16 %v2538, %v2534
    %v2815 = vpack.c.bf16 %v2539, %v2535
    %v2816 = vpack.c.bf16 %v2540, %v2536
    %v2817 = vpack.c.bf16 %v2541, %v2537
    %v2818 = vpack.c.bf16 %v2546, %v2542
    %v2819 = vpack.c.bf16 %v2547, %v2543
    %v2820 = vpack.c.bf16 %v2548, %v2544
    %v2821 = vpack.c.bf16 %v2549, %v2545
    %v2822 = vpack.c.bf16 %v2554, %v2550
    %v2823 = vpack.c.bf16 %v2555, %v2551
    %v2824 = vpack.c.bf16 %v2556, %v2552
    %v2825 = vpack.c.bf16 %v2557, %v2553
    %v2826 = vpack.c.bf16 %v2562, %v2558
    %v2827 = vpack.c.bf16 %v2563, %v2559
    %v2828 = vpack.c.bf16 %v2564, %v2560
    %v2829 = vpack.c.bf16 %v2565, %v2561
    %v2830 = vpack.c.bf16 %v2570, %v2566
    %v2831 = vpack.c.bf16 %v2571, %v2567
    %v2832 = vpack.c.bf16 %v2572, %v2568
    %v2833 = vpack.c.bf16 %v2573, %v2569
    %v2834 = vpack.c.bf16 %v2578, %v2574
    %v2835 = vpack.c.bf16 %v2579, %v2575
    %v2836 = vpack.c.bf16 %v2580, %v2576
    %v2837 = vpack.c.bf16 %v2581, %v2577
    %v2838 = vld [vmem:[%s3] sm:$0xf]
    %v2839 = vld [vmem:[%s3 + $0x4] sm:$0xf]
    %v2840 = vld [vmem:[%s3 + $0x8] sm:$0xf]
    %v2841 = vld [vmem:[%s3 + $0xc] sm:$0xf]
    %v2842 = vld [vmem:[%s3 + $0x10] sm:$0xf]
    %v2843 = vld [vmem:[%s3 + $0x14] sm:$0xf]
    %v2844 = vld [vmem:[%s3 + $0x18] sm:$0xf]
    %v2845 = vld [vmem:[%s3 + $0x1c] sm:$0xf]
    %v2846 = vld [vmem:[%s3 + $0x20] sm:$0xf]
    %v2847 = vld [vmem:[%s3 + $0x24] sm:$0xf]
    %v2848 = vld [vmem:[%s3 + $0x28] sm:$0xf]
    %v2849 = vld [vmem:[%s3 + $0x2c] sm:$0xf]
    %v2850 = vld [vmem:[%s3 + $0x30] sm:$0xf]
    %v2851 = vld [vmem:[%s3 + $0x34] sm:$0xf]
    %v2852 = vld [vmem:[%s3 + $0x38] sm:$0xf]
    %v2853 = vld [vmem:[%s3 + $0x3c] sm:$0xf]
    %v2854 = vld [vmem:[%s3 + $0x40] sm:$0xf]
    %v2855 = vld [vmem:[%s3 + $0x44] sm:$0xf]
    %v2856 = vld [vmem:[%s3 + $0x48] sm:$0xf]
    %v2857 = vld [vmem:[%s3 + $0x4c] sm:$0xf]
    %v2858 = vld [vmem:[%s3 + $0x50] sm:$0xf]
    %v2859 = vld [vmem:[%s3 + $0x54] sm:$0xf]
    %v2860 = vld [vmem:[%s3 + $0x58] sm:$0xf]
    %v2861 = vld [vmem:[%s3 + $0x5c] sm:$0xf]
    %v2862 = vld [vmem:[%s3 + $0x60] sm:$0xf]
    %v2863 = vld [vmem:[%s3 + $0x64] sm:$0xf]
    %v2864 = vld [vmem:[%s3 + $0x68] sm:$0xf]
    %v2865 = vld [vmem:[%s3 + $0x6c] sm:$0xf]
    %v2866 = vld [vmem:[%s3 + $0x70] sm:$0xf]
    %v2867 = vld [vmem:[%s3 + $0x74] sm:$0xf]
    %v2868 = vld [vmem:[%s3 + $0x78] sm:$0xf]
    %v2869 = vld [vmem:[%s3 + $0x7c] sm:$0xf]
    %v2870 = vld [vmem:[%s3 + $0x80] sm:$0xf]
    %v2871 = vld [vmem:[%s3 + $0x84] sm:$0xf]
    %v2872 = vld [vmem:[%s3 + $0x88] sm:$0xf]
    %v2873 = vld [vmem:[%s3 + $0x8c] sm:$0xf]
    %v2874 = vld [vmem:[%s3 + $0x90] sm:$0xf]
    %v2875 = vld [vmem:[%s3 + $0x94] sm:$0xf]
    %v2876 = vld [vmem:[%s3 + $0x98] sm:$0xf]
    %v2877 = vld [vmem:[%s3 + $0x9c] sm:$0xf]
    %v2878 = vld [vmem:[%s3 + $0xa0] sm:$0xf]
    %v2879 = vld [vmem:[%s3 + $0xa4] sm:$0xf]
    %v2880 = vld [vmem:[%s3 + $0xa8] sm:$0xf]
    %v2881 = vld [vmem:[%s3 + $0xac] sm:$0xf]
    %v2882 = vld [vmem:[%s3 + $0xb0] sm:$0xf]
    %v2883 = vld [vmem:[%s3 + $0xb4] sm:$0xf]
    %v2884 = vld [vmem:[%s3 + $0xb8] sm:$0xf]
    %v2885 = vld [vmem:[%s3 + $0xbc] sm:$0xf]
    %v2886 = vld [vmem:[%s3 + $0xc0] sm:$0xf]
    %v2887 = vld [vmem:[%s3 + $0xc4] sm:$0xf]
    %v2888 = vld [vmem:[%s3 + $0xc8] sm:$0xf]
    %v2889 = vld [vmem:[%s3 + $0xcc] sm:$0xf]
    %v2890 = vld [vmem:[%s3 + $0xd0] sm:$0xf]
    %v2891 = vld [vmem:[%s3 + $0xd4] sm:$0xf]
    %v2892 = vld [vmem:[%s3 + $0xd8] sm:$0xf]
    %v2893 = vld [vmem:[%s3 + $0xdc] sm:$0xf]
    %v2894 = vld [vmem:[%s3 + $0xe0] sm:$0xf]
    %v2895 = vld [vmem:[%s3 + $0xe4] sm:$0xf]
    %v2896 = vld [vmem:[%s3 + $0xe8] sm:$0xf]
    %v2897 = vld [vmem:[%s3 + $0xec] sm:$0xf]
    %v2898 = vld [vmem:[%s3 + $0xf0] sm:$0xf]
    %v2899 = vld [vmem:[%s3 + $0xf4] sm:$0xf]
    %v2900 = vld [vmem:[%s3 + $0xf8] sm:$0xf]
    %v2901 = vld [vmem:[%s3 + $0xfc] sm:$0xf]
    %v2966 = vunpack.c.l.b16 %v2838
    %v2967 = vunpack.c.l.b16 %v2839
    %v2968 = vunpack.c.l.b16 %v2840
    %v2969 = vunpack.c.l.b16 %v2841
    %v2970 = vunpack.c.l.b16 %v2842
    %v2971 = vunpack.c.l.b16 %v2843
    %v2972 = vunpack.c.l.b16 %v2844
    %v2973 = vunpack.c.l.b16 %v2845
    %v2974 = vunpack.c.l.b16 %v2846
    %v2975 = vunpack.c.l.b16 %v2847
    %v2976 = vunpack.c.l.b16 %v2848
    %v2977 = vunpack.c.l.b16 %v2849
    %v2978 = vunpack.c.l.b16 %v2850
    %v2979 = vunpack.c.l.b16 %v2851
    %v2980 = vunpack.c.l.b16 %v2852
    %v2981 = vunpack.c.l.b16 %v2853
    %v2982 = vunpack.c.l.b16 %v2854
    %v2983 = vunpack.c.l.b16 %v2855
    %v2984 = vunpack.c.l.b16 %v2856
    %v2985 = vunpack.c.l.b16 %v2857
    %v2986 = vunpack.c.l.b16 %v2858
    %v2987 = vunpack.c.l.b16 %v2859
    %v2988 = vunpack.c.l.b16 %v2860
    %v2989 = vunpack.c.l.b16 %v2861
    %v2990 = vunpack.c.l.b16 %v2862
    %v2991 = vunpack.c.l.b16 %v2863
    %v2992 = vunpack.c.l.b16 %v2864
    %v2993 = vunpack.c.l.b16 %v2865
    %v2994 = vunpack.c.l.b16 %v2866
    %v2995 = vunpack.c.l.b16 %v2867
    %v2996 = vunpack.c.l.b16 %v2868
    %v2997 = vunpack.c.l.b16 %v2869
    %v2998 = vunpack.c.l.b16 %v2870
    %v2999 = vunpack.c.l.b16 %v2871
    %v3000 = vunpack.c.l.b16 %v2872
    %v3001 = vunpack.c.l.b16 %v2873
    %v3002 = vunpack.c.l.b16 %v2874
    %v3003 = vunpack.c.l.b16 %v2875
    %v3004 = vunpack.c.l.b16 %v2876
    %v3005 = vunpack.c.l.b16 %v2877
    %v3006 = vunpack.c.l.b16 %v2878
    %v3007 = vunpack.c.l.b16 %v2879
    %v3008 = vunpack.c.l.b16 %v2880
    %v3009 = vunpack.c.l.b16 %v2881
    %v3010 = vunpack.c.l.b16 %v2882
    %v3011 = vunpack.c.l.b16 %v2883
    %v3012 = vunpack.c.l.b16 %v2884
    %v3013 = vunpack.c.l.b16 %v2885
    %v3014 = vunpack.c.l.b16 %v2886
    %v3015 = vunpack.c.l.b16 %v2887
    %v3016 = vunpack.c.l.b16 %v2888
    %v3017 = vunpack.c.l.b16 %v2889
    %v3018 = vunpack.c.l.b16 %v2890
    %v3019 = vunpack.c.l.b16 %v2891
    %v3020 = vunpack.c.l.b16 %v2892
    %v3021 = vunpack.c.l.b16 %v2893
    %v3022 = vunpack.c.l.b16 %v2894
    %v3023 = vunpack.c.l.b16 %v2895
    %v3024 = vunpack.c.l.b16 %v2896
    %v3025 = vunpack.c.l.b16 %v2897
    %v3026 = vunpack.c.l.b16 %v2898
    %v3027 = vunpack.c.l.b16 %v2899
    %v3028 = vunpack.c.l.b16 %v2900
    %v3029 = vunpack.c.l.b16 %v2901
    %v3030 = vpack.c.b16 %v2967, %v2966
    %v3031 = vpack.c.b16 %v2969, %v2968
    %v3032 = vpack.c.b16 %v2971, %v2970
    %v3033 = vpack.c.b16 %v2973, %v2972
    %v3034 = vpack.c.b16 %v2975, %v2974
    %v3035 = vpack.c.b16 %v2977, %v2976
    %v3036 = vpack.c.b16 %v2979, %v2978
    %v3037 = vpack.c.b16 %v2981, %v2980
    %v3038 = vpack.c.b16 %v2983, %v2982
    %v3039 = vpack.c.b16 %v2985, %v2984
    %v3040 = vpack.c.b16 %v2987, %v2986
    %v3041 = vpack.c.b16 %v2989, %v2988
    %v3042 = vpack.c.b16 %v2991, %v2990
    %v3043 = vpack.c.b16 %v2993, %v2992
    %v3044 = vpack.c.b16 %v2995, %v2994
    %v3045 = vpack.c.b16 %v2997, %v2996
    %v3046 = vpack.c.b16 %v2999, %v2998
    %v3047 = vpack.c.b16 %v3001, %v3000
    %v3048 = vpack.c.b16 %v3003, %v3002
    %v3049 = vpack.c.b16 %v3005, %v3004
    %v3050 = vpack.c.b16 %v3007, %v3006
    %v3051 = vpack.c.b16 %v3009, %v3008
    %v3052 = vpack.c.b16 %v3011, %v3010
    %v3053 = vpack.c.b16 %v3013, %v3012
    %v3054 = vpack.c.b16 %v3015, %v3014
    %v3055 = vpack.c.b16 %v3017, %v3016
    %v3056 = vpack.c.b16 %v3019, %v3018
    %v3057 = vpack.c.b16 %v3021, %v3020
    %v3058 = vpack.c.b16 %v3023, %v3022
    %v3059 = vpack.c.b16 %v3025, %v3024
    %v3060 = vpack.c.b16 %v3027, %v3026
    %v3061 = vpack.c.b16 %v3029, %v3028
    %3094 = vmatpush.bf16.msra.mxu0 %v3037
    %3095 = vmatpush.bf16.msra.mxu0 %v3036
    %3096 = vmatpush.bf16.msra.mxu0 %v3035
    %3097 = vmatpush.bf16.msra.mxu0 %v3034
    %3098 = vmatpush.bf16.msra.mxu0 %v3033
    %3099 = vmatpush.bf16.msra.mxu0 %v3032
    %3100 = vmatpush.bf16.msra.mxu0 %v3031
    %3101 = vmatpush.bf16.msra.mxu0 %v3030
    %3102 = vmatmul.bf16.gmra.mxu0 %v2582
    %v3103 = vpop.f32.mrf.mxu0
    %v3104 = vadd.f32 0.0, %v3103
    %v3105 = vpop.f32.mrf.mxu0
    %v3106 = vadd.f32 0.0, %v3105
    %3107 = vmatmul.bf16.gmra.mxu0 %v2586
    %v3108 = vpop.f32.mrf.mxu0
    %v3109 = vadd.f32 0.0, %v3108
    %v3110 = vpop.f32.mrf.mxu0
    %v3111 = vadd.f32 0.0, %v3110
    %3112 = vmatmul.bf16.gmra.mxu0 %v2590
    %v3113 = vpop.f32.mrf.mxu0
    %v3114 = vadd.f32 0.0, %v3113
    %v3115 = vpop.f32.mrf.mxu0
    %v3116 = vadd.f32 0.0, %v3115
    %3117 = vmatmul.bf16.gmra.mxu0 %v2594
    %v3118 = vpop.f32.mrf.mxu0
    %v3119 = vadd.f32 0.0, %v3118
    %v3120 = vpop.f32.mrf.mxu0
    %v3121 = vadd.f32 0.0, %v3120
    %3122 = vmatmul.bf16.gmra.mxu0 %v2598
    %v3123 = vpop.f32.mrf.mxu0
    %v3124 = vadd.f32 0.0, %v3123
    %v3125 = vpop.f32.mrf.mxu0
    %v3126 = vadd.f32 0.0, %v3125
    %3127 = vmatmul.bf16.gmra.mxu0 %v2602
    %v3128 = vpop.f32.mrf.mxu0
    %v3129 = vadd.f32 0.0, %v3128
    %v3130 = vpop.f32.mrf.mxu0
    %v3131 = vadd.f32 0.0, %v3130
    %3132 = vmatmul.bf16.gmra.mxu0 %v2606
    %v3133 = vpop.f32.mrf.mxu0
    %v3134 = vadd.f32 0.0, %v3133
    %v3135 = vpop.f32.mrf.mxu0
    %v3136 = vadd.f32 0.0, %v3135
    %3137 = vmatmul.bf16.gmra.mxu0 %v2610
    %v3138 = vpop.f32.mrf.mxu0
    %v3139 = vadd.f32 0.0, %v3138
    %v3140 = vpop.f32.mrf.mxu0
    %v3141 = vadd.f32 0.0, %v3140
    %3142 = vmatmul.bf16.gmra.mxu0 %v2614
    %v3143 = vpop.f32.mrf.mxu0
    %v3144 = vadd.f32 0.0, %v3143
    %v3145 = vpop.f32.mrf.mxu0
    %v3146 = vadd.f32 0.0, %v3145
    %3147 = vmatmul.bf16.gmra.mxu0 %v2618
    %v3148 = vpop.f32.mrf.mxu0
    %v3149 = vadd.f32 0.0, %v3148
    %v3150 = vpop.f32.mrf.mxu0
    %v3151 = vadd.f32 0.0, %v3150
    %3152 = vmatmul.bf16.gmra.mxu0 %v2622
    %v3153 = vpop.f32.mrf.mxu0
    %v3154 = vadd.f32 0.0, %v3153
    %v3155 = vpop.f32.mrf.mxu0
    %v3156 = vadd.f32 0.0, %v3155
    %3157 = vmatmul.bf16.gmra.mxu0 %v2626
    %v3158 = vpop.f32.mrf.mxu0
    %v3159 = vadd.f32 0.0, %v3158
    %v3160 = vpop.f32.mrf.mxu0
    %v3161 = vadd.f32 0.0, %v3160
    %3162 = vmatmul.bf16.gmra.mxu0 %v2630
    %v3163 = vpop.f32.mrf.mxu0
    %v3164 = vadd.f32 0.0, %v3163
    %v3165 = vpop.f32.mrf.mxu0
    %v3166 = vadd.f32 0.0, %v3165
    %3167 = vmatmul.bf16.gmra.mxu0 %v2634
    %v3168 = vpop.f32.mrf.mxu0
    %v3169 = vadd.f32 0.0, %v3168
    %v3170 = vpop.f32.mrf.mxu0
    %v3171 = vadd.f32 0.0, %v3170
    %3172 = vmatmul.bf16.gmra.mxu0 %v2638
    %v3173 = vpop.f32.mrf.mxu0
    %v3174 = vadd.f32 0.0, %v3173
    %v3175 = vpop.f32.mrf.mxu0
    %v3176 = vadd.f32 0.0, %v3175
    %3177 = vmatmul.bf16.gmra.mxu0 %v2642
    %v3178 = vpop.f32.mrf.mxu0
    %v3179 = vadd.f32 0.0, %v3178
    %v3180 = vpop.f32.mrf.mxu0
    %v3181 = vadd.f32 0.0, %v3180
    %3182 = vmatmul.bf16.gmra.mxu0 %v2646
    %v3183 = vpop.f32.mrf.mxu0
    %v3184 = vadd.f32 0.0, %v3183
    %v3185 = vpop.f32.mrf.mxu0
    %v3186 = vadd.f32 0.0, %v3185
    %3187 = vmatmul.bf16.gmra.mxu0 %v2650
    %v3188 = vpop.f32.mrf.mxu0
    %v3189 = vadd.f32 0.0, %v3188
    %v3190 = vpop.f32.mrf.mxu0
    %v3191 = vadd.f32 0.0, %v3190
    %3192 = vmatmul.bf16.gmra.mxu0 %v2654
    %v3193 = vpop.f32.mrf.mxu0
    %v3194 = vadd.f32 0.0, %v3193
    %v3195 = vpop.f32.mrf.mxu0
    %v3196 = vadd.f32 0.0, %v3195
    %3197 = vmatmul.bf16.gmra.mxu0 %v2658
    %v3198 = vpop.f32.mrf.mxu0
    %v3199 = vadd.f32 0.0, %v3198
    %v3200 = vpop.f32.mrf.mxu0
    %v3201 = vadd.f32 0.0, %v3200
    %3202 = vmatmul.bf16.gmra.mxu0 %v2662
    %v3203 = vpop.f32.mrf.mxu0
    %v3204 = vadd.f32 0.0, %v3203
    %v3205 = vpop.f32.mrf.mxu0
    %v3206 = vadd.f32 0.0, %v3205
    %3207 = vmatmul.bf16.gmra.mxu0 %v2666
    %v3208 = vpop.f32.mrf.mxu0
    %v3209 = vadd.f32 0.0, %v3208
    %v3210 = vpop.f32.mrf.mxu0
    %v3211 = vadd.f32 0.0, %v3210
    %3212 = vmatmul.bf16.gmra.mxu0 %v2670
    %v3213 = vpop.f32.mrf.mxu0
    %v3214 = vadd.f32 0.0, %v3213
    %v3215 = vpop.f32.mrf.mxu0
    %v3216 = vadd.f32 0.0, %v3215
    %3217 = vmatmul.bf16.gmra.mxu0 %v2674
    %v3218 = vpop.f32.mrf.mxu0
    %v3219 = vadd.f32 0.0, %v3218
    %v3220 = vpop.f32.mrf.mxu0
    %v3221 = vadd.f32 0.0, %v3220
    %3222 = vmatmul.bf16.gmra.mxu0 %v2678
    %v3223 = vpop.f32.mrf.mxu0
    %v3224 = vadd.f32 0.0, %v3223
    %v3225 = vpop.f32.mrf.mxu0
    %v3226 = vadd.f32 0.0, %v3225
    %3227 = vmatmul.bf16.gmra.mxu0 %v2682
    %v3228 = vpop.f32.mrf.mxu0
    %v3229 = vadd.f32 0.0, %v3228
    %v3230 = vpop.f32.mrf.mxu0
    %v3231 = vadd.f32 0.0, %v3230
    %3232 = vmatmul.bf16.gmra.mxu0 %v2686
    %v3233 = vpop.f32.mrf.mxu0
    %v3234 = vadd.f32 0.0, %v3233
    %v3235 = vpop.f32.mrf.mxu0
    %v3236 = vadd.f32 0.0, %v3235
    %3237 = vmatmul.bf16.gmra.mxu0 %v2690
    %v3238 = vpop.f32.mrf.mxu0
    %v3239 = vadd.f32 0.0, %v3238
    %v3240 = vpop.f32.mrf.mxu0
    %v3241 = vadd.f32 0.0, %v3240
    %3242 = vmatmul.bf16.gmra.mxu0 %v2694
    %v3243 = vpop.f32.mrf.mxu0
    %v3244 = vadd.f32 0.0, %v3243
    %v3245 = vpop.f32.mrf.mxu0
    %v3246 = vadd.f32 0.0, %v3245
    %3247 = vmatmul.bf16.gmra.mxu0 %v2698
    %v3248 = vpop.f32.mrf.mxu0
    %v3249 = vadd.f32 0.0, %v3248
    %v3250 = vpop.f32.mrf.mxu0
    %v3251 = vadd.f32 0.0, %v3250
    %3252 = vmatmul.bf16.gmra.mxu0 %v2702
    %v3253 = vpop.f32.mrf.mxu0
    %v3254 = vadd.f32 0.0, %v3253
    %v3255 = vpop.f32.mrf.mxu0
    %v3256 = vadd.f32 0.0, %v3255
    %3257 = vmatmul.bf16.gmra.mxu0 %v2706
    %v3258 = vpop.f32.mrf.mxu0
    %v3259 = vadd.f32 0.0, %v3258
    %v3260 = vpop.f32.mrf.mxu0
    %v3261 = vadd.f32 0.0, %v3260
    %3262 = vmatmul.bf16.gmra.mxu0 %v2710
    %v3263 = vpop.f32.mrf.mxu0
    %v3264 = vadd.f32 0.0, %v3263
    %v3265 = vpop.f32.mrf.mxu0
    %v3266 = vadd.f32 0.0, %v3265
    %3267 = vmatmul.bf16.gmra.mxu0 %v2714
    %v3268 = vpop.f32.mrf.mxu0
    %v3269 = vadd.f32 0.0, %v3268
    %v3270 = vpop.f32.mrf.mxu0
    %v3271 = vadd.f32 0.0, %v3270
    %3272 = vmatmul.bf16.gmra.mxu0 %v2718
    %v3273 = vpop.f32.mrf.mxu0
    %v3274 = vadd.f32 0.0, %v3273
    %v3275 = vpop.f32.mrf.mxu0
    %v3276 = vadd.f32 0.0, %v3275
    %3277 = vmatmul.bf16.gmra.mxu0 %v2722
    %v3278 = vpop.f32.mrf.mxu0
    %v3279 = vadd.f32 0.0, %v3278
    %v3280 = vpop.f32.mrf.mxu0
    %v3281 = vadd.f32 0.0, %v3280
    %3282 = vmatmul.bf16.gmra.mxu0 %v2726
    %v3283 = vpop.f32.mrf.mxu0
    %v3284 = vadd.f32 0.0, %v3283
    %v3285 = vpop.f32.mrf.mxu0
    %v3286 = vadd.f32 0.0, %v3285
    %3287 = vmatmul.bf16.gmra.mxu0 %v2730
    %v3288 = vpop.f32.mrf.mxu0
    %v3289 = vadd.f32 0.0, %v3288
    %v3290 = vpop.f32.mrf.mxu0
    %v3291 = vadd.f32 0.0, %v3290
    %3292 = vmatmul.bf16.gmra.mxu0 %v2734
    %v3293 = vpop.f32.mrf.mxu0
    %v3294 = vadd.f32 0.0, %v3293
    %v3295 = vpop.f32.mrf.mxu0
    %v3296 = vadd.f32 0.0, %v3295
    %3297 = vmatmul.bf16.gmra.mxu0 %v2738
    %v3298 = vpop.f32.mrf.mxu0
    %v3299 = vadd.f32 0.0, %v3298
    %v3300 = vpop.f32.mrf.mxu0
    %v3301 = vadd.f32 0.0, %v3300
    %3302 = vmatmul.bf16.gmra.mxu0 %v2742
    %v3303 = vpop.f32.mrf.mxu0
    %v3304 = vadd.f32 0.0, %v3303
    %v3305 = vpop.f32.mrf.mxu0
    %v3306 = vadd.f32 0.0, %v3305
    %3307 = vmatmul.bf16.gmra.mxu0 %v2746
    %v3308 = vpop.f32.mrf.mxu0
    %v3309 = vadd.f32 0.0, %v3308
    %v3310 = vpop.f32.mrf.mxu0
    %v3311 = vadd.f32 0.0, %v3310
    %3312 = vmatmul.bf16.gmra.mxu0 %v2750
    %v3313 = vpop.f32.mrf.mxu0
    %v3314 = vadd.f32 0.0, %v3313
    %v3315 = vpop.f32.mrf.mxu0
    %v3316 = vadd.f32 0.0, %v3315
    %3317 = vmatmul.bf16.gmra.mxu0 %v2754
    %v3318 = vpop.f32.mrf.mxu0
    %v3319 = vadd.f32 0.0, %v3318
    %v3320 = vpop.f32.mrf.mxu0
    %v3321 = vadd.f32 0.0, %v3320
    %3322 = vmatmul.bf16.gmra.mxu0 %v2758
    %v3323 = vpop.f32.mrf.mxu0
    %v3324 = vadd.f32 0.0, %v3323
    %v3325 = vpop.f32.mrf.mxu0
    %v3326 = vadd.f32 0.0, %v3325
    %3327 = vmatmul.bf16.gmra.mxu0 %v2762
    %v3328 = vpop.f32.mrf.mxu0
    %v3329 = vadd.f32 0.0, %v3328
    %v3330 = vpop.f32.mrf.mxu0
    %v3331 = vadd.f32 0.0, %v3330
    %3332 = vmatmul.bf16.gmra.mxu0 %v2766
    %v3333 = vpop.f32.mrf.mxu0
    %v3334 = vadd.f32 0.0, %v3333
    %v3335 = vpop.f32.mrf.mxu0
    %v3336 = vadd.f32 0.0, %v3335
    %3337 = vmatmul.bf16.gmra.mxu0 %v2770
    %v3338 = vpop.f32.mrf.mxu0
    %v3339 = vadd.f32 0.0, %v3338
    %v3340 = vpop.f32.mrf.mxu0
    %v3341 = vadd.f32 0.0, %v3340
    %3342 = vmatmul.bf16.gmra.mxu0 %v2774
    %v3343 = vpop.f32.mrf.mxu0
    %v3344 = vadd.f32 0.0, %v3343
    %v3345 = vpop.f32.mrf.mxu0
    %v3346 = vadd.f32 0.0, %v3345
    %3347 = vmatmul.bf16.gmra.mxu0 %v2778
    %v3348 = vpop.f32.mrf.mxu0
    %v3349 = vadd.f32 0.0, %v3348
    %v3350 = vpop.f32.mrf.mxu0
    %v3351 = vadd.f32 0.0, %v3350
    %3352 = vmatmul.bf16.gmra.mxu0 %v2782
    %v3353 = vpop.f32.mrf.mxu0
    %v3354 = vadd.f32 0.0, %v3353
    %v3355 = vpop.f32.mrf.mxu0
    %v3356 = vadd.f32 0.0, %v3355
    %3357 = vmatmul.bf16.gmra.mxu0 %v2786
    %v3358 = vpop.f32.mrf.mxu0
    %v3359 = vadd.f32 0.0, %v3358
    %v3360 = vpop.f32.mrf.mxu0
    %v3361 = vadd.f32 0.0, %v3360
    %3362 = vmatmul.bf16.gmra.mxu0 %v2790
    %v3363 = vpop.f32.mrf.mxu0
    %v3364 = vadd.f32 0.0, %v3363
    %v3365 = vpop.f32.mrf.mxu0
    %v3366 = vadd.f32 0.0, %v3365
    %3367 = vmatmul.bf16.gmra.mxu0 %v2794
    %v3368 = vpop.f32.mrf.mxu0
    %v3369 = vadd.f32 0.0, %v3368
    %v3370 = vpop.f32.mrf.mxu0
    %v3371 = vadd.f32 0.0, %v3370
    %3372 = vmatmul.bf16.gmra.mxu0 %v2798
    %v3373 = vpop.f32.mrf.mxu0
    %v3374 = vadd.f32 0.0, %v3373
    %v3375 = vpop.f32.mrf.mxu0
    %v3376 = vadd.f32 0.0, %v3375
    %3377 = vmatmul.bf16.gmra.mxu0 %v2802
    %v3378 = vpop.f32.mrf.mxu0
    %v3379 = vadd.f32 0.0, %v3378
    %v3380 = vpop.f32.mrf.mxu0
    %v3381 = vadd.f32 0.0, %v3380
    %3382 = vmatmul.bf16.gmra.mxu0 %v2806
    %v3383 = vpop.f32.mrf.mxu0
    %v3384 = vadd.f32 0.0, %v3383
    %v3385 = vpop.f32.mrf.mxu0
    %v3386 = vadd.f32 0.0, %v3385
    %3387 = vmatmul.bf16.gmra.mxu0 %v2810
    %v3388 = vpop.f32.mrf.mxu0
    %v3389 = vadd.f32 0.0, %v3388
    %v3390 = vpop.f32.mrf.mxu0
    %v3391 = vadd.f32 0.0, %v3390
    %3392 = vmatmul.bf16.gmra.mxu0 %v2814
    %v3393 = vpop.f32.mrf.mxu0
    %v3394 = vadd.f32 0.0, %v3393
    %v3395 = vpop.f32.mrf.mxu0
    %v3396 = vadd.f32 0.0, %v3395
    %3397 = vmatmul.bf16.gmra.mxu0 %v2818
    %v3398 = vpop.f32.mrf.mxu0
    %v3399 = vadd.f32 0.0, %v3398
    %v3400 = vpop.f32.mrf.mxu0
    %v3401 = vadd.f32 0.0, %v3400
    %3402 = vmatmul.bf16.gmra.mxu0 %v2822
    %v3403 = vpop.f32.mrf.mxu0
    %v3404 = vadd.f32 0.0, %v3403
    %v3405 = vpop.f32.mrf.mxu0
    %v3406 = vadd.f32 0.0, %v3405
    %3407 = vmatmul.bf16.gmra.mxu0 %v2826
    %v3408 = vpop.f32.mrf.mxu0
    %v3409 = vadd.f32 0.0, %v3408
    %v3410 = vpop.f32.mrf.mxu0
    %v3411 = vadd.f32 0.0, %v3410
    %3412 = vmatmul.bf16.gmra.mxu0 %v2830
    %v3413 = vpop.f32.mrf.mxu0
    %v3414 = vadd.f32 0.0, %v3413
    %v3415 = vpop.f32.mrf.mxu0
    %v3416 = vadd.f32 0.0, %v3415
    %3417 = vmatmul.bf16.gmra.mxu0 %v2834
    %v3418 = vpop.f32.mrf.mxu0
    %v3419 = vadd.f32 0.0, %v3418
    %v3420 = vpop.f32.mrf.mxu0
    %v3421 = vadd.f32 0.0, %v3420
    %3422 = vdwg.mxu0
    %3423 = vmatpush.bf16.msra.mxu0 %v3045
    %3424 = vmatpush.bf16.msra.mxu0 %v3044
    %3425 = vmatpush.bf16.msra.mxu0 %v3043
    %3426 = vmatpush.bf16.msra.mxu0 %v3042
    %3427 = vmatpush.bf16.msra.mxu0 %v3041
    %3428 = vmatpush.bf16.msra.mxu0 %v3040
    %3429 = vmatpush.bf16.msra.mxu0 %v3039
    %3430 = vmatpush.bf16.msra.mxu0 %v3038
    %3431 = vmatmul.bf16.gmra.mxu0 %v2583
    %v3432 = vpop.f32.mrf.mxu0
    %v3433 = vadd.f32 %v3104, %v3432
    %v3434 = vpop.f32.mrf.mxu0
    %v3435 = vadd.f32 %v3106, %v3434
    %3436 = vmatmul.bf16.gmra.mxu0 %v2587
    %v3437 = vpop.f32.mrf.mxu0
    %v3438 = vadd.f32 %v3109, %v3437
    %v3439 = vpop.f32.mrf.mxu0
    %v3440 = vadd.f32 %v3111, %v3439
    %3441 = vmatmul.bf16.gmra.mxu0 %v2591
    %v3442 = vpop.f32.mrf.mxu0
    %v3443 = vadd.f32 %v3114, %v3442
    %v3444 = vpop.f32.mrf.mxu0
    %v3445 = vadd.f32 %v3116, %v3444
    %3446 = vmatmul.bf16.gmra.mxu0 %v2595
    %v3447 = vpop.f32.mrf.mxu0
    %v3448 = vadd.f32 %v3119, %v3447
    %v3449 = vpop.f32.mrf.mxu0
    %v3450 = vadd.f32 %v3121, %v3449
    %3451 = vmatmul.bf16.gmra.mxu0 %v2599
    %v3452 = vpop.f32.mrf.mxu0
    %v3453 = vadd.f32 %v3124, %v3452
    %v3454 = vpop.f32.mrf.mxu0
    %v3455 = vadd.f32 %v3126, %v3454
    %3456 = vmatmul.bf16.gmra.mxu0 %v2603
    %v3457 = vpop.f32.mrf.mxu0
    %v3458 = vadd.f32 %v3129, %v3457
    %v3459 = vpop.f32.mrf.mxu0
    %v3460 = vadd.f32 %v3131, %v3459
    %3461 = vmatmul.bf16.gmra.mxu0 %v2607
    %v3462 = vpop.f32.mrf.mxu0
    %v3463 = vadd.f32 %v3134, %v3462
    %v3464 = vpop.f32.mrf.mxu0
    %v3465 = vadd.f32 %v3136, %v3464
    %3466 = vmatmul.bf16.gmra.mxu0 %v2611
    %v3467 = vpop.f32.mrf.mxu0
    %v3468 = vadd.f32 %v3139, %v3467
    %v3469 = vpop.f32.mrf.mxu0
    %v3470 = vadd.f32 %v3141, %v3469
    %3471 = vmatmul.bf16.gmra.mxu0 %v2615
    %v3472 = vpop.f32.mrf.mxu0
    %v3473 = vadd.f32 %v3144, %v3472
    %v3474 = vpop.f32.mrf.mxu0
    %v3475 = vadd.f32 %v3146, %v3474
    %3476 = vmatmul.bf16.gmra.mxu0 %v2619
    %v3477 = vpop.f32.mrf.mxu0
    %v3478 = vadd.f32 %v3149, %v3477
    %v3479 = vpop.f32.mrf.mxu0
    %v3480 = vadd.f32 %v3151, %v3479
    %3481 = vmatmul.bf16.gmra.mxu0 %v2623
    %v3482 = vpop.f32.mrf.mxu0
    %v3483 = vadd.f32 %v3154, %v3482
    %v3484 = vpop.f32.mrf.mxu0
    %v3485 = vadd.f32 %v3156, %v3484
    %3486 = vmatmul.bf16.gmra.mxu0 %v2627
    %v3487 = vpop.f32.mrf.mxu0
    %v3488 = vadd.f32 %v3159, %v3487
    %v3489 = vpop.f32.mrf.mxu0
    %v3490 = vadd.f32 %v3161, %v3489
    %3491 = vmatmul.bf16.gmra.mxu0 %v2631
    %v3492 = vpop.f32.mrf.mxu0
    %v3493 = vadd.f32 %v3164, %v3492
    %v3494 = vpop.f32.mrf.mxu0
    %v3495 = vadd.f32 %v3166, %v3494
    %3496 = vmatmul.bf16.gmra.mxu0 %v2635
    %v3497 = vpop.f32.mrf.mxu0
    %v3498 = vadd.f32 %v3169, %v3497
    %v3499 = vpop.f32.mrf.mxu0
    %v3500 = vadd.f32 %v3171, %v3499
    %3501 = vmatmul.bf16.gmra.mxu0 %v2639
    %v3502 = vpop.f32.mrf.mxu0
    %v3503 = vadd.f32 %v3174, %v3502
    %v3504 = vpop.f32.mrf.mxu0
    %v3505 = vadd.f32 %v3176, %v3504
    %3506 = vmatmul.bf16.gmra.mxu0 %v2643
    %v3507 = vpop.f32.mrf.mxu0
    %v3508 = vadd.f32 %v3179, %v3507
    %v3509 = vpop.f32.mrf.mxu0
    %v3510 = vadd.f32 %v3181, %v3509
    %3511 = vmatmul.bf16.gmra.mxu0 %v2647
    %v3512 = vpop.f32.mrf.mxu0
    %v3513 = vadd.f32 %v3184, %v3512
    %v3514 = vpop.f32.mrf.mxu0
    %v3515 = vadd.f32 %v3186, %v3514
    %3516 = vmatmul.bf16.gmra.mxu0 %v2651
    %v3517 = vpop.f32.mrf.mxu0
    %v3518 = vadd.f32 %v3189, %v3517
    %v3519 = vpop.f32.mrf.mxu0
    %v3520 = vadd.f32 %v3191, %v3519
    %3521 = vmatmul.bf16.gmra.mxu0 %v2655
    %v3522 = vpop.f32.mrf.mxu0
    %v3523 = vadd.f32 %v3194, %v3522
    %v3524 = vpop.f32.mrf.mxu0
    %v3525 = vadd.f32 %v3196, %v3524
    %3526 = vmatmul.bf16.gmra.mxu0 %v2659
    %v3527 = vpop.f32.mrf.mxu0
    %v3528 = vadd.f32 %v3199, %v3527
    %v3529 = vpop.f32.mrf.mxu0
    %v3530 = vadd.f32 %v3201, %v3529
    %3531 = vmatmul.bf16.gmra.mxu0 %v2663
    %v3532 = vpop.f32.mrf.mxu0
    %v3533 = vadd.f32 %v3204, %v3532
    %v3534 = vpop.f32.mrf.mxu0
    %v3535 = vadd.f32 %v3206, %v3534
    %3536 = vmatmul.bf16.gmra.mxu0 %v2667
    %v3537 = vpop.f32.mrf.mxu0
    %v3538 = vadd.f32 %v3209, %v3537
    %v3539 = vpop.f32.mrf.mxu0
    %v3540 = vadd.f32 %v3211, %v3539
    %3541 = vmatmul.bf16.gmra.mxu0 %v2671
    %v3542 = vpop.f32.mrf.mxu0
    %v3543 = vadd.f32 %v3214, %v3542
    %v3544 = vpop.f32.mrf.mxu0
    %v3545 = vadd.f32 %v3216, %v3544
    %3546 = vmatmul.bf16.gmra.mxu0 %v2675
    %v3547 = vpop.f32.mrf.mxu0
    %v3548 = vadd.f32 %v3219, %v3547
    %v3549 = vpop.f32.mrf.mxu0
    %v3550 = vadd.f32 %v3221, %v3549
    %3551 = vmatmul.bf16.gmra.mxu0 %v2679
    %v3552 = vpop.f32.mrf.mxu0
    %v3553 = vadd.f32 %v3224, %v3552
    %v3554 = vpop.f32.mrf.mxu0
    %v3555 = vadd.f32 %v3226, %v3554
    %3556 = vmatmul.bf16.gmra.mxu0 %v2683
    %v3557 = vpop.f32.mrf.mxu0
    %v3558 = vadd.f32 %v3229, %v3557
    %v3559 = vpop.f32.mrf.mxu0
    %v3560 = vadd.f32 %v3231, %v3559
    %3561 = vmatmul.bf16.gmra.mxu0 %v2687
    %v3562 = vpop.f32.mrf.mxu0
    %v3563 = vadd.f32 %v3234, %v3562
    %v3564 = vpop.f32.mrf.mxu0
    %v3565 = vadd.f32 %v3236, %v3564
    %3566 = vmatmul.bf16.gmra.mxu0 %v2691
    %v3567 = vpop.f32.mrf.mxu0
    %v3568 = vadd.f32 %v3239, %v3567
    %v3569 = vpop.f32.mrf.mxu0
    %v3570 = vadd.f32 %v3241, %v3569
    %3571 = vmatmul.bf16.gmra.mxu0 %v2695
    %v3572 = vpop.f32.mrf.mxu0
    %v3573 = vadd.f32 %v3244, %v3572
    %v3574 = vpop.f32.mrf.mxu0
    %v3575 = vadd.f32 %v3246, %v3574
    %3576 = vmatmul.bf16.gmra.mxu0 %v2699
    %v3577 = vpop.f32.mrf.mxu0
    %v3578 = vadd.f32 %v3249, %v3577
    %v3579 = vpop.f32.mrf.mxu0
    %v3580 = vadd.f32 %v3251, %v3579
    %3581 = vmatmul.bf16.gmra.mxu0 %v2703
    %v3582 = vpop.f32.mrf.mxu0
    %v3583 = vadd.f32 %v3254, %v3582
    %v3584 = vpop.f32.mrf.mxu0
    %v3585 = vadd.f32 %v3256, %v3584
    %3586 = vmatmul.bf16.gmra.mxu0 %v2707
    %v3587 = vpop.f32.mrf.mxu0
    %v3588 = vadd.f32 %v3259, %v3587
    %v3589 = vpop.f32.mrf.mxu0
    %v3590 = vadd.f32 %v3261, %v3589
    %3591 = vmatmul.bf16.gmra.mxu0 %v2711
    %v3592 = vpop.f32.mrf.mxu0
    %v3593 = vadd.f32 %v3264, %v3592
    %v3594 = vpop.f32.mrf.mxu0
    %v3595 = vadd.f32 %v3266, %v3594
    %3596 = vmatmul.bf16.gmra.mxu0 %v2715
    %v3597 = vpop.f32.mrf.mxu0
    %v3598 = vadd.f32 %v3269, %v3597
    %v3599 = vpop.f32.mrf.mxu0
    %v3600 = vadd.f32 %v3271, %v3599
    %3601 = vmatmul.bf16.gmra.mxu0 %v2719
    %v3602 = vpop.f32.mrf.mxu0
    %v3603 = vadd.f32 %v3274, %v3602
    %v3604 = vpop.f32.mrf.mxu0
    %v3605 = vadd.f32 %v3276, %v3604
    %3606 = vmatmul.bf16.gmra.mxu0 %v2723
    %v3607 = vpop.f32.mrf.mxu0
    %v3608 = vadd.f32 %v3279, %v3607
    %v3609 = vpop.f32.mrf.mxu0
    %v3610 = vadd.f32 %v3281, %v3609
    %3611 = vmatmul.bf16.gmra.mxu0 %v2727
    %v3612 = vpop.f32.mrf.mxu0
    %v3613 = vadd.f32 %v3284, %v3612
    %v3614 = vpop.f32.mrf.mxu0
    %v3615 = vadd.f32 %v3286, %v3614
    %3616 = vmatmul.bf16.gmra.mxu0 %v2731
    %v3617 = vpop.f32.mrf.mxu0
    %v3618 = vadd.f32 %v3289, %v3617
    %v3619 = vpop.f32.mrf.mxu0
    %v3620 = vadd.f32 %v3291, %v3619
    %3621 = vmatmul.bf16.gmra.mxu0 %v2735
    %v3622 = vpop.f32.mrf.mxu0
    %v3623 = vadd.f32 %v3294, %v3622
    %v3624 = vpop.f32.mrf.mxu0
    %v3625 = vadd.f32 %v3296, %v3624
    %3626 = vmatmul.bf16.gmra.mxu0 %v2739
    %v3627 = vpop.f32.mrf.mxu0
    %v3628 = vadd.f32 %v3299, %v3627
    %v3629 = vpop.f32.mrf.mxu0
    %v3630 = vadd.f32 %v3301, %v3629
    %3631 = vmatmul.bf16.gmra.mxu0 %v2743
    %v3632 = vpop.f32.mrf.mxu0
    %v3633 = vadd.f32 %v3304, %v3632
    %v3634 = vpop.f32.mrf.mxu0
    %v3635 = vadd.f32 %v3306, %v3634
    %3636 = vmatmul.bf16.gmra.mxu0 %v2747
    %v3637 = vpop.f32.mrf.mxu0
    %v3638 = vadd.f32 %v3309, %v3637
    %v3639 = vpop.f32.mrf.mxu0
    %v3640 = vadd.f32 %v3311, %v3639
    %3641 = vmatmul.bf16.gmra.mxu0 %v2751
    %v3642 = vpop.f32.mrf.mxu0
    %v3643 = vadd.f32 %v3314, %v3642
    %v3644 = vpop.f32.mrf.mxu0
    %v3645 = vadd.f32 %v3316, %v3644
    %3646 = vmatmul.bf16.gmra.mxu0 %v2755
    %v3647 = vpop.f32.mrf.mxu0
    %v3648 = vadd.f32 %v3319, %v3647
    %v3649 = vpop.f32.mrf.mxu0
    %v3650 = vadd.f32 %v3321, %v3649
    %3651 = vmatmul.bf16.gmra.mxu0 %v2759
    %v3652 = vpop.f32.mrf.mxu0
    %v3653 = vadd.f32 %v3324, %v3652
    %v3654 = vpop.f32.mrf.mxu0
    %v3655 = vadd.f32 %v3326, %v3654
    %3656 = vmatmul.bf16.gmra.mxu0 %v2763
    %v3657 = vpop.f32.mrf.mxu0
    %v3658 = vadd.f32 %v3329, %v3657
    %v3659 = vpop.f32.mrf.mxu0
    %v3660 = vadd.f32 %v3331, %v3659
    %3661 = vmatmul.bf16.gmra.mxu0 %v2767
    %v3662 = vpop.f32.mrf.mxu0
    %v3663 = vadd.f32 %v3334, %v3662
    %v3664 = vpop.f32.mrf.mxu0
    %v3665 = vadd.f32 %v3336, %v3664
    %3666 = vmatmul.bf16.gmra.mxu0 %v2771
    %v3667 = vpop.f32.mrf.mxu0
    %v3668 = vadd.f32 %v3339, %v3667
    %v3669 = vpop.f32.mrf.mxu0
    %v3670 = vadd.f32 %v3341, %v3669
    %3671 = vmatmul.bf16.gmra.mxu0 %v2775
    %v3672 = vpop.f32.mrf.mxu0
    %v3673 = vadd.f32 %v3344, %v3672
    %v3674 = vpop.f32.mrf.mxu0
    %v3675 = vadd.f32 %v3346, %v3674
    %3676 = vmatmul.bf16.gmra.mxu0 %v2779
    %v3677 = vpop.f32.mrf.mxu0
    %v3678 = vadd.f32 %v3349, %v3677
    %v3679 = vpop.f32.mrf.mxu0
    %v3680 = vadd.f32 %v3351, %v3679
    %3681 = vmatmul.bf16.gmra.mxu0 %v2783
    %v3682 = vpop.f32.mrf.mxu0
    %v3683 = vadd.f32 %v3354, %v3682
    %v3684 = vpop.f32.mrf.mxu0
    %v3685 = vadd.f32 %v3356, %v3684
    %3686 = vmatmul.bf16.gmra.mxu0 %v2787
    %v3687 = vpop.f32.mrf.mxu0
    %v3688 = vadd.f32 %v3359, %v3687
    %v3689 = vpop.f32.mrf.mxu0
    %v3690 = vadd.f32 %v3361, %v3689
    %3691 = vmatmul.bf16.gmra.mxu0 %v2791
    %v3692 = vpop.f32.mrf.mxu0
    %v3693 = vadd.f32 %v3364, %v3692
    %v3694 = vpop.f32.mrf.mxu0
    %v3695 = vadd.f32 %v3366, %v3694
    %3696 = vmatmul.bf16.gmra.mxu0 %v2795
    %v3697 = vpop.f32.mrf.mxu0
    %v3698 = vadd.f32 %v3369, %v3697
    %v3699 = vpop.f32.mrf.mxu0
    %v3700 = vadd.f32 %v3371, %v3699
    %3701 = vmatmul.bf16.gmra.mxu0 %v2799
    %v3702 = vpop.f32.mrf.mxu0
    %v3703 = vadd.f32 %v3374, %v3702
    %v3704 = vpop.f32.mrf.mxu0
    %v3705 = vadd.f32 %v3376, %v3704
    %3706 = vmatmul.bf16.gmra.mxu0 %v2803
    %v3707 = vpop.f32.mrf.mxu0
    %v3708 = vadd.f32 %v3379, %v3707
    %v3709 = vpop.f32.mrf.mxu0
    %v3710 = vadd.f32 %v3381, %v3709
    %3711 = vmatmul.bf16.gmra.mxu0 %v2807
    %v3712 = vpop.f32.mrf.mxu0
    %v3713 = vadd.f32 %v3384, %v3712
    %v3714 = vpop.f32.mrf.mxu0
    %v3715 = vadd.f32 %v3386, %v3714
    %3716 = vmatmul.bf16.gmra.mxu0 %v2811
    %v3717 = vpop.f32.mrf.mxu0
    %v3718 = vadd.f32 %v3389, %v3717
    %v3719 = vpop.f32.mrf.mxu0
    %v3720 = vadd.f32 %v3391, %v3719
    %3721 = vmatmul.bf16.gmra.mxu0 %v2815
    %v3722 = vpop.f32.mrf.mxu0
    %v3723 = vadd.f32 %v3394, %v3722
    %v3724 = vpop.f32.mrf.mxu0
    %v3725 = vadd.f32 %v3396, %v3724
    %3726 = vmatmul.bf16.gmra.mxu0 %v2819
    %v3727 = vpop.f32.mrf.mxu0
    %v3728 = vadd.f32 %v3399, %v3727
    %v3729 = vpop.f32.mrf.mxu0
    %v3730 = vadd.f32 %v3401, %v3729
    %3731 = vmatmul.bf16.gmra.mxu0 %v2823
    %v3732 = vpop.f32.mrf.mxu0
    %v3733 = vadd.f32 %v3404, %v3732
    %v3734 = vpop.f32.mrf.mxu0
    %v3735 = vadd.f32 %v3406, %v3734
    %3736 = vmatmul.bf16.gmra.mxu0 %v2827
    %v3737 = vpop.f32.mrf.mxu0
    %v3738 = vadd.f32 %v3409, %v3737
    %v3739 = vpop.f32.mrf.mxu0
    %v3740 = vadd.f32 %v3411, %v3739
    %3741 = vmatmul.bf16.gmra.mxu0 %v2831
    %v3742 = vpop.f32.mrf.mxu0
    %v3743 = vadd.f32 %v3414, %v3742
    %v3744 = vpop.f32.mrf.mxu0
    %v3745 = vadd.f32 %v3416, %v3744
    %3746 = vmatmul.bf16.gmra.mxu0 %v2835
    %v3747 = vpop.f32.mrf.mxu0
    %v3748 = vadd.f32 %v3419, %v3747
    %v3749 = vpop.f32.mrf.mxu0
    %v3750 = vadd.f32 %v3421, %v3749
    %3751 = vdwg.mxu0
    %3752 = vmatpush.bf16.msra.mxu0 %v3053
    %3753 = vmatpush.bf16.msra.mxu0 %v3052
    %3754 = vmatpush.bf16.msra.mxu0 %v3051
    %3755 = vmatpush.bf16.msra.mxu0 %v3050
    %3756 = vmatpush.bf16.msra.mxu0 %v3049
    %3757 = vmatpush.bf16.msra.mxu0 %v3048
    %3758 = vmatpush.bf16.msra.mxu0 %v3047
    %3759 = vmatpush.bf16.msra.mxu0 %v3046
    %3760 = vmatmul.bf16.gmra.mxu0 %v2584
    %v3761 = vpop.f32.mrf.mxu0
    %v3762 = vadd.f32 %v3433, %v3761
    %v3763 = vpop.f32.mrf.mxu0
    %v3764 = vadd.f32 %v3435, %v3763
    %3765 = vmatmul.bf16.gmra.mxu0 %v2588
    %v3766 = vpop.f32.mrf.mxu0
    %v3767 = vadd.f32 %v3438, %v3766
    %v3768 = vpop.f32.mrf.mxu0
    %v3769 = vadd.f32 %v3440, %v3768
    %3770 = vmatmul.bf16.gmra.mxu0 %v2592
    %v3771 = vpop.f32.mrf.mxu0
    %v3772 = vadd.f32 %v3443, %v3771
    %v3773 = vpop.f32.mrf.mxu0
    %v3774 = vadd.f32 %v3445, %v3773
    %3775 = vmatmul.bf16.gmra.mxu0 %v2596
    %v3776 = vpop.f32.mrf.mxu0
    %v3777 = vadd.f32 %v3448, %v3776
    %v3778 = vpop.f32.mrf.mxu0
    %v3779 = vadd.f32 %v3450, %v3778
    %3780 = vmatmul.bf16.gmra.mxu0 %v2600
    %v3781 = vpop.f32.mrf.mxu0
    %v3782 = vadd.f32 %v3453, %v3781
    %v3783 = vpop.f32.mrf.mxu0
    %v3784 = vadd.f32 %v3455, %v3783
    %3785 = vmatmul.bf16.gmra.mxu0 %v2604
    %v3786 = vpop.f32.mrf.mxu0
    %v3787 = vadd.f32 %v3458, %v3786
    %v3788 = vpop.f32.mrf.mxu0
    %v3789 = vadd.f32 %v3460, %v3788
    %3790 = vmatmul.bf16.gmra.mxu0 %v2608
    %v3791 = vpop.f32.mrf.mxu0
    %v3792 = vadd.f32 %v3463, %v3791
    %v3793 = vpop.f32.mrf.mxu0
    %v3794 = vadd.f32 %v3465, %v3793
    %3795 = vmatmul.bf16.gmra.mxu0 %v2612
    %v3796 = vpop.f32.mrf.mxu0
    %v3797 = vadd.f32 %v3468, %v3796
    %v3798 = vpop.f32.mrf.mxu0
    %v3799 = vadd.f32 %v3470, %v3798
    %3800 = vmatmul.bf16.gmra.mxu0 %v2616
    %v3801 = vpop.f32.mrf.mxu0
    %v3802 = vadd.f32 %v3473, %v3801
    %v3803 = vpop.f32.mrf.mxu0
    %v3804 = vadd.f32 %v3475, %v3803
    %3805 = vmatmul.bf16.gmra.mxu0 %v2620
    %v3806 = vpop.f32.mrf.mxu0
    %v3807 = vadd.f32 %v3478, %v3806
    %v3808 = vpop.f32.mrf.mxu0
    %v3809 = vadd.f32 %v3480, %v3808
    %3810 = vmatmul.bf16.gmra.mxu0 %v2624
    %v3811 = vpop.f32.mrf.mxu0
    %v3812 = vadd.f32 %v3483, %v3811
    %v3813 = vpop.f32.mrf.mxu0
    %v3814 = vadd.f32 %v3485, %v3813
    %3815 = vmatmul.bf16.gmra.mxu0 %v2628
    %v3816 = vpop.f32.mrf.mxu0
    %v3817 = vadd.f32 %v3488, %v3816
    %v3818 = vpop.f32.mrf.mxu0
    %v3819 = vadd.f32 %v3490, %v3818
    %3820 = vmatmul.bf16.gmra.mxu0 %v2632
    %v3821 = vpop.f32.mrf.mxu0
    %v3822 = vadd.f32 %v3493, %v3821
    %v3823 = vpop.f32.mrf.mxu0
    %v3824 = vadd.f32 %v3495, %v3823
    %3825 = vmatmul.bf16.gmra.mxu0 %v2636
    %v3826 = vpop.f32.mrf.mxu0
    %v3827 = vadd.f32 %v3498, %v3826
    %v3828 = vpop.f32.mrf.mxu0
    %v3829 = vadd.f32 %v3500, %v3828
    %3830 = vmatmul.bf16.gmra.mxu0 %v2640
    %v3831 = vpop.f32.mrf.mxu0
    %v3832 = vadd.f32 %v3503, %v3831
    %v3833 = vpop.f32.mrf.mxu0
    %v3834 = vadd.f32 %v3505, %v3833
    %3835 = vmatmul.bf16.gmra.mxu0 %v2644
    %v3836 = vpop.f32.mrf.mxu0
    %v3837 = vadd.f32 %v3508, %v3836
    %v3838 = vpop.f32.mrf.mxu0
    %v3839 = vadd.f32 %v3510, %v3838
    %3840 = vmatmul.bf16.gmra.mxu0 %v2648
    %v3841 = vpop.f32.mrf.mxu0
    %v3842 = vadd.f32 %v3513, %v3841
    %v3843 = vpop.f32.mrf.mxu0
    %v3844 = vadd.f32 %v3515, %v3843
    %3845 = vmatmul.bf16.gmra.mxu0 %v2652
    %v3846 = vpop.f32.mrf.mxu0
    %v3847 = vadd.f32 %v3518, %v3846
    %v3848 = vpop.f32.mrf.mxu0
    %v3849 = vadd.f32 %v3520, %v3848
    %3850 = vmatmul.bf16.gmra.mxu0 %v2656
    %v3851 = vpop.f32.mrf.mxu0
    %v3852 = vadd.f32 %v3523, %v3851
    %v3853 = vpop.f32.mrf.mxu0
    %v3854 = vadd.f32 %v3525, %v3853
    %3855 = vmatmul.bf16.gmra.mxu0 %v2660
    %v3856 = vpop.f32.mrf.mxu0
    %v3857 = vadd.f32 %v3528, %v3856
    %v3858 = vpop.f32.mrf.mxu0
    %v3859 = vadd.f32 %v3530, %v3858
    %3860 = vmatmul.bf16.gmra.mxu0 %v2664
    %v3861 = vpop.f32.mrf.mxu0
    %v3862 = vadd.f32 %v3533, %v3861
    %v3863 = vpop.f32.mrf.mxu0
    %v3864 = vadd.f32 %v3535, %v3863
    %3865 = vmatmul.bf16.gmra.mxu0 %v2668
    %v3866 = vpop.f32.mrf.mxu0
    %v3867 = vadd.f32 %v3538, %v3866
    %v3868 = vpop.f32.mrf.mxu0
    %v3869 = vadd.f32 %v3540, %v3868
    %3870 = vmatmul.bf16.gmra.mxu0 %v2672
    %v3871 = vpop.f32.mrf.mxu0
    %v3872 = vadd.f32 %v3543, %v3871
    %v3873 = vpop.f32.mrf.mxu0
    %v3874 = vadd.f32 %v3545, %v3873
    %3875 = vmatmul.bf16.gmra.mxu0 %v2676
    %v3876 = vpop.f32.mrf.mxu0
    %v3877 = vadd.f32 %v3548, %v3876
    %v3878 = vpop.f32.mrf.mxu0
    %v3879 = vadd.f32 %v3550, %v3878
    %3880 = vmatmul.bf16.gmra.mxu0 %v2680
    %v3881 = vpop.f32.mrf.mxu0
    %v3882 = vadd.f32 %v3553, %v3881
    %v3883 = vpop.f32.mrf.mxu0
    %v3884 = vadd.f32 %v3555, %v3883
    %3885 = vmatmul.bf16.gmra.mxu0 %v2684
    %v3886 = vpop.f32.mrf.mxu0
    %v3887 = vadd.f32 %v3558, %v3886
    %v3888 = vpop.f32.mrf.mxu0
    %v3889 = vadd.f32 %v3560, %v3888
    %3890 = vmatmul.bf16.gmra.mxu0 %v2688
    %v3891 = vpop.f32.mrf.mxu0
    %v3892 = vadd.f32 %v3563, %v3891
    %v3893 = vpop.f32.mrf.mxu0
    %v3894 = vadd.f32 %v3565, %v3893
    %3895 = vmatmul.bf16.gmra.mxu0 %v2692
    %v3896 = vpop.f32.mrf.mxu0
    %v3897 = vadd.f32 %v3568, %v3896
    %v3898 = vpop.f32.mrf.mxu0
    %v3899 = vadd.f32 %v3570, %v3898
    %3900 = vmatmul.bf16.gmra.mxu0 %v2696
    %v3901 = vpop.f32.mrf.mxu0
    %v3902 = vadd.f32 %v3573, %v3901
    %v3903 = vpop.f32.mrf.mxu0
    %v3904 = vadd.f32 %v3575, %v3903
    %3905 = vmatmul.bf16.gmra.mxu0 %v2700
    %v3906 = vpop.f32.mrf.mxu0
    %v3907 = vadd.f32 %v3578, %v3906
    %v3908 = vpop.f32.mrf.mxu0
    %v3909 = vadd.f32 %v3580, %v3908
    %3910 = vmatmul.bf16.gmra.mxu0 %v2704
    %v3911 = vpop.f32.mrf.mxu0
    %v3912 = vadd.f32 %v3583, %v3911
    %v3913 = vpop.f32.mrf.mxu0
    %v3914 = vadd.f32 %v3585, %v3913
    %3915 = vmatmul.bf16.gmra.mxu0 %v2708
    %v3916 = vpop.f32.mrf.mxu0
    %v3917 = vadd.f32 %v3588, %v3916
    %v3918 = vpop.f32.mrf.mxu0
    %v3919 = vadd.f32 %v3590, %v3918
    %3920 = vmatmul.bf16.gmra.mxu0 %v2712
    %v3921 = vpop.f32.mrf.mxu0
    %v3922 = vadd.f32 %v3593, %v3921
    %v3923 = vpop.f32.mrf.mxu0
    %v3924 = vadd.f32 %v3595, %v3923
    %3925 = vmatmul.bf16.gmra.mxu0 %v2716
    %v3926 = vpop.f32.mrf.mxu0
    %v3927 = vadd.f32 %v3598, %v3926
    %v3928 = vpop.f32.mrf.mxu0
    %v3929 = vadd.f32 %v3600, %v3928
    %3930 = vmatmul.bf16.gmra.mxu0 %v2720
    %v3931 = vpop.f32.mrf.mxu0
    %v3932 = vadd.f32 %v3603, %v3931
    %v3933 = vpop.f32.mrf.mxu0
    %v3934 = vadd.f32 %v3605, %v3933
    %3935 = vmatmul.bf16.gmra.mxu0 %v2724
    %v3936 = vpop.f32.mrf.mxu0
    %v3937 = vadd.f32 %v3608, %v3936
    %v3938 = vpop.f32.mrf.mxu0
    %v3939 = vadd.f32 %v3610, %v3938
    %3940 = vmatmul.bf16.gmra.mxu0 %v2728
    %v3941 = vpop.f32.mrf.mxu0
    %v3942 = vadd.f32 %v3613, %v3941
    %v3943 = vpop.f32.mrf.mxu0
    %v3944 = vadd.f32 %v3615, %v3943
    %3945 = vmatmul.bf16.gmra.mxu0 %v2732
    %v3946 = vpop.f32.mrf.mxu0
    %v3947 = vadd.f32 %v3618, %v3946
    %v3948 = vpop.f32.mrf.mxu0
    %v3949 = vadd.f32 %v3620, %v3948
    %3950 = vmatmul.bf16.gmra.mxu0 %v2736
    %v3951 = vpop.f32.mrf.mxu0
    %v3952 = vadd.f32 %v3623, %v3951
    %v3953 = vpop.f32.mrf.mxu0
    %v3954 = vadd.f32 %v3625, %v3953
    %3955 = vmatmul.bf16.gmra.mxu0 %v2740
    %v3956 = vpop.f32.mrf.mxu0
    %v3957 = vadd.f32 %v3628, %v3956
    %v3958 = vpop.f32.mrf.mxu0
    %v3959 = vadd.f32 %v3630, %v3958
    %3960 = vmatmul.bf16.gmra.mxu0 %v2744
    %v3961 = vpop.f32.mrf.mxu0
    %v3962 = vadd.f32 %v3633, %v3961
    %v3963 = vpop.f32.mrf.mxu0
    %v3964 = vadd.f32 %v3635, %v3963
    %3965 = vmatmul.bf16.gmra.mxu0 %v2748
    %v3966 = vpop.f32.mrf.mxu0
    %v3967 = vadd.f32 %v3638, %v3966
    %v3968 = vpop.f32.mrf.mxu0
    %v3969 = vadd.f32 %v3640, %v3968
    %3970 = vmatmul.bf16.gmra.mxu0 %v2752
    %v3971 = vpop.f32.mrf.mxu0
    %v3972 = vadd.f32 %v3643, %v3971
    %v3973 = vpop.f32.mrf.mxu0
    %v3974 = vadd.f32 %v3645, %v3973
    %3975 = vmatmul.bf16.gmra.mxu0 %v2756
    %v3976 = vpop.f32.mrf.mxu0
    %v3977 = vadd.f32 %v3648, %v3976
    %v3978 = vpop.f32.mrf.mxu0
    %v3979 = vadd.f32 %v3650, %v3978
    %3980 = vmatmul.bf16.gmra.mxu0 %v2760
    %v3981 = vpop.f32.mrf.mxu0
    %v3982 = vadd.f32 %v3653, %v3981
    %v3983 = vpop.f32.mrf.mxu0
    %v3984 = vadd.f32 %v3655, %v3983
    %3985 = vmatmul.bf16.gmra.mxu0 %v2764
    %v3986 = vpop.f32.mrf.mxu0
    %v3987 = vadd.f32 %v3658, %v3986
    %v3988 = vpop.f32.mrf.mxu0
    %v3989 = vadd.f32 %v3660, %v3988
    %3990 = vmatmul.bf16.gmra.mxu0 %v2768
    %v3991 = vpop.f32.mrf.mxu0
    %v3992 = vadd.f32 %v3663, %v3991
    %v3993 = vpop.f32.mrf.mxu0
    %v3994 = vadd.f32 %v3665, %v3993
    %3995 = vmatmul.bf16.gmra.mxu0 %v2772
    %v3996 = vpop.f32.mrf.mxu0
    %v3997 = vadd.f32 %v3668, %v3996
    %v3998 = vpop.f32.mrf.mxu0
    %v3999 = vadd.f32 %v3670, %v3998
    %4000 = vmatmul.bf16.gmra.mxu0 %v2776
    %v4001 = vpop.f32.mrf.mxu0
    %v4002 = vadd.f32 %v3673, %v4001
    %v4003 = vpop.f32.mrf.mxu0
    %v4004 = vadd.f32 %v3675, %v4003
    %4005 = vmatmul.bf16.gmra.mxu0 %v2780
    %v4006 = vpop.f32.mrf.mxu0
    %v4007 = vadd.f32 %v3678, %v4006
    %v4008 = vpop.f32.mrf.mxu0
    %v4009 = vadd.f32 %v3680, %v4008
    %4010 = vmatmul.bf16.gmra.mxu0 %v2784
    %v4011 = vpop.f32.mrf.mxu0
    %v4012 = vadd.f32 %v3683, %v4011
    %v4013 = vpop.f32.mrf.mxu0
    %v4014 = vadd.f32 %v3685, %v4013
    %4015 = vmatmul.bf16.gmra.mxu0 %v2788
    %v4016 = vpop.f32.mrf.mxu0
    %v4017 = vadd.f32 %v3688, %v4016
    %v4018 = vpop.f32.mrf.mxu0
    %v4019 = vadd.f32 %v3690, %v4018
    %4020 = vmatmul.bf16.gmra.mxu0 %v2792
    %v4021 = vpop.f32.mrf.mxu0
    %v4022 = vadd.f32 %v3693, %v4021
    %v4023 = vpop.f32.mrf.mxu0
    %v4024 = vadd.f32 %v3695, %v4023
    %4025 = vmatmul.bf16.gmra.mxu0 %v2796
    %v4026 = vpop.f32.mrf.mxu0
    %v4027 = vadd.f32 %v3698, %v4026
    %v4028 = vpop.f32.mrf.mxu0
    %v4029 = vadd.f32 %v3700, %v4028
    %4030 = vmatmul.bf16.gmra.mxu0 %v2800
    %v4031 = vpop.f32.mrf.mxu0
    %v4032 = vadd.f32 %v3703, %v4031
    %v4033 = vpop.f32.mrf.mxu0
    %v4034 = vadd.f32 %v3705, %v4033
    %4035 = vmatmul.bf16.gmra.mxu0 %v2804
    %v4036 = vpop.f32.mrf.mxu0
    %v4037 = vadd.f32 %v3708, %v4036
    %v4038 = vpop.f32.mrf.mxu0
    %v4039 = vadd.f32 %v3710, %v4038
    %4040 = vmatmul.bf16.gmra.mxu0 %v2808
    %v4041 = vpop.f32.mrf.mxu0
    %v4042 = vadd.f32 %v3713, %v4041
    %v4043 = vpop.f32.mrf.mxu0
    %v4044 = vadd.f32 %v3715, %v4043
    %4045 = vmatmul.bf16.gmra.mxu0 %v2812
    %v4046 = vpop.f32.mrf.mxu0
    %v4047 = vadd.f32 %v3718, %v4046
    %v4048 = vpop.f32.mrf.mxu0
    %v4049 = vadd.f32 %v3720, %v4048
    %4050 = vmatmul.bf16.gmra.mxu0 %v2816
    %v4051 = vpop.f32.mrf.mxu0
    %v4052 = vadd.f32 %v3723, %v4051
    %v4053 = vpop.f32.mrf.mxu0
    %v4054 = vadd.f32 %v3725, %v4053
    %4055 = vmatmul.bf16.gmra.mxu0 %v2820
    %v4056 = vpop.f32.mrf.mxu0
    %v4057 = vadd.f32 %v3728, %v4056
    %v4058 = vpop.f32.mrf.mxu0
    %v4059 = vadd.f32 %v3730, %v4058
    %4060 = vmatmul.bf16.gmra.mxu0 %v2824
    %v4061 = vpop.f32.mrf.mxu0
    %v4062 = vadd.f32 %v3733, %v4061
    %v4063 = vpop.f32.mrf.mxu0
    %v4064 = vadd.f32 %v3735, %v4063
    %4065 = vmatmul.bf16.gmra.mxu0 %v2828
    %v4066 = vpop.f32.mrf.mxu0
    %v4067 = vadd.f32 %v3738, %v4066
    %v4068 = vpop.f32.mrf.mxu0
    %v4069 = vadd.f32 %v3740, %v4068
    %4070 = vmatmul.bf16.gmra.mxu0 %v2832
    %v4071 = vpop.f32.mrf.mxu0
    %v4072 = vadd.f32 %v3743, %v4071
    %v4073 = vpop.f32.mrf.mxu0
    %v4074 = vadd.f32 %v3745, %v4073
    %4075 = vmatmul.bf16.gmra.mxu0 %v2836
    %v4076 = vpop.f32.mrf.mxu0
    %v4077 = vadd.f32 %v3748, %v4076
    %v4078 = vpop.f32.mrf.mxu0
    %v4079 = vadd.f32 %v3750, %v4078
    %4080 = vdwg.mxu0
    %4081 = vmatpush.bf16.msra.mxu0 %v3061
    %4082 = vmatpush.bf16.msra.mxu0 %v3060
    %4083 = vmatpush.bf16.msra.mxu0 %v3059
    %4084 = vmatpush.bf16.msra.mxu0 %v3058
    %4085 = vmatpush.bf16.msra.mxu0 %v3057
    %4086 = vmatpush.bf16.msra.mxu0 %v3056
    %4087 = vmatpush.bf16.msra.mxu0 %v3055
    %4088 = vmatpush.bf16.msra.mxu0 %v3054
    %4089 = vmatmul.bf16.gmra.mxu0 %v2585
    %v4090 = vpop.f32.mrf.mxu0
    %v4091 = vadd.f32 %v3762, %v4090
    %v4092 = vpop.f32.mrf.mxu0
    %v4093 = vadd.f32 %v3764, %v4092
    %4094 = vmatmul.bf16.gmra.mxu0 %v2589
    %v4095 = vpop.f32.mrf.mxu0
    %v4096 = vadd.f32 %v3767, %v4095
    %v4097 = vpop.f32.mrf.mxu0
    %v4098 = vadd.f32 %v3769, %v4097
    %4099 = vmatmul.bf16.gmra.mxu0 %v2593
    %v4100 = vpop.f32.mrf.mxu0
    %v4101 = vadd.f32 %v3772, %v4100
    %v4102 = vpop.f32.mrf.mxu0
    %v4103 = vadd.f32 %v3774, %v4102
    %4104 = vmatmul.bf16.gmra.mxu0 %v2597
    %v4105 = vpop.f32.mrf.mxu0
    %v4106 = vadd.f32 %v3777, %v4105
    %v4107 = vpop.f32.mrf.mxu0
    %v4108 = vadd.f32 %v3779, %v4107
    %4109 = vmatmul.bf16.gmra.mxu0 %v2601
    %v4110 = vpop.f32.mrf.mxu0
    %v4111 = vadd.f32 %v3782, %v4110
    %v4112 = vpop.f32.mrf.mxu0
    %v4113 = vadd.f32 %v3784, %v4112
    %4114 = vmatmul.bf16.gmra.mxu0 %v2605
    %v4115 = vpop.f32.mrf.mxu0
    %v4116 = vadd.f32 %v3787, %v4115
    %v4117 = vpop.f32.mrf.mxu0
    %v4118 = vadd.f32 %v3789, %v4117
    %4119 = vmatmul.bf16.gmra.mxu0 %v2609
    %v4120 = vpop.f32.mrf.mxu0
    %v4121 = vadd.f32 %v3792, %v4120
    %v4122 = vpop.f32.mrf.mxu0
    %v4123 = vadd.f32 %v3794, %v4122
    %4124 = vmatmul.bf16.gmra.mxu0 %v2613
    %v4125 = vpop.f32.mrf.mxu0
    %v4126 = vadd.f32 %v3797, %v4125
    %v4127 = vpop.f32.mrf.mxu0
    %v4128 = vadd.f32 %v3799, %v4127
    %4129 = vmatmul.bf16.gmra.mxu0 %v2617
    %v4130 = vpop.f32.mrf.mxu0
    %v4131 = vadd.f32 %v3802, %v4130
    %v4132 = vpop.f32.mrf.mxu0
    %v4133 = vadd.f32 %v3804, %v4132
    %4134 = vmatmul.bf16.gmra.mxu0 %v2621
    %v4135 = vpop.f32.mrf.mxu0
    %v4136 = vadd.f32 %v3807, %v4135
    %v4137 = vpop.f32.mrf.mxu0
    %v4138 = vadd.f32 %v3809, %v4137
    %4139 = vmatmul.bf16.gmra.mxu0 %v2625
    %v4140 = vpop.f32.mrf.mxu0
    %v4141 = vadd.f32 %v3812, %v4140
    %v4142 = vpop.f32.mrf.mxu0
    %v4143 = vadd.f32 %v3814, %v4142
    %4144 = vmatmul.bf16.gmra.mxu0 %v2629
    %v4145 = vpop.f32.mrf.mxu0
    %v4146 = vadd.f32 %v3817, %v4145
    %v4147 = vpop.f32.mrf.mxu0
    %v4148 = vadd.f32 %v3819, %v4147
    %4149 = vmatmul.bf16.gmra.mxu0 %v2633
    %v4150 = vpop.f32.mrf.mxu0
    %v4151 = vadd.f32 %v3822, %v4150
    %v4152 = vpop.f32.mrf.mxu0
    %v4153 = vadd.f32 %v3824, %v4152
    %4154 = vmatmul.bf16.gmra.mxu0 %v2637
    %v4155 = vpop.f32.mrf.mxu0
    %v4156 = vadd.f32 %v3827, %v4155
    %v4157 = vpop.f32.mrf.mxu0
    %v4158 = vadd.f32 %v3829, %v4157
    %4159 = vmatmul.bf16.gmra.mxu0 %v2641
    %v4160 = vpop.f32.mrf.mxu0
    %v4161 = vadd.f32 %v3832, %v4160
    %v4162 = vpop.f32.mrf.mxu0
    %v4163 = vadd.f32 %v3834, %v4162
    %4164 = vmatmul.bf16.gmra.mxu0 %v2645
    %v4165 = vpop.f32.mrf.mxu0
    %v4166 = vadd.f32 %v3837, %v4165
    %v4167 = vpop.f32.mrf.mxu0
    %v4168 = vadd.f32 %v3839, %v4167
    %4169 = vmatmul.bf16.gmra.mxu0 %v2649
    %v4170 = vpop.f32.mrf.mxu0
    %v4171 = vadd.f32 %v3842, %v4170
    %v4172 = vpop.f32.mrf.mxu0
    %v4173 = vadd.f32 %v3844, %v4172
    %4174 = vmatmul.bf16.gmra.mxu0 %v2653
    %v4175 = vpop.f32.mrf.mxu0
    %v4176 = vadd.f32 %v3847, %v4175
    %v4177 = vpop.f32.mrf.mxu0
    %v4178 = vadd.f32 %v3849, %v4177
    %4179 = vmatmul.bf16.gmra.mxu0 %v2657
    %v4180 = vpop.f32.mrf.mxu0
    %v4181 = vadd.f32 %v3852, %v4180
    %v4182 = vpop.f32.mrf.mxu0
    %v4183 = vadd.f32 %v3854, %v4182
    %4184 = vmatmul.bf16.gmra.mxu0 %v2661
    %v4185 = vpop.f32.mrf.mxu0
    %v4186 = vadd.f32 %v3857, %v4185
    %v4187 = vpop.f32.mrf.mxu0
    %v4188 = vadd.f32 %v3859, %v4187
    %4189 = vmatmul.bf16.gmra.mxu0 %v2665
    %v4190 = vpop.f32.mrf.mxu0
    %v4191 = vadd.f32 %v3862, %v4190
    %v4192 = vpop.f32.mrf.mxu0
    %v4193 = vadd.f32 %v3864, %v4192
    %4194 = vmatmul.bf16.gmra.mxu0 %v2669
    %v4195 = vpop.f32.mrf.mxu0
    %v4196 = vadd.f32 %v3867, %v4195
    %v4197 = vpop.f32.mrf.mxu0
    %v4198 = vadd.f32 %v3869, %v4197
    %4199 = vmatmul.bf16.gmra.mxu0 %v2673
    %v4200 = vpop.f32.mrf.mxu0
    %v4201 = vadd.f32 %v3872, %v4200
    %v4202 = vpop.f32.mrf.mxu0
    %v4203 = vadd.f32 %v3874, %v4202
    %4204 = vmatmul.bf16.gmra.mxu0 %v2677
    %v4205 = vpop.f32.mrf.mxu0
    %v4206 = vadd.f32 %v3877, %v4205
    %v4207 = vpop.f32.mrf.mxu0
    %v4208 = vadd.f32 %v3879, %v4207
    %4209 = vmatmul.bf16.gmra.mxu0 %v2681
    %v4210 = vpop.f32.mrf.mxu0
    %v4211 = vadd.f32 %v3882, %v4210
    %v4212 = vpop.f32.mrf.mxu0
    %v4213 = vadd.f32 %v3884, %v4212
    %4214 = vmatmul.bf16.gmra.mxu0 %v2685
    %v4215 = vpop.f32.mrf.mxu0
    %v4216 = vadd.f32 %v3887, %v4215
    %v4217 = vpop.f32.mrf.mxu0
    %v4218 = vadd.f32 %v3889, %v4217
    %4219 = vmatmul.bf16.gmra.mxu0 %v2689
    %v4220 = vpop.f32.mrf.mxu0
    %v4221 = vadd.f32 %v3892, %v4220
    %v4222 = vpop.f32.mrf.mxu0
    %v4223 = vadd.f32 %v3894, %v4222
    %4224 = vmatmul.bf16.gmra.mxu0 %v2693
    %v4225 = vpop.f32.mrf.mxu0
    %v4226 = vadd.f32 %v3897, %v4225
    %v4227 = vpop.f32.mrf.mxu0
    %v4228 = vadd.f32 %v3899, %v4227
    %4229 = vmatmul.bf16.gmra.mxu0 %v2697
    %v4230 = vpop.f32.mrf.mxu0
    %v4231 = vadd.f32 %v3902, %v4230
    %v4232 = vpop.f32.mrf.mxu0
    %v4233 = vadd.f32 %v3904, %v4232
    %4234 = vmatmul.bf16.gmra.mxu0 %v2701
    %v4235 = vpop.f32.mrf.mxu0
    %v4236 = vadd.f32 %v3907, %v4235
    %v4237 = vpop.f32.mrf.mxu0
    %v4238 = vadd.f32 %v3909, %v4237
    %4239 = vmatmul.bf16.gmra.mxu0 %v2705
    %v4240 = vpop.f32.mrf.mxu0
    %v4241 = vadd.f32 %v3912, %v4240
    %v4242 = vpop.f32.mrf.mxu0
    %v4243 = vadd.f32 %v3914, %v4242
    %4244 = vmatmul.bf16.gmra.mxu0 %v2709
    %v4245 = vpop.f32.mrf.mxu0
    %v4246 = vadd.f32 %v3917, %v4245
    %v4247 = vpop.f32.mrf.mxu0
    %v4248 = vadd.f32 %v3919, %v4247
    %4249 = vmatmul.bf16.gmra.mxu0 %v2713
    %v4250 = vpop.f32.mrf.mxu0
    %v4251 = vadd.f32 %v3922, %v4250
    %v4252 = vpop.f32.mrf.mxu0
    %v4253 = vadd.f32 %v3924, %v4252
    %4254 = vmatmul.bf16.gmra.mxu0 %v2717
    %v4255 = vpop.f32.mrf.mxu0
    %v4256 = vadd.f32 %v3927, %v4255
    %v4257 = vpop.f32.mrf.mxu0
    %v4258 = vadd.f32 %v3929, %v4257
    %4259 = vmatmul.bf16.gmra.mxu0 %v2721
    %v4260 = vpop.f32.mrf.mxu0
    %v4261 = vadd.f32 %v3932, %v4260
    %v4262 = vpop.f32.mrf.mxu0
    %v4263 = vadd.f32 %v3934, %v4262
    %4264 = vmatmul.bf16.gmra.mxu0 %v2725
    %v4265 = vpop.f32.mrf.mxu0
    %v4266 = vadd.f32 %v3937, %v4265
    %v4267 = vpop.f32.mrf.mxu0
    %v4268 = vadd.f32 %v3939, %v4267
    %4269 = vmatmul.bf16.gmra.mxu0 %v2729
    %v4270 = vpop.f32.mrf.mxu0
    %v4271 = vadd.f32 %v3942, %v4270
    %v4272 = vpop.f32.mrf.mxu0
    %v4273 = vadd.f32 %v3944, %v4272
    %4274 = vmatmul.bf16.gmra.mxu0 %v2733
    %v4275 = vpop.f32.mrf.mxu0
    %v4276 = vadd.f32 %v3947, %v4275
    %v4277 = vpop.f32.mrf.mxu0
    %v4278 = vadd.f32 %v3949, %v4277
    %4279 = vmatmul.bf16.gmra.mxu0 %v2737
    %v4280 = vpop.f32.mrf.mxu0
    %v4281 = vadd.f32 %v3952, %v4280
    %v4282 = vpop.f32.mrf.mxu0
    %v4283 = vadd.f32 %v3954, %v4282
    %4284 = vmatmul.bf16.gmra.mxu0 %v2741
    %v4285 = vpop.f32.mrf.mxu0
    %v4286 = vadd.f32 %v3957, %v4285
    %v4287 = vpop.f32.mrf.mxu0
    %v4288 = vadd.f32 %v3959, %v4287
    %4289 = vmatmul.bf16.gmra.mxu0 %v2745
    %v4290 = vpop.f32.mrf.mxu0
    %v4291 = vadd.f32 %v3962, %v4290
    %v4292 = vpop.f32.mrf.mxu0
    %v4293 = vadd.f32 %v3964, %v4292
    %4294 = vmatmul.bf16.gmra.mxu0 %v2749
    %v4295 = vpop.f32.mrf.mxu0
    %v4296 = vadd.f32 %v3967, %v4295
    %v4297 = vpop.f32.mrf.mxu0
    %v4298 = vadd.f32 %v3969, %v4297
    %4299 = vmatmul.bf16.gmra.mxu0 %v2753
    %v4300 = vpop.f32.mrf.mxu0
    %v4301 = vadd.f32 %v3972, %v4300
    %v4302 = vpop.f32.mrf.mxu0
    %v4303 = vadd.f32 %v3974, %v4302
    %4304 = vmatmul.bf16.gmra.mxu0 %v2757
    %v4305 = vpop.f32.mrf.mxu0
    %v4306 = vadd.f32 %v3977, %v4305
    %v4307 = vpop.f32.mrf.mxu0
    %v4308 = vadd.f32 %v3979, %v4307
    %4309 = vmatmul.bf16.gmra.mxu0 %v2761
    %v4310 = vpop.f32.mrf.mxu0
    %v4311 = vadd.f32 %v3982, %v4310
    %v4312 = vpop.f32.mrf.mxu0
    %v4313 = vadd.f32 %v3984, %v4312
    %4314 = vmatmul.bf16.gmra.mxu0 %v2765
    %v4315 = vpop.f32.mrf.mxu0
    %v4316 = vadd.f32 %v3987, %v4315
    %v4317 = vpop.f32.mrf.mxu0
    %v4318 = vadd.f32 %v3989, %v4317
    %4319 = vmatmul.bf16.gmra.mxu0 %v2769
    %v4320 = vpop.f32.mrf.mxu0
    %v4321 = vadd.f32 %v3992, %v4320
    %v4322 = vpop.f32.mrf.mxu0
    %v4323 = vadd.f32 %v3994, %v4322
    %4324 = vmatmul.bf16.gmra.mxu0 %v2773
    %v4325 = vpop.f32.mrf.mxu0
    %v4326 = vadd.f32 %v3997, %v4325
    %v4327 = vpop.f32.mrf.mxu0
    %v4328 = vadd.f32 %v3999, %v4327
    %4329 = vmatmul.bf16.gmra.mxu0 %v2777
    %v4330 = vpop.f32.mrf.mxu0
    %v4331 = vadd.f32 %v4002, %v4330
    %v4332 = vpop.f32.mrf.mxu0
    %v4333 = vadd.f32 %v4004, %v4332
    %4334 = vmatmul.bf16.gmra.mxu0 %v2781
    %v4335 = vpop.f32.mrf.mxu0
    %v4336 = vadd.f32 %v4007, %v4335
    %v4337 = vpop.f32.mrf.mxu0
    %v4338 = vadd.f32 %v4009, %v4337
    %4339 = vmatmul.bf16.gmra.mxu0 %v2785
    %v4340 = vpop.f32.mrf.mxu0
    %v4341 = vadd.f32 %v4012, %v4340
    %v4342 = vpop.f32.mrf.mxu0
    %v4343 = vadd.f32 %v4014, %v4342
    %4344 = vmatmul.bf16.gmra.mxu0 %v2789
    %v4345 = vpop.f32.mrf.mxu0
    %v4346 = vadd.f32 %v4017, %v4345
    %v4347 = vpop.f32.mrf.mxu0
    %v4348 = vadd.f32 %v4019, %v4347
    %4349 = vmatmul.bf16.gmra.mxu0 %v2793
    %v4350 = vpop.f32.mrf.mxu0
    %v4351 = vadd.f32 %v4022, %v4350
    %v4352 = vpop.f32.mrf.mxu0
    %v4353 = vadd.f32 %v4024, %v4352
    %4354 = vmatmul.bf16.gmra.mxu0 %v2797
    %v4355 = vpop.f32.mrf.mxu0
    %v4356 = vadd.f32 %v4027, %v4355
    %v4357 = vpop.f32.mrf.mxu0
    %v4358 = vadd.f32 %v4029, %v4357
    %4359 = vmatmul.bf16.gmra.mxu0 %v2801
    %v4360 = vpop.f32.mrf.mxu0
    %v4361 = vadd.f32 %v4032, %v4360
    %v4362 = vpop.f32.mrf.mxu0
    %v4363 = vadd.f32 %v4034, %v4362
    %4364 = vmatmul.bf16.gmra.mxu0 %v2805
    %v4365 = vpop.f32.mrf.mxu0
    %v4366 = vadd.f32 %v4037, %v4365
    %v4367 = vpop.f32.mrf.mxu0
    %v4368 = vadd.f32 %v4039, %v4367
    %4369 = vmatmul.bf16.gmra.mxu0 %v2809
    %v4370 = vpop.f32.mrf.mxu0
    %v4371 = vadd.f32 %v4042, %v4370
    %v4372 = vpop.f32.mrf.mxu0
    %v4373 = vadd.f32 %v4044, %v4372
    %4374 = vmatmul.bf16.gmra.mxu0 %v2813
    %v4375 = vpop.f32.mrf.mxu0
    %v4376 = vadd.f32 %v4047, %v4375
    %v4377 = vpop.f32.mrf.mxu0
    %v4378 = vadd.f32 %v4049, %v4377
    %4379 = vmatmul.bf16.gmra.mxu0 %v2817
    %v4380 = vpop.f32.mrf.mxu0
    %v4381 = vadd.f32 %v4052, %v4380
    %v4382 = vpop.f32.mrf.mxu0
    %v4383 = vadd.f32 %v4054, %v4382
    %4384 = vmatmul.bf16.gmra.mxu0 %v2821
    %v4385 = vpop.f32.mrf.mxu0
    %v4386 = vadd.f32 %v4057, %v4385
    %v4387 = vpop.f32.mrf.mxu0
    %v4388 = vadd.f32 %v4059, %v4387
    %4389 = vmatmul.bf16.gmra.mxu0 %v2825
    %v4390 = vpop.f32.mrf.mxu0
    %v4391 = vadd.f32 %v4062, %v4390
    %v4392 = vpop.f32.mrf.mxu0
    %v4393 = vadd.f32 %v4064, %v4392
    %4394 = vmatmul.bf16.gmra.mxu0 %v2829
    %v4395 = vpop.f32.mrf.mxu0
    %v4396 = vadd.f32 %v4067, %v4395
    %v4397 = vpop.f32.mrf.mxu0
    %v4398 = vadd.f32 %v4069, %v4397
    %4399 = vmatmul.bf16.gmra.mxu0 %v2833
    %v4400 = vpop.f32.mrf.mxu0
    %v4401 = vadd.f32 %v4072, %v4400
    %v4402 = vpop.f32.mrf.mxu0
    %v4403 = vadd.f32 %v4074, %v4402
    %4404 = vmatmul.bf16.gmra.mxu0 %v2837
    %v4405 = vpop.f32.mrf.mxu0
    %v4406 = vadd.f32 %v4077, %v4405
    %v4407 = vpop.f32.mrf.mxu0
    %v4408 = vadd.f32 %v4079, %v4407
    %4409 = vdwg.mxu0
    %v4410 = vtanh.pop %v4091
    %v4411 = vtanh.pop %v4093
    %v4412 = vtanh.pop %v4096
    %v4413 = vtanh.pop %v4098
    %v4414 = vtanh.pop %v4101
    %v4415 = vtanh.pop %v4103
    %v4416 = vtanh.pop %v4106
    %v4417 = vtanh.pop %v4108
    %v4418 = vtanh.pop %v4111
    %v4419 = vtanh.pop %v4113
    %v4420 = vtanh.pop %v4116
    %v4421 = vtanh.pop %v4118
    %v4422 = vtanh.pop %v4121
    %v4423 = vtanh.pop %v4123
    %v4424 = vtanh.pop %v4126
    %v4425 = vtanh.pop %v4128
    %v4426 = vtanh.pop %v4131
    %v4427 = vtanh.pop %v4133
    %v4428 = vtanh.pop %v4136
    %v4429 = vtanh.pop %v4138
    %v4430 = vtanh.pop %v4141
    %v4431 = vtanh.pop %v4143
    %v4432 = vtanh.pop %v4146
    %v4433 = vtanh.pop %v4148
    %v4434 = vtanh.pop %v4151
    %v4435 = vtanh.pop %v4153
    %v4436 = vtanh.pop %v4156
    %v4437 = vtanh.pop %v4158
    %v4438 = vtanh.pop %v4161
    %v4439 = vtanh.pop %v4163
    %v4440 = vtanh.pop %v4166
    %v4441 = vtanh.pop %v4168
    %v4442 = vtanh.pop %v4171
    %v4443 = vtanh.pop %v4173
    %v4444 = vtanh.pop %v4176
    %v4445 = vtanh.pop %v4178
    %v4446 = vtanh.pop %v4181
    %v4447 = vtanh.pop %v4183
    %v4448 = vtanh.pop %v4186
    %v4449 = vtanh.pop %v4188
    %v4450 = vtanh.pop %v4191
    %v4451 = vtanh.pop %v4193
    %v4452 = vtanh.pop %v4196
    %v4453 = vtanh.pop %v4198
    %v4454 = vtanh.pop %v4201
    %v4455 = vtanh.pop %v4203
    %v4456 = vtanh.pop %v4206
    %v4457 = vtanh.pop %v4208
    %v4458 = vtanh.pop %v4211
    %v4459 = vtanh.pop %v4213
    %v4460 = vtanh.pop %v4216
    %v4461 = vtanh.pop %v4218
    %v4462 = vtanh.pop %v4221
    %v4463 = vtanh.pop %v4223
    %v4464 = vtanh.pop %v4226
    %v4465 = vtanh.pop %v4228
    %v4466 = vtanh.pop %v4231
    %v4467 = vtanh.pop %v4233
    %v4468 = vtanh.pop %v4236
    %v4469 = vtanh.pop %v4238
    %v4470 = vtanh.pop %v4241
    %v4471 = vtanh.pop %v4243
    %v4472 = vtanh.pop %v4246
    %v4473 = vtanh.pop %v4248
    %v4474 = vtanh.pop %v4251
    %v4475 = vtanh.pop %v4253
    %v4476 = vtanh.pop %v4256
    %v4477 = vtanh.pop %v4258
    %v4478 = vtanh.pop %v4261
    %v4479 = vtanh.pop %v4263
    %v4480 = vtanh.pop %v4266
    %v4481 = vtanh.pop %v4268
    %v4482 = vtanh.pop %v4271
    %v4483 = vtanh.pop %v4273
    %v4484 = vtanh.pop %v4276
    %v4485 = vtanh.pop %v4278
    %v4486 = vtanh.pop %v4281
    %v4487 = vtanh.pop %v4283
    %v4488 = vtanh.pop %v4286
    %v4489 = vtanh.pop %v4288
    %v4490 = vtanh.pop %v4291
    %v4491 = vtanh.pop %v4293
    %v4492 = vtanh.pop %v4296
    %v4493 = vtanh.pop %v4298
    %v4494 = vtanh.pop %v4301
    %v4495 = vtanh.pop %v4303
    %v4496 = vtanh.pop %v4306
    %v4497 = vtanh.pop %v4308
    %v4498 = vtanh.pop %v4311
    %v4499 = vtanh.pop %v4313
    %v4500 = vtanh.pop %v4316
    %v4501 = vtanh.pop %v4318
    %v4502 = vtanh.pop %v4321
    %v4503 = vtanh.pop %v4323
    %v4504 = vtanh.pop %v4326
    %v4505 = vtanh.pop %v4328
    %v4506 = vtanh.pop %v4331
    %v4507 = vtanh.pop %v4333
    %v4508 = vtanh.pop %v4336
    %v4509 = vtanh.pop %v4338
    %v4510 = vtanh.pop %v4341
    %v4511 = vtanh.pop %v4343
    %v4512 = vtanh.pop %v4346
    %v4513 = vtanh.pop %v4348
    %v4514 = vtanh.pop %v4351
    %v4515 = vtanh.pop %v4353
    %v4516 = vtanh.pop %v4356
    %v4517 = vtanh.pop %v4358
    %v4518 = vtanh.pop %v4361
    %v4519 = vtanh.pop %v4363
    %v4520 = vtanh.pop %v4366
    %v4521 = vtanh.pop %v4368
    %v4522 = vtanh.pop %v4371
    %v4523 = vtanh.pop %v4373
    %v4524 = vtanh.pop %v4376
    %v4525 = vtanh.pop %v4378
    %v4526 = vtanh.pop %v4381
    %v4527 = vtanh.pop %v4383
    %v4528 = vtanh.pop %v4386
    %v4529 = vtanh.pop %v4388
    %v4530 = vtanh.pop %v4391
    %v4531 = vtanh.pop %v4393
    %v4532 = vtanh.pop %v4396
    %v4533 = vtanh.pop %v4398
    %v4534 = vtanh.pop %v4401
    %v4535 = vtanh.pop %v4403
    %v4536 = vtanh.pop %v4406
    %v4537 = vtanh.pop %v4408
    %v4538 = vxor.u32 %v4091, 2147483648
    %v4539 = vxor.u32 %v4093, 2147483648
    %v4540 = vxor.u32 %v4096, 2147483648
    %v4541 = vxor.u32 %v4098, 2147483648
    %v4542 = vxor.u32 %v4101, 2147483648
    %v4543 = vxor.u32 %v4103, 2147483648
    %v4544 = vxor.u32 %v4106, 2147483648
    %v4545 = vxor.u32 %v4108, 2147483648
    %v4546 = vxor.u32 %v4111, 2147483648
    %v4547 = vxor.u32 %v4113, 2147483648
    %v4548 = vxor.u32 %v4116, 2147483648
    %v4549 = vxor.u32 %v4118, 2147483648
    %v4550 = vxor.u32 %v4121, 2147483648
    %v4551 = vxor.u32 %v4123, 2147483648
    %v4552 = vxor.u32 %v4126, 2147483648
    %v4553 = vxor.u32 %v4128, 2147483648
    %v4554 = vxor.u32 %v4131, 2147483648
    %v4555 = vxor.u32 %v4133, 2147483648
    %v4556 = vxor.u32 %v4136, 2147483648
    %v4557 = vxor.u32 %v4138, 2147483648
    %v4558 = vxor.u32 %v4141, 2147483648
    %v4559 = vxor.u32 %v4143, 2147483648
    %v4560 = vxor.u32 %v4146, 2147483648
    %v4561 = vxor.u32 %v4148, 2147483648
    %v4562 = vxor.u32 %v4151, 2147483648
    %v4563 = vxor.u32 %v4153, 2147483648
    %v4564 = vxor.u32 %v4156, 2147483648
    %v4565 = vxor.u32 %v4158, 2147483648
    %v4566 = vxor.u32 %v4161, 2147483648
    %v4567 = vxor.u32 %v4163, 2147483648
    %v4568 = vxor.u32 %v4166, 2147483648
    %v4569 = vxor.u32 %v4168, 2147483648
    %v4570 = vxor.u32 %v4171, 2147483648
    %v4571 = vxor.u32 %v4173, 2147483648
    %v4572 = vxor.u32 %v4176, 2147483648
    %v4573 = vxor.u32 %v4178, 2147483648
    %v4574 = vxor.u32 %v4181, 2147483648
    %v4575 = vxor.u32 %v4183, 2147483648
    %v4576 = vxor.u32 %v4186, 2147483648
    %v4577 = vxor.u32 %v4188, 2147483648
    %v4578 = vxor.u32 %v4191, 2147483648
    %v4579 = vxor.u32 %v4193, 2147483648
    %v4580 = vxor.u32 %v4196, 2147483648
    %v4581 = vxor.u32 %v4198, 2147483648
    %v4582 = vxor.u32 %v4201, 2147483648
    %v4583 = vxor.u32 %v4203, 2147483648
    %v4584 = vxor.u32 %v4206, 2147483648
    %v4585 = vxor.u32 %v4208, 2147483648
    %v4586 = vxor.u32 %v4211, 2147483648
    %v4587 = vxor.u32 %v4213, 2147483648
    %v4588 = vxor.u32 %v4216, 2147483648
    %v4589 = vxor.u32 %v4218, 2147483648
    %v4590 = vxor.u32 %v4221, 2147483648
    %v4591 = vxor.u32 %v4223, 2147483648
    %v4592 = vxor.u32 %v4226, 2147483648
    %v4593 = vxor.u32 %v4228, 2147483648
    %v4594 = vxor.u32 %v4231, 2147483648
    %v4595 = vxor.u32 %v4233, 2147483648
    %v4596 = vxor.u32 %v4236, 2147483648
    %v4597 = vxor.u32 %v4238, 2147483648
    %v4598 = vxor.u32 %v4241, 2147483648
    %v4599 = vxor.u32 %v4243, 2147483648
    %v4600 = vxor.u32 %v4246, 2147483648
    %v4601 = vxor.u32 %v4248, 2147483648
    %v4602 = vxor.u32 %v4251, 2147483648
    %v4603 = vxor.u32 %v4253, 2147483648
    %v4604 = vxor.u32 %v4256, 2147483648
    %v4605 = vxor.u32 %v4258, 2147483648
    %v4606 = vxor.u32 %v4261, 2147483648
    %v4607 = vxor.u32 %v4263, 2147483648
    %v4608 = vxor.u32 %v4266, 2147483648
    %v4609 = vxor.u32 %v4268, 2147483648
    %v4610 = vxor.u32 %v4271, 2147483648
    %v4611 = vxor.u32 %v4273, 2147483648
    %v4612 = vxor.u32 %v4276, 2147483648
    %v4613 = vxor.u32 %v4278, 2147483648
    %v4614 = vxor.u32 %v4281, 2147483648
    %v4615 = vxor.u32 %v4283, 2147483648
    %v4616 = vxor.u32 %v4286, 2147483648
    %v4617 = vxor.u32 %v4288, 2147483648
    %v4618 = vxor.u32 %v4291, 2147483648
    %v4619 = vxor.u32 %v4293, 2147483648
    %v4620 = vxor.u32 %v4296, 2147483648
    %v4621 = vxor.u32 %v4298, 2147483648
    %v4622 = vxor.u32 %v4301, 2147483648
    %v4623 = vxor.u32 %v4303, 2147483648
    %v4624 = vxor.u32 %v4306, 2147483648
    %v4625 = vxor.u32 %v4308, 2147483648
    %v4626 = vxor.u32 %v4311, 2147483648
    %v4627 = vxor.u32 %v4313, 2147483648
    %v4628 = vxor.u32 %v4316, 2147483648
    %v4629 = vxor.u32 %v4318, 2147483648
    %v4630 = vxor.u32 %v4321, 2147483648
    %v4631 = vxor.u32 %v4323, 2147483648
    %v4632 = vxor.u32 %v4326, 2147483648
    %v4633 = vxor.u32 %v4328, 2147483648
    %v4634 = vxor.u32 %v4331, 2147483648
    %v4635 = vxor.u32 %v4333, 2147483648
    %v4636 = vxor.u32 %v4336, 2147483648
    %v4637 = vxor.u32 %v4338, 2147483648
    %v4638 = vxor.u32 %v4341, 2147483648
    %v4639 = vxor.u32 %v4343, 2147483648
    %v4640 = vxor.u32 %v4346, 2147483648
    %v4641 = vxor.u32 %v4348, 2147483648
    %v4642 = vxor.u32 %v4351, 2147483648
    %v4643 = vxor.u32 %v4353, 2147483648
    %v4644 = vxor.u32 %v4356, 2147483648
    %v4645 = vxor.u32 %v4358, 2147483648
    %v4646 = vxor.u32 %v4361, 2147483648
    %v4647 = vxor.u32 %v4363, 2147483648
    %v4648 = vxor.u32 %v4366, 2147483648
    %v4649 = vxor.u32 %v4368, 2147483648
    %v4650 = vxor.u32 %v4371, 2147483648
    %v4651 = vxor.u32 %v4373, 2147483648
    %v4652 = vxor.u32 %v4376, 2147483648
    %v4653 = vxor.u32 %v4378, 2147483648
    %v4654 = vxor.u32 %v4381, 2147483648
    %v4655 = vxor.u32 %v4383, 2147483648
    %v4656 = vxor.u32 %v4386, 2147483648
    %v4657 = vxor.u32 %v4388, 2147483648
    %v4658 = vxor.u32 %v4391, 2147483648
    %v4659 = vxor.u32 %v4393, 2147483648
    %v4660 = vxor.u32 %v4396, 2147483648
    %v4661 = vxor.u32 %v4398, 2147483648
    %v4662 = vxor.u32 %v4401, 2147483648
    %v4663 = vxor.u32 %v4403, 2147483648
    %v4664 = vxor.u32 %v4406, 2147483648
    %v4665 = vxor.u32 %v4408, 2147483648
    %v4666 = vmul.f32 %v4538, 1.442695
    %v4667 = vpow.pop %v4666
    %v4668 = vmul.f32 %v4539, 1.442695
    %v4669 = vpow.pop %v4668
    %v4670 = vmul.f32 %v4540, 1.442695
    %v4671 = vpow.pop %v4670
    %v4672 = vmul.f32 %v4541, 1.442695
    %v4673 = vpow.pop %v4672
    %v4674 = vmul.f32 %v4542, 1.442695
    %v4675 = vpow.pop %v4674
    %v4676 = vmul.f32 %v4543, 1.442695
    %v4677 = vpow.pop %v4676
    %v4678 = vmul.f32 %v4544, 1.442695
    %v4679 = vpow.pop %v4678
    %v4680 = vmul.f32 %v4545, 1.442695
    %v4681 = vpow.pop %v4680
    %v4682 = vmul.f32 %v4546, 1.442695
    %v4683 = vpow.pop %v4682
    %v4684 = vmul.f32 %v4547, 1.442695
    %v4685 = vpow.pop %v4684
    %v4686 = vmul.f32 %v4548, 1.442695
    %v4687 = vpow.pop %v4686
    %v4688 = vmul.f32 %v4549, 1.442695
    %v4689 = vpow.pop %v4688
    %v4690 = vmul.f32 %v4550, 1.442695
    %v4691 = vpow.pop %v4690
    %v4692 = vmul.f32 %v4551, 1.442695
    %v4693 = vpow.pop %v4692
    %v4694 = vmul.f32 %v4552, 1.442695
    %v4695 = vpow.pop %v4694
    %v4696 = vmul.f32 %v4553, 1.442695
    %v4697 = vpow.pop %v4696
    %v4698 = vmul.f32 %v4554, 1.442695
    %v4699 = vpow.pop %v4698
    %v4700 = vmul.f32 %v4555, 1.442695
    %v4701 = vpow.pop %v4700
    %v4702 = vmul.f32 %v4556, 1.442695
    %v4703 = vpow.pop %v4702
    %v4704 = vmul.f32 %v4557, 1.442695
    %v4705 = vpow.pop %v4704
    %v4706 = vmul.f32 %v4558, 1.442695
    %v4707 = vpow.pop %v4706
    %v4708 = vmul.f32 %v4559, 1.442695
    %v4709 = vpow.pop %v4708
    %v4710 = vmul.f32 %v4560, 1.442695
    %v4711 = vpow.pop %v4710
    %v4712 = vmul.f32 %v4561, 1.442695
    %v4713 = vpow.pop %v4712
    %v4714 = vmul.f32 %v4562, 1.442695
    %v4715 = vpow.pop %v4714
    %v4716 = vmul.f32 %v4563, 1.442695
    %v4717 = vpow.pop %v4716
    %v4718 = vmul.f32 %v4564, 1.442695
    %v4719 = vpow.pop %v4718
    %v4720 = vmul.f32 %v4565, 1.442695
    %v4721 = vpow.pop %v4720
    %v4722 = vmul.f32 %v4566, 1.442695
    %v4723 = vpow.pop %v4722
    %v4724 = vmul.f32 %v4567, 1.442695
    %v4725 = vpow.pop %v4724
    %v4726 = vmul.f32 %v4568, 1.442695
    %v4727 = vpow.pop %v4726
    %v4728 = vmul.f32 %v4569, 1.442695
    %v4729 = vpow.pop %v4728
    %v4730 = vmul.f32 %v4570, 1.442695
    %v4731 = vpow.pop %v4730
    %v4732 = vmul.f32 %v4571, 1.442695
    %v4733 = vpow.pop %v4732
    %v4734 = vmul.f32 %v4572, 1.442695
    %v4735 = vpow.pop %v4734
    %v4736 = vmul.f32 %v4573, 1.442695
    %v4737 = vpow.pop %v4736
    %v4738 = vmul.f32 %v4574, 1.442695
    %v4739 = vpow.pop %v4738
    %v4740 = vmul.f32 %v4575, 1.442695
    %v4741 = vpow.pop %v4740
    %v4742 = vmul.f32 %v4576, 1.442695
    %v4743 = vpow.pop %v4742
    %v4744 = vmul.f32 %v4577, 1.442695
    %v4745 = vpow.pop %v4744
    %v4746 = vmul.f32 %v4578, 1.442695
    %v4747 = vpow.pop %v4746
    %v4748 = vmul.f32 %v4579, 1.442695
    %v4749 = vpow.pop %v4748
    %v4750 = vmul.f32 %v4580, 1.442695
    %v4751 = vpow.pop %v4750
    %v4752 = vmul.f32 %v4581, 1.442695
    %v4753 = vpow.pop %v4752
    %v4754 = vmul.f32 %v4582, 1.442695
    %v4755 = vpow.pop %v4754
    %v4756 = vmul.f32 %v4583, 1.442695
    %v4757 = vpow.pop %v4756
    %v4758 = vmul.f32 %v4584, 1.442695
    %v4759 = vpow.pop %v4758
    %v4760 = vmul.f32 %v4585, 1.442695
    %v4761 = vpow.pop %v4760
    %v4762 = vmul.f32 %v4586, 1.442695
    %v4763 = vpow.pop %v4762
    %v4764 = vmul.f32 %v4587, 1.442695
    %v4765 = vpow.pop %v4764
    %v4766 = vmul.f32 %v4588, 1.442695
    %v4767 = vpow.pop %v4766
    %v4768 = vmul.f32 %v4589, 1.442695
    %v4769 = vpow.pop %v4768
    %v4770 = vmul.f32 %v4590, 1.442695
    %v4771 = vpow.pop %v4770
    %v4772 = vmul.f32 %v4591, 1.442695
    %v4773 = vpow.pop %v4772
    %v4774 = vmul.f32 %v4592, 1.442695
    %v4775 = vpow.pop %v4774
    %v4776 = vmul.f32 %v4593, 1.442695
    %v4777 = vpow.pop %v4776
    %v4778 = vmul.f32 %v4594, 1.442695
    %v4779 = vpow.pop %v4778
    %v4780 = vmul.f32 %v4595, 1.442695
    %v4781 = vpow.pop %v4780
    %v4782 = vmul.f32 %v4596, 1.442695
    %v4783 = vpow.pop %v4782
    %v4784 = vmul.f32 %v4597, 1.442695
    %v4785 = vpow.pop %v4784
    %v4786 = vmul.f32 %v4598, 1.442695
    %v4787 = vpow.pop %v4786
    %v4788 = vmul.f32 %v4599, 1.442695
    %v4789 = vpow.pop %v4788
    %v4790 = vmul.f32 %v4600, 1.442695
    %v4791 = vpow.pop %v4790
    %v4792 = vmul.f32 %v4601, 1.442695
    %v4793 = vpow.pop %v4792
    %v4794 = vmul.f32 %v4602, 1.442695
    %v4795 = vpow.pop %v4794
    %v4796 = vmul.f32 %v4603, 1.442695
    %v4797 = vpow.pop %v4796
    %v4798 = vmul.f32 %v4604, 1.442695
    %v4799 = vpow.pop %v4798
    %v4800 = vmul.f32 %v4605, 1.442695
    %v4801 = vpow.pop %v4800
    %v4802 = vmul.f32 %v4606, 1.442695
    %v4803 = vpow.pop %v4802
    %v4804 = vmul.f32 %v4607, 1.442695
    %v4805 = vpow.pop %v4804
    %v4806 = vmul.f32 %v4608, 1.442695
    %v4807 = vpow.pop %v4806
    %v4808 = vmul.f32 %v4609, 1.442695
    %v4809 = vpow.pop %v4808
    %v4810 = vmul.f32 %v4610, 1.442695
    %v4811 = vpow.pop %v4810
    %v4812 = vmul.f32 %v4611, 1.442695
    %v4813 = vpow.pop %v4812
    %v4814 = vmul.f32 %v4612, 1.442695
    %v4815 = vpow.pop %v4814
    %v4816 = vmul.f32 %v4613, 1.442695
    %v4817 = vpow.pop %v4816
    %v4818 = vmul.f32 %v4614, 1.442695
    %v4819 = vpow.pop %v4818
    %v4820 = vmul.f32 %v4615, 1.442695
    %v4821 = vpow.pop %v4820
    %v4822 = vmul.f32 %v4616, 1.442695
    %v4823 = vpow.pop %v4822
    %v4824 = vmul.f32 %v4617, 1.442695
    %v4825 = vpow.pop %v4824
    %v4826 = vmul.f32 %v4618, 1.442695
    %v4827 = vpow.pop %v4826
    %v4828 = vmul.f32 %v4619, 1.442695
    %v4829 = vpow.pop %v4828
    %v4830 = vmul.f32 %v4620, 1.442695
    %v4831 = vpow.pop %v4830
    %v4832 = vmul.f32 %v4621, 1.442695
    %v4833 = vpow.pop %v4832
    %v4834 = vmul.f32 %v4622, 1.442695
    %v4835 = vpow.pop %v4834
    %v4836 = vmul.f32 %v4623, 1.442695
    %v4837 = vpow.pop %v4836
    %v4838 = vmul.f32 %v4624, 1.442695
    %v4839 = vpow.pop %v4838
    %v4840 = vmul.f32 %v4625, 1.442695
    %v4841 = vpow.pop %v4840
    %v4842 = vmul.f32 %v4626, 1.442695
    %v4843 = vpow.pop %v4842
    %v4844 = vmul.f32 %v4627, 1.442695
    %v4845 = vpow.pop %v4844
    %v4846 = vmul.f32 %v4628, 1.442695
    %v4847 = vpow.pop %v4846
    %v4848 = vmul.f32 %v4629, 1.442695
    %v4849 = vpow.pop %v4848
    %v4850 = vmul.f32 %v4630, 1.442695
    %v4851 = vpow.pop %v4850
    %v4852 = vmul.f32 %v4631, 1.442695
    %v4853 = vpow.pop %v4852
    %v4854 = vmul.f32 %v4632, 1.442695
    %v4855 = vpow.pop %v4854
    %v4856 = vmul.f32 %v4633, 1.442695
    %v4857 = vpow.pop %v4856
    %v4858 = vmul.f32 %v4634, 1.442695
    %v4859 = vpow.pop %v4858
    %v4860 = vmul.f32 %v4635, 1.442695
    %v4861 = vpow.pop %v4860
    %v4862 = vmul.f32 %v4636, 1.442695
    %v4863 = vpow.pop %v4862
    %v4864 = vmul.f32 %v4637, 1.442695
    %v4865 = vpow.pop %v4864
    %v4866 = vmul.f32 %v4638, 1.442695
    %v4867 = vpow.pop %v4866
    %v4868 = vmul.f32 %v4639, 1.442695
    %v4869 = vpow.pop %v4868
    %v4870 = vmul.f32 %v4640, 1.442695
    %v4871 = vpow.pop %v4870
    %v4872 = vmul.f32 %v4641, 1.442695
    %v4873 = vpow.pop %v4872
    %v4874 = vmul.f32 %v4642, 1.442695
    %v4875 = vpow.pop %v4874
    %v4876 = vmul.f32 %v4643, 1.442695
    %v4877 = vpow.pop %v4876
    %v4878 = vmul.f32 %v4644, 1.442695
    %v4879 = vpow.pop %v4878
    %v4880 = vmul.f32 %v4645, 1.442695
    %v4881 = vpow.pop %v4880
    %v4882 = vmul.f32 %v4646, 1.442695
    %v4883 = vpow.pop %v4882
    %v4884 = vmul.f32 %v4647, 1.442695
    %v4885 = vpow.pop %v4884
    %v4886 = vmul.f32 %v4648, 1.442695
    %v4887 = vpow.pop %v4886
    %v4888 = vmul.f32 %v4649, 1.442695
    %v4889 = vpow.pop %v4888
    %v4890 = vmul.f32 %v4650, 1.442695
    %v4891 = vpow.pop %v4890
    %v4892 = vmul.f32 %v4651, 1.442695
    %v4893 = vpow.pop %v4892
    %v4894 = vmul.f32 %v4652, 1.442695
    %v4895 = vpow.pop %v4894
    %v4896 = vmul.f32 %v4653, 1.442695
    %v4897 = vpow.pop %v4896
    %v4898 = vmul.f32 %v4654, 1.442695
    %v4899 = vpow.pop %v4898
    %v4900 = vmul.f32 %v4655, 1.442695
    %v4901 = vpow.pop %v4900
    %v4902 = vmul.f32 %v4656, 1.442695
    %v4903 = vpow.pop %v4902
    %v4904 = vmul.f32 %v4657, 1.442695
    %v4905 = vpow.pop %v4904
    %v4906 = vmul.f32 %v4658, 1.442695
    %v4907 = vpow.pop %v4906
    %v4908 = vmul.f32 %v4659, 1.442695
    %v4909 = vpow.pop %v4908
    %v4910 = vmul.f32 %v4660, 1.442695
    %v4911 = vpow.pop %v4910
    %v4912 = vmul.f32 %v4661, 1.442695
    %v4913 = vpow.pop %v4912
    %v4914 = vmul.f32 %v4662, 1.442695
    %v4915 = vpow.pop %v4914
    %v4916 = vmul.f32 %v4663, 1.442695
    %v4917 = vpow.pop %v4916
    %v4918 = vmul.f32 %v4664, 1.442695
    %v4919 = vpow.pop %v4918
    %v4920 = vmul.f32 %v4665, 1.442695
    %v4921 = vpow.pop %v4920
    %v4922 = vadd.f32 %v4667, 1.0
    %v4923 = vadd.f32 %v4669, 1.0
    %v4924 = vadd.f32 %v4671, 1.0
    %v4925 = vadd.f32 %v4673, 1.0
    %v4926 = vadd.f32 %v4675, 1.0
    %v4927 = vadd.f32 %v4677, 1.0
    %v4928 = vadd.f32 %v4679, 1.0
    %v4929 = vadd.f32 %v4681, 1.0
    %v4930 = vadd.f32 %v4683, 1.0
    %v4931 = vadd.f32 %v4685, 1.0
    %v4932 = vadd.f32 %v4687, 1.0
    %v4933 = vadd.f32 %v4689, 1.0
    %v4934 = vadd.f32 %v4691, 1.0
    %v4935 = vadd.f32 %v4693, 1.0
    %v4936 = vadd.f32 %v4695, 1.0
    %v4937 = vadd.f32 %v4697, 1.0
    %v4938 = vadd.f32 %v4699, 1.0
    %v4939 = vadd.f32 %v4701, 1.0
    %v4940 = vadd.f32 %v4703, 1.0
    %v4941 = vadd.f32 %v4705, 1.0
    %v4942 = vadd.f32 %v4707, 1.0
    %v4943 = vadd.f32 %v4709, 1.0
    %v4944 = vadd.f32 %v4711, 1.0
    %v4945 = vadd.f32 %v4713, 1.0
    %v4946 = vadd.f32 %v4715, 1.0
    %v4947 = vadd.f32 %v4717, 1.0
    %v4948 = vadd.f32 %v4719, 1.0
    %v4949 = vadd.f32 %v4721, 1.0
    %v4950 = vadd.f32 %v4723, 1.0
    %v4951 = vadd.f32 %v4725, 1.0
    %v4952 = vadd.f32 %v4727, 1.0
    %v4953 = vadd.f32 %v4729, 1.0
    %v4954 = vadd.f32 %v4731, 1.0
    %v4955 = vadd.f32 %v4733, 1.0
    %v4956 = vadd.f32 %v4735, 1.0
    %v4957 = vadd.f32 %v4737, 1.0
    %v4958 = vadd.f32 %v4739, 1.0
    %v4959 = vadd.f32 %v4741, 1.0
    %v4960 = vadd.f32 %v4743, 1.0
    %v4961 = vadd.f32 %v4745, 1.0
    %v4962 = vadd.f32 %v4747, 1.0
    %v4963 = vadd.f32 %v4749, 1.0
    %v4964 = vadd.f32 %v4751, 1.0
    %v4965 = vadd.f32 %v4753, 1.0
    %v4966 = vadd.f32 %v4755, 1.0
    %v4967 = vadd.f32 %v4757, 1.0
    %v4968 = vadd.f32 %v4759, 1.0
    %v4969 = vadd.f32 %v4761, 1.0
    %v4970 = vadd.f32 %v4763, 1.0
    %v4971 = vadd.f32 %v4765, 1.0
    %v4972 = vadd.f32 %v4767, 1.0
    %v4973 = vadd.f32 %v4769, 1.0
    %v4974 = vadd.f32 %v4771, 1.0
    %v4975 = vadd.f32 %v4773, 1.0
    %v4976 = vadd.f32 %v4775, 1.0
    %v4977 = vadd.f32 %v4777, 1.0
    %v4978 = vadd.f32 %v4779, 1.0
    %v4979 = vadd.f32 %v4781, 1.0
    %v4980 = vadd.f32 %v4783, 1.0
    %v4981 = vadd.f32 %v4785, 1.0
    %v4982 = vadd.f32 %v4787, 1.0
    %v4983 = vadd.f32 %v4789, 1.0
    %v4984 = vadd.f32 %v4791, 1.0
    %v4985 = vadd.f32 %v4793, 1.0
    %v4986 = vadd.f32 %v4795, 1.0
    %v4987 = vadd.f32 %v4797, 1.0
    %v4988 = vadd.f32 %v4799, 1.0
    %v4989 = vadd.f32 %v4801, 1.0
    %v4990 = vadd.f32 %v4803, 1.0
    %v4991 = vadd.f32 %v4805, 1.0
    %v4992 = vadd.f32 %v4807, 1.0
    %v4993 = vadd.f32 %v4809, 1.0
    %v4994 = vadd.f32 %v4811, 1.0
    %v4995 = vadd.f32 %v4813, 1.0
    %v4996 = vadd.f32 %v4815, 1.0
    %v4997 = vadd.f32 %v4817, 1.0
    %v4998 = vadd.f32 %v4819, 1.0
    %v4999 = vadd.f32 %v4821, 1.0
    %v5000 = vadd.f32 %v4823, 1.0
    %v5001 = vadd.f32 %v4825, 1.0
    %v5002 = vadd.f32 %v4827, 1.0
    %v5003 = vadd.f32 %v4829, 1.0
    %v5004 = vadd.f32 %v4831, 1.0
    %v5005 = vadd.f32 %v4833, 1.0
    %v5006 = vadd.f32 %v4835, 1.0
    %v5007 = vadd.f32 %v4837, 1.0
    %v5008 = vadd.f32 %v4839, 1.0
    %v5009 = vadd.f32 %v4841, 1.0
    %v5010 = vadd.f32 %v4843, 1.0
    %v5011 = vadd.f32 %v4845, 1.0
    %v5012 = vadd.f32 %v4847, 1.0
    %v5013 = vadd.f32 %v4849, 1.0
    %v5014 = vadd.f32 %v4851, 1.0
    %v5015 = vadd.f32 %v4853, 1.0
    %v5016 = vadd.f32 %v4855, 1.0
    %v5017 = vadd.f32 %v4857, 1.0
    %v5018 = vadd.f32 %v4859, 1.0
    %v5019 = vadd.f32 %v4861, 1.0
    %v5020 = vadd.f32 %v4863, 1.0
    %v5021 = vadd.f32 %v4865, 1.0
    %v5022 = vadd.f32 %v4867, 1.0
    %v5023 = vadd.f32 %v4869, 1.0
    %v5024 = vadd.f32 %v4871, 1.0
    %v5025 = vadd.f32 %v4873, 1.0
    %v5026 = vadd.f32 %v4875, 1.0
    %v5027 = vadd.f32 %v4877, 1.0
    %v5028 = vadd.f32 %v4879, 1.0
    %v5029 = vadd.f32 %v4881, 1.0
    %v5030 = vadd.f32 %v4883, 1.0
    %v5031 = vadd.f32 %v4885, 1.0
    %v5032 = vadd.f32 %v4887, 1.0
    %v5033 = vadd.f32 %v4889, 1.0
    %v5034 = vadd.f32 %v4891, 1.0
    %v5035 = vadd.f32 %v4893, 1.0
    %v5036 = vadd.f32 %v4895, 1.0
    %v5037 = vadd.f32 %v4897, 1.0
    %v5038 = vadd.f32 %v4899, 1.0
    %v5039 = vadd.f32 %v4901, 1.0
    %v5040 = vadd.f32 %v4903, 1.0
    %v5041 = vadd.f32 %v4905, 1.0
    %v5042 = vadd.f32 %v4907, 1.0
    %v5043 = vadd.f32 %v4909, 1.0
    %v5044 = vadd.f32 %v4911, 1.0
    %v5045 = vadd.f32 %v4913, 1.0
    %v5046 = vadd.f32 %v4915, 1.0
    %v5047 = vadd.f32 %v4917, 1.0
    %v5048 = vadd.f32 %v4919, 1.0
    %v5049 = vadd.f32 %v4921, 1.0
    %v5050 = vrcp.pop %v4922
    %v5051 = vmul.f32 %v4922, %v5050
    %v5052 = vsub.f32 1.0, %v5051
    %v5053 = vmul.f32 %v5050, %v5052
    %v5054 = vadd.f32 %v5050, %v5053
    %vm5055 = vweird.f32 %v4922
    %vm5056 = vweird.f32 %v5050
    %vm5057 = vmor %vm5055, %vm5056
    %v5058 = vsel %vm5057, %v5050, %v5054
    %v5059 = vand.u32 2147483647, %v4922
    %vm5060 = vcmp.eq.f32.partialorder %v5059, 8.507059e+37
    %v5061 = vand.u32 %v4922, 2147483648
    %v5062 = vor.u32 1.1754944e-38, %v5061
    %v5063 = vsel %vm5060, %v5062, %v5058
    %v5064 = vmul.f32 1.0, %v5063
    %v5065 = vrcp.pop %v4923
    %v5066 = vmul.f32 %v4923, %v5065
    %v5067 = vsub.f32 1.0, %v5066
    %v5068 = vmul.f32 %v5065, %v5067
    %v5069 = vadd.f32 %v5065, %v5068
    %vm5070 = vweird.f32 %v4923
    %vm5071 = vweird.f32 %v5065
    %vm5072 = vmor %vm5070, %vm5071
    %v5073 = vsel %vm5072, %v5065, %v5069
    %v5074 = vand.u32 2147483647, %v4923
    %vm5075 = vcmp.eq.f32.partialorder %v5074, 8.507059e+37
    %v5076 = vand.u32 %v4923, 2147483648
    %v5077 = vor.u32 1.1754944e-38, %v5076
    %v5078 = vsel %vm5075, %v5077, %v5073
    %v5079 = vmul.f32 1.0, %v5078
    %v5080 = vrcp.pop %v4924
    %v5081 = vmul.f32 %v4924, %v5080
    %v5082 = vsub.f32 1.0, %v5081
    %v5083 = vmul.f32 %v5080, %v5082
    %v5084 = vadd.f32 %v5080, %v5083
    %vm5085 = vweird.f32 %v4924
    %vm5086 = vweird.f32 %v5080
    %vm5087 = vmor %vm5085, %vm5086
    %v5088 = vsel %vm5087, %v5080, %v5084
    %v5089 = vand.u32 2147483647, %v4924
    %vm5090 = vcmp.eq.f32.partialorder %v5089, 8.507059e+37
    %v5091 = vand.u32 %v4924, 2147483648
    %v5092 = vor.u32 1.1754944e-38, %v5091
    %v5093 = vsel %vm5090, %v5092, %v5088
    %v5094 = vmul.f32 1.0, %v5093
    %v5095 = vrcp.pop %v4925
    %v5096 = vmul.f32 %v4925, %v5095
    %v5097 = vsub.f32 1.0, %v5096
    %v5098 = vmul.f32 %v5095, %v5097
    %v5099 = vadd.f32 %v5095, %v5098
    %vm5100 = vweird.f32 %v4925
    %vm5101 = vweird.f32 %v5095
    %vm5102 = vmor %vm5100, %vm5101
    %v5103 = vsel %vm5102, %v5095, %v5099
    %v5104 = vand.u32 2147483647, %v4925
    %vm5105 = vcmp.eq.f32.partialorder %v5104, 8.507059e+37
    %v5106 = vand.u32 %v4925, 2147483648
    %v5107 = vor.u32 1.1754944e-38, %v5106
    %v5108 = vsel %vm5105, %v5107, %v5103
    %v5109 = vmul.f32 1.0, %v5108
    %v5110 = vrcp.pop %v4926
    %v5111 = vmul.f32 %v4926, %v5110
    %v5112 = vsub.f32 1.0, %v5111
    %v5113 = vmul.f32 %v5110, %v5112
    %v5114 = vadd.f32 %v5110, %v5113
    %vm5115 = vweird.f32 %v4926
    %vm5116 = vweird.f32 %v5110
    %vm5117 = vmor %vm5115, %vm5116
    %v5118 = vsel %vm5117, %v5110, %v5114
    %v5119 = vand.u32 2147483647, %v4926
    %vm5120 = vcmp.eq.f32.partialorder %v5119, 8.507059e+37
    %v5121 = vand.u32 %v4926, 2147483648
    %v5122 = vor.u32 1.1754944e-38, %v5121
    %v5123 = vsel %vm5120, %v5122, %v5118
    %v5124 = vmul.f32 1.0, %v5123
    %v5125 = vrcp.pop %v4927
    %v5126 = vmul.f32 %v4927, %v5125
    %v5127 = vsub.f32 1.0, %v5126
    %v5128 = vmul.f32 %v5125, %v5127
    %v5129 = vadd.f32 %v5125, %v5128
    %vm5130 = vweird.f32 %v4927
    %vm5131 = vweird.f32 %v5125
    %vm5132 = vmor %vm5130, %vm5131
    %v5133 = vsel %vm5132, %v5125, %v5129
    %v5134 = vand.u32 2147483647, %v4927
    %vm5135 = vcmp.eq.f32.partialorder %v5134, 8.507059e+37
    %v5136 = vand.u32 %v4927, 2147483648
    %v5137 = vor.u32 1.1754944e-38, %v5136
    %v5138 = vsel %vm5135, %v5137, %v5133
    %v5139 = vmul.f32 1.0, %v5138
    %v5140 = vrcp.pop %v4928
    %v5141 = vmul.f32 %v4928, %v5140
    %v5142 = vsub.f32 1.0, %v5141
    %v5143 = vmul.f32 %v5140, %v5142
    %v5144 = vadd.f32 %v5140, %v5143
    %vm5145 = vweird.f32 %v4928
    %vm5146 = vweird.f32 %v5140
    %vm5147 = vmor %vm5145, %vm5146
    %v5148 = vsel %vm5147, %v5140, %v5144
    %v5149 = vand.u32 2147483647, %v4928
    %vm5150 = vcmp.eq.f32.partialorder %v5149, 8.507059e+37
    %v5151 = vand.u32 %v4928, 2147483648
    %v5152 = vor.u32 1.1754944e-38, %v5151
    %v5153 = vsel %vm5150, %v5152, %v5148
    %v5154 = vmul.f32 1.0, %v5153
    %v5155 = vrcp.pop %v4929
    %v5156 = vmul.f32 %v4929, %v5155
    %v5157 = vsub.f32 1.0, %v5156
    %v5158 = vmul.f32 %v5155, %v5157
    %v5159 = vadd.f32 %v5155, %v5158
    %vm5160 = vweird.f32 %v4929
    %vm5161 = vweird.f32 %v5155
    %vm5162 = vmor %vm5160, %vm5161
    %v5163 = vsel %vm5162, %v5155, %v5159
    %v5164 = vand.u32 2147483647, %v4929
    %vm5165 = vcmp.eq.f32.partialorder %v5164, 8.507059e+37
    %v5166 = vand.u32 %v4929, 2147483648
    %v5167 = vor.u32 1.1754944e-38, %v5166
    %v5168 = vsel %vm5165, %v5167, %v5163
    %v5169 = vmul.f32 1.0, %v5168
    %v5170 = vrcp.pop %v4930
    %v5171 = vmul.f32 %v4930, %v5170
    %v5172 = vsub.f32 1.0, %v5171
    %v5173 = vmul.f32 %v5170, %v5172
    %v5174 = vadd.f32 %v5170, %v5173
    %vm5175 = vweird.f32 %v4930
    %vm5176 = vweird.f32 %v5170
    %vm5177 = vmor %vm5175, %vm5176
    %v5178 = vsel %vm5177, %v5170, %v5174
    %v5179 = vand.u32 2147483647, %v4930
    %vm5180 = vcmp.eq.f32.partialorder %v5179, 8.507059e+37
    %v5181 = vand.u32 %v4930, 2147483648
    %v5182 = vor.u32 1.1754944e-38, %v5181
    %v5183 = vsel %vm5180, %v5182, %v5178
    %v5184 = vmul.f32 1.0, %v5183
    %v5185 = vrcp.pop %v4931
    %v5186 = vmul.f32 %v4931, %v5185
    %v5187 = vsub.f32 1.0, %v5186
    %v5188 = vmul.f32 %v5185, %v5187
    %v5189 = vadd.f32 %v5185, %v5188
    %vm5190 = vweird.f32 %v4931
    %vm5191 = vweird.f32 %v5185
    %vm5192 = vmor %vm5190, %vm5191
    %v5193 = vsel %vm5192, %v5185, %v5189
    %v5194 = vand.u32 2147483647, %v4931
    %vm5195 = vcmp.eq.f32.partialorder %v5194, 8.507059e+37
    %v5196 = vand.u32 %v4931, 2147483648
    %v5197 = vor.u32 1.1754944e-38, %v5196
    %v5198 = vsel %vm5195, %v5197, %v5193
    %v5199 = vmul.f32 1.0, %v5198
    %v5200 = vrcp.pop %v4932
    %v5201 = vmul.f32 %v4932, %v5200
    %v5202 = vsub.f32 1.0, %v5201
    %v5203 = vmul.f32 %v5200, %v5202
    %v5204 = vadd.f32 %v5200, %v5203
    %vm5205 = vweird.f32 %v4932
    %vm5206 = vweird.f32 %v5200
    %vm5207 = vmor %vm5205, %vm5206
    %v5208 = vsel %vm5207, %v5200, %v5204
    %v5209 = vand.u32 2147483647, %v4932
    %vm5210 = vcmp.eq.f32.partialorder %v5209, 8.507059e+37
    %v5211 = vand.u32 %v4932, 2147483648
    %v5212 = vor.u32 1.1754944e-38, %v5211
    %v5213 = vsel %vm5210, %v5212, %v5208
    %v5214 = vmul.f32 1.0, %v5213
    %v5215 = vrcp.pop %v4933
    %v5216 = vmul.f32 %v4933, %v5215
    %v5217 = vsub.f32 1.0, %v5216
    %v5218 = vmul.f32 %v5215, %v5217
    %v5219 = vadd.f32 %v5215, %v5218
    %vm5220 = vweird.f32 %v4933
    %vm5221 = vweird.f32 %v5215
    %vm5222 = vmor %vm5220, %vm5221
    %v5223 = vsel %vm5222, %v5215, %v5219
    %v5224 = vand.u32 2147483647, %v4933
    %vm5225 = vcmp.eq.f32.partialorder %v5224, 8.507059e+37
    %v5226 = vand.u32 %v4933, 2147483648
    %v5227 = vor.u32 1.1754944e-38, %v5226
    %v5228 = vsel %vm5225, %v5227, %v5223
    %v5229 = vmul.f32 1.0, %v5228
    %v5230 = vrcp.pop %v4934
    %v5231 = vmul.f32 %v4934, %v5230
    %v5232 = vsub.f32 1.0, %v5231
    %v5233 = vmul.f32 %v5230, %v5232
    %v5234 = vadd.f32 %v5230, %v5233
    %vm5235 = vweird.f32 %v4934
    %vm5236 = vweird.f32 %v5230
    %vm5237 = vmor %vm5235, %vm5236
    %v5238 = vsel %vm5237, %v5230, %v5234
    %v5239 = vand.u32 2147483647, %v4934
    %vm5240 = vcmp.eq.f32.partialorder %v5239, 8.507059e+37
    %v5241 = vand.u32 %v4934, 2147483648
    %v5242 = vor.u32 1.1754944e-38, %v5241
    %v5243 = vsel %vm5240, %v5242, %v5238
    %v5244 = vmul.f32 1.0, %v5243
    %v5245 = vrcp.pop %v4935
    %v5246 = vmul.f32 %v4935, %v5245
    %v5247 = vsub.f32 1.0, %v5246
    %v5248 = vmul.f32 %v5245, %v5247
    %v5249 = vadd.f32 %v5245, %v5248
    %vm5250 = vweird.f32 %v4935
    %vm5251 = vweird.f32 %v5245
    %vm5252 = vmor %vm5250, %vm5251
    %v5253 = vsel %vm5252, %v5245, %v5249
    %v5254 = vand.u32 2147483647, %v4935
    %vm5255 = vcmp.eq.f32.partialorder %v5254, 8.507059e+37
    %v5256 = vand.u32 %v4935, 2147483648
    %v5257 = vor.u32 1.1754944e-38, %v5256
    %v5258 = vsel %vm5255, %v5257, %v5253
    %v5259 = vmul.f32 1.0, %v5258
    %v5260 = vrcp.pop %v4936
    %v5261 = vmul.f32 %v4936, %v5260
    %v5262 = vsub.f32 1.0, %v5261
    %v5263 = vmul.f32 %v5260, %v5262
    %v5264 = vadd.f32 %v5260, %v5263
    %vm5265 = vweird.f32 %v4936
    %vm5266 = vweird.f32 %v5260
    %vm5267 = vmor %vm5265, %vm5266
    %v5268 = vsel %vm5267, %v5260, %v5264
    %v5269 = vand.u32 2147483647, %v4936
    %vm5270 = vcmp.eq.f32.partialorder %v5269, 8.507059e+37
    %v5271 = vand.u32 %v4936, 2147483648
    %v5272 = vor.u32 1.1754944e-38, %v5271
    %v5273 = vsel %vm5270, %v5272, %v5268
    %v5274 = vmul.f32 1.0, %v5273
    %v5275 = vrcp.pop %v4937
    %v5276 = vmul.f32 %v4937, %v5275
    %v5277 = vsub.f32 1.0, %v5276
    %v5278 = vmul.f32 %v5275, %v5277
    %v5279 = vadd.f32 %v5275, %v5278
    %vm5280 = vweird.f32 %v4937
    %vm5281 = vweird.f32 %v5275
    %vm5282 = vmor %vm5280, %vm5281
    %v5283 = vsel %vm5282, %v5275, %v5279
    %v5284 = vand.u32 2147483647, %v4937
    %vm5285 = vcmp.eq.f32.partialorder %v5284, 8.507059e+37
    %v5286 = vand.u32 %v4937, 2147483648
    %v5287 = vor.u32 1.1754944e-38, %v5286
    %v5288 = vsel %vm5285, %v5287, %v5283
    %v5289 = vmul.f32 1.0, %v5288
    %v5290 = vrcp.pop %v4938
    %v5291 = vmul.f32 %v4938, %v5290
    %v5292 = vsub.f32 1.0, %v5291
    %v5293 = vmul.f32 %v5290, %v5292
    %v5294 = vadd.f32 %v5290, %v5293
    %vm5295 = vweird.f32 %v4938
    %vm5296 = vweird.f32 %v5290
    %vm5297 = vmor %vm5295, %vm5296
    %v5298 = vsel %vm5297, %v5290, %v5294
    %v5299 = vand.u32 2147483647, %v4938
    %vm5300 = vcmp.eq.f32.partialorder %v5299, 8.507059e+37
    %v5301 = vand.u32 %v4938, 2147483648
    %v5302 = vor.u32 1.1754944e-38, %v5301
    %v5303 = vsel %vm5300, %v5302, %v5298
    %v5304 = vmul.f32 1.0, %v5303
    %v5305 = vrcp.pop %v4939
    %v5306 = vmul.f32 %v4939, %v5305
    %v5307 = vsub.f32 1.0, %v5306
    %v5308 = vmul.f32 %v5305, %v5307
    %v5309 = vadd.f32 %v5305, %v5308
    %vm5310 = vweird.f32 %v4939
    %vm5311 = vweird.f32 %v5305
    %vm5312 = vmor %vm5310, %vm5311
    %v5313 = vsel %vm5312, %v5305, %v5309
    %v5314 = vand.u32 2147483647, %v4939
    %vm5315 = vcmp.eq.f32.partialorder %v5314, 8.507059e+37
    %v5316 = vand.u32 %v4939, 2147483648
    %v5317 = vor.u32 1.1754944e-38, %v5316
    %v5318 = vsel %vm5315, %v5317, %v5313
    %v5319 = vmul.f32 1.0, %v5318
    %v5320 = vrcp.pop %v4940
    %v5321 = vmul.f32 %v4940, %v5320
    %v5322 = vsub.f32 1.0, %v5321
    %v5323 = vmul.f32 %v5320, %v5322
    %v5324 = vadd.f32 %v5320, %v5323
    %vm5325 = vweird.f32 %v4940
    %vm5326 = vweird.f32 %v5320
    %vm5327 = vmor %vm5325, %vm5326
    %v5328 = vsel %vm5327, %v5320, %v5324
    %v5329 = vand.u32 2147483647, %v4940
    %vm5330 = vcmp.eq.f32.partialorder %v5329, 8.507059e+37
    %v5331 = vand.u32 %v4940, 2147483648
    %v5332 = vor.u32 1.1754944e-38, %v5331
    %v5333 = vsel %vm5330, %v5332, %v5328
    %v5334 = vmul.f32 1.0, %v5333
    %v5335 = vrcp.pop %v4941
    %v5336 = vmul.f32 %v4941, %v5335
    %v5337 = vsub.f32 1.0, %v5336
    %v5338 = vmul.f32 %v5335, %v5337
    %v5339 = vadd.f32 %v5335, %v5338
    %vm5340 = vweird.f32 %v4941
    %vm5341 = vweird.f32 %v5335
    %vm5342 = vmor %vm5340, %vm5341
    %v5343 = vsel %vm5342, %v5335, %v5339
    %v5344 = vand.u32 2147483647, %v4941
    %vm5345 = vcmp.eq.f32.partialorder %v5344, 8.507059e+37
    %v5346 = vand.u32 %v4941, 2147483648
    %v5347 = vor.u32 1.1754944e-38, %v5346
    %v5348 = vsel %vm5345, %v5347, %v5343
    %v5349 = vmul.f32 1.0, %v5348
    %v5350 = vrcp.pop %v4942
    %v5351 = vmul.f32 %v4942, %v5350
    %v5352 = vsub.f32 1.0, %v5351
    %v5353 = vmul.f32 %v5350, %v5352
    %v5354 = vadd.f32 %v5350, %v5353
    %vm5355 = vweird.f32 %v4942
    %vm5356 = vweird.f32 %v5350
    %vm5357 = vmor %vm5355, %vm5356
    %v5358 = vsel %vm5357, %v5350, %v5354
    %v5359 = vand.u32 2147483647, %v4942
    %vm5360 = vcmp.eq.f32.partialorder %v5359, 8.507059e+37
    %v5361 = vand.u32 %v4942, 2147483648
    %v5362 = vor.u32 1.1754944e-38, %v5361
    %v5363 = vsel %vm5360, %v5362, %v5358
    %v5364 = vmul.f32 1.0, %v5363
    %v5365 = vrcp.pop %v4943
    %v5366 = vmul.f32 %v4943, %v5365
    %v5367 = vsub.f32 1.0, %v5366
    %v5368 = vmul.f32 %v5365, %v5367
    %v5369 = vadd.f32 %v5365, %v5368
    %vm5370 = vweird.f32 %v4943
    %vm5371 = vweird.f32 %v5365
    %vm5372 = vmor %vm5370, %vm5371
    %v5373 = vsel %vm5372, %v5365, %v5369
    %v5374 = vand.u32 2147483647, %v4943
    %vm5375 = vcmp.eq.f32.partialorder %v5374, 8.507059e+37
    %v5376 = vand.u32 %v4943, 2147483648
    %v5377 = vor.u32 1.1754944e-38, %v5376
    %v5378 = vsel %vm5375, %v5377, %v5373
    %v5379 = vmul.f32 1.0, %v5378
    %v5380 = vrcp.pop %v4944
    %v5381 = vmul.f32 %v4944, %v5380
    %v5382 = vsub.f32 1.0, %v5381
    %v5383 = vmul.f32 %v5380, %v5382
    %v5384 = vadd.f32 %v5380, %v5383
    %vm5385 = vweird.f32 %v4944
    %vm5386 = vweird.f32 %v5380
    %vm5387 = vmor %vm5385, %vm5386
    %v5388 = vsel %vm5387, %v5380, %v5384
    %v5389 = vand.u32 2147483647, %v4944
    %vm5390 = vcmp.eq.f32.partialorder %v5389, 8.507059e+37
    %v5391 = vand.u32 %v4944, 2147483648
    %v5392 = vor.u32 1.1754944e-38, %v5391
    %v5393 = vsel %vm5390, %v5392, %v5388
    %v5394 = vmul.f32 1.0, %v5393
    %v5395 = vrcp.pop %v4945
    %v5396 = vmul.f32 %v4945, %v5395
    %v5397 = vsub.f32 1.0, %v5396
    %v5398 = vmul.f32 %v5395, %v5397
    %v5399 = vadd.f32 %v5395, %v5398
    %vm5400 = vweird.f32 %v4945
    %vm5401 = vweird.f32 %v5395
    %vm5402 = vmor %vm5400, %vm5401
    %v5403 = vsel %vm5402, %v5395, %v5399
    %v5404 = vand.u32 2147483647, %v4945
    %vm5405 = vcmp.eq.f32.partialorder %v5404, 8.507059e+37
    %v5406 = vand.u32 %v4945, 2147483648
    %v5407 = vor.u32 1.1754944e-38, %v5406
    %v5408 = vsel %vm5405, %v5407, %v5403
    %v5409 = vmul.f32 1.0, %v5408
    %v5410 = vrcp.pop %v4946
    %v5411 = vmul.f32 %v4946, %v5410
    %v5412 = vsub.f32 1.0, %v5411
    %v5413 = vmul.f32 %v5410, %v5412
    %v5414 = vadd.f32 %v5410, %v5413
    %vm5415 = vweird.f32 %v4946
    %vm5416 = vweird.f32 %v5410
    %vm5417 = vmor %vm5415, %vm5416
    %v5418 = vsel %vm5417, %v5410, %v5414
    %v5419 = vand.u32 2147483647, %v4946
    %vm5420 = vcmp.eq.f32.partialorder %v5419, 8.507059e+37
    %v5421 = vand.u32 %v4946, 2147483648
    %v5422 = vor.u32 1.1754944e-38, %v5421
    %v5423 = vsel %vm5420, %v5422, %v5418
    %v5424 = vmul.f32 1.0, %v5423
    %v5425 = vrcp.pop %v4947
    %v5426 = vmul.f32 %v4947, %v5425
    %v5427 = vsub.f32 1.0, %v5426
    %v5428 = vmul.f32 %v5425, %v5427
    %v5429 = vadd.f32 %v5425, %v5428
    %vm5430 = vweird.f32 %v4947
    %vm5431 = vweird.f32 %v5425
    %vm5432 = vmor %vm5430, %vm5431
    %v5433 = vsel %vm5432, %v5425, %v5429
    %v5434 = vand.u32 2147483647, %v4947
    %vm5435 = vcmp.eq.f32.partialorder %v5434, 8.507059e+37
    %v5436 = vand.u32 %v4947, 2147483648
    %v5437 = vor.u32 1.1754944e-38, %v5436
    %v5438 = vsel %vm5435, %v5437, %v5433
    %v5439 = vmul.f32 1.0, %v5438
    %v5440 = vrcp.pop %v4948
    %v5441 = vmul.f32 %v4948, %v5440
    %v5442 = vsub.f32 1.0, %v5441
    %v5443 = vmul.f32 %v5440, %v5442
    %v5444 = vadd.f32 %v5440, %v5443
    %vm5445 = vweird.f32 %v4948
    %vm5446 = vweird.f32 %v5440
    %vm5447 = vmor %vm5445, %vm5446
    %v5448 = vsel %vm5447, %v5440, %v5444
    %v5449 = vand.u32 2147483647, %v4948
    %vm5450 = vcmp.eq.f32.partialorder %v5449, 8.507059e+37
    %v5451 = vand.u32 %v4948, 2147483648
    %v5452 = vor.u32 1.1754944e-38, %v5451
    %v5453 = vsel %vm5450, %v5452, %v5448
    %v5454 = vmul.f32 1.0, %v5453
    %v5455 = vrcp.pop %v4949
    %v5456 = vmul.f32 %v4949, %v5455
    %v5457 = vsub.f32 1.0, %v5456
    %v5458 = vmul.f32 %v5455, %v5457
    %v5459 = vadd.f32 %v5455, %v5458
    %vm5460 = vweird.f32 %v4949
    %vm5461 = vweird.f32 %v5455
    %vm5462 = vmor %vm5460, %vm5461
    %v5463 = vsel %vm5462, %v5455, %v5459
    %v5464 = vand.u32 2147483647, %v4949
    %vm5465 = vcmp.eq.f32.partialorder %v5464, 8.507059e+37
    %v5466 = vand.u32 %v4949, 2147483648
    %v5467 = vor.u32 1.1754944e-38, %v5466
    %v5468 = vsel %vm5465, %v5467, %v5463
    %v5469 = vmul.f32 1.0, %v5468
    %v5470 = vrcp.pop %v4950
    %v5471 = vmul.f32 %v4950, %v5470
    %v5472 = vsub.f32 1.0, %v5471
    %v5473 = vmul.f32 %v5470, %v5472
    %v5474 = vadd.f32 %v5470, %v5473
    %vm5475 = vweird.f32 %v4950
    %vm5476 = vweird.f32 %v5470
    %vm5477 = vmor %vm5475, %vm5476
    %v5478 = vsel %vm5477, %v5470, %v5474
    %v5479 = vand.u32 2147483647, %v4950
    %vm5480 = vcmp.eq.f32.partialorder %v5479, 8.507059e+37
    %v5481 = vand.u32 %v4950, 2147483648
    %v5482 = vor.u32 1.1754944e-38, %v5481
    %v5483 = vsel %vm5480, %v5482, %v5478
    %v5484 = vmul.f32 1.0, %v5483
    %v5485 = vrcp.pop %v4951
    %v5486 = vmul.f32 %v4951, %v5485
    %v5487 = vsub.f32 1.0, %v5486
    %v5488 = vmul.f32 %v5485, %v5487
    %v5489 = vadd.f32 %v5485, %v5488
    %vm5490 = vweird.f32 %v4951
    %vm5491 = vweird.f32 %v5485
    %vm5492 = vmor %vm5490, %vm5491
    %v5493 = vsel %vm5492, %v5485, %v5489
    %v5494 = vand.u32 2147483647, %v4951
    %vm5495 = vcmp.eq.f32.partialorder %v5494, 8.507059e+37
    %v5496 = vand.u32 %v4951, 2147483648
    %v5497 = vor.u32 1.1754944e-38, %v5496
    %v5498 = vsel %vm5495, %v5497, %v5493
    %v5499 = vmul.f32 1.0, %v5498
    %v5500 = vrcp.pop %v4952
    %v5501 = vmul.f32 %v4952, %v5500
    %v5502 = vsub.f32 1.0, %v5501
    %v5503 = vmul.f32 %v5500, %v5502
    %v5504 = vadd.f32 %v5500, %v5503
    %vm5505 = vweird.f32 %v4952
    %vm5506 = vweird.f32 %v5500
    %vm5507 = vmor %vm5505, %vm5506
    %v5508 = vsel %vm5507, %v5500, %v5504
    %v5509 = vand.u32 2147483647, %v4952
    %vm5510 = vcmp.eq.f32.partialorder %v5509, 8.507059e+37
    %v5511 = vand.u32 %v4952, 2147483648
    %v5512 = vor.u32 1.1754944e-38, %v5511
    %v5513 = vsel %vm5510, %v5512, %v5508
    %v5514 = vmul.f32 1.0, %v5513
    %v5515 = vrcp.pop %v4953
    %v5516 = vmul.f32 %v4953, %v5515
    %v5517 = vsub.f32 1.0, %v5516
    %v5518 = vmul.f32 %v5515, %v5517
    %v5519 = vadd.f32 %v5515, %v5518
    %vm5520 = vweird.f32 %v4953
    %vm5521 = vweird.f32 %v5515
    %vm5522 = vmor %vm5520, %vm5521
    %v5523 = vsel %vm5522, %v5515, %v5519
    %v5524 = vand.u32 2147483647, %v4953
    %vm5525 = vcmp.eq.f32.partialorder %v5524, 8.507059e+37
    %v5526 = vand.u32 %v4953, 2147483648
    %v5527 = vor.u32 1.1754944e-38, %v5526
    %v5528 = vsel %vm5525, %v5527, %v5523
    %v5529 = vmul.f32 1.0, %v5528
    %v5530 = vrcp.pop %v4954
    %v5531 = vmul.f32 %v4954, %v5530
    %v5532 = vsub.f32 1.0, %v5531
    %v5533 = vmul.f32 %v5530, %v5532
    %v5534 = vadd.f32 %v5530, %v5533
    %vm5535 = vweird.f32 %v4954
    %vm5536 = vweird.f32 %v5530
    %vm5537 = vmor %vm5535, %vm5536
    %v5538 = vsel %vm5537, %v5530, %v5534
    %v5539 = vand.u32 2147483647, %v4954
    %vm5540 = vcmp.eq.f32.partialorder %v5539, 8.507059e+37
    %v5541 = vand.u32 %v4954, 2147483648
    %v5542 = vor.u32 1.1754944e-38, %v5541
    %v5543 = vsel %vm5540, %v5542, %v5538
    %v5544 = vmul.f32 1.0, %v5543
    %v5545 = vrcp.pop %v4955
    %v5546 = vmul.f32 %v4955, %v5545
    %v5547 = vsub.f32 1.0, %v5546
    %v5548 = vmul.f32 %v5545, %v5547
    %v5549 = vadd.f32 %v5545, %v5548
    %vm5550 = vweird.f32 %v4955
    %vm5551 = vweird.f32 %v5545
    %vm5552 = vmor %vm5550, %vm5551
    %v5553 = vsel %vm5552, %v5545, %v5549
    %v5554 = vand.u32 2147483647, %v4955
    %vm5555 = vcmp.eq.f32.partialorder %v5554, 8.507059e+37
    %v5556 = vand.u32 %v4955, 2147483648
    %v5557 = vor.u32 1.1754944e-38, %v5556
    %v5558 = vsel %vm5555, %v5557, %v5553
    %v5559 = vmul.f32 1.0, %v5558
    %v5560 = vrcp.pop %v4956
    %v5561 = vmul.f32 %v4956, %v5560
    %v5562 = vsub.f32 1.0, %v5561
    %v5563 = vmul.f32 %v5560, %v5562
    %v5564 = vadd.f32 %v5560, %v5563
    %vm5565 = vweird.f32 %v4956
    %vm5566 = vweird.f32 %v5560
    %vm5567 = vmor %vm5565, %vm5566
    %v5568 = vsel %vm5567, %v5560, %v5564
    %v5569 = vand.u32 2147483647, %v4956
    %vm5570 = vcmp.eq.f32.partialorder %v5569, 8.507059e+37
    %v5571 = vand.u32 %v4956, 2147483648
    %v5572 = vor.u32 1.1754944e-38, %v5571
    %v5573 = vsel %vm5570, %v5572, %v5568
    %v5574 = vmul.f32 1.0, %v5573
    %v5575 = vrcp.pop %v4957
    %v5576 = vmul.f32 %v4957, %v5575
    %v5577 = vsub.f32 1.0, %v5576
    %v5578 = vmul.f32 %v5575, %v5577
    %v5579 = vadd.f32 %v5575, %v5578
    %vm5580 = vweird.f32 %v4957
    %vm5581 = vweird.f32 %v5575
    %vm5582 = vmor %vm5580, %vm5581
    %v5583 = vsel %vm5582, %v5575, %v5579
    %v5584 = vand.u32 2147483647, %v4957
    %vm5585 = vcmp.eq.f32.partialorder %v5584, 8.507059e+37
    %v5586 = vand.u32 %v4957, 2147483648
    %v5587 = vor.u32 1.1754944e-38, %v5586
    %v5588 = vsel %vm5585, %v5587, %v5583
    %v5589 = vmul.f32 1.0, %v5588
    %v5590 = vrcp.pop %v4958
    %v5591 = vmul.f32 %v4958, %v5590
    %v5592 = vsub.f32 1.0, %v5591
    %v5593 = vmul.f32 %v5590, %v5592
    %v5594 = vadd.f32 %v5590, %v5593
    %vm5595 = vweird.f32 %v4958
    %vm5596 = vweird.f32 %v5590
    %vm5597 = vmor %vm5595, %vm5596
    %v5598 = vsel %vm5597, %v5590, %v5594
    %v5599 = vand.u32 2147483647, %v4958
    %vm5600 = vcmp.eq.f32.partialorder %v5599, 8.507059e+37
    %v5601 = vand.u32 %v4958, 2147483648
    %v5602 = vor.u32 1.1754944e-38, %v5601
    %v5603 = vsel %vm5600, %v5602, %v5598
    %v5604 = vmul.f32 1.0, %v5603
    %v5605 = vrcp.pop %v4959
    %v5606 = vmul.f32 %v4959, %v5605
    %v5607 = vsub.f32 1.0, %v5606
    %v5608 = vmul.f32 %v5605, %v5607
    %v5609 = vadd.f32 %v5605, %v5608
    %vm5610 = vweird.f32 %v4959
    %vm5611 = vweird.f32 %v5605
    %vm5612 = vmor %vm5610, %vm5611
    %v5613 = vsel %vm5612, %v5605, %v5609
    %v5614 = vand.u32 2147483647, %v4959
    %vm5615 = vcmp.eq.f32.partialorder %v5614, 8.507059e+37
    %v5616 = vand.u32 %v4959, 2147483648
    %v5617 = vor.u32 1.1754944e-38, %v5616
    %v5618 = vsel %vm5615, %v5617, %v5613
    %v5619 = vmul.f32 1.0, %v5618
    %v5620 = vrcp.pop %v4960
    %v5621 = vmul.f32 %v4960, %v5620
    %v5622 = vsub.f32 1.0, %v5621
    %v5623 = vmul.f32 %v5620, %v5622
    %v5624 = vadd.f32 %v5620, %v5623
    %vm5625 = vweird.f32 %v4960
    %vm5626 = vweird.f32 %v5620
    %vm5627 = vmor %vm5625, %vm5626
    %v5628 = vsel %vm5627, %v5620, %v5624
    %v5629 = vand.u32 2147483647, %v4960
    %vm5630 = vcmp.eq.f32.partialorder %v5629, 8.507059e+37
    %v5631 = vand.u32 %v4960, 2147483648
    %v5632 = vor.u32 1.1754944e-38, %v5631
    %v5633 = vsel %vm5630, %v5632, %v5628
    %v5634 = vmul.f32 1.0, %v5633
    %v5635 = vrcp.pop %v4961
    %v5636 = vmul.f32 %v4961, %v5635
    %v5637 = vsub.f32 1.0, %v5636
    %v5638 = vmul.f32 %v5635, %v5637
    %v5639 = vadd.f32 %v5635, %v5638
    %vm5640 = vweird.f32 %v4961
    %vm5641 = vweird.f32 %v5635
    %vm5642 = vmor %vm5640, %vm5641
    %v5643 = vsel %vm5642, %v5635, %v5639
    %v5644 = vand.u32 2147483647, %v4961
    %vm5645 = vcmp.eq.f32.partialorder %v5644, 8.507059e+37
    %v5646 = vand.u32 %v4961, 2147483648
    %v5647 = vor.u32 1.1754944e-38, %v5646
    %v5648 = vsel %vm5645, %v5647, %v5643
    %v5649 = vmul.f32 1.0, %v5648
    %v5650 = vrcp.pop %v4962
    %v5651 = vmul.f32 %v4962, %v5650
    %v5652 = vsub.f32 1.0, %v5651
    %v5653 = vmul.f32 %v5650, %v5652
    %v5654 = vadd.f32 %v5650, %v5653
    %vm5655 = vweird.f32 %v4962
    %vm5656 = vweird.f32 %v5650
    %vm5657 = vmor %vm5655, %vm5656
    %v5658 = vsel %vm5657, %v5650, %v5654
    %v5659 = vand.u32 2147483647, %v4962
    %vm5660 = vcmp.eq.f32.partialorder %v5659, 8.507059e+37
    %v5661 = vand.u32 %v4962, 2147483648
    %v5662 = vor.u32 1.1754944e-38, %v5661
    %v5663 = vsel %vm5660, %v5662, %v5658
    %v5664 = vmul.f32 1.0, %v5663
    %v5665 = vrcp.pop %v4963
    %v5666 = vmul.f32 %v4963, %v5665
    %v5667 = vsub.f32 1.0, %v5666
    %v5668 = vmul.f32 %v5665, %v5667
    %v5669 = vadd.f32 %v5665, %v5668
    %vm5670 = vweird.f32 %v4963
    %vm5671 = vweird.f32 %v5665
    %vm5672 = vmor %vm5670, %vm5671
    %v5673 = vsel %vm5672, %v5665, %v5669
    %v5674 = vand.u32 2147483647, %v4963
    %vm5675 = vcmp.eq.f32.partialorder %v5674, 8.507059e+37
    %v5676 = vand.u32 %v4963, 2147483648
    %v5677 = vor.u32 1.1754944e-38, %v5676
    %v5678 = vsel %vm5675, %v5677, %v5673
    %v5679 = vmul.f32 1.0, %v5678
    %v5680 = vrcp.pop %v4964
    %v5681 = vmul.f32 %v4964, %v5680
    %v5682 = vsub.f32 1.0, %v5681
    %v5683 = vmul.f32 %v5680, %v5682
    %v5684 = vadd.f32 %v5680, %v5683
    %vm5685 = vweird.f32 %v4964
    %vm5686 = vweird.f32 %v5680
    %vm5687 = vmor %vm5685, %vm5686
    %v5688 = vsel %vm5687, %v5680, %v5684
    %v5689 = vand.u32 2147483647, %v4964
    %vm5690 = vcmp.eq.f32.partialorder %v5689, 8.507059e+37
    %v5691 = vand.u32 %v4964, 2147483648
    %v5692 = vor.u32 1.1754944e-38, %v5691
    %v5693 = vsel %vm5690, %v5692, %v5688
    %v5694 = vmul.f32 1.0, %v5693
    %v5695 = vrcp.pop %v4965
    %v5696 = vmul.f32 %v4965, %v5695
    %v5697 = vsub.f32 1.0, %v5696
    %v5698 = vmul.f32 %v5695, %v5697
    %v5699 = vadd.f32 %v5695, %v5698
    %vm5700 = vweird.f32 %v4965
    %vm5701 = vweird.f32 %v5695
    %vm5702 = vmor %vm5700, %vm5701
    %v5703 = vsel %vm5702, %v5695, %v5699
    %v5704 = vand.u32 2147483647, %v4965
    %vm5705 = vcmp.eq.f32.partialorder %v5704, 8.507059e+37
    %v5706 = vand.u32 %v4965, 2147483648
    %v5707 = vor.u32 1.1754944e-38, %v5706
    %v5708 = vsel %vm5705, %v5707, %v5703
    %v5709 = vmul.f32 1.0, %v5708
    %v5710 = vrcp.pop %v4966
    %v5711 = vmul.f32 %v4966, %v5710
    %v5712 = vsub.f32 1.0, %v5711
    %v5713 = vmul.f32 %v5710, %v5712
    %v5714 = vadd.f32 %v5710, %v5713
    %vm5715 = vweird.f32 %v4966
    %vm5716 = vweird.f32 %v5710
    %vm5717 = vmor %vm5715, %vm5716
    %v5718 = vsel %vm5717, %v5710, %v5714
    %v5719 = vand.u32 2147483647, %v4966
    %vm5720 = vcmp.eq.f32.partialorder %v5719, 8.507059e+37
    %v5721 = vand.u32 %v4966, 2147483648
    %v5722 = vor.u32 1.1754944e-38, %v5721
    %v5723 = vsel %vm5720, %v5722, %v5718
    %v5724 = vmul.f32 1.0, %v5723
    %v5725 = vrcp.pop %v4967
    %v5726 = vmul.f32 %v4967, %v5725
    %v5727 = vsub.f32 1.0, %v5726
    %v5728 = vmul.f32 %v5725, %v5727
    %v5729 = vadd.f32 %v5725, %v5728
    %vm5730 = vweird.f32 %v4967
    %vm5731 = vweird.f32 %v5725
    %vm5732 = vmor %vm5730, %vm5731
    %v5733 = vsel %vm5732, %v5725, %v5729
    %v5734 = vand.u32 2147483647, %v4967
    %vm5735 = vcmp.eq.f32.partialorder %v5734, 8.507059e+37
    %v5736 = vand.u32 %v4967, 2147483648
    %v5737 = vor.u32 1.1754944e-38, %v5736
    %v5738 = vsel %vm5735, %v5737, %v5733
    %v5739 = vmul.f32 1.0, %v5738
    %v5740 = vrcp.pop %v4968
    %v5741 = vmul.f32 %v4968, %v5740
    %v5742 = vsub.f32 1.0, %v5741
    %v5743 = vmul.f32 %v5740, %v5742
    %v5744 = vadd.f32 %v5740, %v5743
    %vm5745 = vweird.f32 %v4968
    %vm5746 = vweird.f32 %v5740
    %vm5747 = vmor %vm5745, %vm5746
    %v5748 = vsel %vm5747, %v5740, %v5744
    %v5749 = vand.u32 2147483647, %v4968
    %vm5750 = vcmp.eq.f32.partialorder %v5749, 8.507059e+37
    %v5751 = vand.u32 %v4968, 2147483648
    %v5752 = vor.u32 1.1754944e-38, %v5751
    %v5753 = vsel %vm5750, %v5752, %v5748
    %v5754 = vmul.f32 1.0, %v5753
    %v5755 = vrcp.pop %v4969
    %v5756 = vmul.f32 %v4969, %v5755
    %v5757 = vsub.f32 1.0, %v5756
    %v5758 = vmul.f32 %v5755, %v5757
    %v5759 = vadd.f32 %v5755, %v5758
    %vm5760 = vweird.f32 %v4969
    %vm5761 = vweird.f32 %v5755
    %vm5762 = vmor %vm5760, %vm5761
    %v5763 = vsel %vm5762, %v5755, %v5759
    %v5764 = vand.u32 2147483647, %v4969
    %vm5765 = vcmp.eq.f32.partialorder %v5764, 8.507059e+37
    %v5766 = vand.u32 %v4969, 2147483648
    %v5767 = vor.u32 1.1754944e-38, %v5766
    %v5768 = vsel %vm5765, %v5767, %v5763
    %v5769 = vmul.f32 1.0, %v5768
    %v5770 = vrcp.pop %v4970
    %v5771 = vmul.f32 %v4970, %v5770
    %v5772 = vsub.f32 1.0, %v5771
    %v5773 = vmul.f32 %v5770, %v5772
    %v5774 = vadd.f32 %v5770, %v5773
    %vm5775 = vweird.f32 %v4970
    %vm5776 = vweird.f32 %v5770
    %vm5777 = vmor %vm5775, %vm5776
    %v5778 = vsel %vm5777, %v5770, %v5774
    %v5779 = vand.u32 2147483647, %v4970
    %vm5780 = vcmp.eq.f32.partialorder %v5779, 8.507059e+37
    %v5781 = vand.u32 %v4970, 2147483648
    %v5782 = vor.u32 1.1754944e-38, %v5781
    %v5783 = vsel %vm5780, %v5782, %v5778
    %v5784 = vmul.f32 1.0, %v5783
    %v5785 = vrcp.pop %v4971
    %v5786 = vmul.f32 %v4971, %v5785
    %v5787 = vsub.f32 1.0, %v5786
    %v5788 = vmul.f32 %v5785, %v5787
    %v5789 = vadd.f32 %v5785, %v5788
    %vm5790 = vweird.f32 %v4971
    %vm5791 = vweird.f32 %v5785
    %vm5792 = vmor %vm5790, %vm5791
    %v5793 = vsel %vm5792, %v5785, %v5789
    %v5794 = vand.u32 2147483647, %v4971
    %vm5795 = vcmp.eq.f32.partialorder %v5794, 8.507059e+37
    %v5796 = vand.u32 %v4971, 2147483648
    %v5797 = vor.u32 1.1754944e-38, %v5796
    %v5798 = vsel %vm5795, %v5797, %v5793
    %v5799 = vmul.f32 1.0, %v5798
    %v5800 = vrcp.pop %v4972
    %v5801 = vmul.f32 %v4972, %v5800
    %v5802 = vsub.f32 1.0, %v5801
    %v5803 = vmul.f32 %v5800, %v5802
    %v5804 = vadd.f32 %v5800, %v5803
    %vm5805 = vweird.f32 %v4972
    %vm5806 = vweird.f32 %v5800
    %vm5807 = vmor %vm5805, %vm5806
    %v5808 = vsel %vm5807, %v5800, %v5804
    %v5809 = vand.u32 2147483647, %v4972
    %vm5810 = vcmp.eq.f32.partialorder %v5809, 8.507059e+37
    %v5811 = vand.u32 %v4972, 2147483648
    %v5812 = vor.u32 1.1754944e-38, %v5811
    %v5813 = vsel %vm5810, %v5812, %v5808
    %v5814 = vmul.f32 1.0, %v5813
    %v5815 = vrcp.pop %v4973
    %v5816 = vmul.f32 %v4973, %v5815
    %v5817 = vsub.f32 1.0, %v5816
    %v5818 = vmul.f32 %v5815, %v5817
    %v5819 = vadd.f32 %v5815, %v5818
    %vm5820 = vweird.f32 %v4973
    %vm5821 = vweird.f32 %v5815
    %vm5822 = vmor %vm5820, %vm5821
    %v5823 = vsel %vm5822, %v5815, %v5819
    %v5824 = vand.u32 2147483647, %v4973
    %vm5825 = vcmp.eq.f32.partialorder %v5824, 8.507059e+37
    %v5826 = vand.u32 %v4973, 2147483648
    %v5827 = vor.u32 1.1754944e-38, %v5826
    %v5828 = vsel %vm5825, %v5827, %v5823
    %v5829 = vmul.f32 1.0, %v5828
    %v5830 = vrcp.pop %v4974
    %v5831 = vmul.f32 %v4974, %v5830
    %v5832 = vsub.f32 1.0, %v5831
    %v5833 = vmul.f32 %v5830, %v5832
    %v5834 = vadd.f32 %v5830, %v5833
    %vm5835 = vweird.f32 %v4974
    %vm5836 = vweird.f32 %v5830
    %vm5837 = vmor %vm5835, %vm5836
    %v5838 = vsel %vm5837, %v5830, %v5834
    %v5839 = vand.u32 2147483647, %v4974
    %vm5840 = vcmp.eq.f32.partialorder %v5839, 8.507059e+37
    %v5841 = vand.u32 %v4974, 2147483648
    %v5842 = vor.u32 1.1754944e-38, %v5841
    %v5843 = vsel %vm5840, %v5842, %v5838
    %v5844 = vmul.f32 1.0, %v5843
    %v5845 = vrcp.pop %v4975
    %v5846 = vmul.f32 %v4975, %v5845
    %v5847 = vsub.f32 1.0, %v5846
    %v5848 = vmul.f32 %v5845, %v5847
    %v5849 = vadd.f32 %v5845, %v5848
    %vm5850 = vweird.f32 %v4975
    %vm5851 = vweird.f32 %v5845
    %vm5852 = vmor %vm5850, %vm5851
    %v5853 = vsel %vm5852, %v5845, %v5849
    %v5854 = vand.u32 2147483647, %v4975
    %vm5855 = vcmp.eq.f32.partialorder %v5854, 8.507059e+37
    %v5856 = vand.u32 %v4975, 2147483648
    %v5857 = vor.u32 1.1754944e-38, %v5856
    %v5858 = vsel %vm5855, %v5857, %v5853
    %v5859 = vmul.f32 1.0, %v5858
    %v5860 = vrcp.pop %v4976
    %v5861 = vmul.f32 %v4976, %v5860
    %v5862 = vsub.f32 1.0, %v5861
    %v5863 = vmul.f32 %v5860, %v5862
    %v5864 = vadd.f32 %v5860, %v5863
    %vm5865 = vweird.f32 %v4976
    %vm5866 = vweird.f32 %v5860
    %vm5867 = vmor %vm5865, %vm5866
    %v5868 = vsel %vm5867, %v5860, %v5864
    %v5869 = vand.u32 2147483647, %v4976
    %vm5870 = vcmp.eq.f32.partialorder %v5869, 8.507059e+37
    %v5871 = vand.u32 %v4976, 2147483648
    %v5872 = vor.u32 1.1754944e-38, %v5871
    %v5873 = vsel %vm5870, %v5872, %v5868
    %v5874 = vmul.f32 1.0, %v5873
    %v5875 = vrcp.pop %v4977
    %v5876 = vmul.f32 %v4977, %v5875
    %v5877 = vsub.f32 1.0, %v5876
    %v5878 = vmul.f32 %v5875, %v5877
    %v5879 = vadd.f32 %v5875, %v5878
    %vm5880 = vweird.f32 %v4977
    %vm5881 = vweird.f32 %v5875
    %vm5882 = vmor %vm5880, %vm5881
    %v5883 = vsel %vm5882, %v5875, %v5879
    %v5884 = vand.u32 2147483647, %v4977
    %vm5885 = vcmp.eq.f32.partialorder %v5884, 8.507059e+37
    %v5886 = vand.u32 %v4977, 2147483648
    %v5887 = vor.u32 1.1754944e-38, %v5886
    %v5888 = vsel %vm5885, %v5887, %v5883
    %v5889 = vmul.f32 1.0, %v5888
    %v5890 = vrcp.pop %v4978
    %v5891 = vmul.f32 %v4978, %v5890
    %v5892 = vsub.f32 1.0, %v5891
    %v5893 = vmul.f32 %v5890, %v5892
    %v5894 = vadd.f32 %v5890, %v5893
    %vm5895 = vweird.f32 %v4978
    %vm5896 = vweird.f32 %v5890
    %vm5897 = vmor %vm5895, %vm5896
    %v5898 = vsel %vm5897, %v5890, %v5894
    %v5899 = vand.u32 2147483647, %v4978
    %vm5900 = vcmp.eq.f32.partialorder %v5899, 8.507059e+37
    %v5901 = vand.u32 %v4978, 2147483648
    %v5902 = vor.u32 1.1754944e-38, %v5901
    %v5903 = vsel %vm5900, %v5902, %v5898
    %v5904 = vmul.f32 1.0, %v5903
    %v5905 = vrcp.pop %v4979
    %v5906 = vmul.f32 %v4979, %v5905
    %v5907 = vsub.f32 1.0, %v5906
    %v5908 = vmul.f32 %v5905, %v5907
    %v5909 = vadd.f32 %v5905, %v5908
    %vm5910 = vweird.f32 %v4979
    %vm5911 = vweird.f32 %v5905
    %vm5912 = vmor %vm5910, %vm5911
    %v5913 = vsel %vm5912, %v5905, %v5909
    %v5914 = vand.u32 2147483647, %v4979
    %vm5915 = vcmp.eq.f32.partialorder %v5914, 8.507059e+37
    %v5916 = vand.u32 %v4979, 2147483648
    %v5917 = vor.u32 1.1754944e-38, %v5916
    %v5918 = vsel %vm5915, %v5917, %v5913
    %v5919 = vmul.f32 1.0, %v5918
    %v5920 = vrcp.pop %v4980
    %v5921 = vmul.f32 %v4980, %v5920
    %v5922 = vsub.f32 1.0, %v5921
    %v5923 = vmul.f32 %v5920, %v5922
    %v5924 = vadd.f32 %v5920, %v5923
    %vm5925 = vweird.f32 %v4980
    %vm5926 = vweird.f32 %v5920
    %vm5927 = vmor %vm5925, %vm5926
    %v5928 = vsel %vm5927, %v5920, %v5924
    %v5929 = vand.u32 2147483647, %v4980
    %vm5930 = vcmp.eq.f32.partialorder %v5929, 8.507059e+37
    %v5931 = vand.u32 %v4980, 2147483648
    %v5932 = vor.u32 1.1754944e-38, %v5931
    %v5933 = vsel %vm5930, %v5932, %v5928
    %v5934 = vmul.f32 1.0, %v5933
    %v5935 = vrcp.pop %v4981
    %v5936 = vmul.f32 %v4981, %v5935
    %v5937 = vsub.f32 1.0, %v5936
    %v5938 = vmul.f32 %v5935, %v5937
    %v5939 = vadd.f32 %v5935, %v5938
    %vm5940 = vweird.f32 %v4981
    %vm5941 = vweird.f32 %v5935
    %vm5942 = vmor %vm5940, %vm5941
    %v5943 = vsel %vm5942, %v5935, %v5939
    %v5944 = vand.u32 2147483647, %v4981
    %vm5945 = vcmp.eq.f32.partialorder %v5944, 8.507059e+37
    %v5946 = vand.u32 %v4981, 2147483648
    %v5947 = vor.u32 1.1754944e-38, %v5946
    %v5948 = vsel %vm5945, %v5947, %v5943
    %v5949 = vmul.f32 1.0, %v5948
    %v5950 = vrcp.pop %v4982
    %v5951 = vmul.f32 %v4982, %v5950
    %v5952 = vsub.f32 1.0, %v5951
    %v5953 = vmul.f32 %v5950, %v5952
    %v5954 = vadd.f32 %v5950, %v5953
    %vm5955 = vweird.f32 %v4982
    %vm5956 = vweird.f32 %v5950
    %vm5957 = vmor %vm5955, %vm5956
    %v5958 = vsel %vm5957, %v5950, %v5954
    %v5959 = vand.u32 2147483647, %v4982
    %vm5960 = vcmp.eq.f32.partialorder %v5959, 8.507059e+37
    %v5961 = vand.u32 %v4982, 2147483648
    %v5962 = vor.u32 1.1754944e-38, %v5961
    %v5963 = vsel %vm5960, %v5962, %v5958
    %v5964 = vmul.f32 1.0, %v5963
    %v5965 = vrcp.pop %v4983
    %v5966 = vmul.f32 %v4983, %v5965
    %v5967 = vsub.f32 1.0, %v5966
    %v5968 = vmul.f32 %v5965, %v5967
    %v5969 = vadd.f32 %v5965, %v5968
    %vm5970 = vweird.f32 %v4983
    %vm5971 = vweird.f32 %v5965
    %vm5972 = vmor %vm5970, %vm5971
    %v5973 = vsel %vm5972, %v5965, %v5969
    %v5974 = vand.u32 2147483647, %v4983
    %vm5975 = vcmp.eq.f32.partialorder %v5974, 8.507059e+37
    %v5976 = vand.u32 %v4983, 2147483648
    %v5977 = vor.u32 1.1754944e-38, %v5976
    %v5978 = vsel %vm5975, %v5977, %v5973
    %v5979 = vmul.f32 1.0, %v5978
    %v5980 = vrcp.pop %v4984
    %v5981 = vmul.f32 %v4984, %v5980
    %v5982 = vsub.f32 1.0, %v5981
    %v5983 = vmul.f32 %v5980, %v5982
    %v5984 = vadd.f32 %v5980, %v5983
    %vm5985 = vweird.f32 %v4984
    %vm5986 = vweird.f32 %v5980
    %vm5987 = vmor %vm5985, %vm5986
    %v5988 = vsel %vm5987, %v5980, %v5984
    %v5989 = vand.u32 2147483647, %v4984
    %vm5990 = vcmp.eq.f32.partialorder %v5989, 8.507059e+37
    %v5991 = vand.u32 %v4984, 2147483648
    %v5992 = vor.u32 1.1754944e-38, %v5991
    %v5993 = vsel %vm5990, %v5992, %v5988
    %v5994 = vmul.f32 1.0, %v5993
    %v5995 = vrcp.pop %v4985
    %v5996 = vmul.f32 %v4985, %v5995
    %v5997 = vsub.f32 1.0, %v5996
    %v5998 = vmul.f32 %v5995, %v5997
    %v5999 = vadd.f32 %v5995, %v5998
    %vm6000 = vweird.f32 %v4985
    %vm6001 = vweird.f32 %v5995
    %vm6002 = vmor %vm6000, %vm6001
    %v6003 = vsel %vm6002, %v5995, %v5999
    %v6004 = vand.u32 2147483647, %v4985
    %vm6005 = vcmp.eq.f32.partialorder %v6004, 8.507059e+37
    %v6006 = vand.u32 %v4985, 2147483648
    %v6007 = vor.u32 1.1754944e-38, %v6006
    %v6008 = vsel %vm6005, %v6007, %v6003
    %v6009 = vmul.f32 1.0, %v6008
    %v6010 = vrcp.pop %v4986
    %v6011 = vmul.f32 %v4986, %v6010
    %v6012 = vsub.f32 1.0, %v6011
    %v6013 = vmul.f32 %v6010, %v6012
    %v6014 = vadd.f32 %v6010, %v6013
    %vm6015 = vweird.f32 %v4986
    %vm6016 = vweird.f32 %v6010
    %vm6017 = vmor %vm6015, %vm6016
    %v6018 = vsel %vm6017, %v6010, %v6014
    %v6019 = vand.u32 2147483647, %v4986
    %vm6020 = vcmp.eq.f32.partialorder %v6019, 8.507059e+37
    %v6021 = vand.u32 %v4986, 2147483648
    %v6022 = vor.u32 1.1754944e-38, %v6021
    %v6023 = vsel %vm6020, %v6022, %v6018
    %v6024 = vmul.f32 1.0, %v6023
    %v6025 = vrcp.pop %v4987
    %v6026 = vmul.f32 %v4987, %v6025
    %v6027 = vsub.f32 1.0, %v6026
    %v6028 = vmul.f32 %v6025, %v6027
    %v6029 = vadd.f32 %v6025, %v6028
    %vm6030 = vweird.f32 %v4987
    %vm6031 = vweird.f32 %v6025
    %vm6032 = vmor %vm6030, %vm6031
    %v6033 = vsel %vm6032, %v6025, %v6029
    %v6034 = vand.u32 2147483647, %v4987
    %vm6035 = vcmp.eq.f32.partialorder %v6034, 8.507059e+37
    %v6036 = vand.u32 %v4987, 2147483648
    %v6037 = vor.u32 1.1754944e-38, %v6036
    %v6038 = vsel %vm6035, %v6037, %v6033
    %v6039 = vmul.f32 1.0, %v6038
    %v6040 = vrcp.pop %v4988
    %v6041 = vmul.f32 %v4988, %v6040
    %v6042 = vsub.f32 1.0, %v6041
    %v6043 = vmul.f32 %v6040, %v6042
    %v6044 = vadd.f32 %v6040, %v6043
    %vm6045 = vweird.f32 %v4988
    %vm6046 = vweird.f32 %v6040
    %vm6047 = vmor %vm6045, %vm6046
    %v6048 = vsel %vm6047, %v6040, %v6044
    %v6049 = vand.u32 2147483647, %v4988
    %vm6050 = vcmp.eq.f32.partialorder %v6049, 8.507059e+37
    %v6051 = vand.u32 %v4988, 2147483648
    %v6052 = vor.u32 1.1754944e-38, %v6051
    %v6053 = vsel %vm6050, %v6052, %v6048
    %v6054 = vmul.f32 1.0, %v6053
    %v6055 = vrcp.pop %v4989
    %v6056 = vmul.f32 %v4989, %v6055
    %v6057 = vsub.f32 1.0, %v6056
    %v6058 = vmul.f32 %v6055, %v6057
    %v6059 = vadd.f32 %v6055, %v6058
    %vm6060 = vweird.f32 %v4989
    %vm6061 = vweird.f32 %v6055
    %vm6062 = vmor %vm6060, %vm6061
    %v6063 = vsel %vm6062, %v6055, %v6059
    %v6064 = vand.u32 2147483647, %v4989
    %vm6065 = vcmp.eq.f32.partialorder %v6064, 8.507059e+37
    %v6066 = vand.u32 %v4989, 2147483648
    %v6067 = vor.u32 1.1754944e-38, %v6066
    %v6068 = vsel %vm6065, %v6067, %v6063
    %v6069 = vmul.f32 1.0, %v6068
    %v6070 = vrcp.pop %v4990
    %v6071 = vmul.f32 %v4990, %v6070
    %v6072 = vsub.f32 1.0, %v6071
    %v6073 = vmul.f32 %v6070, %v6072
    %v6074 = vadd.f32 %v6070, %v6073
    %vm6075 = vweird.f32 %v4990
    %vm6076 = vweird.f32 %v6070
    %vm6077 = vmor %vm6075, %vm6076
    %v6078 = vsel %vm6077, %v6070, %v6074
    %v6079 = vand.u32 2147483647, %v4990
    %vm6080 = vcmp.eq.f32.partialorder %v6079, 8.507059e+37
    %v6081 = vand.u32 %v4990, 2147483648
    %v6082 = vor.u32 1.1754944e-38, %v6081
    %v6083 = vsel %vm6080, %v6082, %v6078
    %v6084 = vmul.f32 1.0, %v6083
    %v6085 = vrcp.pop %v4991
    %v6086 = vmul.f32 %v4991, %v6085
    %v6087 = vsub.f32 1.0, %v6086
    %v6088 = vmul.f32 %v6085, %v6087
    %v6089 = vadd.f32 %v6085, %v6088
    %vm6090 = vweird.f32 %v4991
    %vm6091 = vweird.f32 %v6085
    %vm6092 = vmor %vm6090, %vm6091
    %v6093 = vsel %vm6092, %v6085, %v6089
    %v6094 = vand.u32 2147483647, %v4991
    %vm6095 = vcmp.eq.f32.partialorder %v6094, 8.507059e+37
    %v6096 = vand.u32 %v4991, 2147483648
    %v6097 = vor.u32 1.1754944e-38, %v6096
    %v6098 = vsel %vm6095, %v6097, %v6093
    %v6099 = vmul.f32 1.0, %v6098
    %v6100 = vrcp.pop %v4992
    %v6101 = vmul.f32 %v4992, %v6100
    %v6102 = vsub.f32 1.0, %v6101
    %v6103 = vmul.f32 %v6100, %v6102
    %v6104 = vadd.f32 %v6100, %v6103
    %vm6105 = vweird.f32 %v4992
    %vm6106 = vweird.f32 %v6100
    %vm6107 = vmor %vm6105, %vm6106
    %v6108 = vsel %vm6107, %v6100, %v6104
    %v6109 = vand.u32 2147483647, %v4992
    %vm6110 = vcmp.eq.f32.partialorder %v6109, 8.507059e+37
    %v6111 = vand.u32 %v4992, 2147483648
    %v6112 = vor.u32 1.1754944e-38, %v6111
    %v6113 = vsel %vm6110, %v6112, %v6108
    %v6114 = vmul.f32 1.0, %v6113
    %v6115 = vrcp.pop %v4993
    %v6116 = vmul.f32 %v4993, %v6115
    %v6117 = vsub.f32 1.0, %v6116
    %v6118 = vmul.f32 %v6115, %v6117
    %v6119 = vadd.f32 %v6115, %v6118
    %vm6120 = vweird.f32 %v4993
    %vm6121 = vweird.f32 %v6115
    %vm6122 = vmor %vm6120, %vm6121
    %v6123 = vsel %vm6122, %v6115, %v6119
    %v6124 = vand.u32 2147483647, %v4993
    %vm6125 = vcmp.eq.f32.partialorder %v6124, 8.507059e+37
    %v6126 = vand.u32 %v4993, 2147483648
    %v6127 = vor.u32 1.1754944e-38, %v6126
    %v6128 = vsel %vm6125, %v6127, %v6123
    %v6129 = vmul.f32 1.0, %v6128
    %v6130 = vrcp.pop %v4994
    %v6131 = vmul.f32 %v4994, %v6130
    %v6132 = vsub.f32 1.0, %v6131
    %v6133 = vmul.f32 %v6130, %v6132
    %v6134 = vadd.f32 %v6130, %v6133
    %vm6135 = vweird.f32 %v4994
    %vm6136 = vweird.f32 %v6130
    %vm6137 = vmor %vm6135, %vm6136
    %v6138 = vsel %vm6137, %v6130, %v6134
    %v6139 = vand.u32 2147483647, %v4994
    %vm6140 = vcmp.eq.f32.partialorder %v6139, 8.507059e+37
    %v6141 = vand.u32 %v4994, 2147483648
    %v6142 = vor.u32 1.1754944e-38, %v6141
    %v6143 = vsel %vm6140, %v6142, %v6138
    %v6144 = vmul.f32 1.0, %v6143
    %v6145 = vrcp.pop %v4995
    %v6146 = vmul.f32 %v4995, %v6145
    %v6147 = vsub.f32 1.0, %v6146
    %v6148 = vmul.f32 %v6145, %v6147
    %v6149 = vadd.f32 %v6145, %v6148
    %vm6150 = vweird.f32 %v4995
    %vm6151 = vweird.f32 %v6145
    %vm6152 = vmor %vm6150, %vm6151
    %v6153 = vsel %vm6152, %v6145, %v6149
    %v6154 = vand.u32 2147483647, %v4995
    %vm6155 = vcmp.eq.f32.partialorder %v6154, 8.507059e+37
    %v6156 = vand.u32 %v4995, 2147483648
    %v6157 = vor.u32 1.1754944e-38, %v6156
    %v6158 = vsel %vm6155, %v6157, %v6153
    %v6159 = vmul.f32 1.0, %v6158
    %v6160 = vrcp.pop %v4996
    %v6161 = vmul.f32 %v4996, %v6160
    %v6162 = vsub.f32 1.0, %v6161
    %v6163 = vmul.f32 %v6160, %v6162
    %v6164 = vadd.f32 %v6160, %v6163
    %vm6165 = vweird.f32 %v4996
    %vm6166 = vweird.f32 %v6160
    %vm6167 = vmor %vm6165, %vm6166
    %v6168 = vsel %vm6167, %v6160, %v6164
    %v6169 = vand.u32 2147483647, %v4996
    %vm6170 = vcmp.eq.f32.partialorder %v6169, 8.507059e+37
    %v6171 = vand.u32 %v4996, 2147483648
    %v6172 = vor.u32 1.1754944e-38, %v6171
    %v6173 = vsel %vm6170, %v6172, %v6168
    %v6174 = vmul.f32 1.0, %v6173
    %v6175 = vrcp.pop %v4997
    %v6176 = vmul.f32 %v4997, %v6175
    %v6177 = vsub.f32 1.0, %v6176
    %v6178 = vmul.f32 %v6175, %v6177
    %v6179 = vadd.f32 %v6175, %v6178
    %vm6180 = vweird.f32 %v4997
    %vm6181 = vweird.f32 %v6175
    %vm6182 = vmor %vm6180, %vm6181
    %v6183 = vsel %vm6182, %v6175, %v6179
    %v6184 = vand.u32 2147483647, %v4997
    %vm6185 = vcmp.eq.f32.partialorder %v6184, 8.507059e+37
    %v6186 = vand.u32 %v4997, 2147483648
    %v6187 = vor.u32 1.1754944e-38, %v6186
    %v6188 = vsel %vm6185, %v6187, %v6183
    %v6189 = vmul.f32 1.0, %v6188
    %v6190 = vrcp.pop %v4998
    %v6191 = vmul.f32 %v4998, %v6190
    %v6192 = vsub.f32 1.0, %v6191
    %v6193 = vmul.f32 %v6190, %v6192
    %v6194 = vadd.f32 %v6190, %v6193
    %vm6195 = vweird.f32 %v4998
    %vm6196 = vweird.f32 %v6190
    %vm6197 = vmor %vm6195, %vm6196
    %v6198 = vsel %vm6197, %v6190, %v6194
    %v6199 = vand.u32 2147483647, %v4998
    %vm6200 = vcmp.eq.f32.partialorder %v6199, 8.507059e+37
    %v6201 = vand.u32 %v4998, 2147483648
    %v6202 = vor.u32 1.1754944e-38, %v6201
    %v6203 = vsel %vm6200, %v6202, %v6198
    %v6204 = vmul.f32 1.0, %v6203
    %v6205 = vrcp.pop %v4999
    %v6206 = vmul.f32 %v4999, %v6205
    %v6207 = vsub.f32 1.0, %v6206
    %v6208 = vmul.f32 %v6205, %v6207
    %v6209 = vadd.f32 %v6205, %v6208
    %vm6210 = vweird.f32 %v4999
    %vm6211 = vweird.f32 %v6205
    %vm6212 = vmor %vm6210, %vm6211
    %v6213 = vsel %vm6212, %v6205, %v6209
    %v6214 = vand.u32 2147483647, %v4999
    %vm6215 = vcmp.eq.f32.partialorder %v6214, 8.507059e+37
    %v6216 = vand.u32 %v4999, 2147483648
    %v6217 = vor.u32 1.1754944e-38, %v6216
    %v6218 = vsel %vm6215, %v6217, %v6213
    %v6219 = vmul.f32 1.0, %v6218
    %v6220 = vrcp.pop %v5000
    %v6221 = vmul.f32 %v5000, %v6220
    %v6222 = vsub.f32 1.0, %v6221
    %v6223 = vmul.f32 %v6220, %v6222
    %v6224 = vadd.f32 %v6220, %v6223
    %vm6225 = vweird.f32 %v5000
    %vm6226 = vweird.f32 %v6220
    %vm6227 = vmor %vm6225, %vm6226
    %v6228 = vsel %vm6227, %v6220, %v6224
    %v6229 = vand.u32 2147483647, %v5000
    %vm6230 = vcmp.eq.f32.partialorder %v6229, 8.507059e+37
    %v6231 = vand.u32 %v5000, 2147483648
    %v6232 = vor.u32 1.1754944e-38, %v6231
    %v6233 = vsel %vm6230, %v6232, %v6228
    %v6234 = vmul.f32 1.0, %v6233
    %v6235 = vrcp.pop %v5001
    %v6236 = vmul.f32 %v5001, %v6235
    %v6237 = vsub.f32 1.0, %v6236
    %v6238 = vmul.f32 %v6235, %v6237
    %v6239 = vadd.f32 %v6235, %v6238
    %vm6240 = vweird.f32 %v5001
    %vm6241 = vweird.f32 %v6235
    %vm6242 = vmor %vm6240, %vm6241
    %v6243 = vsel %vm6242, %v6235, %v6239
    %v6244 = vand.u32 2147483647, %v5001
    %vm6245 = vcmp.eq.f32.partialorder %v6244, 8.507059e+37
    %v6246 = vand.u32 %v5001, 2147483648
    %v6247 = vor.u32 1.1754944e-38, %v6246
    %v6248 = vsel %vm6245, %v6247, %v6243
    %v6249 = vmul.f32 1.0, %v6248
    %v6250 = vrcp.pop %v5002
    %v6251 = vmul.f32 %v5002, %v6250
    %v6252 = vsub.f32 1.0, %v6251
    %v6253 = vmul.f32 %v6250, %v6252
    %v6254 = vadd.f32 %v6250, %v6253
    %vm6255 = vweird.f32 %v5002
    %vm6256 = vweird.f32 %v6250
    %vm6257 = vmor %vm6255, %vm6256
    %v6258 = vsel %vm6257, %v6250, %v6254
    %v6259 = vand.u32 2147483647, %v5002
    %vm6260 = vcmp.eq.f32.partialorder %v6259, 8.507059e+37
    %v6261 = vand.u32 %v5002, 2147483648
    %v6262 = vor.u32 1.1754944e-38, %v6261
    %v6263 = vsel %vm6260, %v6262, %v6258
    %v6264 = vmul.f32 1.0, %v6263
    %v6265 = vrcp.pop %v5003
    %v6266 = vmul.f32 %v5003, %v6265
    %v6267 = vsub.f32 1.0, %v6266
    %v6268 = vmul.f32 %v6265, %v6267
    %v6269 = vadd.f32 %v6265, %v6268
    %vm6270 = vweird.f32 %v5003
    %vm6271 = vweird.f32 %v6265
    %vm6272 = vmor %vm6270, %vm6271
    %v6273 = vsel %vm6272, %v6265, %v6269
    %v6274 = vand.u32 2147483647, %v5003
    %vm6275 = vcmp.eq.f32.partialorder %v6274, 8.507059e+37
    %v6276 = vand.u32 %v5003, 2147483648
    %v6277 = vor.u32 1.1754944e-38, %v6276
    %v6278 = vsel %vm6275, %v6277, %v6273
    %v6279 = vmul.f32 1.0, %v6278
    %v6280 = vrcp.pop %v5004
    %v6281 = vmul.f32 %v5004, %v6280
    %v6282 = vsub.f32 1.0, %v6281
    %v6283 = vmul.f32 %v6280, %v6282
    %v6284 = vadd.f32 %v6280, %v6283
    %vm6285 = vweird.f32 %v5004
    %vm6286 = vweird.f32 %v6280
    %vm6287 = vmor %vm6285, %vm6286
    %v6288 = vsel %vm6287, %v6280, %v6284
    %v6289 = vand.u32 2147483647, %v5004
    %vm6290 = vcmp.eq.f32.partialorder %v6289, 8.507059e+37
    %v6291 = vand.u32 %v5004, 2147483648
    %v6292 = vor.u32 1.1754944e-38, %v6291
    %v6293 = vsel %vm6290, %v6292, %v6288
    %v6294 = vmul.f32 1.0, %v6293
    %v6295 = vrcp.pop %v5005
    %v6296 = vmul.f32 %v5005, %v6295
    %v6297 = vsub.f32 1.0, %v6296
    %v6298 = vmul.f32 %v6295, %v6297
    %v6299 = vadd.f32 %v6295, %v6298
    %vm6300 = vweird.f32 %v5005
    %vm6301 = vweird.f32 %v6295
    %vm6302 = vmor %vm6300, %vm6301
    %v6303 = vsel %vm6302, %v6295, %v6299
    %v6304 = vand.u32 2147483647, %v5005
    %vm6305 = vcmp.eq.f32.partialorder %v6304, 8.507059e+37
    %v6306 = vand.u32 %v5005, 2147483648
    %v6307 = vor.u32 1.1754944e-38, %v6306
    %v6308 = vsel %vm6305, %v6307, %v6303
    %v6309 = vmul.f32 1.0, %v6308
    %v6310 = vrcp.pop %v5006
    %v6311 = vmul.f32 %v5006, %v6310
    %v6312 = vsub.f32 1.0, %v6311
    %v6313 = vmul.f32 %v6310, %v6312
    %v6314 = vadd.f32 %v6310, %v6313
    %vm6315 = vweird.f32 %v5006
    %vm6316 = vweird.f32 %v6310
    %vm6317 = vmor %vm6315, %vm6316
    %v6318 = vsel %vm6317, %v6310, %v6314
    %v6319 = vand.u32 2147483647, %v5006
    %vm6320 = vcmp.eq.f32.partialorder %v6319, 8.507059e+37
    %v6321 = vand.u32 %v5006, 2147483648
    %v6322 = vor.u32 1.1754944e-38, %v6321
    %v6323 = vsel %vm6320, %v6322, %v6318
    %v6324 = vmul.f32 1.0, %v6323
    %v6325 = vrcp.pop %v5007
    %v6326 = vmul.f32 %v5007, %v6325
    %v6327 = vsub.f32 1.0, %v6326
    %v6328 = vmul.f32 %v6325, %v6327
    %v6329 = vadd.f32 %v6325, %v6328
    %vm6330 = vweird.f32 %v5007
    %vm6331 = vweird.f32 %v6325
    %vm6332 = vmor %vm6330, %vm6331
    %v6333 = vsel %vm6332, %v6325, %v6329
    %v6334 = vand.u32 2147483647, %v5007
    %vm6335 = vcmp.eq.f32.partialorder %v6334, 8.507059e+37
    %v6336 = vand.u32 %v5007, 2147483648
    %v6337 = vor.u32 1.1754944e-38, %v6336
    %v6338 = vsel %vm6335, %v6337, %v6333
    %v6339 = vmul.f32 1.0, %v6338
    %v6340 = vrcp.pop %v5008
    %v6341 = vmul.f32 %v5008, %v6340
    %v6342 = vsub.f32 1.0, %v6341
    %v6343 = vmul.f32 %v6340, %v6342
    %v6344 = vadd.f32 %v6340, %v6343
    %vm6345 = vweird.f32 %v5008
    %vm6346 = vweird.f32 %v6340
    %vm6347 = vmor %vm6345, %vm6346
    %v6348 = vsel %vm6347, %v6340, %v6344
    %v6349 = vand.u32 2147483647, %v5008
    %vm6350 = vcmp.eq.f32.partialorder %v6349, 8.507059e+37
    %v6351 = vand.u32 %v5008, 2147483648
    %v6352 = vor.u32 1.1754944e-38, %v6351
    %v6353 = vsel %vm6350, %v6352, %v6348
    %v6354 = vmul.f32 1.0, %v6353
    %v6355 = vrcp.pop %v5009
    %v6356 = vmul.f32 %v5009, %v6355
    %v6357 = vsub.f32 1.0, %v6356
    %v6358 = vmul.f32 %v6355, %v6357
    %v6359 = vadd.f32 %v6355, %v6358
    %vm6360 = vweird.f32 %v5009
    %vm6361 = vweird.f32 %v6355
    %vm6362 = vmor %vm6360, %vm6361
    %v6363 = vsel %vm6362, %v6355, %v6359
    %v6364 = vand.u32 2147483647, %v5009
    %vm6365 = vcmp.eq.f32.partialorder %v6364, 8.507059e+37
    %v6366 = vand.u32 %v5009, 2147483648
    %v6367 = vor.u32 1.1754944e-38, %v6366
    %v6368 = vsel %vm6365, %v6367, %v6363
    %v6369 = vmul.f32 1.0, %v6368
    %v6370 = vrcp.pop %v5010
    %v6371 = vmul.f32 %v5010, %v6370
    %v6372 = vsub.f32 1.0, %v6371
    %v6373 = vmul.f32 %v6370, %v6372
    %v6374 = vadd.f32 %v6370, %v6373
    %vm6375 = vweird.f32 %v5010
    %vm6376 = vweird.f32 %v6370
    %vm6377 = vmor %vm6375, %vm6376
    %v6378 = vsel %vm6377, %v6370, %v6374
    %v6379 = vand.u32 2147483647, %v5010
    %vm6380 = vcmp.eq.f32.partialorder %v6379, 8.507059e+37
    %v6381 = vand.u32 %v5010, 2147483648
    %v6382 = vor.u32 1.1754944e-38, %v6381
    %v6383 = vsel %vm6380, %v6382, %v6378
    %v6384 = vmul.f32 1.0, %v6383
    %v6385 = vrcp.pop %v5011
    %v6386 = vmul.f32 %v5011, %v6385
    %v6387 = vsub.f32 1.0, %v6386
    %v6388 = vmul.f32 %v6385, %v6387
    %v6389 = vadd.f32 %v6385, %v6388
    %vm6390 = vweird.f32 %v5011
    %vm6391 = vweird.f32 %v6385
    %vm6392 = vmor %vm6390, %vm6391
    %v6393 = vsel %vm6392, %v6385, %v6389
    %v6394 = vand.u32 2147483647, %v5011
    %vm6395 = vcmp.eq.f32.partialorder %v6394, 8.507059e+37
    %v6396 = vand.u32 %v5011, 2147483648
    %v6397 = vor.u32 1.1754944e-38, %v6396
    %v6398 = vsel %vm6395, %v6397, %v6393
    %v6399 = vmul.f32 1.0, %v6398
    %v6400 = vrcp.pop %v5012
    %v6401 = vmul.f32 %v5012, %v6400
    %v6402 = vsub.f32 1.0, %v6401
    %v6403 = vmul.f32 %v6400, %v6402
    %v6404 = vadd.f32 %v6400, %v6403
    %vm6405 = vweird.f32 %v5012
    %vm6406 = vweird.f32 %v6400
    %vm6407 = vmor %vm6405, %vm6406
    %v6408 = vsel %vm6407, %v6400, %v6404
    %v6409 = vand.u32 2147483647, %v5012
    %vm6410 = vcmp.eq.f32.partialorder %v6409, 8.507059e+37
    %v6411 = vand.u32 %v5012, 2147483648
    %v6412 = vor.u32 1.1754944e-38, %v6411
    %v6413 = vsel %vm6410, %v6412, %v6408
    %v6414 = vmul.f32 1.0, %v6413
    %v6415 = vrcp.pop %v5013
    %v6416 = vmul.f32 %v5013, %v6415
    %v6417 = vsub.f32 1.0, %v6416
    %v6418 = vmul.f32 %v6415, %v6417
    %v6419 = vadd.f32 %v6415, %v6418
    %vm6420 = vweird.f32 %v5013
    %vm6421 = vweird.f32 %v6415
    %vm6422 = vmor %vm6420, %vm6421
    %v6423 = vsel %vm6422, %v6415, %v6419
    %v6424 = vand.u32 2147483647, %v5013
    %vm6425 = vcmp.eq.f32.partialorder %v6424, 8.507059e+37
    %v6426 = vand.u32 %v5013, 2147483648
    %v6427 = vor.u32 1.1754944e-38, %v6426
    %v6428 = vsel %vm6425, %v6427, %v6423
    %v6429 = vmul.f32 1.0, %v6428
    %v6430 = vrcp.pop %v5014
    %v6431 = vmul.f32 %v5014, %v6430
    %v6432 = vsub.f32 1.0, %v6431
    %v6433 = vmul.f32 %v6430, %v6432
    %v6434 = vadd.f32 %v6430, %v6433
    %vm6435 = vweird.f32 %v5014
    %vm6436 = vweird.f32 %v6430
    %vm6437 = vmor %vm6435, %vm6436
    %v6438 = vsel %vm6437, %v6430, %v6434
    %v6439 = vand.u32 2147483647, %v5014
    %vm6440 = vcmp.eq.f32.partialorder %v6439, 8.507059e+37
    %v6441 = vand.u32 %v5014, 2147483648
    %v6442 = vor.u32 1.1754944e-38, %v6441
    %v6443 = vsel %vm6440, %v6442, %v6438
    %v6444 = vmul.f32 1.0, %v6443
    %v6445 = vrcp.pop %v5015
    %v6446 = vmul.f32 %v5015, %v6445
    %v6447 = vsub.f32 1.0, %v6446
    %v6448 = vmul.f32 %v6445, %v6447
    %v6449 = vadd.f32 %v6445, %v6448
    %vm6450 = vweird.f32 %v5015
    %vm6451 = vweird.f32 %v6445
    %vm6452 = vmor %vm6450, %vm6451
    %v6453 = vsel %vm6452, %v6445, %v6449
    %v6454 = vand.u32 2147483647, %v5015
    %vm6455 = vcmp.eq.f32.partialorder %v6454, 8.507059e+37
    %v6456 = vand.u32 %v5015, 2147483648
    %v6457 = vor.u32 1.1754944e-38, %v6456
    %v6458 = vsel %vm6455, %v6457, %v6453
    %v6459 = vmul.f32 1.0, %v6458
    %v6460 = vrcp.pop %v5016
    %v6461 = vmul.f32 %v5016, %v6460
    %v6462 = vsub.f32 1.0, %v6461
    %v6463 = vmul.f32 %v6460, %v6462
    %v6464 = vadd.f32 %v6460, %v6463
    %vm6465 = vweird.f32 %v5016
    %vm6466 = vweird.f32 %v6460
    %vm6467 = vmor %vm6465, %vm6466
    %v6468 = vsel %vm6467, %v6460, %v6464
    %v6469 = vand.u32 2147483647, %v5016
    %vm6470 = vcmp.eq.f32.partialorder %v6469, 8.507059e+37
    %v6471 = vand.u32 %v5016, 2147483648
    %v6472 = vor.u32 1.1754944e-38, %v6471
    %v6473 = vsel %vm6470, %v6472, %v6468
    %v6474 = vmul.f32 1.0, %v6473
    %v6475 = vrcp.pop %v5017
    %v6476 = vmul.f32 %v5017, %v6475
    %v6477 = vsub.f32 1.0, %v6476
    %v6478 = vmul.f32 %v6475, %v6477
    %v6479 = vadd.f32 %v6475, %v6478
    %vm6480 = vweird.f32 %v5017
    %vm6481 = vweird.f32 %v6475
    %vm6482 = vmor %vm6480, %vm6481
    %v6483 = vsel %vm6482, %v6475, %v6479
    %v6484 = vand.u32 2147483647, %v5017
    %vm6485 = vcmp.eq.f32.partialorder %v6484, 8.507059e+37
    %v6486 = vand.u32 %v5017, 2147483648
    %v6487 = vor.u32 1.1754944e-38, %v6486
    %v6488 = vsel %vm6485, %v6487, %v6483
    %v6489 = vmul.f32 1.0, %v6488
    %v6490 = vrcp.pop %v5018
    %v6491 = vmul.f32 %v5018, %v6490
    %v6492 = vsub.f32 1.0, %v6491
    %v6493 = vmul.f32 %v6490, %v6492
    %v6494 = vadd.f32 %v6490, %v6493
    %vm6495 = vweird.f32 %v5018
    %vm6496 = vweird.f32 %v6490
    %vm6497 = vmor %vm6495, %vm6496
    %v6498 = vsel %vm6497, %v6490, %v6494
    %v6499 = vand.u32 2147483647, %v5018
    %vm6500 = vcmp.eq.f32.partialorder %v6499, 8.507059e+37
    %v6501 = vand.u32 %v5018, 2147483648
    %v6502 = vor.u32 1.1754944e-38, %v6501
    %v6503 = vsel %vm6500, %v6502, %v6498
    %v6504 = vmul.f32 1.0, %v6503
    %v6505 = vrcp.pop %v5019
    %v6506 = vmul.f32 %v5019, %v6505
    %v6507 = vsub.f32 1.0, %v6506
    %v6508 = vmul.f32 %v6505, %v6507
    %v6509 = vadd.f32 %v6505, %v6508
    %vm6510 = vweird.f32 %v5019
    %vm6511 = vweird.f32 %v6505
    %vm6512 = vmor %vm6510, %vm6511
    %v6513 = vsel %vm6512, %v6505, %v6509
    %v6514 = vand.u32 2147483647, %v5019
    %vm6515 = vcmp.eq.f32.partialorder %v6514, 8.507059e+37
    %v6516 = vand.u32 %v5019, 2147483648
    %v6517 = vor.u32 1.1754944e-38, %v6516
    %v6518 = vsel %vm6515, %v6517, %v6513
    %v6519 = vmul.f32 1.0, %v6518
    %v6520 = vrcp.pop %v5020
    %v6521 = vmul.f32 %v5020, %v6520
    %v6522 = vsub.f32 1.0, %v6521
    %v6523 = vmul.f32 %v6520, %v6522
    %v6524 = vadd.f32 %v6520, %v6523
    %vm6525 = vweird.f32 %v5020
    %vm6526 = vweird.f32 %v6520
    %vm6527 = vmor %vm6525, %vm6526
    %v6528 = vsel %vm6527, %v6520, %v6524
    %v6529 = vand.u32 2147483647, %v5020
    %vm6530 = vcmp.eq.f32.partialorder %v6529, 8.507059e+37
    %v6531 = vand.u32 %v5020, 2147483648
    %v6532 = vor.u32 1.1754944e-38, %v6531
    %v6533 = vsel %vm6530, %v6532, %v6528
    %v6534 = vmul.f32 1.0, %v6533
    %v6535 = vrcp.pop %v5021
    %v6536 = vmul.f32 %v5021, %v6535
    %v6537 = vsub.f32 1.0, %v6536
    %v6538 = vmul.f32 %v6535, %v6537
    %v6539 = vadd.f32 %v6535, %v6538
    %vm6540 = vweird.f32 %v5021
    %vm6541 = vweird.f32 %v6535
    %vm6542 = vmor %vm6540, %vm6541
    %v6543 = vsel %vm6542, %v6535, %v6539
    %v6544 = vand.u32 2147483647, %v5021
    %vm6545 = vcmp.eq.f32.partialorder %v6544, 8.507059e+37
    %v6546 = vand.u32 %v5021, 2147483648
    %v6547 = vor.u32 1.1754944e-38, %v6546
    %v6548 = vsel %vm6545, %v6547, %v6543
    %v6549 = vmul.f32 1.0, %v6548
    %v6550 = vrcp.pop %v5022
    %v6551 = vmul.f32 %v5022, %v6550
    %v6552 = vsub.f32 1.0, %v6551
    %v6553 = vmul.f32 %v6550, %v6552
    %v6554 = vadd.f32 %v6550, %v6553
    %vm6555 = vweird.f32 %v5022
    %vm6556 = vweird.f32 %v6550
    %vm6557 = vmor %vm6555, %vm6556
    %v6558 = vsel %vm6557, %v6550, %v6554
    %v6559 = vand.u32 2147483647, %v5022
    %vm6560 = vcmp.eq.f32.partialorder %v6559, 8.507059e+37
    %v6561 = vand.u32 %v5022, 2147483648
    %v6562 = vor.u32 1.1754944e-38, %v6561
    %v6563 = vsel %vm6560, %v6562, %v6558
    %v6564 = vmul.f32 1.0, %v6563
    %v6565 = vrcp.pop %v5023
    %v6566 = vmul.f32 %v5023, %v6565
    %v6567 = vsub.f32 1.0, %v6566
    %v6568 = vmul.f32 %v6565, %v6567
    %v6569 = vadd.f32 %v6565, %v6568
    %vm6570 = vweird.f32 %v5023
    %vm6571 = vweird.f32 %v6565
    %vm6572 = vmor %vm6570, %vm6571
    %v6573 = vsel %vm6572, %v6565, %v6569
    %v6574 = vand.u32 2147483647, %v5023
    %vm6575 = vcmp.eq.f32.partialorder %v6574, 8.507059e+37
    %v6576 = vand.u32 %v5023, 2147483648
    %v6577 = vor.u32 1.1754944e-38, %v6576
    %v6578 = vsel %vm6575, %v6577, %v6573
    %v6579 = vmul.f32 1.0, %v6578
    %v6580 = vrcp.pop %v5024
    %v6581 = vmul.f32 %v5024, %v6580
    %v6582 = vsub.f32 1.0, %v6581
    %v6583 = vmul.f32 %v6580, %v6582
    %v6584 = vadd.f32 %v6580, %v6583
    %vm6585 = vweird.f32 %v5024
    %vm6586 = vweird.f32 %v6580
    %vm6587 = vmor %vm6585, %vm6586
    %v6588 = vsel %vm6587, %v6580, %v6584
    %v6589 = vand.u32 2147483647, %v5024
    %vm6590 = vcmp.eq.f32.partialorder %v6589, 8.507059e+37
    %v6591 = vand.u32 %v5024, 2147483648
    %v6592 = vor.u32 1.1754944e-38, %v6591
    %v6593 = vsel %vm6590, %v6592, %v6588
    %v6594 = vmul.f32 1.0, %v6593
    %v6595 = vrcp.pop %v5025
    %v6596 = vmul.f32 %v5025, %v6595
    %v6597 = vsub.f32 1.0, %v6596
    %v6598 = vmul.f32 %v6595, %v6597
    %v6599 = vadd.f32 %v6595, %v6598
    %vm6600 = vweird.f32 %v5025
    %vm6601 = vweird.f32 %v6595
    %vm6602 = vmor %vm6600, %vm6601
    %v6603 = vsel %vm6602, %v6595, %v6599
    %v6604 = vand.u32 2147483647, %v5025
    %vm6605 = vcmp.eq.f32.partialorder %v6604, 8.507059e+37
    %v6606 = vand.u32 %v5025, 2147483648
    %v6607 = vor.u32 1.1754944e-38, %v6606
    %v6608 = vsel %vm6605, %v6607, %v6603
    %v6609 = vmul.f32 1.0, %v6608
    %v6610 = vrcp.pop %v5026
    %v6611 = vmul.f32 %v5026, %v6610
    %v6612 = vsub.f32 1.0, %v6611
    %v6613 = vmul.f32 %v6610, %v6612
    %v6614 = vadd.f32 %v6610, %v6613
    %vm6615 = vweird.f32 %v5026
    %vm6616 = vweird.f32 %v6610
    %vm6617 = vmor %vm6615, %vm6616
    %v6618 = vsel %vm6617, %v6610, %v6614
    %v6619 = vand.u32 2147483647, %v5026
    %vm6620 = vcmp.eq.f32.partialorder %v6619, 8.507059e+37
    %v6621 = vand.u32 %v5026, 2147483648
    %v6622 = vor.u32 1.1754944e-38, %v6621
    %v6623 = vsel %vm6620, %v6622, %v6618
    %v6624 = vmul.f32 1.0, %v6623
    %v6625 = vrcp.pop %v5027
    %v6626 = vmul.f32 %v5027, %v6625
    %v6627 = vsub.f32 1.0, %v6626
    %v6628 = vmul.f32 %v6625, %v6627
    %v6629 = vadd.f32 %v6625, %v6628
    %vm6630 = vweird.f32 %v5027
    %vm6631 = vweird.f32 %v6625
    %vm6632 = vmor %vm6630, %vm6631
    %v6633 = vsel %vm6632, %v6625, %v6629
    %v6634 = vand.u32 2147483647, %v5027
    %vm6635 = vcmp.eq.f32.partialorder %v6634, 8.507059e+37
    %v6636 = vand.u32 %v5027, 2147483648
    %v6637 = vor.u32 1.1754944e-38, %v6636
    %v6638 = vsel %vm6635, %v6637, %v6633
    %v6639 = vmul.f32 1.0, %v6638
    %v6640 = vrcp.pop %v5028
    %v6641 = vmul.f32 %v5028, %v6640
    %v6642 = vsub.f32 1.0, %v6641
    %v6643 = vmul.f32 %v6640, %v6642
    %v6644 = vadd.f32 %v6640, %v6643
    %vm6645 = vweird.f32 %v5028
    %vm6646 = vweird.f32 %v6640
    %vm6647 = vmor %vm6645, %vm6646
    %v6648 = vsel %vm6647, %v6640, %v6644
    %v6649 = vand.u32 2147483647, %v5028
    %vm6650 = vcmp.eq.f32.partialorder %v6649, 8.507059e+37
    %v6651 = vand.u32 %v5028, 2147483648
    %v6652 = vor.u32 1.1754944e-38, %v6651
    %v6653 = vsel %vm6650, %v6652, %v6648
    %v6654 = vmul.f32 1.0, %v6653
    %v6655 = vrcp.pop %v5029
    %v6656 = vmul.f32 %v5029, %v6655
    %v6657 = vsub.f32 1.0, %v6656
    %v6658 = vmul.f32 %v6655, %v6657
    %v6659 = vadd.f32 %v6655, %v6658
    %vm6660 = vweird.f32 %v5029
    %vm6661 = vweird.f32 %v6655
    %vm6662 = vmor %vm6660, %vm6661
    %v6663 = vsel %vm6662, %v6655, %v6659
    %v6664 = vand.u32 2147483647, %v5029
    %vm6665 = vcmp.eq.f32.partialorder %v6664, 8.507059e+37
    %v6666 = vand.u32 %v5029, 2147483648
    %v6667 = vor.u32 1.1754944e-38, %v6666
    %v6668 = vsel %vm6665, %v6667, %v6663
    %v6669 = vmul.f32 1.0, %v6668
    %v6670 = vrcp.pop %v5030
    %v6671 = vmul.f32 %v5030, %v6670
    %v6672 = vsub.f32 1.0, %v6671
    %v6673 = vmul.f32 %v6670, %v6672
    %v6674 = vadd.f32 %v6670, %v6673
    %vm6675 = vweird.f32 %v5030
    %vm6676 = vweird.f32 %v6670
    %vm6677 = vmor %vm6675, %vm6676
    %v6678 = vsel %vm6677, %v6670, %v6674
    %v6679 = vand.u32 2147483647, %v5030
    %vm6680 = vcmp.eq.f32.partialorder %v6679, 8.507059e+37
    %v6681 = vand.u32 %v5030, 2147483648
    %v6682 = vor.u32 1.1754944e-38, %v6681
    %v6683 = vsel %vm6680, %v6682, %v6678
    %v6684 = vmul.f32 1.0, %v6683
    %v6685 = vrcp.pop %v5031
    %v6686 = vmul.f32 %v5031, %v6685
    %v6687 = vsub.f32 1.0, %v6686
    %v6688 = vmul.f32 %v6685, %v6687
    %v6689 = vadd.f32 %v6685, %v6688
    %vm6690 = vweird.f32 %v5031
    %vm6691 = vweird.f32 %v6685
    %vm6692 = vmor %vm6690, %vm6691
    %v6693 = vsel %vm6692, %v6685, %v6689
    %v6694 = vand.u32 2147483647, %v5031
    %vm6695 = vcmp.eq.f32.partialorder %v6694, 8.507059e+37
    %v6696 = vand.u32 %v5031, 2147483648
    %v6697 = vor.u32 1.1754944e-38, %v6696
    %v6698 = vsel %vm6695, %v6697, %v6693
    %v6699 = vmul.f32 1.0, %v6698
    %v6700 = vrcp.pop %v5032
    %v6701 = vmul.f32 %v5032, %v6700
    %v6702 = vsub.f32 1.0, %v6701
    %v6703 = vmul.f32 %v6700, %v6702
    %v6704 = vadd.f32 %v6700, %v6703
    %vm6705 = vweird.f32 %v5032
    %vm6706 = vweird.f32 %v6700
    %vm6707 = vmor %vm6705, %vm6706
    %v6708 = vsel %vm6707, %v6700, %v6704
    %v6709 = vand.u32 2147483647, %v5032
    %vm6710 = vcmp.eq.f32.partialorder %v6709, 8.507059e+37
    %v6711 = vand.u32 %v5032, 2147483648
    %v6712 = vor.u32 1.1754944e-38, %v6711
    %v6713 = vsel %vm6710, %v6712, %v6708
    %v6714 = vmul.f32 1.0, %v6713
    %v6715 = vrcp.pop %v5033
    %v6716 = vmul.f32 %v5033, %v6715
    %v6717 = vsub.f32 1.0, %v6716
    %v6718 = vmul.f32 %v6715, %v6717
    %v6719 = vadd.f32 %v6715, %v6718
    %vm6720 = vweird.f32 %v5033
    %vm6721 = vweird.f32 %v6715
    %vm6722 = vmor %vm6720, %vm6721
    %v6723 = vsel %vm6722, %v6715, %v6719
    %v6724 = vand.u32 2147483647, %v5033
    %vm6725 = vcmp.eq.f32.partialorder %v6724, 8.507059e+37
    %v6726 = vand.u32 %v5033, 2147483648
    %v6727 = vor.u32 1.1754944e-38, %v6726
    %v6728 = vsel %vm6725, %v6727, %v6723
    %v6729 = vmul.f32 1.0, %v6728
    %v6730 = vrcp.pop %v5034
    %v6731 = vmul.f32 %v5034, %v6730
    %v6732 = vsub.f32 1.0, %v6731
    %v6733 = vmul.f32 %v6730, %v6732
    %v6734 = vadd.f32 %v6730, %v6733
    %vm6735 = vweird.f32 %v5034
    %vm6736 = vweird.f32 %v6730
    %vm6737 = vmor %vm6735, %vm6736
    %v6738 = vsel %vm6737, %v6730, %v6734
    %v6739 = vand.u32 2147483647, %v5034
    %vm6740 = vcmp.eq.f32.partialorder %v6739, 8.507059e+37
    %v6741 = vand.u32 %v5034, 2147483648
    %v6742 = vor.u32 1.1754944e-38, %v6741
    %v6743 = vsel %vm6740, %v6742, %v6738
    %v6744 = vmul.f32 1.0, %v6743
    %v6745 = vrcp.pop %v5035
    %v6746 = vmul.f32 %v5035, %v6745
    %v6747 = vsub.f32 1.0, %v6746
    %v6748 = vmul.f32 %v6745, %v6747
    %v6749 = vadd.f32 %v6745, %v6748
    %vm6750 = vweird.f32 %v5035
    %vm6751 = vweird.f32 %v6745
    %vm6752 = vmor %vm6750, %vm6751
    %v6753 = vsel %vm6752, %v6745, %v6749
    %v6754 = vand.u32 2147483647, %v5035
    %vm6755 = vcmp.eq.f32.partialorder %v6754, 8.507059e+37
    %v6756 = vand.u32 %v5035, 2147483648
    %v6757 = vor.u32 1.1754944e-38, %v6756
    %v6758 = vsel %vm6755, %v6757, %v6753
    %v6759 = vmul.f32 1.0, %v6758
    %v6760 = vrcp.pop %v5036
    %v6761 = vmul.f32 %v5036, %v6760
    %v6762 = vsub.f32 1.0, %v6761
    %v6763 = vmul.f32 %v6760, %v6762
    %v6764 = vadd.f32 %v6760, %v6763
    %vm6765 = vweird.f32 %v5036
    %vm6766 = vweird.f32 %v6760
    %vm6767 = vmor %vm6765, %vm6766
    %v6768 = vsel %vm6767, %v6760, %v6764
    %v6769 = vand.u32 2147483647, %v5036
    %vm6770 = vcmp.eq.f32.partialorder %v6769, 8.507059e+37
    %v6771 = vand.u32 %v5036, 2147483648
    %v6772 = vor.u32 1.1754944e-38, %v6771
    %v6773 = vsel %vm6770, %v6772, %v6768
    %v6774 = vmul.f32 1.0, %v6773
    %v6775 = vrcp.pop %v5037
    %v6776 = vmul.f32 %v5037, %v6775
    %v6777 = vsub.f32 1.0, %v6776
    %v6778 = vmul.f32 %v6775, %v6777
    %v6779 = vadd.f32 %v6775, %v6778
    %vm6780 = vweird.f32 %v5037
    %vm6781 = vweird.f32 %v6775
    %vm6782 = vmor %vm6780, %vm6781
    %v6783 = vsel %vm6782, %v6775, %v6779
    %v6784 = vand.u32 2147483647, %v5037
    %vm6785 = vcmp.eq.f32.partialorder %v6784, 8.507059e+37
    %v6786 = vand.u32 %v5037, 2147483648
    %v6787 = vor.u32 1.1754944e-38, %v6786
    %v6788 = vsel %vm6785, %v6787, %v6783
    %v6789 = vmul.f32 1.0, %v6788
    %v6790 = vrcp.pop %v5038
    %v6791 = vmul.f32 %v5038, %v6790
    %v6792 = vsub.f32 1.0, %v6791
    %v6793 = vmul.f32 %v6790, %v6792
    %v6794 = vadd.f32 %v6790, %v6793
    %vm6795 = vweird.f32 %v5038
    %vm6796 = vweird.f32 %v6790
    %vm6797 = vmor %vm6795, %vm6796
    %v6798 = vsel %vm6797, %v6790, %v6794
    %v6799 = vand.u32 2147483647, %v5038
    %vm6800 = vcmp.eq.f32.partialorder %v6799, 8.507059e+37
    %v6801 = vand.u32 %v5038, 2147483648
    %v6802 = vor.u32 1.1754944e-38, %v6801
    %v6803 = vsel %vm6800, %v6802, %v6798
    %v6804 = vmul.f32 1.0, %v6803
    %v6805 = vrcp.pop %v5039
    %v6806 = vmul.f32 %v5039, %v6805
    %v6807 = vsub.f32 1.0, %v6806
    %v6808 = vmul.f32 %v6805, %v6807
    %v6809 = vadd.f32 %v6805, %v6808
    %vm6810 = vweird.f32 %v5039
    %vm6811 = vweird.f32 %v6805
    %vm6812 = vmor %vm6810, %vm6811
    %v6813 = vsel %vm6812, %v6805, %v6809
    %v6814 = vand.u32 2147483647, %v5039
    %vm6815 = vcmp.eq.f32.partialorder %v6814, 8.507059e+37
    %v6816 = vand.u32 %v5039, 2147483648
    %v6817 = vor.u32 1.1754944e-38, %v6816
    %v6818 = vsel %vm6815, %v6817, %v6813
    %v6819 = vmul.f32 1.0, %v6818
    %v6820 = vrcp.pop %v5040
    %v6821 = vmul.f32 %v5040, %v6820
    %v6822 = vsub.f32 1.0, %v6821
    %v6823 = vmul.f32 %v6820, %v6822
    %v6824 = vadd.f32 %v6820, %v6823
    %vm6825 = vweird.f32 %v5040
    %vm6826 = vweird.f32 %v6820
    %vm6827 = vmor %vm6825, %vm6826
    %v6828 = vsel %vm6827, %v6820, %v6824
    %v6829 = vand.u32 2147483647, %v5040
    %vm6830 = vcmp.eq.f32.partialorder %v6829, 8.507059e+37
    %v6831 = vand.u32 %v5040, 2147483648
    %v6832 = vor.u32 1.1754944e-38, %v6831
    %v6833 = vsel %vm6830, %v6832, %v6828
    %v6834 = vmul.f32 1.0, %v6833
    %v6835 = vrcp.pop %v5041
    %v6836 = vmul.f32 %v5041, %v6835
    %v6837 = vsub.f32 1.0, %v6836
    %v6838 = vmul.f32 %v6835, %v6837
    %v6839 = vadd.f32 %v6835, %v6838
    %vm6840 = vweird.f32 %v5041
    %vm6841 = vweird.f32 %v6835
    %vm6842 = vmor %vm6840, %vm6841
    %v6843 = vsel %vm6842, %v6835, %v6839
    %v6844 = vand.u32 2147483647, %v5041
    %vm6845 = vcmp.eq.f32.partialorder %v6844, 8.507059e+37
    %v6846 = vand.u32 %v5041, 2147483648
    %v6847 = vor.u32 1.1754944e-38, %v6846
    %v6848 = vsel %vm6845, %v6847, %v6843
    %v6849 = vmul.f32 1.0, %v6848
    %v6850 = vrcp.pop %v5042
    %v6851 = vmul.f32 %v5042, %v6850
    %v6852 = vsub.f32 1.0, %v6851
    %v6853 = vmul.f32 %v6850, %v6852
    %v6854 = vadd.f32 %v6850, %v6853
    %vm6855 = vweird.f32 %v5042
    %vm6856 = vweird.f32 %v6850
    %vm6857 = vmor %vm6855, %vm6856
    %v6858 = vsel %vm6857, %v6850, %v6854
    %v6859 = vand.u32 2147483647, %v5042
    %vm6860 = vcmp.eq.f32.partialorder %v6859, 8.507059e+37
    %v6861 = vand.u32 %v5042, 2147483648
    %v6862 = vor.u32 1.1754944e-38, %v6861
    %v6863 = vsel %vm6860, %v6862, %v6858
    %v6864 = vmul.f32 1.0, %v6863
    %v6865 = vrcp.pop %v5043
    %v6866 = vmul.f32 %v5043, %v6865
    %v6867 = vsub.f32 1.0, %v6866
    %v6868 = vmul.f32 %v6865, %v6867
    %v6869 = vadd.f32 %v6865, %v6868
    %vm6870 = vweird.f32 %v5043
    %vm6871 = vweird.f32 %v6865
    %vm6872 = vmor %vm6870, %vm6871
    %v6873 = vsel %vm6872, %v6865, %v6869
    %v6874 = vand.u32 2147483647, %v5043
    %vm6875 = vcmp.eq.f32.partialorder %v6874, 8.507059e+37
    %v6876 = vand.u32 %v5043, 2147483648
    %v6877 = vor.u32 1.1754944e-38, %v6876
    %v6878 = vsel %vm6875, %v6877, %v6873
    %v6879 = vmul.f32 1.0, %v6878
    %v6880 = vrcp.pop %v5044
    %v6881 = vmul.f32 %v5044, %v6880
    %v6882 = vsub.f32 1.0, %v6881
    %v6883 = vmul.f32 %v6880, %v6882
    %v6884 = vadd.f32 %v6880, %v6883
    %vm6885 = vweird.f32 %v5044
    %vm6886 = vweird.f32 %v6880
    %vm6887 = vmor %vm6885, %vm6886
    %v6888 = vsel %vm6887, %v6880, %v6884
    %v6889 = vand.u32 2147483647, %v5044
    %vm6890 = vcmp.eq.f32.partialorder %v6889, 8.507059e+37
    %v6891 = vand.u32 %v5044, 2147483648
    %v6892 = vor.u32 1.1754944e-38, %v6891
    %v6893 = vsel %vm6890, %v6892, %v6888
    %v6894 = vmul.f32 1.0, %v6893
    %v6895 = vrcp.pop %v5045
    %v6896 = vmul.f32 %v5045, %v6895
    %v6897 = vsub.f32 1.0, %v6896
    %v6898 = vmul.f32 %v6895, %v6897
    %v6899 = vadd.f32 %v6895, %v6898
    %vm6900 = vweird.f32 %v5045
    %vm6901 = vweird.f32 %v6895
    %vm6902 = vmor %vm6900, %vm6901
    %v6903 = vsel %vm6902, %v6895, %v6899
    %v6904 = vand.u32 2147483647, %v5045
    %vm6905 = vcmp.eq.f32.partialorder %v6904, 8.507059e+37
    %v6906 = vand.u32 %v5045, 2147483648
    %v6907 = vor.u32 1.1754944e-38, %v6906
    %v6908 = vsel %vm6905, %v6907, %v6903
    %v6909 = vmul.f32 1.0, %v6908
    %v6910 = vrcp.pop %v5046
    %v6911 = vmul.f32 %v5046, %v6910
    %v6912 = vsub.f32 1.0, %v6911
    %v6913 = vmul.f32 %v6910, %v6912
    %v6914 = vadd.f32 %v6910, %v6913
    %vm6915 = vweird.f32 %v5046
    %vm6916 = vweird.f32 %v6910
    %vm6917 = vmor %vm6915, %vm6916
    %v6918 = vsel %vm6917, %v6910, %v6914
    %v6919 = vand.u32 2147483647, %v5046
    %vm6920 = vcmp.eq.f32.partialorder %v6919, 8.507059e+37
    %v6921 = vand.u32 %v5046, 2147483648
    %v6922 = vor.u32 1.1754944e-38, %v6921
    %v6923 = vsel %vm6920, %v6922, %v6918
    %v6924 = vmul.f32 1.0, %v6923
    %v6925 = vrcp.pop %v5047
    %v6926 = vmul.f32 %v5047, %v6925
    %v6927 = vsub.f32 1.0, %v6926
    %v6928 = vmul.f32 %v6925, %v6927
    %v6929 = vadd.f32 %v6925, %v6928
    %vm6930 = vweird.f32 %v5047
    %vm6931 = vweird.f32 %v6925
    %vm6932 = vmor %vm6930, %vm6931
    %v6933 = vsel %vm6932, %v6925, %v6929
    %v6934 = vand.u32 2147483647, %v5047
    %vm6935 = vcmp.eq.f32.partialorder %v6934, 8.507059e+37
    %v6936 = vand.u32 %v5047, 2147483648
    %v6937 = vor.u32 1.1754944e-38, %v6936
    %v6938 = vsel %vm6935, %v6937, %v6933
    %v6939 = vmul.f32 1.0, %v6938
    %v6940 = vrcp.pop %v5048
    %v6941 = vmul.f32 %v5048, %v6940
    %v6942 = vsub.f32 1.0, %v6941
    %v6943 = vmul.f32 %v6940, %v6942
    %v6944 = vadd.f32 %v6940, %v6943
    %vm6945 = vweird.f32 %v5048
    %vm6946 = vweird.f32 %v6940
    %vm6947 = vmor %vm6945, %vm6946
    %v6948 = vsel %vm6947, %v6940, %v6944
    %v6949 = vand.u32 2147483647, %v5048
    %vm6950 = vcmp.eq.f32.partialorder %v6949, 8.507059e+37
    %v6951 = vand.u32 %v5048, 2147483648
    %v6952 = vor.u32 1.1754944e-38, %v6951
    %v6953 = vsel %vm6950, %v6952, %v6948
    %v6954 = vmul.f32 1.0, %v6953
    %v6955 = vrcp.pop %v5049
    %v6956 = vmul.f32 %v5049, %v6955
    %v6957 = vsub.f32 1.0, %v6956
    %v6958 = vmul.f32 %v6955, %v6957
    %v6959 = vadd.f32 %v6955, %v6958
    %vm6960 = vweird.f32 %v5049
    %vm6961 = vweird.f32 %v6955
    %vm6962 = vmor %vm6960, %vm6961
    %v6963 = vsel %vm6962, %v6955, %v6959
    %v6964 = vand.u32 2147483647, %v5049
    %vm6965 = vcmp.eq.f32.partialorder %v6964, 8.507059e+37
    %v6966 = vand.u32 %v5049, 2147483648
    %v6967 = vor.u32 1.1754944e-38, %v6966
    %v6968 = vsel %vm6965, %v6967, %v6963
    %v6969 = vmul.f32 1.0, %v6968
    %7098 = vrot.lane.b32.xlu0 %v5064, 64
    %v7099 = vpop.permute.xlu0 %7098
    %7100 = vrot.lane.b32.xlu0 %v5079, 64
    %v7101 = vpop.permute.xlu0 %7100
    %7102 = vrot.lane.b32.xlu0 %v5094, 64
    %v7103 = vpop.permute.xlu0 %7102
    %7104 = vrot.lane.b32.xlu0 %v5109, 64
    %v7105 = vpop.permute.xlu0 %7104
    %7106 = vrot.lane.b32.xlu0 %v5124, 64
    %v7107 = vpop.permute.xlu0 %7106
    %7108 = vrot.lane.b32.xlu0 %v5139, 64
    %v7109 = vpop.permute.xlu0 %7108
    %7110 = vrot.lane.b32.xlu0 %v5154, 64
    %v7111 = vpop.permute.xlu0 %7110
    %7112 = vrot.lane.b32.xlu0 %v5169, 64
    %v7113 = vpop.permute.xlu0 %7112
    %7114 = vrot.lane.b32.xlu0 %v5184, 64
    %v7115 = vpop.permute.xlu0 %7114
    %7116 = vrot.lane.b32.xlu0 %v5199, 64
    %v7117 = vpop.permute.xlu0 %7116
    %7118 = vrot.lane.b32.xlu0 %v5214, 64
    %v7119 = vpop.permute.xlu0 %7118
    %7120 = vrot.lane.b32.xlu0 %v5229, 64
    %v7121 = vpop.permute.xlu0 %7120
    %7122 = vrot.lane.b32.xlu0 %v5244, 64
    %v7123 = vpop.permute.xlu0 %7122
    %7124 = vrot.lane.b32.xlu0 %v5259, 64
    %v7125 = vpop.permute.xlu0 %7124
    %7126 = vrot.lane.b32.xlu0 %v5274, 64
    %v7127 = vpop.permute.xlu0 %7126
    %7128 = vrot.lane.b32.xlu0 %v5289, 64
    %v7129 = vpop.permute.xlu0 %7128
    %7130 = vrot.lane.b32.xlu0 %v5304, 64
    %v7131 = vpop.permute.xlu0 %7130
    %7132 = vrot.lane.b32.xlu0 %v5319, 64
    %v7133 = vpop.permute.xlu0 %7132
    %7134 = vrot.lane.b32.xlu0 %v5334, 64
    %v7135 = vpop.permute.xlu0 %7134
    %7136 = vrot.lane.b32.xlu0 %v5349, 64
    %v7137 = vpop.permute.xlu0 %7136
    %7138 = vrot.lane.b32.xlu0 %v5364, 64
    %v7139 = vpop.permute.xlu0 %7138
    %7140 = vrot.lane.b32.xlu0 %v5379, 64
    %v7141 = vpop.permute.xlu0 %7140
    %7142 = vrot.lane.b32.xlu0 %v5394, 64
    %v7143 = vpop.permute.xlu0 %7142
    %7144 = vrot.lane.b32.xlu0 %v5409, 64
    %v7145 = vpop.permute.xlu0 %7144
    %7146 = vrot.lane.b32.xlu0 %v5424, 64
    %v7147 = vpop.permute.xlu0 %7146
    %7148 = vrot.lane.b32.xlu0 %v5439, 64
    %v7149 = vpop.permute.xlu0 %7148
    %7150 = vrot.lane.b32.xlu0 %v5454, 64
    %v7151 = vpop.permute.xlu0 %7150
    %7152 = vrot.lane.b32.xlu0 %v5469, 64
    %v7153 = vpop.permute.xlu0 %7152
    %7154 = vrot.lane.b32.xlu0 %v5484, 64
    %v7155 = vpop.permute.xlu0 %7154
    %7156 = vrot.lane.b32.xlu0 %v5499, 64
    %v7157 = vpop.permute.xlu0 %7156
    %7158 = vrot.lane.b32.xlu0 %v5514, 64
    %v7159 = vpop.permute.xlu0 %7158
    %7160 = vrot.lane.b32.xlu0 %v5529, 64
    %v7161 = vpop.permute.xlu0 %7160
    %7162 = vrot.lane.b32.xlu0 %v5544, 64
    %v7163 = vpop.permute.xlu0 %7162
    %7164 = vrot.lane.b32.xlu0 %v5559, 64
    %v7165 = vpop.permute.xlu0 %7164
    %7166 = vrot.lane.b32.xlu0 %v5574, 64
    %v7167 = vpop.permute.xlu0 %7166
    %7168 = vrot.lane.b32.xlu0 %v5589, 64
    %v7169 = vpop.permute.xlu0 %7168
    %7170 = vrot.lane.b32.xlu0 %v5604, 64
    %v7171 = vpop.permute.xlu0 %7170
    %7172 = vrot.lane.b32.xlu0 %v5619, 64
    %v7173 = vpop.permute.xlu0 %7172
    %7174 = vrot.lane.b32.xlu0 %v5634, 64
    %v7175 = vpop.permute.xlu0 %7174
    %7176 = vrot.lane.b32.xlu0 %v5649, 64
    %v7177 = vpop.permute.xlu0 %7176
    %7178 = vrot.lane.b32.xlu0 %v5664, 64
    %v7179 = vpop.permute.xlu0 %7178
    %7180 = vrot.lane.b32.xlu0 %v5679, 64
    %v7181 = vpop.permute.xlu0 %7180
    %7182 = vrot.lane.b32.xlu0 %v5694, 64
    %v7183 = vpop.permute.xlu0 %7182
    %7184 = vrot.lane.b32.xlu0 %v5709, 64
    %v7185 = vpop.permute.xlu0 %7184
    %7186 = vrot.lane.b32.xlu0 %v5724, 64
    %v7187 = vpop.permute.xlu0 %7186
    %7188 = vrot.lane.b32.xlu0 %v5739, 64
    %v7189 = vpop.permute.xlu0 %7188
    %7190 = vrot.lane.b32.xlu0 %v5754, 64
    %v7191 = vpop.permute.xlu0 %7190
    %7192 = vrot.lane.b32.xlu0 %v5769, 64
    %v7193 = vpop.permute.xlu0 %7192
    %7194 = vrot.lane.b32.xlu0 %v5784, 64
    %v7195 = vpop.permute.xlu0 %7194
    %7196 = vrot.lane.b32.xlu0 %v5799, 64
    %v7197 = vpop.permute.xlu0 %7196
    %7198 = vrot.lane.b32.xlu0 %v5814, 64
    %v7199 = vpop.permute.xlu0 %7198
    %7200 = vrot.lane.b32.xlu0 %v5829, 64
    %v7201 = vpop.permute.xlu0 %7200
    %7202 = vrot.lane.b32.xlu0 %v5844, 64
    %v7203 = vpop.permute.xlu0 %7202
    %7204 = vrot.lane.b32.xlu0 %v5859, 64
    %v7205 = vpop.permute.xlu0 %7204
    %7206 = vrot.lane.b32.xlu0 %v5874, 64
    %v7207 = vpop.permute.xlu0 %7206
    %7208 = vrot.lane.b32.xlu0 %v5889, 64
    %v7209 = vpop.permute.xlu0 %7208
    %7210 = vrot.lane.b32.xlu0 %v5904, 64
    %v7211 = vpop.permute.xlu0 %7210
    %7212 = vrot.lane.b32.xlu0 %v5919, 64
    %v7213 = vpop.permute.xlu0 %7212
    %7214 = vrot.lane.b32.xlu0 %v5934, 64
    %v7215 = vpop.permute.xlu0 %7214
    %7216 = vrot.lane.b32.xlu0 %v5949, 64
    %v7217 = vpop.permute.xlu0 %7216
    %7218 = vrot.lane.b32.xlu0 %v5964, 64
    %v7219 = vpop.permute.xlu0 %7218
    %7220 = vrot.lane.b32.xlu0 %v5979, 64
    %v7221 = vpop.permute.xlu0 %7220
    %7222 = vrot.lane.b32.xlu0 %v5994, 64
    %v7223 = vpop.permute.xlu0 %7222
    %7224 = vrot.lane.b32.xlu0 %v6009, 64
    %v7225 = vpop.permute.xlu0 %7224
    %7226 = vrot.lane.b32.xlu0 %v6024, 64
    %v7227 = vpop.permute.xlu0 %7226
    %7228 = vrot.lane.b32.xlu0 %v6039, 64
    %v7229 = vpop.permute.xlu0 %7228
    %7230 = vrot.lane.b32.xlu0 %v6054, 64
    %v7231 = vpop.permute.xlu0 %7230
    %7232 = vrot.lane.b32.xlu0 %v6069, 64
    %v7233 = vpop.permute.xlu0 %7232
    %7234 = vrot.lane.b32.xlu0 %v6084, 64
    %v7235 = vpop.permute.xlu0 %7234
    %7236 = vrot.lane.b32.xlu0 %v6099, 64
    %v7237 = vpop.permute.xlu0 %7236
    %7238 = vrot.lane.b32.xlu0 %v6114, 64
    %v7239 = vpop.permute.xlu0 %7238
    %7240 = vrot.lane.b32.xlu0 %v6129, 64
    %v7241 = vpop.permute.xlu0 %7240
    %7242 = vrot.lane.b32.xlu0 %v6144, 64
    %v7243 = vpop.permute.xlu0 %7242
    %7244 = vrot.lane.b32.xlu0 %v6159, 64
    %v7245 = vpop.permute.xlu0 %7244
    %7246 = vrot.lane.b32.xlu0 %v6174, 64
    %v7247 = vpop.permute.xlu0 %7246
    %7248 = vrot.lane.b32.xlu0 %v6189, 64
    %v7249 = vpop.permute.xlu0 %7248
    %7250 = vrot.lane.b32.xlu0 %v6204, 64
    %v7251 = vpop.permute.xlu0 %7250
    %7252 = vrot.lane.b32.xlu0 %v6219, 64
    %v7253 = vpop.permute.xlu0 %7252
    %7254 = vrot.lane.b32.xlu0 %v6234, 64
    %v7255 = vpop.permute.xlu0 %7254
    %7256 = vrot.lane.b32.xlu0 %v6249, 64
    %v7257 = vpop.permute.xlu0 %7256
    %7258 = vrot.lane.b32.xlu0 %v6264, 64
    %v7259 = vpop.permute.xlu0 %7258
    %7260 = vrot.lane.b32.xlu0 %v6279, 64
    %v7261 = vpop.permute.xlu0 %7260
    %7262 = vrot.lane.b32.xlu0 %v6294, 64
    %v7263 = vpop.permute.xlu0 %7262
    %7264 = vrot.lane.b32.xlu0 %v6309, 64
    %v7265 = vpop.permute.xlu0 %7264
    %7266 = vrot.lane.b32.xlu0 %v6324, 64
    %v7267 = vpop.permute.xlu0 %7266
    %7268 = vrot.lane.b32.xlu0 %v6339, 64
    %v7269 = vpop.permute.xlu0 %7268
    %7270 = vrot.lane.b32.xlu0 %v6354, 64
    %v7271 = vpop.permute.xlu0 %7270
    %7272 = vrot.lane.b32.xlu0 %v6369, 64
    %v7273 = vpop.permute.xlu0 %7272
    %7274 = vrot.lane.b32.xlu0 %v6384, 64
    %v7275 = vpop.permute.xlu0 %7274
    %7276 = vrot.lane.b32.xlu0 %v6399, 64
    %v7277 = vpop.permute.xlu0 %7276
    %7278 = vrot.lane.b32.xlu0 %v6414, 64
    %v7279 = vpop.permute.xlu0 %7278
    %7280 = vrot.lane.b32.xlu0 %v6429, 64
    %v7281 = vpop.permute.xlu0 %7280
    %7282 = vrot.lane.b32.xlu0 %v6444, 64
    %v7283 = vpop.permute.xlu0 %7282
    %7284 = vrot.lane.b32.xlu0 %v6459, 64
    %v7285 = vpop.permute.xlu0 %7284
    %7286 = vrot.lane.b32.xlu0 %v6474, 64
    %v7287 = vpop.permute.xlu0 %7286
    %7288 = vrot.lane.b32.xlu0 %v6489, 64
    %v7289 = vpop.permute.xlu0 %7288
    %7290 = vrot.lane.b32.xlu0 %v6504, 64
    %v7291 = vpop.permute.xlu0 %7290
    %7292 = vrot.lane.b32.xlu0 %v6519, 64
    %v7293 = vpop.permute.xlu0 %7292
    %7294 = vrot.lane.b32.xlu0 %v6534, 64
    %v7295 = vpop.permute.xlu0 %7294
    %7296 = vrot.lane.b32.xlu0 %v6549, 64
    %v7297 = vpop.permute.xlu0 %7296
    %7298 = vrot.lane.b32.xlu0 %v6564, 64
    %v7299 = vpop.permute.xlu0 %7298
    %7300 = vrot.lane.b32.xlu0 %v6579, 64
    %v7301 = vpop.permute.xlu0 %7300
    %7302 = vrot.lane.b32.xlu0 %v6594, 64
    %v7303 = vpop.permute.xlu0 %7302
    %7304 = vrot.lane.b32.xlu0 %v6609, 64
    %v7305 = vpop.permute.xlu0 %7304
    %7306 = vrot.lane.b32.xlu0 %v6624, 64
    %v7307 = vpop.permute.xlu0 %7306
    %7308 = vrot.lane.b32.xlu0 %v6639, 64
    %v7309 = vpop.permute.xlu0 %7308
    %7310 = vrot.lane.b32.xlu0 %v6654, 64
    %v7311 = vpop.permute.xlu0 %7310
    %7312 = vrot.lane.b32.xlu0 %v6669, 64
    %v7313 = vpop.permute.xlu0 %7312
    %7314 = vrot.lane.b32.xlu0 %v6684, 64
    %v7315 = vpop.permute.xlu0 %7314
    %7316 = vrot.lane.b32.xlu0 %v6699, 64
    %v7317 = vpop.permute.xlu0 %7316
    %7318 = vrot.lane.b32.xlu0 %v6714, 64
    %v7319 = vpop.permute.xlu0 %7318
    %7320 = vrot.lane.b32.xlu0 %v6729, 64
    %v7321 = vpop.permute.xlu0 %7320
    %7322 = vrot.lane.b32.xlu0 %v6744, 64
    %v7323 = vpop.permute.xlu0 %7322
    %7324 = vrot.lane.b32.xlu0 %v6759, 64
    %v7325 = vpop.permute.xlu0 %7324
    %7326 = vrot.lane.b32.xlu0 %v6774, 64
    %v7327 = vpop.permute.xlu0 %7326
    %7328 = vrot.lane.b32.xlu0 %v6789, 64
    %v7329 = vpop.permute.xlu0 %7328
    %7330 = vrot.lane.b32.xlu0 %v6804, 64
    %v7331 = vpop.permute.xlu0 %7330
    %7332 = vrot.lane.b32.xlu0 %v6819, 64
    %v7333 = vpop.permute.xlu0 %7332
    %7334 = vrot.lane.b32.xlu0 %v6834, 64
    %v7335 = vpop.permute.xlu0 %7334
    %7336 = vrot.lane.b32.xlu0 %v6849, 64
    %v7337 = vpop.permute.xlu0 %7336
    %7338 = vrot.lane.b32.xlu0 %v6864, 64
    %v7339 = vpop.permute.xlu0 %7338
    %7340 = vrot.lane.b32.xlu0 %v6879, 64
    %v7341 = vpop.permute.xlu0 %7340
    %7342 = vrot.lane.b32.xlu0 %v6894, 64
    %v7343 = vpop.permute.xlu0 %7342
    %7344 = vrot.lane.b32.xlu0 %v6909, 64
    %v7345 = vpop.permute.xlu0 %7344
    %7346 = vrot.lane.b32.xlu0 %v6924, 64
    %v7347 = vpop.permute.xlu0 %7346
    %7348 = vrot.lane.b32.xlu0 %v6939, 64
    %v7349 = vpop.permute.xlu0 %7348
    %7350 = vrot.lane.b32.xlu0 %v6954, 64
    %v7351 = vpop.permute.xlu0 %7350
    %7352 = vrot.lane.b32.xlu0 %v6969, 64
    %v7353 = vpop.permute.xlu0 %7352
    %v7482 = vmul.f32 %v4410, %v7099
    %v7483 = vmul.f32 %v4411, %v7101
    %v7484 = vmul.f32 %v4412, %v7103
    %v7485 = vmul.f32 %v4413, %v7105
    %v7486 = vmul.f32 %v4414, %v7107
    %v7487 = vmul.f32 %v4415, %v7109
    %v7488 = vmul.f32 %v4416, %v7111
    %v7489 = vmul.f32 %v4417, %v7113
    %v7490 = vmul.f32 %v4418, %v7115
    %v7491 = vmul.f32 %v4419, %v7117
    %v7492 = vmul.f32 %v4420, %v7119
    %v7493 = vmul.f32 %v4421, %v7121
    %v7494 = vmul.f32 %v4422, %v7123
    %v7495 = vmul.f32 %v4423, %v7125
    %v7496 = vmul.f32 %v4424, %v7127
    %v7497 = vmul.f32 %v4425, %v7129
    %v7498 = vmul.f32 %v4426, %v7131
    %v7499 = vmul.f32 %v4427, %v7133
    %v7500 = vmul.f32 %v4428, %v7135
    %v7501 = vmul.f32 %v4429, %v7137
    %v7502 = vmul.f32 %v4430, %v7139
    %v7503 = vmul.f32 %v4431, %v7141
    %v7504 = vmul.f32 %v4432, %v7143
    %v7505 = vmul.f32 %v4433, %v7145
    %v7506 = vmul.f32 %v4434, %v7147
    %v7507 = vmul.f32 %v4435, %v7149
    %v7508 = vmul.f32 %v4436, %v7151
    %v7509 = vmul.f32 %v4437, %v7153
    %v7510 = vmul.f32 %v4438, %v7155
    %v7511 = vmul.f32 %v4439, %v7157
    %v7512 = vmul.f32 %v4440, %v7159
    %v7513 = vmul.f32 %v4441, %v7161
    %v7514 = vmul.f32 %v4442, %v7163
    %v7515 = vmul.f32 %v4443, %v7165
    %v7516 = vmul.f32 %v4444, %v7167
    %v7517 = vmul.f32 %v4445, %v7169
    %v7518 = vmul.f32 %v4446, %v7171
    %v7519 = vmul.f32 %v4447, %v7173
    %v7520 = vmul.f32 %v4448, %v7175
    %v7521 = vmul.f32 %v4449, %v7177
    %v7522 = vmul.f32 %v4450, %v7179
    %v7523 = vmul.f32 %v4451, %v7181
    %v7524 = vmul.f32 %v4452, %v7183
    %v7525 = vmul.f32 %v4453, %v7185
    %v7526 = vmul.f32 %v4454, %v7187
    %v7527 = vmul.f32 %v4455, %v7189
    %v7528 = vmul.f32 %v4456, %v7191
    %v7529 = vmul.f32 %v4457, %v7193
    %v7530 = vmul.f32 %v4458, %v7195
    %v7531 = vmul.f32 %v4459, %v7197
    %v7532 = vmul.f32 %v4460, %v7199
    %v7533 = vmul.f32 %v4461, %v7201
    %v7534 = vmul.f32 %v4462, %v7203
    %v7535 = vmul.f32 %v4463, %v7205
    %v7536 = vmul.f32 %v4464, %v7207
    %v7537 = vmul.f32 %v4465, %v7209
    %v7538 = vmul.f32 %v4466, %v7211
    %v7539 = vmul.f32 %v4467, %v7213
    %v7540 = vmul.f32 %v4468, %v7215
    %v7541 = vmul.f32 %v4469, %v7217
    %v7542 = vmul.f32 %v4470, %v7219
    %v7543 = vmul.f32 %v4471, %v7221
    %v7544 = vmul.f32 %v4472, %v7223
    %v7545 = vmul.f32 %v4473, %v7225
    %v7546 = vmul.f32 %v4474, %v7227
    %v7547 = vmul.f32 %v4475, %v7229
    %v7548 = vmul.f32 %v4476, %v7231
    %v7549 = vmul.f32 %v4477, %v7233
    %v7550 = vmul.f32 %v4478, %v7235
    %v7551 = vmul.f32 %v4479, %v7237
    %v7552 = vmul.f32 %v4480, %v7239
    %v7553 = vmul.f32 %v4481, %v7241
    %v7554 = vmul.f32 %v4482, %v7243
    %v7555 = vmul.f32 %v4483, %v7245
    %v7556 = vmul.f32 %v4484, %v7247
    %v7557 = vmul.f32 %v4485, %v7249
    %v7558 = vmul.f32 %v4486, %v7251
    %v7559 = vmul.f32 %v4487, %v7253
    %v7560 = vmul.f32 %v4488, %v7255
    %v7561 = vmul.f32 %v4489, %v7257
    %v7562 = vmul.f32 %v4490, %v7259
    %v7563 = vmul.f32 %v4491, %v7261
    %v7564 = vmul.f32 %v4492, %v7263
    %v7565 = vmul.f32 %v4493, %v7265
    %v7566 = vmul.f32 %v4494, %v7267
    %v7567 = vmul.f32 %v4495, %v7269
    %v7568 = vmul.f32 %v4496, %v7271
    %v7569 = vmul.f32 %v4497, %v7273
    %v7570 = vmul.f32 %v4498, %v7275
    %v7571 = vmul.f32 %v4499, %v7277
    %v7572 = vmul.f32 %v4500, %v7279
    %v7573 = vmul.f32 %v4501, %v7281
    %v7574 = vmul.f32 %v4502, %v7283
    %v7575 = vmul.f32 %v4503, %v7285
    %v7576 = vmul.f32 %v4504, %v7287
    %v7577 = vmul.f32 %v4505, %v7289
    %v7578 = vmul.f32 %v4506, %v7291
    %v7579 = vmul.f32 %v4507, %v7293
    %v7580 = vmul.f32 %v4508, %v7295
    %v7581 = vmul.f32 %v4509, %v7297
    %v7582 = vmul.f32 %v4510, %v7299
    %v7583 = vmul.f32 %v4511, %v7301
    %v7584 = vmul.f32 %v4512, %v7303
    %v7585 = vmul.f32 %v4513, %v7305
    %v7586 = vmul.f32 %v4514, %v7307
    %v7587 = vmul.f32 %v4515, %v7309
    %v7588 = vmul.f32 %v4516, %v7311
    %v7589 = vmul.f32 %v4517, %v7313
    %v7590 = vmul.f32 %v4518, %v7315
    %v7591 = vmul.f32 %v4519, %v7317
    %v7592 = vmul.f32 %v4520, %v7319
    %v7593 = vmul.f32 %v4521, %v7321
    %v7594 = vmul.f32 %v4522, %v7323
    %v7595 = vmul.f32 %v4523, %v7325
    %v7596 = vmul.f32 %v4524, %v7327
    %v7597 = vmul.f32 %v4525, %v7329
    %v7598 = vmul.f32 %v4526, %v7331
    %v7599 = vmul.f32 %v4527, %v7333
    %v7600 = vmul.f32 %v4528, %v7335
    %v7601 = vmul.f32 %v4529, %v7337
    %v7602 = vmul.f32 %v4530, %v7339
    %v7603 = vmul.f32 %v4531, %v7341
    %v7604 = vmul.f32 %v4532, %v7343
    %v7605 = vmul.f32 %v4533, %v7345
    %v7606 = vmul.f32 %v4534, %v7347
    %v7607 = vmul.f32 %v4535, %v7349
    %v7608 = vmul.f32 %v4536, %v7351
    %v7609 = vmul.f32 %v4537, %v7353
    %v7610 = vld [vmem:[%s4] sm:$0x1]
    %v7611 = vpack.c.bf16 %v7483, %v7482
    %v7612 = vpack.c.bf16 %v7485, %v7484
    %v7613 = vpack.c.bf16 %v7487, %v7486
    %v7614 = vpack.c.bf16 %v7489, %v7488
    %v7615 = vpack.c.bf16 %v7491, %v7490
    %v7616 = vpack.c.bf16 %v7493, %v7492
    %v7617 = vpack.c.bf16 %v7495, %v7494
    %v7618 = vpack.c.bf16 %v7497, %v7496
    %v7619 = vpack.c.bf16 %v7499, %v7498
    %v7620 = vpack.c.bf16 %v7501, %v7500
    %v7621 = vpack.c.bf16 %v7503, %v7502
    %v7622 = vpack.c.bf16 %v7505, %v7504
    %v7623 = vpack.c.bf16 %v7507, %v7506
    %v7624 = vpack.c.bf16 %v7509, %v7508
    %v7625 = vpack.c.bf16 %v7511, %v7510
    %v7626 = vpack.c.bf16 %v7513, %v7512
    %v7627 = vpack.c.bf16 %v7515, %v7514
    %v7628 = vpack.c.bf16 %v7517, %v7516
    %v7629 = vpack.c.bf16 %v7519, %v7518
    %v7630 = vpack.c.bf16 %v7521, %v7520
    %v7631 = vpack.c.bf16 %v7523, %v7522
    %v7632 = vpack.c.bf16 %v7525, %v7524
    %v7633 = vpack.c.bf16 %v7527, %v7526
    %v7634 = vpack.c.bf16 %v7529, %v7528
    %v7635 = vpack.c.bf16 %v7531, %v7530
    %v7636 = vpack.c.bf16 %v7533, %v7532
    %v7637 = vpack.c.bf16 %v7535, %v7534
    %v7638 = vpack.c.bf16 %v7537, %v7536
    %v7639 = vpack.c.bf16 %v7539, %v7538
    %v7640 = vpack.c.bf16 %v7541, %v7540
    %v7641 = vpack.c.bf16 %v7543, %v7542
    %v7642 = vpack.c.bf16 %v7545, %v7544
    %v7643 = vpack.c.bf16 %v7547, %v7546
    %v7644 = vpack.c.bf16 %v7549, %v7548
    %v7645 = vpack.c.bf16 %v7551, %v7550
    %v7646 = vpack.c.bf16 %v7553, %v7552
    %v7647 = vpack.c.bf16 %v7555, %v7554
    %v7648 = vpack.c.bf16 %v7557, %v7556
    %v7649 = vpack.c.bf16 %v7559, %v7558
    %v7650 = vpack.c.bf16 %v7561, %v7560
    %v7651 = vpack.c.bf16 %v7563, %v7562
    %v7652 = vpack.c.bf16 %v7565, %v7564
    %v7653 = vpack.c.bf16 %v7567, %v7566
    %v7654 = vpack.c.bf16 %v7569, %v7568
    %v7655 = vpack.c.bf16 %v7571, %v7570
    %v7656 = vpack.c.bf16 %v7573, %v7572
    %v7657 = vpack.c.bf16 %v7575, %v7574
    %v7658 = vpack.c.bf16 %v7577, %v7576
    %v7659 = vpack.c.bf16 %v7579, %v7578
    %v7660 = vpack.c.bf16 %v7581, %v7580
    %v7661 = vpack.c.bf16 %v7583, %v7582
    %v7662 = vpack.c.bf16 %v7585, %v7584
    %v7663 = vpack.c.bf16 %v7587, %v7586
    %v7664 = vpack.c.bf16 %v7589, %v7588
    %v7665 = vpack.c.bf16 %v7591, %v7590
    %v7666 = vpack.c.bf16 %v7593, %v7592
    %v7667 = vpack.c.bf16 %v7595, %v7594
    %v7668 = vpack.c.bf16 %v7597, %v7596
    %v7669 = vpack.c.bf16 %v7599, %v7598
    %v7670 = vpack.c.bf16 %v7601, %v7600
    %v7671 = vpack.c.bf16 %v7603, %v7602
    %v7672 = vpack.c.bf16 %v7605, %v7604
    %v7673 = vpack.c.bf16 %v7607, %v7606
    %v7674 = vpack.c.bf16 %v7609, %v7608
    %vm7675 = vcmask 523264
    %v7677 = vsel %vm7675, %v7610, 0
    %v7680 = vsel %vm7675, %v7611, 0
    %v7683 = vsel %vm7675, %v7612, 0
    %v7686 = vsel %vm7675, %v7613, 0
    %v7689 = vsel %vm7675, %v7614, 0
    %v7692 = vsel %vm7675, %v7615, 0
    %v7695 = vsel %vm7675, %v7616, 0
    %v7698 = vsel %vm7675, %v7617, 0
    %v7701 = vsel %vm7675, %v7618, 0
    %v7704 = vsel %vm7675, %v7619, 0
    %v7707 = vsel %vm7675, %v7620, 0
    %v7710 = vsel %vm7675, %v7621, 0
    %v7713 = vsel %vm7675, %v7622, 0
    %v7716 = vsel %vm7675, %v7623, 0
    %v7719 = vsel %vm7675, %v7624, 0
    %v7722 = vsel %vm7675, %v7625, 0
    %v7725 = vsel %vm7675, %v7626, 0
    %v7728 = vsel %vm7675, %v7627, 0
    %v7731 = vsel %vm7675, %v7628, 0
    %v7734 = vsel %vm7675, %v7629, 0
    %v7737 = vsel %vm7675, %v7630, 0
    %v7740 = vsel %vm7675, %v7631, 0
    %v7743 = vsel %vm7675, %v7632, 0
    %v7746 = vsel %vm7675, %v7633, 0
    %v7749 = vsel %vm7675, %v7634, 0
    %v7752 = vsel %vm7675, %v7635, 0
    %v7755 = vsel %vm7675, %v7636, 0
    %v7758 = vsel %vm7675, %v7637, 0
    %v7761 = vsel %vm7675, %v7638, 0
    %v7764 = vsel %vm7675, %v7639, 0
    %v7767 = vsel %vm7675, %v7640, 0
    %v7770 = vsel %vm7675, %v7641, 0
    %v7773 = vsel %vm7675, %v7642, 0
    %v7776 = vsel %vm7675, %v7643, 0
    %v7779 = vsel %vm7675, %v7644, 0
    %v7782 = vsel %vm7675, %v7645, 0
    %v7785 = vsel %vm7675, %v7646, 0
    %v7788 = vsel %vm7675, %v7647, 0
    %v7791 = vsel %vm7675, %v7648, 0
    %v7794 = vsel %vm7675, %v7649, 0
    %v7797 = vsel %vm7675, %v7650, 0
    %v7800 = vsel %vm7675, %v7651, 0
    %v7803 = vsel %vm7675, %v7652, 0
    %v7806 = vsel %vm7675, %v7653, 0
    %v7809 = vsel %vm7675, %v7654, 0
    %v7812 = vsel %vm7675, %v7655, 0
    %v7815 = vsel %vm7675, %v7656, 0
    %v7818 = vsel %vm7675, %v7657, 0
    %v7821 = vsel %vm7675, %v7658, 0
    %v7824 = vsel %vm7675, %v7659, 0
    %v7827 = vsel %vm7675, %v7660, 0
    %v7830 = vsel %vm7675, %v7661, 0
    %v7833 = vsel %vm7675, %v7662, 0
    %v7836 = vsel %vm7675, %v7663, 0
    %v7839 = vsel %vm7675, %v7664, 0
    %v7842 = vsel %vm7675, %v7665, 0
    %v7845 = vsel %vm7675, %v7666, 0
    %v7848 = vsel %vm7675, %v7667, 0
    %v7851 = vsel %vm7675, %v7668, 0
    %v7854 = vsel %vm7675, %v7669, 0
    %v7857 = vsel %vm7675, %v7670, 0
    %v7860 = vsel %vm7675, %v7671, 0
    %v7863 = vsel %vm7675, %v7672, 0
    %v7866 = vsel %vm7675, %v7673, 0
    %v7869 = vsel %vm7675, %v7674, 0
    %7871 = vmatpush.bf16.xpose.msra.mxu0 %v7701
    %7872 = vmatpush.bf16.xpose.msra.mxu0 %v7698
    %7873 = vmatpush.bf16.xpose.msra.mxu0 %v7695
    %7874 = vmatpush.bf16.xpose.msra.mxu0 %v7692
    %7875 = vmatpush.bf16.xpose.msra.mxu0 %v7689
    %7876 = vmatpush.bf16.xpose.msra.mxu0 %v7686
    %7877 = vmatpush.bf16.xpose.msra.mxu0 %v7683
    %7878 = vmatpush.bf16.xpose.msra.mxu0 %v7680
    %7879 = vmatmul.bf16.gmra.mxu0 %v7677
    %v7880 = vpop.f32.mrf.mxu0
    %v7881 = vadd.f32 0.0, %v7880
    %v7882 = vpop.f32.mrf.mxu0
    %7883 = vdwg.mxu0
    %7884 = vmatpush.bf16.xpose.msra.mxu0 %v7725
    %7885 = vmatpush.bf16.xpose.msra.mxu0 %v7722
    %7886 = vmatpush.bf16.xpose.msra.mxu0 %v7719
    %7887 = vmatpush.bf16.xpose.msra.mxu0 %v7716
    %7888 = vmatpush.bf16.xpose.msra.mxu0 %v7713
    %7889 = vmatpush.bf16.xpose.msra.mxu0 %v7710
    %7890 = vmatpush.bf16.xpose.msra.mxu0 %v7707
    %7891 = vmatpush.bf16.xpose.msra.mxu0 %v7704
    %7892 = vmatmul.bf16.gmra.mxu0 %v7677
    %v7893 = vpop.f32.mrf.mxu0
    %v7894 = vadd.f32 0.0, %v7893
    %v7895 = vpop.f32.mrf.mxu0
    %7896 = vdwg.mxu0
    %7897 = vmatpush.bf16.xpose.msra.mxu0 %v7749
    %7898 = vmatpush.bf16.xpose.msra.mxu0 %v7746
    %7899 = vmatpush.bf16.xpose.msra.mxu0 %v7743
    %7900 = vmatpush.bf16.xpose.msra.mxu0 %v7740
    %7901 = vmatpush.bf16.xpose.msra.mxu0 %v7737
    %7902 = vmatpush.bf16.xpose.msra.mxu0 %v7734
    %7903 = vmatpush.bf16.xpose.msra.mxu0 %v7731
    %7904 = vmatpush.bf16.xpose.msra.mxu0 %v7728
    %7905 = vmatmul.bf16.gmra.mxu0 %v7677
    %v7906 = vpop.f32.mrf.mxu0
    %v7907 = vadd.f32 0.0, %v7906
    %v7908 = vpop.f32.mrf.mxu0
    %7909 = vdwg.mxu0
    %7910 = vmatpush.bf16.xpose.msra.mxu0 %v7773
    %7911 = vmatpush.bf16.xpose.msra.mxu0 %v7770
    %7912 = vmatpush.bf16.xpose.msra.mxu0 %v7767
    %7913 = vmatpush.bf16.xpose.msra.mxu0 %v7764
    %7914 = vmatpush.bf16.xpose.msra.mxu0 %v7761
    %7915 = vmatpush.bf16.xpose.msra.mxu0 %v7758
    %7916 = vmatpush.bf16.xpose.msra.mxu0 %v7755
    %7917 = vmatpush.bf16.xpose.msra.mxu0 %v7752
    %7918 = vmatmul.bf16.gmra.mxu0 %v7677
    %v7919 = vpop.f32.mrf.mxu0
    %v7920 = vadd.f32 0.0, %v7919
    %v7921 = vpop.f32.mrf.mxu0
    %7922 = vdwg.mxu0
    %7923 = vmatpush.bf16.xpose.msra.mxu0 %v7797
    %7924 = vmatpush.bf16.xpose.msra.mxu0 %v7794
    %7925 = vmatpush.bf16.xpose.msra.mxu0 %v7791
    %7926 = vmatpush.bf16.xpose.msra.mxu0 %v7788
    %7927 = vmatpush.bf16.xpose.msra.mxu0 %v7785
    %7928 = vmatpush.bf16.xpose.msra.mxu0 %v7782
    %7929 = vmatpush.bf16.xpose.msra.mxu0 %v7779
    %7930 = vmatpush.bf16.xpose.msra.mxu0 %v7776
    %7931 = vmatmul.bf16.gmra.mxu0 %v7677
    %v7932 = vpop.f32.mrf.mxu0
    %v7933 = vadd.f32 0.0, %v7932
    %v7934 = vpop.f32.mrf.mxu0
    %7935 = vdwg.mxu0
    %7936 = vmatpush.bf16.xpose.msra.mxu0 %v7821
    %7937 = vmatpush.bf16.xpose.msra.mxu0 %v7818
    %7938 = vmatpush.bf16.xpose.msra.mxu0 %v7815
    %7939 = vmatpush.bf16.xpose.msra.mxu0 %v7812
    %7940 = vmatpush.bf16.xpose.msra.mxu0 %v7809
    %7941 = vmatpush.bf16.xpose.msra.mxu0 %v7806
    %7942 = vmatpush.bf16.xpose.msra.mxu0 %v7803
    %7943 = vmatpush.bf16.xpose.msra.mxu0 %v7800
    %7944 = vmatmul.bf16.gmra.mxu0 %v7677
    %v7945 = vpop.f32.mrf.mxu0
    %v7946 = vadd.f32 0.0, %v7945
    %v7947 = vpop.f32.mrf.mxu0
    %7948 = vdwg.mxu0
    %7949 = vmatpush.bf16.xpose.msra.mxu0 %v7845
    %7950 = vmatpush.bf16.xpose.msra.mxu0 %v7842
    %7951 = vmatpush.bf16.xpose.msra.mxu0 %v7839
    %7952 = vmatpush.bf16.xpose.msra.mxu0 %v7836
    %7953 = vmatpush.bf16.xpose.msra.mxu0 %v7833
    %7954 = vmatpush.bf16.xpose.msra.mxu0 %v7830
    %7955 = vmatpush.bf16.xpose.msra.mxu0 %v7827
    %7956 = vmatpush.bf16.xpose.msra.mxu0 %v7824
    %7957 = vmatmul.bf16.gmra.mxu0 %v7677
    %v7958 = vpop.f32.mrf.mxu0
    %v7959 = vadd.f32 0.0, %v7958
    %v7960 = vpop.f32.mrf.mxu0
    %7961 = vdwg.mxu0
    %7962 = vmatpush.bf16.xpose.msra.mxu0 %v7869
    %7963 = vmatpush.bf16.xpose.msra.mxu0 %v7866
    %7964 = vmatpush.bf16.xpose.msra.mxu0 %v7863
    %7965 = vmatpush.bf16.xpose.msra.mxu0 %v7860
    %7966 = vmatpush.bf16.xpose.msra.mxu0 %v7857
    %7967 = vmatpush.bf16.xpose.msra.mxu0 %v7854
    %7968 = vmatpush.bf16.xpose.msra.mxu0 %v7851
    %7969 = vmatpush.bf16.xpose.msra.mxu0 %v7848
    %7970 = vmatmul.bf16.gmra.mxu0 %v7677
    %v7971 = vpop.f32.mrf.mxu0
    %v7972 = vadd.f32 0.0, %v7971
    %v7973 = vpop.f32.mrf.mxu0
    %7974 = vdwg.mxu0
    %v7975 = vlaneseq
    %v7976 = vand.u32 %v7975, 127
    %v7977 = vadd.s32 %v7976, 128
    %v7978 = vadd.s32 %v7976, 256
    %v7979 = vadd.s32 %v7976, 384
    %v7980 = vadd.s32 %v7976, 512
    %v7981 = vadd.s32 %v7976, 640
    %v7982 = vadd.s32 %v7976, 768
    %v7983 = vadd.s32 %v7976, 896
    %s7984 = smul.u32 0, 1024
    %v7985 = vstv %s7984
    %v7986 = vadd.s32 %v7976, %v7985
    %v7987 = vadd.s32 %v7977, %v7985
    %v7988 = vadd.s32 %v7978, %v7985
    %v7989 = vadd.s32 %v7979, %v7985
    %v7990 = vadd.s32 %v7980, %v7985
    %v7991 = vadd.s32 %v7981, %v7985
    %v7992 = vadd.s32 %v7982, %v7985
    %v7993 = vadd.s32 %v7983, %v7985
    %v7994 = vstv %s27
    %vm7995 = vcmp.lt.s32.totalorder %v7986, %v7994
    %vm7996 = vcmp.lt.s32.totalorder %v7987, %v7994
    %vm7997 = vcmp.lt.s32.totalorder %v7988, %v7994
    %vm7998 = vcmp.lt.s32.totalorder %v7989, %v7994
    %vm7999 = vcmp.lt.s32.totalorder %v7990, %v7994
    %vm8000 = vcmp.lt.s32.totalorder %v7991, %v7994
    %vm8001 = vcmp.lt.s32.totalorder %v7992, %v7994
    %vm8002 = vcmp.lt.s32.totalorder %v7993, %v7994
    %v8003 = vsel %vm7995, %v7881, -1e+30
    %v8004 = vsel %vm7996, %v7894, -1e+30
    %v8005 = vsel %vm7997, %v7907, -1e+30
    %v8006 = vsel %vm7998, %v7920, -1e+30
    %v8007 = vsel %vm7999, %v7933, -1e+30
    %v8008 = vsel %vm8000, %v7946, -1e+30
    %v8009 = vsel %vm8001, %v7959, -1e+30
    %v8010 = vsel %vm8002, %v7972, -1e+30
    %v8019 = vrot.slane %v8004, 7
    %v8020 = vrot.slane %v8005, 6
    %v8021 = vrot.slane %v8006, 5
    %v8022 = vrot.slane %v8007, 4
    %v8023 = vrot.slane %v8008, 3
    %v8024 = vrot.slane %v8009, 2
    %v8025 = vrot.slane %v8010, 1
    %vm8026 = vcmask 1040384
    %v8027 = vsel %vm8026, %v8003, %v8019
    %vm8028 = vcmask 1042434
    %v8029 = vsel %vm8028, %v8020, %v8021
    %vm8030 = vcmask 1041408
    %v8031 = vsel %vm8030, %v8027, %v8029
    %vm8032 = vcmask 1044484
    %v8033 = vsel %vm8032, %v8022, %v8023
    %vm8034 = vcmask 1046534
    %v8035 = vsel %vm8034, %v8024, %v8025
    %vm8036 = vcmask 1045508
    %v8037 = vsel %vm8036, %v8033, %v8035
    %v8038 = vsel %vm741, %v8031, %v8037
    %s8040 = sshra.s32 %s7984, 7
    %s8041 = sand.u32 %s7984, 127
    %s8042 = scalar_lea.vmem [#allocation9], %s8040
    %8043 = vst [vmem:[%s8042] sm:$0xff] %v8038
    %v8044 = vld [vmem:[#allocation2] sm:$0x1]
    %v8045 = vsel %vm8026, %v8003, -inf
    %v8046 = vsel %vm8026, %v8004, -inf
    %v8047 = vsel %vm8026, %v8005, -inf
    %v8048 = vsel %vm8026, %v8006, -inf
    %v8049 = vsel %vm8026, %v8007, -inf
    %v8050 = vmax.f32 %v8045, %v8049
    %v8051 = vsel %vm8026, %v8008, -inf
    %v8052 = vmax.f32 %v8046, %v8051
    %v8053 = vsel %vm8026, %v8009, -inf
    %v8054 = vmax.f32 %v8047, %v8053
    %v8055 = vsel %vm8026, %v8010, -inf
    %v8056 = vmax.f32 %v8048, %v8055
    %v8057 = vmax.f32 %v8050, %v8052
    %v8058 = vmax.f32 %v8054, %v8056
    %v8059 = vmax.f32 %v8057, %v8058
    %8060 = vmax.xlane.f32.xlu0 %v8059
    %v8061 = vpop.xlane.xlu0 %8060
    %v8062 = vmax.f32 %v8044, %v8061
    %v8063 = vsub.f32 %v8044, %v8062
    %v8064 = vmul.f32 %v8063, 1.442695
    %v8065 = vpow.pop %v8064
    %8067 = vset.pattern.permute.xlu0 0
    %8068 = vperm.xlu0 %8067, %v8062
    %v8069 = vpop.permute.xlu0 %8068
    %v8071 = vperm.slane %v8069, 0
    %v8072 = vsub.f32 %v8003, %v8071
    %v8073 = vsub.f32 %v8004, %v8071
    %v8074 = vsub.f32 %v8005, %v8071
    %v8075 = vsub.f32 %v8006, %v8071
    %v8076 = vsub.f32 %v8007, %v8071
    %v8077 = vsub.f32 %v8008, %v8071
    %v8078 = vsub.f32 %v8009, %v8071
    %v8079 = vsub.f32 %v8010, %v8071
    %v8080 = vmul.f32 %v8072, 1.442695
    %v8081 = vpow.pop %v8080
    %v8082 = vmul.f32 %v8073, 1.442695
    %v8083 = vpow.pop %v8082
    %v8084 = vmul.f32 %v8074, 1.442695
    %v8085 = vpow.pop %v8084
    %v8086 = vmul.f32 %v8075, 1.442695
    %v8087 = vpow.pop %v8086
    %v8088 = vmul.f32 %v8076, 1.442695
    %v8089 = vpow.pop %v8088
    %v8090 = vmul.f32 %v8077, 1.442695
    %v8091 = vpow.pop %v8090
    %v8092 = vmul.f32 %v8078, 1.442695
    %v8093 = vpow.pop %v8092
    %v8094 = vmul.f32 %v8079, 1.442695
    %v8095 = vpow.pop %v8094
    %v8096 = vsel %vm7995, %v8081, 0.0
    %v8097 = vsel %vm7996, %v8083, 0.0
    %v8098 = vsel %vm7997, %v8085, 0.0
    %v8099 = vsel %vm7998, %v8087, 0.0
    %v8100 = vsel %vm7999, %v8089, 0.0
    %v8101 = vsel %vm8000, %v8091, 0.0
    %v8102 = vsel %vm8001, %v8093, 0.0
    %v8103 = vsel %vm8002, %v8095, 0.0
    %v8104 = vld [vmem:[#allocation3] sm:$0x1]
    %v8105 = vmul.f32 %v8104, %v8065
    %v8106 = vsel %vm8026, %v8096, 0.0
    %v8107 = vsel %vm8026, %v8097, 0.0
    %v8108 = vadd.f32 %v8106, %v8107
    %v8109 = vsel %vm8026, %v8098, 0.0
    %v8110 = vadd.f32 %v8108, %v8109
    %v8111 = vsel %vm8026, %v8099, 0.0
    %v8112 = vadd.f32 %v8110, %v8111
    %v8113 = vsel %vm8026, %v8100, 0.0
    %v8114 = vadd.f32 %v8112, %v8113
    %v8115 = vsel %vm8026, %v8101, 0.0
    %v8116 = vadd.f32 %v8114, %v8115
    %v8117 = vsel %vm8026, %v8102, 0.0
    %v8118 = vadd.f32 %v8116, %v8117
    %v8119 = vsel %vm8026, %v8103, 0.0
    %v8120 = vadd.f32 %v8118, %v8119
    %8121 = vadd.xlane.f32.xlu0 %v8120
    %v8122 = vpop.xlane.xlu0 %8121
    %v8123 = vadd.f32 %v8105, %v8122
    %vm8124 = vcmask 0
    %8125 = vst.msk [vmem:[#allocation3] sm:$0x1] %vm8124, %v8123
    %v8126 = vld [vmem:[#allocation4] sm:$0xf]
    %8128 = vset.pattern.permute.xlu0 0
    %8129 = vperm.xlu0 %8128, %v8065
    %v8130 = vpop.permute.xlu0 %8129
    %v8132 = vperm.slane %v8130, 0
    %v8133 = vmul.f32 %v8126, %v8132
    %v8134 = vpack.c.bf16 %v8096, %v8096
    %v8135 = vpack.c.bf16 %v8097, %v8097
    %v8136 = vpack.c.bf16 %v8098, %v8098
    %v8137 = vpack.c.bf16 %v8099, %v8099
    %v8138 = vpack.c.bf16 %v8100, %v8100
    %v8139 = vpack.c.bf16 %v8101, %v8101
    %v8140 = vpack.c.bf16 %v8102, %v8102
    %v8141 = vpack.c.bf16 %v8103, %v8103
    %8142 = vmatpush.bf16.msra.mxu0 %v2610
    %8143 = vmatpush.bf16.msra.mxu0 %v2606
    %8144 = vmatpush.bf16.msra.mxu0 %v2602
    %8145 = vmatpush.bf16.msra.mxu0 %v2598
    %8146 = vmatpush.bf16.msra.mxu0 %v2594
    %8147 = vmatpush.bf16.msra.mxu0 %v2590
    %8148 = vmatpush.bf16.msra.mxu0 %v2586
    %8149 = vmatpush.bf16.msra.mxu0 %v2582
    %8150 = vmatmul.bf16.gmra.mxu0 %v8134
    %v8151 = vpop.f32.mrf.mxu0
    %v8152 = vadd.f32 0.0, %v8151
    %v8153 = vpop.f32.mrf.mxu0
    %8154 = vdwg.mxu0
    %8155 = vmatpush.bf16.msra.mxu0 %v2642
    %8156 = vmatpush.bf16.msra.mxu0 %v2638
    %8157 = vmatpush.bf16.msra.mxu0 %v2634
    %8158 = vmatpush.bf16.msra.mxu0 %v2630
    %8159 = vmatpush.bf16.msra.mxu0 %v2626
    %8160 = vmatpush.bf16.msra.mxu0 %v2622
    %8161 = vmatpush.bf16.msra.mxu0 %v2618
    %8162 = vmatpush.bf16.msra.mxu0 %v2614
    %8163 = vmatmul.bf16.gmra.mxu0 %v8135
    %v8164 = vpop.f32.mrf.mxu0
    %v8165 = vadd.f32 %v8152, %v8164
    %v8166 = vpop.f32.mrf.mxu0
    %8167 = vdwg.mxu0
    %8168 = vmatpush.bf16.msra.mxu0 %v2674
    %8169 = vmatpush.bf16.msra.mxu0 %v2670
    %8170 = vmatpush.bf16.msra.mxu0 %v2666
    %8171 = vmatpush.bf16.msra.mxu0 %v2662
    %8172 = vmatpush.bf16.msra.mxu0 %v2658
    %8173 = vmatpush.bf16.msra.mxu0 %v2654
    %8174 = vmatpush.bf16.msra.mxu0 %v2650
    %8175 = vmatpush.bf16.msra.mxu0 %v2646
    %8176 = vmatmul.bf16.gmra.mxu0 %v8136
    %v8177 = vpop.f32.mrf.mxu0
    %v8178 = vadd.f32 %v8165, %v8177
    %v8179 = vpop.f32.mrf.mxu0
    %8180 = vdwg.mxu0
    %8181 = vmatpush.bf16.msra.mxu0 %v2706
    %8182 = vmatpush.bf16.msra.mxu0 %v2702
    %8183 = vmatpush.bf16.msra.mxu0 %v2698
    %8184 = vmatpush.bf16.msra.mxu0 %v2694
    %8185 = vmatpush.bf16.msra.mxu0 %v2690
    %8186 = vmatpush.bf16.msra.mxu0 %v2686
    %8187 = vmatpush.bf16.msra.mxu0 %v2682
    %8188 = vmatpush.bf16.msra.mxu0 %v2678
    %8189 = vmatmul.bf16.gmra.mxu0 %v8137
    %v8190 = vpop.f32.mrf.mxu0
    %v8191 = vadd.f32 %v8178, %v8190
    %v8192 = vpop.f32.mrf.mxu0
    %8193 = vdwg.mxu0
    %8194 = vmatpush.bf16.msra.mxu0 %v2738
    %8195 = vmatpush.bf16.msra.mxu0 %v2734
    %8196 = vmatpush.bf16.msra.mxu0 %v2730
    %8197 = vmatpush.bf16.msra.mxu0 %v2726
    %8198 = vmatpush.bf16.msra.mxu0 %v2722
    %8199 = vmatpush.bf16.msra.mxu0 %v2718
    %8200 = vmatpush.bf16.msra.mxu0 %v2714
    %8201 = vmatpush.bf16.msra.mxu0 %v2710
    %8202 = vmatmul.bf16.gmra.mxu0 %v8138
    %v8203 = vpop.f32.mrf.mxu0
    %v8204 = vadd.f32 %v8191, %v8203
    %v8205 = vpop.f32.mrf.mxu0
    %8206 = vdwg.mxu0
    %8207 = vmatpush.bf16.msra.mxu0 %v2770
    %8208 = vmatpush.bf16.msra.mxu0 %v2766
    %8209 = vmatpush.bf16.msra.mxu0 %v2762
    %8210 = vmatpush.bf16.msra.mxu0 %v2758
    %8211 = vmatpush.bf16.msra.mxu0 %v2754
    %8212 = vmatpush.bf16.msra.mxu0 %v2750
    %8213 = vmatpush.bf16.msra.mxu0 %v2746
    %8214 = vmatpush.bf16.msra.mxu0 %v2742
    %8215 = vmatmul.bf16.gmra.mxu0 %v8139
    %v8216 = vpop.f32.mrf.mxu0
    %v8217 = vadd.f32 %v8204, %v8216
    %v8218 = vpop.f32.mrf.mxu0
    %8219 = vdwg.mxu0
    %8220 = vmatpush.bf16.msra.mxu0 %v2802
    %8221 = vmatpush.bf16.msra.mxu0 %v2798
    %8222 = vmatpush.bf16.msra.mxu0 %v2794
    %8223 = vmatpush.bf16.msra.mxu0 %v2790
    %8224 = vmatpush.bf16.msra.mxu0 %v2786
    %8225 = vmatpush.bf16.msra.mxu0 %v2782
    %8226 = vmatpush.bf16.msra.mxu0 %v2778
    %8227 = vmatpush.bf16.msra.mxu0 %v2774
    %8228 = vmatmul.bf16.gmra.mxu0 %v8140
    %v8229 = vpop.f32.mrf.mxu0
    %v8230 = vadd.f32 %v8217, %v8229
    %v8231 = vpop.f32.mrf.mxu0
    %8232 = vdwg.mxu0
    %8233 = vmatpush.bf16.msra.mxu0 %v2834
    %8234 = vmatpush.bf16.msra.mxu0 %v2830
    %8235 = vmatpush.bf16.msra.mxu0 %v2826
    %8236 = vmatpush.bf16.msra.mxu0 %v2822
    %8237 = vmatpush.bf16.msra.mxu0 %v2818
    %8238 = vmatpush.bf16.msra.mxu0 %v2814
    %8239 = vmatpush.bf16.msra.mxu0 %v2810
    %8240 = vmatpush.bf16.msra.mxu0 %v2806
    %8241 = vmatmul.bf16.gmra.mxu0 %v8141
    %v8242 = vpop.f32.mrf.mxu0
    %v8243 = vadd.f32 %v8230, %v8242
    %v8244 = vpop.f32.mrf.mxu0
    %8245 = vdwg.mxu0
    %8246 = vmatpush.bf16.msra.mxu0 %v2611
    %8247 = vmatpush.bf16.msra.mxu0 %v2607
    %8248 = vmatpush.bf16.msra.mxu0 %v2603
    %8249 = vmatpush.bf16.msra.mxu0 %v2599
    %8250 = vmatpush.bf16.msra.mxu0 %v2595
    %8251 = vmatpush.bf16.msra.mxu0 %v2591
    %8252 = vmatpush.bf16.msra.mxu0 %v2587
    %8253 = vmatpush.bf16.msra.mxu0 %v2583
    %8254 = vmatmul.bf16.gmra.mxu0 %v8134
    %v8255 = vpop.f32.mrf.mxu0
    %v8256 = vadd.f32 0.0, %v8255
    %v8257 = vpop.f32.mrf.mxu0
    %8258 = vdwg.mxu0
    %8259 = vmatpush.bf16.msra.mxu0 %v2643
    %8260 = vmatpush.bf16.msra.mxu0 %v2639
    %8261 = vmatpush.bf16.msra.mxu0 %v2635
    %8262 = vmatpush.bf16.msra.mxu0 %v2631
    %8263 = vmatpush.bf16.msra.mxu0 %v2627
    %8264 = vmatpush.bf16.msra.mxu0 %v2623
    %8265 = vmatpush.bf16.msra.mxu0 %v2619
    %8266 = vmatpush.bf16.msra.mxu0 %v2615
    %8267 = vmatmul.bf16.gmra.mxu0 %v8135
    %v8268 = vpop.f32.mrf.mxu0
    %v8269 = vadd.f32 %v8256, %v8268
    %v8270 = vpop.f32.mrf.mxu0
    %8271 = vdwg.mxu0
    %8272 = vmatpush.bf16.msra.mxu0 %v2675
    %8273 = vmatpush.bf16.msra.mxu0 %v2671
    %8274 = vmatpush.bf16.msra.mxu0 %v2667
    %8275 = vmatpush.bf16.msra.mxu0 %v2663
    %8276 = vmatpush.bf16.msra.mxu0 %v2659
    %8277 = vmatpush.bf16.msra.mxu0 %v2655
    %8278 = vmatpush.bf16.msra.mxu0 %v2651
    %8279 = vmatpush.bf16.msra.mxu0 %v2647
    %8280 = vmatmul.bf16.gmra.mxu0 %v8136
    %v8281 = vpop.f32.mrf.mxu0
    %v8282 = vadd.f32 %v8269, %v8281
    %v8283 = vpop.f32.mrf.mxu0
    %8284 = vdwg.mxu0
    %8285 = vmatpush.bf16.msra.mxu0 %v2707
    %8286 = vmatpush.bf16.msra.mxu0 %v2703
    %8287 = vmatpush.bf16.msra.mxu0 %v2699
    %8288 = vmatpush.bf16.msra.mxu0 %v2695
    %8289 = vmatpush.bf16.msra.mxu0 %v2691
    %8290 = vmatpush.bf16.msra.mxu0 %v2687
    %8291 = vmatpush.bf16.msra.mxu0 %v2683
    %8292 = vmatpush.bf16.msra.mxu0 %v2679
    %8293 = vmatmul.bf16.gmra.mxu0 %v8137
    %v8294 = vpop.f32.mrf.mxu0
    %v8295 = vadd.f32 %v8282, %v8294
    %v8296 = vpop.f32.mrf.mxu0
    %8297 = vdwg.mxu0
    %8298 = vmatpush.bf16.msra.mxu0 %v2739
    %8299 = vmatpush.bf16.msra.mxu0 %v2735
    %8300 = vmatpush.bf16.msra.mxu0 %v2731
    %8301 = vmatpush.bf16.msra.mxu0 %v2727
    %8302 = vmatpush.bf16.msra.mxu0 %v2723
    %8303 = vmatpush.bf16.msra.mxu0 %v2719
    %8304 = vmatpush.bf16.msra.mxu0 %v2715
    %8305 = vmatpush.bf16.msra.mxu0 %v2711
    %8306 = vmatmul.bf16.gmra.mxu0 %v8138
    %v8307 = vpop.f32.mrf.mxu0
    %v8308 = vadd.f32 %v8295, %v8307
    %v8309 = vpop.f32.mrf.mxu0
    %8310 = vdwg.mxu0
    %8311 = vmatpush.bf16.msra.mxu0 %v2771
    %8312 = vmatpush.bf16.msra.mxu0 %v2767
    %8313 = vmatpush.bf16.msra.mxu0 %v2763
    %8314 = vmatpush.bf16.msra.mxu0 %v2759
    %8315 = vmatpush.bf16.msra.mxu0 %v2755
    %8316 = vmatpush.bf16.msra.mxu0 %v2751
    %8317 = vmatpush.bf16.msra.mxu0 %v2747
    %8318 = vmatpush.bf16.msra.mxu0 %v2743
    %8319 = vmatmul.bf16.gmra.mxu0 %v8139
    %v8320 = vpop.f32.mrf.mxu0
    %v8321 = vadd.f32 %v8308, %v8320
    %v8322 = vpop.f32.mrf.mxu0
    %8323 = vdwg.mxu0
    %8324 = vmatpush.bf16.msra.mxu0 %v2803
    %8325 = vmatpush.bf16.msra.mxu0 %v2799
    %8326 = vmatpush.bf16.msra.mxu0 %v2795
    %8327 = vmatpush.bf16.msra.mxu0 %v2791
    %8328 = vmatpush.bf16.msra.mxu0 %v2787
    %8329 = vmatpush.bf16.msra.mxu0 %v2783
    %8330 = vmatpush.bf16.msra.mxu0 %v2779
    %8331 = vmatpush.bf16.msra.mxu0 %v2775
    %8332 = vmatmul.bf16.gmra.mxu0 %v8140
    %v8333 = vpop.f32.mrf.mxu0
    %v8334 = vadd.f32 %v8321, %v8333
    %v8335 = vpop.f32.mrf.mxu0
    %8336 = vdwg.mxu0
    %8337 = vmatpush.bf16.msra.mxu0 %v2835
    %8338 = vmatpush.bf16.msra.mxu0 %v2831
    %8339 = vmatpush.bf16.msra.mxu0 %v2827
    %8340 = vmatpush.bf16.msra.mxu0 %v2823
    %8341 = vmatpush.bf16.msra.mxu0 %v2819
    %8342 = vmatpush.bf16.msra.mxu0 %v2815
    %8343 = vmatpush.bf16.msra.mxu0 %v2811
    %8344 = vmatpush.bf16.msra.mxu0 %v2807
    %8345 = vmatmul.bf16.gmra.mxu0 %v8141
    %v8346 = vpop.f32.mrf.mxu0
    %v8347 = vadd.f32 %v8334, %v8346
    %v8348 = vpop.f32.mrf.mxu0
    %8349 = vdwg.mxu0
    %8350 = vmatpush.bf16.msra.mxu0 %v2612
    %8351 = vmatpush.bf16.msra.mxu0 %v2608
    %8352 = vmatpush.bf16.msra.mxu0 %v2604
    %8353 = vmatpush.bf16.msra.mxu0 %v2600
    %8354 = vmatpush.bf16.msra.mxu0 %v2596
    %8355 = vmatpush.bf16.msra.mxu0 %v2592
    %8356 = vmatpush.bf16.msra.mxu0 %v2588
    %8357 = vmatpush.bf16.msra.mxu0 %v2584
    %8358 = vmatmul.bf16.gmra.mxu0 %v8134
    %v8359 = vpop.f32.mrf.mxu0
    %v8360 = vadd.f32 0.0, %v8359
    %v8361 = vpop.f32.mrf.mxu0
    %8362 = vdwg.mxu0
    %8363 = vmatpush.bf16.msra.mxu0 %v2644
    %8364 = vmatpush.bf16.msra.mxu0 %v2640
    %8365 = vmatpush.bf16.msra.mxu0 %v2636
    %8366 = vmatpush.bf16.msra.mxu0 %v2632
    %8367 = vmatpush.bf16.msra.mxu0 %v2628
    %8368 = vmatpush.bf16.msra.mxu0 %v2624
    %8369 = vmatpush.bf16.msra.mxu0 %v2620
    %8370 = vmatpush.bf16.msra.mxu0 %v2616
    %8371 = vmatmul.bf16.gmra.mxu0 %v8135
    %v8372 = vpop.f32.mrf.mxu0
    %v8373 = vadd.f32 %v8360, %v8372
    %v8374 = vpop.f32.mrf.mxu0
    %8375 = vdwg.mxu0
    %8376 = vmatpush.bf16.msra.mxu0 %v2676
    %8377 = vmatpush.bf16.msra.mxu0 %v2672
    %8378 = vmatpush.bf16.msra.mxu0 %v2668
    %8379 = vmatpush.bf16.msra.mxu0 %v2664
    %8380 = vmatpush.bf16.msra.mxu0 %v2660
    %8381 = vmatpush.bf16.msra.mxu0 %v2656
    %8382 = vmatpush.bf16.msra.mxu0 %v2652
    %8383 = vmatpush.bf16.msra.mxu0 %v2648
    %8384 = vmatmul.bf16.gmra.mxu0 %v8136
    %v8385 = vpop.f32.mrf.mxu0
    %v8386 = vadd.f32 %v8373, %v8385
    %v8387 = vpop.f32.mrf.mxu0
    %8388 = vdwg.mxu0
    %8389 = vmatpush.bf16.msra.mxu0 %v2708
    %8390 = vmatpush.bf16.msra.mxu0 %v2704
    %8391 = vmatpush.bf16.msra.mxu0 %v2700
    %8392 = vmatpush.bf16.msra.mxu0 %v2696
    %8393 = vmatpush.bf16.msra.mxu0 %v2692
    %8394 = vmatpush.bf16.msra.mxu0 %v2688
    %8395 = vmatpush.bf16.msra.mxu0 %v2684
    %8396 = vmatpush.bf16.msra.mxu0 %v2680
    %8397 = vmatmul.bf16.gmra.mxu0 %v8137
    %v8398 = vpop.f32.mrf.mxu0
    %v8399 = vadd.f32 %v8386, %v8398
    %v8400 = vpop.f32.mrf.mxu0
    %8401 = vdwg.mxu0
    %8402 = vmatpush.bf16.msra.mxu0 %v2740
    %8403 = vmatpush.bf16.msra.mxu0 %v2736
    %8404 = vmatpush.bf16.msra.mxu0 %v2732
    %8405 = vmatpush.bf16.msra.mxu0 %v2728
    %8406 = vmatpush.bf16.msra.mxu0 %v2724
    %8407 = vmatpush.bf16.msra.mxu0 %v2720
    %8408 = vmatpush.bf16.msra.mxu0 %v2716
    %8409 = vmatpush.bf16.msra.mxu0 %v2712
    %8410 = vmatmul.bf16.gmra.mxu0 %v8138
    %v8411 = vpop.f32.mrf.mxu0
    %v8412 = vadd.f32 %v8399, %v8411
    %v8413 = vpop.f32.mrf.mxu0
    %8414 = vdwg.mxu0
    %8415 = vmatpush.bf16.msra.mxu0 %v2772
    %8416 = vmatpush.bf16.msra.mxu0 %v2768
    %8417 = vmatpush.bf16.msra.mxu0 %v2764
    %8418 = vmatpush.bf16.msra.mxu0 %v2760
    %8419 = vmatpush.bf16.msra.mxu0 %v2756
    %8420 = vmatpush.bf16.msra.mxu0 %v2752
    %8421 = vmatpush.bf16.msra.mxu0 %v2748
    %8422 = vmatpush.bf16.msra.mxu0 %v2744
    %8423 = vmatmul.bf16.gmra.mxu0 %v8139
    %v8424 = vpop.f32.mrf.mxu0
    %v8425 = vadd.f32 %v8412, %v8424
    %v8426 = vpop.f32.mrf.mxu0
    %8427 = vdwg.mxu0
    %8428 = vmatpush.bf16.msra.mxu0 %v2804
    %8429 = vmatpush.bf16.msra.mxu0 %v2800
    %8430 = vmatpush.bf16.msra.mxu0 %v2796
    %8431 = vmatpush.bf16.msra.mxu0 %v2792
    %8432 = vmatpush.bf16.msra.mxu0 %v2788
    %8433 = vmatpush.bf16.msra.mxu0 %v2784
    %8434 = vmatpush.bf16.msra.mxu0 %v2780
    %8435 = vmatpush.bf16.msra.mxu0 %v2776
    %8436 = vmatmul.bf16.gmra.mxu0 %v8140
    %v8437 = vpop.f32.mrf.mxu0
    %v8438 = vadd.f32 %v8425, %v8437
    %v8439 = vpop.f32.mrf.mxu0
    %8440 = vdwg.mxu0
    %8441 = vmatpush.bf16.msra.mxu0 %v2836
    %8442 = vmatpush.bf16.msra.mxu0 %v2832
    %8443 = vmatpush.bf16.msra.mxu0 %v2828
    %8444 = vmatpush.bf16.msra.mxu0 %v2824
    %8445 = vmatpush.bf16.msra.mxu0 %v2820
    %8446 = vmatpush.bf16.msra.mxu0 %v2816
    %8447 = vmatpush.bf16.msra.mxu0 %v2812
    %8448 = vmatpush.bf16.msra.mxu0 %v2808
    %8449 = vmatmul.bf16.gmra.mxu0 %v8141
    %v8450 = vpop.f32.mrf.mxu0
    %v8451 = vadd.f32 %v8438, %v8450
    %v8452 = vpop.f32.mrf.mxu0
    %8453 = vdwg.mxu0
    %8454 = vmatpush.bf16.msra.mxu0 %v2613
    %8455 = vmatpush.bf16.msra.mxu0 %v2609
    %8456 = vmatpush.bf16.msra.mxu0 %v2605
    %8457 = vmatpush.bf16.msra.mxu0 %v2601
    %8458 = vmatpush.bf16.msra.mxu0 %v2597
    %8459 = vmatpush.bf16.msra.mxu0 %v2593
    %8460 = vmatpush.bf16.msra.mxu0 %v2589
    %8461 = vmatpush.bf16.msra.mxu0 %v2585
    %8462 = vmatmul.bf16.gmra.mxu0 %v8134
    %v8463 = vpop.f32.mrf.mxu0
    %v8464 = vadd.f32 0.0, %v8463
    %v8465 = vpop.f32.mrf.mxu0
    %8466 = vdwg.mxu0
    %8467 = vmatpush.bf16.msra.mxu0 %v2645
    %8468 = vmatpush.bf16.msra.mxu0 %v2641
    %8469 = vmatpush.bf16.msra.mxu0 %v2637
    %8470 = vmatpush.bf16.msra.mxu0 %v2633
    %8471 = vmatpush.bf16.msra.mxu0 %v2629
    %8472 = vmatpush.bf16.msra.mxu0 %v2625
    %8473 = vmatpush.bf16.msra.mxu0 %v2621
    %8474 = vmatpush.bf16.msra.mxu0 %v2617
    %8475 = vmatmul.bf16.gmra.mxu0 %v8135
    %v8476 = vpop.f32.mrf.mxu0
    %v8477 = vadd.f32 %v8464, %v8476
    %v8478 = vpop.f32.mrf.mxu0
    %8479 = vdwg.mxu0
    %8480 = vmatpush.bf16.msra.mxu0 %v2677
    %8481 = vmatpush.bf16.msra.mxu0 %v2673
    %8482 = vmatpush.bf16.msra.mxu0 %v2669
    %8483 = vmatpush.bf16.msra.mxu0 %v2665
    %8484 = vmatpush.bf16.msra.mxu0 %v2661
    %8485 = vmatpush.bf16.msra.mxu0 %v2657
    %8486 = vmatpush.bf16.msra.mxu0 %v2653
    %8487 = vmatpush.bf16.msra.mxu0 %v2649
    %8488 = vmatmul.bf16.gmra.mxu0 %v8136
    %v8489 = vpop.f32.mrf.mxu0
    %v8490 = vadd.f32 %v8477, %v8489
    %v8491 = vpop.f32.mrf.mxu0
    %8492 = vdwg.mxu0
    %8493 = vmatpush.bf16.msra.mxu0 %v2709
    %8494 = vmatpush.bf16.msra.mxu0 %v2705
    %8495 = vmatpush.bf16.msra.mxu0 %v2701
    %8496 = vmatpush.bf16.msra.mxu0 %v2697
    %8497 = vmatpush.bf16.msra.mxu0 %v2693
    %8498 = vmatpush.bf16.msra.mxu0 %v2689
    %8499 = vmatpush.bf16.msra.mxu0 %v2685
    %8500 = vmatpush.bf16.msra.mxu0 %v2681
    %8501 = vmatmul.bf16.gmra.mxu0 %v8137
    %v8502 = vpop.f32.mrf.mxu0
    %v8503 = vadd.f32 %v8490, %v8502
    %v8504 = vpop.f32.mrf.mxu0
    %8505 = vdwg.mxu0
    %8506 = vmatpush.bf16.msra.mxu0 %v2741
    %8507 = vmatpush.bf16.msra.mxu0 %v2737
    %8508 = vmatpush.bf16.msra.mxu0 %v2733
    %8509 = vmatpush.bf16.msra.mxu0 %v2729
    %8510 = vmatpush.bf16.msra.mxu0 %v2725
    %8511 = vmatpush.bf16.msra.mxu0 %v2721
    %8512 = vmatpush.bf16.msra.mxu0 %v2717
    %8513 = vmatpush.bf16.msra.mxu0 %v2713
    %8514 = vmatmul.bf16.gmra.mxu0 %v8138
    %v8515 = vpop.f32.mrf.mxu0
    %v8516 = vadd.f32 %v8503, %v8515
    %v8517 = vpop.f32.mrf.mxu0
    %8518 = vdwg.mxu0
    %8519 = vmatpush.bf16.msra.mxu0 %v2773
    %8520 = vmatpush.bf16.msra.mxu0 %v2769
    %8521 = vmatpush.bf16.msra.mxu0 %v2765
    %8522 = vmatpush.bf16.msra.mxu0 %v2761
    %8523 = vmatpush.bf16.msra.mxu0 %v2757
    %8524 = vmatpush.bf16.msra.mxu0 %v2753
    %8525 = vmatpush.bf16.msra.mxu0 %v2749
    %8526 = vmatpush.bf16.msra.mxu0 %v2745
    %8527 = vmatmul.bf16.gmra.mxu0 %v8139
    %v8528 = vpop.f32.mrf.mxu0
    %v8529 = vadd.f32 %v8516, %v8528
    %v8530 = vpop.f32.mrf.mxu0
    %8531 = vdwg.mxu0
    %8532 = vmatpush.bf16.msra.mxu0 %v2805
    %8533 = vmatpush.bf16.msra.mxu0 %v2801
    %8534 = vmatpush.bf16.msra.mxu0 %v2797
    %8535 = vmatpush.bf16.msra.mxu0 %v2793
    %8536 = vmatpush.bf16.msra.mxu0 %v2789
    %8537 = vmatpush.bf16.msra.mxu0 %v2785
    %8538 = vmatpush.bf16.msra.mxu0 %v2781
    %8539 = vmatpush.bf16.msra.mxu0 %v2777
    %8540 = vmatmul.bf16.gmra.mxu0 %v8140
    %v8541 = vpop.f32.mrf.mxu0
    %v8542 = vadd.f32 %v8529, %v8541
    %v8543 = vpop.f32.mrf.mxu0
    %8544 = vdwg.mxu0
    %8545 = vmatpush.bf16.msra.mxu0 %v2837
    %8546 = vmatpush.bf16.msra.mxu0 %v2833
    %8547 = vmatpush.bf16.msra.mxu0 %v2829
    %8548 = vmatpush.bf16.msra.mxu0 %v2825
    %8549 = vmatpush.bf16.msra.mxu0 %v2821
    %8550 = vmatpush.bf16.msra.mxu0 %v2817
    %8551 = vmatpush.bf16.msra.mxu0 %v2813
    %8552 = vmatpush.bf16.msra.mxu0 %v2809
    %8553 = vmatmul.bf16.gmra.mxu0 %v8141
    %v8554 = vpop.f32.mrf.mxu0
    %v8555 = vadd.f32 %v8542, %v8554
    %v8556 = vpop.f32.mrf.mxu0
    %8557 = vdwg.mxu0
    %v8562 = vrot.slane %v8347, 7
    %v8563 = vrot.slane %v8451, 6
    %v8564 = vrot.slane %v8555, 5
    %v8565 = vsel %vm8026, %v8243, %v8562
    %v8566 = vsel %vm8028, %v8563, %v8564
    %v8567 = vsel %vm8030, %v8565, %v8566
    %v8569 = vadd.f32 %v8133, %v8567
    %v8570 = vlaneseq
    %vm8571 = vcmp.ge.s32.totalorder %v8570, 0
    %vm8572 = vcmp.lt.s32.totalorder %v8570, 512
    %vm8573 = vmand %vm8571, %vm8572
    %8574 = vst.msk [vmem:[#allocation4] sm:$0xf] %vm8573, %v8569
    %8575 = vst.msk [vmem:[#allocation2] sm:$0x1] %vm8124, %v8062
    // Predicated region
    $region26: #{tpu_custom_call.1} parent=1 // pred_check
      %p8576 = pneg %p28
    $region27: #{tpu_custom_call.1} parent=1 // pred_check_branch
      %8578 = sbr.rel (%p8576) target = $region29
    $region28: #{tpu_custom_call.1} parent=1 // pred_region
      %v8579 = vld [vmem:[#allocation3] sm:$0x1]
      %v8580 = vrcp.pop %v8579
      %v8581 = vmul.f32 %v8579, %v8580
      %v8582 = vsub.f32 1.0, %v8581
      %v8583 = vmul.f32 %v8580, %v8582
      %v8584 = vadd.f32 %v8580, %v8583
      %vm8585 = vweird.f32 %v8579
      %vm8586 = vweird.f32 %v8580
      %vm8587 = vmor %vm8585, %vm8586
      %v8588 = vsel %vm8587, %v8580, %v8584
      %v8589 = vand.u32 2147483647, %v8579
      %vm8590 = vcmp.eq.f32.partialorder %v8589, 8.507059e+37
      %v8591 = vand.u32 %v8579, 2147483648
      %v8592 = vor.u32 1.1754944e-38, %v8591
      %v8593 = vsel %vm8590, %v8592, %v8588
      %v8594 = vld [vmem:[#allocation9] sm:$0xff]
      %v8595 = vld [vmem:[#allocation2] sm:$0x1]
      %8597 = vset.pattern.permute.xlu0 0
      %8598 = vperm.xlu0 %8597, %v8595
      %v8599 = vpop.permute.xlu0 %8598
      %v8601 = vperm.slane %v8599, 0
      %v8602 = vsub.f32 %v8594, %v8601
      %v8603 = vmul.f32 %v8602, 1.442695
      %v8604 = vpow.pop %v8603
      %8606 = vset.pattern.permute.xlu0 0
      %8607 = vperm.xlu0 %8606, %v8593
      %v8608 = vpop.permute.xlu0 %8607
      %v8610 = vperm.slane %v8608, 0
      %v8611 = vmul.f32 %v8604, %v8610
      %8612 = vst [vmem:[#allocation9] sm:$0xff] %v8611
      %v8613 = vld [vmem:[#allocation4] sm:$0xf]
      %v8614 = vmul.f32 %v8613, %v8610
      %v8615 = vld [vmem:[%s5] sm:$0xf]
      %v8616 = vmul.f32 %v8614, %v8615
      %v8618 = vperm.slane %v8616, 0
      %v8619 = vperm.slane %v8616, 1
      %v8620 = vperm.slane %v8616, 2
      %v8621 = vperm.slane %v8616, 3
      %v8626 = vsel %vm8026, %v8618, 0.0
      %v8627 = vsel %vm8026, %v8619, 0.0
      %v8628 = vadd.f32 %v8626, %v8627
      %v8629 = vsel %vm8026, %v8620, 0.0
      %v8630 = vadd.f32 %v8628, %v8629
      %v8631 = vsel %vm8026, %v8621, 0.0
      %v8632 = vadd.f32 %v8630, %v8631
      %8633 = vadd.xlane.f32.xlu0 %v8632
      %v8634 = vpop.xlane.xlu0 %8633
      %v8635 = vxor.u32 %v8634, 2147483648
      %v8636 = vmul.f32 %v8635, 1.442695
      %v8637 = vpow.pop %v8636
      %v8638 = vadd.f32 %v8637, 1.0
      %v8639 = vrcp.pop %v8638
      %v8640 = vmul.f32 %v8638, %v8639
      %v8641 = vsub.f32 1.0, %v8640
      %v8642 = vmul.f32 %v8639, %v8641
      %v8643 = vadd.f32 %v8639, %v8642
      %vm8644 = vweird.f32 %v8638
      %vm8645 = vweird.f32 %v8639
      %vm8646 = vmor %vm8644, %vm8645
      %v8647 = vsel %vm8646, %v8639, %v8643
      %v8648 = vand.u32 2147483647, %v8638
      %vm8649 = vcmp.eq.f32.partialorder %v8648, 8.507059e+37
      %v8650 = vand.u32 %v8638, 2147483648
      %v8651 = vor.u32 1.1754944e-38, %v8650
      %v8652 = vsel %vm8649, %v8651, %v8647
      %v8653 = vmul.f32 1.0, %v8652
      %vm8654 = vcmp.ge.f32.partialorder %v8653, 0.5
      %v8655 = vsel %vm8654, 1, 0
      %v8656 = vcvt.s32.f32 %v8655
      %vm8657 = vcmp.eq.s32.totalorder %v7976, 0
      %vm8658 = vcmp.eq.s32.totalorder %v7976, 1
      %v8659 = vsel %vm8658, %v8656, 0.0
      %v8660 = vsel %vm8657, %v8653, %v8659
      %8661 = vst [vmem:[#allocation7] sm:$0x1] %v8660
    $region29: #{tpu_custom_call.1} parent=1 // pred_fallthru
      _
    // Predicated region
    $region30: #{tpu_custom_call.1} parent=1 // pred_check
      _
    $region31: #{tpu_custom_call.1} parent=1 // pred_check_branch
      %8663 = sbr.rel (0) target = $region33
    $region32: #{tpu_custom_call.1} parent=1 // pred_region
      %8665 = vsyncadd [#allocation8], 0
      %s8667 = sshll.u32 [#allocation7], 4
      %s8668 = int_to_ptr.vmem [resolvable:$true] %s8667
      %s8669 = sshll.u32 %s6, 4
      %s8670 = int_to_ptr.hbm [resolvable:$true] %s8669
      %8672 = dma.vmem_to_hbm [thread:$0]  %s8668, 16, %s8670, [#allocation8]
    $region33: #{tpu_custom_call.1} parent=1 // pred_fallthru
      _
    // Predicated region
    $region34: #{tpu_custom_call.1} parent=1 // pred_check
      _
    $region35: #{tpu_custom_call.1} parent=1 // pred_check_branch
      %8674 = sbr.rel (0) target = $region37
    $region36: #{tpu_custom_call.1} parent=1 // pred_region
      %8676 = vsyncadd [#allocation10], 0
      %s8678 = sshll.u32 [#allocation9], 4
      %s8679 = int_to_ptr.vmem [resolvable:$true] %s8678
      %s8680 = sshll.u32 %s7, 4
      %s8681 = int_to_ptr.hbm [resolvable:$true] %s8680
      %8683 = dma.vmem_to_hbm [thread:$0]  %s8679, 128, %s8681, [#allocation10]
    $region37: #{tpu_custom_call.1} parent=1 // pred_fallthru
      _
    // Predicated region
    $region38: #{tpu_custom_call.1} parent=1 // pred_check
      _
    $region39: #{tpu_custom_call.1} parent=1 // pred_check_branch
      %8685 = sbr.rel (0) target = $region41
    $region40: #{tpu_custom_call.1} parent=1 // pred_region
      %8687 = dma.done [#allocation8], 16
    $region41: #{tpu_custom_call.1} parent=1 // pred_fallthru
      _
    // Predicated region
    $region42: #{tpu_custom_call.1} parent=1 // pred_check
      _
    $region43: #{tpu_custom_call.1} parent=1 // pred_check_branch
      %8689 = sbr.rel (0) target = $region45
    $region44: #{tpu_custom_call.1} parent=1 // pred_region
      %8691 = dma.done [#allocation10], 128
    $region45: #{tpu_custom_call.1} parent=1 // pred_fallthru
      _
    %8692 = vsyncpa [#allocation8], 1
    %8693 = vsyncpa [#allocation10], 1

</llo_original>
